<compile_context>
chip_gen: v7x
topology: tpu7x:2x2x1
jax: 0.10.0
libtpu: 0.0.40
codegen_flags: <defaults>
</compile_context>

<pallas_src>
import jax
import jax.numpy as jnp
from jax import lax
from jax.experimental import pallas as pl
from jax.experimental.pallas import tpu as pltpu

ITEM_MAX_LEN = 50
USER_MAX_LEN = 50


# ---------------------------------------------------------------------------
# Fused per-side kernel: projection + time-aware attention + gate + update
# ---------------------------------------------------------------------------
def dsgr_side_kernel(mb_ref, dst_ref, reorder_ref, last_ref,
                     w_dst_ref, w_src_ref, w_src_t_ref,
                     tbl_t_ref, tbl_k_ref,
                     wg_a_ref, wg_b_ref, wu_a_ref, wu_b_ref,
                     out_ref):
    # mb_ref      : [tn, L, H]  RAW gathered neighbor (source-node) features
    # dst_ref     : [tn, H]     RAW destination-node features (also "orig")
    # reorder_ref : [tn, L]     descending time-rank of each neighbor (int32)
    # last_ref    : [tn, 1]     argmax-time neighbor slot (int32)
    # w_dst_ref   : [H, H]      dst projection weight (in, out)
    # w_src_ref   : [H, H]      src projection weight (in, out)
    # w_src_t_ref : [H, H]      src projection weight transposed (out, in)
    # tbl_t_ref   : [H, K]      date embedding table, transposed
    # tbl_k_ref   : [K, H]      date "key" embedding table
    # wg_a/wg_b   : [H, H]      agg_gate weight split (h_long / h_short halves)
    # wu_a/wu_b   : [H, H]      update weight split (agg / orig halves)
    mb = mb_ref[...]
    dst = dst_ref[...]
    reorder = reorder_ref[...]
    last = last_ref[...]

    tn, L, H = mb.shape
    K = tbl_k_ref.shape[0]
    f32 = jnp.float32
    scale = 1.0 / jnp.sqrt(f32(H))

    # fused dst projection: dst_h = dst @ W_dst
    dst_h = jnp.dot(dst, w_dst_ref[...], preferred_element_type=f32)        # [tn,H]

    # Fold the src projection into the query:
    #   <W_src-projected mb[t,l], dst_h[t]> == <mb[t,l], dst_h[t] @ W_src^T>
    q = jnp.dot(dst_h, w_src_t_ref[...], preferred_element_type=f32)        # [tn,H]

    # Date-embedding contribution to the scores: S[t,k] = <dst_h[t], emb[k]>
    s_tbl = jnp.dot(dst_h, tbl_t_ref[...], preferred_element_type=f32)      # [tn,K]

    # exact one-hot of the time ranks over the K table rows
    k_iota = lax.broadcasted_iota(jnp.int32, (tn, L, K), 2)
    onehot = (reorder[:, :, None] == k_iota).astype(f32)                    # [tn,L,K]

    # ---- long-term (time-aware) attention ----
    e = (jnp.sum(onehot * s_tbl[:, None, :], axis=2)
         + jnp.sum(mb * q[:, None, :], axis=2)) * scale                     # [tn,L]
    e = e - jnp.max(e, axis=1, keepdims=True)
    p = jnp.exp(e)
    alpha = p * pl.reciprocal(jnp.sum(p, axis=1, keepdims=True), approx=True)

    m_long = jnp.sum(alpha[:, :, None] * mb, axis=1)                        # [tn,H]
    wk = jnp.sum(alpha[:, :, None] * onehot, axis=1)                        # [tn,K]
    h_long = (jnp.dot(m_long, w_src_ref[...], preferred_element_type=f32)
              + jnp.dot(wk, tbl_k_ref[...], preferred_element_type=f32))    # [tn,H]

    # ---- short-term (last interaction) attention ----
    l_iota = lax.broadcasted_iota(jnp.int32, (tn, L), 1)
    sel_last = (last == l_iota).astype(f32)                                 # [tn,L]
    last_raw = jnp.sum(sel_last[:, :, None] * mb, axis=1)                   # [tn,H]
    last_src = jnp.dot(last_raw, w_src_ref[...], preferred_element_type=f32)
    q1 = jnp.dot(last_src, w_src_t_ref[...], preferred_element_type=f32)    # [tn,H]

    e1 = jnp.sum(mb * q1[:, None, :], axis=2) * scale                       # [tn,L]
    e1 = e1 - jnp.max(e1, axis=1, keepdims=True)
    p1 = jnp.exp(e1)
    alpha1 = p1 * pl.reciprocal(jnp.sum(p1, axis=1, keepdims=True), approx=True)
    m_short = jnp.sum(alpha1[:, :, None] * mb, axis=1)                      # [tn,H]
    h_short = jnp.dot(m_short, w_src_ref[...], preferred_element_type=f32)  # [tn,H]

    # ---- agg gate + node update (split weights, no lane-axis concat) ----
    agg = (jnp.dot(h_long, wg_a_ref[...], preferred_element_type=f32)
           + jnp.dot(h_short, wg_b_ref[...], preferred_element_type=f32))   # [tn,H]
    out = jnp.tanh(jnp.dot(agg, wu_a_ref[...], preferred_element_type=f32)
                   + jnp.dot(dst, wu_b_ref[...], preferred_element_type=f32))
    out_ref[...] = out.astype(out_ref.dtype)


# ---------------------------------------------------------------------------
# Tiling helpers + per-side wrapper
# ---------------------------------------------------------------------------
def _round_up(x, m):
    return ((x + m - 1) // m) * m


def _auto_tile(n, L, H, vmem_budget_bytes=32 * 1024 * 1024):
    # ~6 live f32 slabs of shape [tn, L, max(H, 128)] (double-buffered mailbox
    # input block + in-kernel temporaries such as the one-hot and products).
    per_node = 6 * L * max(H, 128) * 4
    tn = vmem_budget_bytes // max(per_node, 1)
    tn = max(8, min(512, (tn // 8) * 8))
    return min(tn, _round_up(n, 8))


def dsgr_side(dst_feat, src_feat, nbr_idx, nbr_time,
              w_dst, w_src, date_tbl, date_tbl_k, wg, wu, *, tn=None):
    N, H = dst_feat.shape
    L = nbr_idx.shape[1]
    K = date_tbl.shape[0]
    assert L <= K, "neighbor count must not exceed the date-embedding table"

    # ---- XLA glue: cheap [N, L] integer work + the one remaining gather ----
    order = jnp.argsort(jnp.argsort(nbr_time, axis=1), axis=1)
    reorder = (L - order - 1).astype(jnp.int32)                       # [N, L]
    last = jnp.argmax(nbr_time, axis=1).astype(jnp.int32)[:, None]    # [N, 1]
    raw_mb = src_feat[nbr_idx]                                        # [N, L, H]
    # TODO(synk): move this raw-feature gather in-kernel (scalar-prefetch /
    # per-row DMA gather) to remove the last [N, L, H] HBM stream as well.

    if tn is None:
        tn = _auto_tile(N, L, H)
    tn = max(8, (min(tn, _round_up(N, 8)) // 8) * 8)
    n_pad = int(pl.cdiv(N, tn)) * tn
    pad = n_pad - N
    dst_p = dst_feat
    if pad:
        raw_mb = jnp.pad(raw_mb, ((0, pad), (0, 0), (0, 0)))
        dst_p = jnp.pad(dst_feat, ((0, pad), (0, 0)))
        reorder = jnp.pad(reorder, ((0, pad), (0, 0)))
        last = jnp.pad(last, ((0, pad), (0, 0)))

    def full(a):  # whole (small) array resident every grid step
        return pl.BlockSpec(a.shape, lambda i: (0, 0))

    consts = (w_dst, w_src, w_src.T, date_tbl.T, date_tbl_k,
              wg[:H], wg[H:], wu[:H], wu[H:])

    out = pl.pallas_call(
        dsgr_side_kernel,
        out_shape=jax.ShapeDtypeStruct((n_pad, H), dst_feat.dtype),
        grid=(n_pad // tn,),
        in_specs=[
            pl.BlockSpec((tn, L, H), lambda i: (i, 0, 0)),   # raw mailbox
            pl.BlockSpec((tn, H), lambda i: (i, 0)),         # dst / orig feats
            pl.BlockSpec((tn, L), lambda i: (i, 0)),         # time ranks
            pl.BlockSpec((tn, 1), lambda i: (i, 0)),         # argmax-time slot
        ] + [full(c) for c in consts],
        out_specs=pl.BlockSpec((tn, H), lambda i: (i, 0)),
        compiler_params=pltpu.CompilerParams(
            dimension_semantics=("parallel",),
            vmem_limit_bytes=48 * 1024 * 1024),
    )(raw_mb, dst_p, reorder, last, *consts)
    return out[:N]


# ---------------------------------------------------------------------------
# Parameters (deterministic synthetic init; nn.Linear weights stored [in, out])
# ---------------------------------------------------------------------------
def make_params(key, H):
    ks = jax.random.split(key, 12)

    def lin(k, din, dout):
        bound = 1.0 / jnp.sqrt(jnp.float32(din))
        return jax.random.uniform(k, (din, dout), jnp.float32, -bound, bound)

    return {
        "user_weight": lin(ks[0], H, H),
        "recipe_weight": lin(ks[1], H, H),
        "agg_gate_user": lin(ks[2], 2 * H, H),
        "agg_gate_recipe": lin(ks[3], 2 * H, H),
        "user_update": lin(ks[4], 2 * H, H),
        "recipe_update": lin(ks[5], 2 * H, H),
        "user_last_weight": lin(ks[6], H, H),     # defined but unused in forward
        "recipe_last_weight": lin(ks[7], H, H),   # defined but unused in forward
        "recipe_date_emb": jax.random.normal(ks[8], (USER_MAX_LEN, H), jnp.float32),
        "recipe_date_emb_k": jax.random.normal(ks[9], (USER_MAX_LEN, H), jnp.float32),
        "user_date_emb": jax.random.normal(ks[10], (ITEM_MAX_LEN, H), jnp.float32),
        "user_date_emb_k": jax.random.normal(ks[11], (ITEM_MAX_LEN, H), jnp.float32),
    }


# ---------------------------------------------------------------------------
# Forward pass: two fused pallas_calls (one per node type)
# ---------------------------------------------------------------------------
def dsgr_forward(params, user_feat, item_feat,
                 user_nbr_items, user_nbr_time,
                 item_nbr_users, item_nbr_time, *, tn=None):
    # 'by' edges: item -> user  (user_reduce)
    user_new = dsgr_side(
        user_feat, item_feat, user_nbr_items, user_nbr_time,
        params["user_weight"], params["recipe_weight"],
        params["user_date_emb"], params["user_date_emb_k"],
        params["agg_gate_user"], params["user_update"], tn=tn)
    # 'pby' edges: user -> item  (recipe_reduce)
    item_new = dsgr_side(
        item_feat, user_feat, item_nbr_users, item_nbr_time,
        params["recipe_weight"], params["user_weight"],
        params["recipe_date_emb"], params["recipe_date_emb_k"],
        params["agg_gate_recipe"], params["recipe_update"], tn=tn)
    return {"user": user_new, "item": item_new}


# ---------------------------------------------------------------------------
# Pure-JAX reference (same math, no Pallas) for correctness check
# ---------------------------------------------------------------------------
def dsgr_reference(params, user_feat, item_feat,
                   user_nbr_items, user_nbr_time,
                   item_nbr_users, item_nbr_time):
    H = user_feat.shape[-1]
    scale = 1.0 / jnp.sqrt(jnp.float32(H))
    user_h = user_feat @ params["user_weight"]
    item_h = item_feat @ params["recipe_weight"]

    def side(src_mb, dst_h, times, emb_tbl, embk_tbl, orig, wg, wu):
        L = times.shape[1]
        order = jnp.argsort(jnp.argsort(times, axis=1), axis=1)
        reorder = L - order - 1
        emb = emb_tbl[reorder]
        embk = embk_tbl[reorder]
        e = jnp.sum((emb + src_mb) * dst_h[:, None, :], axis=-1) * scale
        alpha = jax.nn.softmax(e, axis=1)
        h_long = jnp.sum(alpha[:, :, None] * (src_mb + embk), axis=1)
        last = jnp.argmax(times, axis=1)
        last_emb = jnp.take_along_axis(src_mb, last[:, None, None], axis=1)
        e1 = jnp.sum(last_emb * src_mb, axis=-1) * scale
        alpha1 = jax.nn.softmax(e1, axis=1)
        h_short = jnp.sum(alpha1[:, :, None] * src_mb, axis=1)
        agg = jnp.concatenate([h_long, h_short], axis=-1) @ wg
        return jnp.tanh(jnp.concatenate([agg, orig], axis=-1) @ wu)

    user_new = side(item_h[user_nbr_items], user_h, user_nbr_time,
                    params["user_date_emb"], params["user_date_emb_k"],
                    user_feat, params["agg_gate_user"], params["user_update"])
    item_new = side(user_h[item_nbr_users], item_h, item_nbr_time,
                    params["recipe_date_emb"], params["recipe_date_emb_k"],
                    item_feat, params["agg_gate_recipe"], params["recipe_update"])
    return {"user": user_new, "item": item_new}


# ---------------------------------------------------------------------------
if __name__ == "__main__":
    H = 128        # hidden size — multiple of 128 keeps every block lane-dense
    N_USER = 72    # not a multiple of the tile -> exercises cdiv + padding path
    N_ITEM = 56
    L = 10         # fixed neighbor count per node (dense mailbox), <= 50

    key = jax.random.PRNGKey(0)
    k_par, k_u, k_i, k_ui, k_ut, k_iu, k_it = jax.random.split(key, 7)

    params = make_params(k_par, H)
    user_feat = jax.random.normal(k_u, (N_USER, H), jnp.float32)
    item_feat = jax.random.normal(k_i, (N_ITEM, H), jnp.float32)
    user_nbr_items = jax.random.randint(k_ui, (N_USER, L), 0, N_ITEM)
    user_nbr_time = jax.random.uniform(k_ut, (N_USER, L), jnp.float32)
    item_nbr_users = jax.random.randint(k_iu, (N_ITEM, L), 0, N_USER)
    item_nbr_time = jax.random.uniform(k_it, (N_ITEM, L), jnp.float32)

    ref = dsgr_reference(params, user_feat, item_feat,
                         user_nbr_items, user_nbr_time,
                         item_nbr_users, item_nbr_time)

    # explicit small tile -> multi-step grid with tail padding (72->96, 56->64)
    out = dsgr_forward(params, user_feat, item_feat,
                       user_nbr_items, user_nbr_time,
                       item_nbr_users, item_nbr_time, tn=32)
    out = jax.block_until_ready(out)

    # tolerance accommodates pl.reciprocal(approx=True) in the two softmaxes
    TOL = dict(atol=2e-2, rtol=2e-2)
    assert jnp.allclose(out["user"], ref["user"], **TOL), \
        float(jnp.max(jnp.abs(out["user"] - ref["user"])))
    assert jnp.allclose(out["item"], ref["item"], **TOL), \
        float(jnp.max(jnp.abs(out["item"] - ref["item"])))

    # also exercise the auto (VMEM-budget) tile-size path
    out_auto = jax.block_until_ready(
        dsgr_forward(params, user_feat, item_feat,
                     user_nbr_items, user_nbr_time,
                     item_nbr_users, item_nbr_time))
    assert jnp.allclose(out_auto["user"], ref["user"], **TOL)
    assert jnp.allclose(out_auto["item"], ref["item"], **TOL)

    print("KERNEL_OK")
</pallas_src>

<mosaic_0001>
module attributes {stable_mosaic.version = 11 : i64} {
  func.func @dsgr_side_kernel(%arg0: i32, %arg1: memref<32x10x128xf32, #tpu.memory_space<vmem>>, %arg2: memref<32x128xf32, #tpu.memory_space<vmem>>, %arg3: memref<32x10xi32, #tpu.memory_space<vmem>>, %arg4: memref<32x1xi32, #tpu.memory_space<vmem>>, %arg5: memref<128x128xf32, #tpu.memory_space<vmem>>, %arg6: memref<128x128xf32, #tpu.memory_space<vmem>>, %arg7: memref<128x128xf32, #tpu.memory_space<vmem>>, %arg8: memref<128x50xf32, #tpu.memory_space<vmem>>, %arg9: memref<50x128xf32, #tpu.memory_space<vmem>>, %arg10: memref<128x128xf32, #tpu.memory_space<vmem>>, %arg11: memref<128x128xf32, #tpu.memory_space<vmem>>, %arg12: memref<128x128xf32, #tpu.memory_space<vmem>>, %arg13: memref<128x128xf32, #tpu.memory_space<vmem>>, %arg14: memref<32x128xf32, #tpu.memory_space<vmem>>) attributes {dimension_semantics = [#tpu.dimension_semantics<parallel>], iteration_bounds = array<i64: 3>, scalar_prefetch = 0 : i64, scratch_operands = 0 : i64, tpu.core_type = #tpu.core_type<tc>, window_params = [{transform_indices = @transform_0, window_bounds = array<i64: 32, 10, 128>}, {transform_indices = @transform_1, window_bounds = array<i64: 32, 128>}, {transform_indices = @transform_2, window_bounds = array<i64: 32, 10>}, {transform_indices = @transform_3, window_bounds = array<i64: 32, 1>}, {pipeline_mode = #tpu.pipeline_mode<synchronous>, transform_indices = @transform_4, window_bounds = array<i64: 128, 128>}, {pipeline_mode = #tpu.pipeline_mode<synchronous>, transform_indices = @transform_5, window_bounds = array<i64: 128, 128>}, {pipeline_mode = #tpu.pipeline_mode<synchronous>, transform_indices = @transform_6, window_bounds = array<i64: 128, 128>}, {pipeline_mode = #tpu.pipeline_mode<synchronous>, transform_indices = @transform_7, window_bounds = array<i64: 128, 50>}, {pipeline_mode = #tpu.pipeline_mode<synchronous>, transform_indices = @transform_8, window_bounds = array<i64: 50, 128>}, {pipeline_mode = #tpu.pipeline_mode<synchronous>, transform_indices = @transform_9, window_bounds = array<i64: 128, 128>}, {pipeline_mode = #tpu.pipeline_mode<synchronous>, transform_indices = @transform_10, window_bounds = array<i64: 128, 128>}, {pipeline_mode = #tpu.pipeline_mode<synchronous>, transform_indices = @transform_11, window_bounds = array<i64: 128, 128>}, {pipeline_mode = #tpu.pipeline_mode<synchronous>, transform_indices = @transform_12, window_bounds = array<i64: 128, 128>}, {transform_indices = @transform_13, window_bounds = array<i64: 32, 128>}]} {
    %c0 = arith.constant 0 : index
    %c0_0 = arith.constant 0 : index
    %c0_1 = arith.constant 0 : index
    %0 = vector.load %arg1[%c0, %c0_0, %c0_1] : memref<32x10x128xf32, #tpu.memory_space<vmem>>, vector<32x10x128xf32>
    %c0_2 = arith.constant 0 : index
    %c0_3 = arith.constant 0 : index
    %1 = vector.load %arg2[%c0_2, %c0_3] : memref<32x128xf32, #tpu.memory_space<vmem>>, vector<32x128xf32>
    %c0_4 = arith.constant 0 : index
    %c0_5 = arith.constant 0 : index
    %2 = vector.load %arg3[%c0_4, %c0_5] : memref<32x10xi32, #tpu.memory_space<vmem>>, vector<32x10xi32>
    %c0_6 = arith.constant 0 : index
    %c0_7 = arith.constant 0 : index
    %3 = vector.load %arg4[%c0_6, %c0_7] : memref<32x1xi32, #tpu.memory_space<vmem>>, vector<32x1xi32>
    %cst = arith.constant 1.280000e+02 : f32
    %4 = math.sqrt %cst : f32
    %cst_8 = arith.constant 1.000000e+00 : f32
    %5 = arith.divf %cst_8, %4 : f32
    %c0_9 = arith.constant 0 : index
    %c0_10 = arith.constant 0 : index
    %6 = vector.load %arg5[%c0_9, %c0_10] : memref<128x128xf32, #tpu.memory_space<vmem>>, vector<128x128xf32>
    %cst_11 = arith.constant dense<0.000000e+00> : vector<32x128xf32>
    %7 = tpu.matmul %1, %6, %cst_11 {dimension_numbers = #tpu.dot_dimension_numbers<[1], [0], [0], [1], [0, 0, 1, 1], [], []>} : vector<32x128xf32>, vector<128x128xf32>, vector<32x128xf32> -> vector<32x128xf32>
    %c0_12 = arith.constant 0 : index
    %c0_13 = arith.constant 0 : index
    %8 = vector.load %arg7[%c0_12, %c0_13] : memref<128x128xf32, #tpu.memory_space<vmem>>, vector<128x128xf32>
    %cst_14 = arith.constant dense<0.000000e+00> : vector<32x128xf32>
    %9 = tpu.matmul %7, %8, %cst_14 {dimension_numbers = #tpu.dot_dimension_numbers<[1], [0], [0], [1], [0, 0, 1, 1], [], []>} : vector<32x128xf32>, vector<128x128xf32>, vector<32x128xf32> -> vector<32x128xf32>
    %c0_15 = arith.constant 0 : index
    %c0_16 = arith.constant 0 : index
    %10 = vector.load %arg8[%c0_15, %c0_16] : memref<128x50xf32, #tpu.memory_space<vmem>>, vector<128x50xf32>
    %cst_17 = arith.constant dense<0.000000e+00> : vector<32x50xf32>
    %11 = tpu.matmul %7, %10, %cst_17 {dimension_numbers = #tpu.dot_dimension_numbers<[1], [0], [0], [1], [0, 0, 1, 1], [], []>} : vector<32x128xf32>, vector<128x50xf32>, vector<32x50xf32> -> vector<32x50xf32>
    %12 = tpu.iota {dimensions = array<i32: 2>} : vector<32x10x50xi32>
    %13 = vector.shape_cast %2 : vector<32x10xi32> to vector<32x10x1xi32>
    %14 = vector.broadcast %13 : vector<32x10x1xi32> to vector<32x10x50xi32>
    %15 = arith.cmpi eq, %14, %12 : vector<32x10x50xi32>
    %16 = arith.extui %15 : vector<32x10x50xi1> to vector<32x10x50xi32>
    %17 = arith.sitofp %16 : vector<32x10x50xi32> to vector<32x10x50xf32>
    %18 = vector.shape_cast %11 : vector<32x50xf32> to vector<32x1x50xf32>
    %19 = vector.broadcast %18 : vector<32x1x50xf32> to vector<32x10x50xf32>
    %20 = arith.mulf %17, %19 : vector<32x10x50xf32>
    %cst_18 = arith.constant dense<0.000000e+00> : vector<32x10xf32>
    %21 = vector.multi_reduction <add>, %20, %cst_18 [2] : vector<32x10x50xf32> to vector<32x10xf32>
    %22 = vector.shape_cast %9 : vector<32x128xf32> to vector<32x1x128xf32>
    %23 = vector.broadcast %22 : vector<32x1x128xf32> to vector<32x10x128xf32>
    %24 = arith.mulf %0, %23 : vector<32x10x128xf32>
    %cst_19 = arith.constant dense<0.000000e+00> : vector<32x10xf32>
    %25 = vector.multi_reduction <add>, %24, %cst_19 [2] : vector<32x10x128xf32> to vector<32x10xf32>
    %26 = arith.addf %21, %25 : vector<32x10xf32>
    %27 = vector.broadcast %5 : f32 to vector<32x10xf32>
    %28 = arith.mulf %26, %27 : vector<32x10xf32>
    %cst_20 = arith.constant dense<0xFF800000> : vector<32xf32>
    %29 = vector.multi_reduction <maximumf>, %28, %cst_20 [1] : vector<32x10xf32> to vector<32xf32>
    %30 = vector.shape_cast %29 : vector<32xf32> to vector<32x1xf32>
    %31 = vector.broadcast %30 : vector<32x1xf32> to vector<32x10xf32>
    %32 = arith.subf %28, %31 : vector<32x10xf32>
    %33 = math.exp %32 : vector<32x10xf32>
    %cst_21 = arith.constant dense<0.000000e+00> : vector<32xf32>
    %34 = vector.multi_reduction <add>, %33, %cst_21 [1] : vector<32x10xf32> to vector<32xf32>
    %35 = vector.shape_cast %34 : vector<32xf32> to vector<32x1xf32>
    %36 = tpu.reciprocal %35 {approx = true} : vector<32x1xf32> -> vector<32x1xf32>
    %37 = vector.broadcast %36 : vector<32x1xf32> to vector<32x10xf32>
    %38 = arith.mulf %33, %37 : vector<32x10xf32>
    %39 = vector.shape_cast %38 : vector<32x10xf32> to vector<32x10x1xf32>
    %40 = vector.broadcast %39 : vector<32x10x1xf32> to vector<32x10x128xf32>
    %41 = arith.mulf %40, %0 : vector<32x10x128xf32>
    %cst_22 = arith.constant dense<0.000000e+00> : vector<32x128xf32>
    %42 = vector.multi_reduction <add>, %41, %cst_22 [1] : vector<32x10x128xf32> to vector<32x128xf32>
    %43 = vector.shape_cast %38 : vector<32x10xf32> to vector<32x10x1xf32>
    %44 = vector.broadcast %43 : vector<32x10x1xf32> to vector<32x10x50xf32>
    %45 = arith.mulf %44, %17 : vector<32x10x50xf32>
    %cst_23 = arith.constant dense<0.000000e+00> : vector<32x50xf32>
    %46 = vector.multi_reduction <add>, %45, %cst_23 [1] : vector<32x10x50xf32> to vector<32x50xf32>
    %c0_24 = arith.constant 0 : index
    %c0_25 = arith.constant 0 : index
    %47 = vector.load %arg6[%c0_24, %c0_25] : memref<128x128xf32, #tpu.memory_space<vmem>>, vector<128x128xf32>
    %cst_26 = arith.constant dense<0.000000e+00> : vector<32x128xf32>
    %48 = tpu.matmul %42, %47, %cst_26 {dimension_numbers = #tpu.dot_dimension_numbers<[1], [0], [0], [1], [0, 0, 1, 1], [], []>} : vector<32x128xf32>, vector<128x128xf32>, vector<32x128xf32> -> vector<32x128xf32>
    %c0_27 = arith.constant 0 : index
    %c0_28 = arith.constant 0 : index
    %49 = vector.load %arg9[%c0_27, %c0_28] : memref<50x128xf32, #tpu.memory_space<vmem>>, vector<50x128xf32>
    %cst_29 = arith.constant dense<0.000000e+00> : vector<32x128xf32>
    %50 = tpu.matmul %46, %49, %cst_29 {dimension_numbers = #tpu.dot_dimension_numbers<[1], [0], [0], [1], [0, 0, 1, 1], [], []>} : vector<32x50xf32>, vector<50x128xf32>, vector<32x128xf32> -> vector<32x128xf32>
    %51 = arith.addf %48, %50 : vector<32x128xf32>
    %52 = tpu.iota {dimensions = array<i32: 1>} : vector<32x10xi32>
    %53 = vector.broadcast %3 : vector<32x1xi32> to vector<32x10xi32>
    %54 = arith.cmpi eq, %53, %52 : vector<32x10xi32>
    %55 = arith.extui %54 : vector<32x10xi1> to vector<32x10xi32>
    %56 = arith.sitofp %55 : vector<32x10xi32> to vector<32x10xf32>
    %57 = vector.shape_cast %56 : vector<32x10xf32> to vector<32x10x1xf32>
    %58 = vector.broadcast %57 : vector<32x10x1xf32> to vector<32x10x128xf32>
    %59 = arith.mulf %58, %0 : vector<32x10x128xf32>
    %cst_30 = arith.constant dense<0.000000e+00> : vector<32x128xf32>
    %60 = vector.multi_reduction <add>, %59, %cst_30 [1] : vector<32x10x128xf32> to vector<32x128xf32>
    %c0_31 = arith.constant 0 : index
    %c0_32 = arith.constant 0 : index
    %61 = vector.load %arg6[%c0_31, %c0_32] : memref<128x128xf32, #tpu.memory_space<vmem>>, vector<128x128xf32>
    %cst_33 = arith.constant dense<0.000000e+00> : vector<32x128xf32>
    %62 = tpu.matmul %60, %61, %cst_33 {dimension_numbers = #tpu.dot_dimension_numbers<[1], [0], [0], [1], [0, 0, 1, 1], [], []>} : vector<32x128xf32>, vector<128x128xf32>, vector<32x128xf32> -> vector<32x128xf32>
    %c0_34 = arith.constant 0 : index
    %c0_35 = arith.constant 0 : index
    %63 = vector.load %arg7[%c0_34, %c0_35] : memref<128x128xf32, #tpu.memory_space<vmem>>, vector<128x128xf32>
    %cst_36 = arith.constant dense<0.000000e+00> : vector<32x128xf32>
    %64 = tpu.matmul %62, %63, %cst_36 {dimension_numbers = #tpu.dot_dimension_numbers<[1], [0], [0], [1], [0, 0, 1, 1], [], []>} : vector<32x128xf32>, vector<128x128xf32>, vector<32x128xf32> -> vector<32x128xf32>
    %65 = vector.shape_cast %64 : vector<32x128xf32> to vector<32x1x128xf32>
    %66 = vector.broadcast %65 : vector<32x1x128xf32> to vector<32x10x128xf32>
    %67 = arith.mulf %0, %66 : vector<32x10x128xf32>
    %cst_37 = arith.constant dense<0.000000e+00> : vector<32x10xf32>
    %68 = vector.multi_reduction <add>, %67, %cst_37 [2] : vector<32x10x128xf32> to vector<32x10xf32>
    %69 = vector.broadcast %5 : f32 to vector<32x10xf32>
    %70 = arith.mulf %68, %69 : vector<32x10xf32>
    %cst_38 = arith.constant dense<0xFF800000> : vector<32xf32>
    %71 = vector.multi_reduction <maximumf>, %70, %cst_38 [1] : vector<32x10xf32> to vector<32xf32>
    %72 = vector.shape_cast %71 : vector<32xf32> to vector<32x1xf32>
    %73 = vector.broadcast %72 : vector<32x1xf32> to vector<32x10xf32>
    %74 = arith.subf %70, %73 : vector<32x10xf32>
    %75 = math.exp %74 : vector<32x10xf32>
    %cst_39 = arith.constant dense<0.000000e+00> : vector<32xf32>
    %76 = vector.multi_reduction <add>, %75, %cst_39 [1] : vector<32x10xf32> to vector<32xf32>
    %77 = vector.shape_cast %76 : vector<32xf32> to vector<32x1xf32>
    %78 = tpu.reciprocal %77 {approx = true} : vector<32x1xf32> -> vector<32x1xf32>
    %79 = vector.broadcast %78 : vector<32x1xf32> to vector<32x10xf32>
    %80 = arith.mulf %75, %79 : vector<32x10xf32>
    %81 = vector.shape_cast %80 : vector<32x10xf32> to vector<32x10x1xf32>
    %82 = vector.broadcast %81 : vector<32x10x1xf32> to vector<32x10x128xf32>
    %83 = arith.mulf %82, %0 : vector<32x10x128xf32>
    %cst_40 = arith.constant dense<0.000000e+00> : vector<32x128xf32>
    %84 = vector.multi_reduction <add>, %83, %cst_40 [1] : vector<32x10x128xf32> to vector<32x128xf32>
    %c0_41 = arith.constant 0 : index
    %c0_42 = arith.constant 0 : index
    %85 = vector.load %arg6[%c0_41, %c0_42] : memref<128x128xf32, #tpu.memory_space<vmem>>, vector<128x128xf32>
    %cst_43 = arith.constant dense<0.000000e+00> : vector<32x128xf32>
    %86 = tpu.matmul %84, %85, %cst_43 {dimension_numbers = #tpu.dot_dimension_numbers<[1], [0], [0], [1], [0, 0, 1, 1], [], []>} : vector<32x128xf32>, vector<128x128xf32>, vector<32x128xf32> -> vector<32x128xf32>
    %c0_44 = arith.constant 0 : index
    %c0_45 = arith.constant 0 : index
    %87 = vector.load %arg10[%c0_44, %c0_45] : memref<128x128xf32, #tpu.memory_space<vmem>>, vector<128x128xf32>
    %cst_46 = arith.constant dense<0.000000e+00> : vector<32x128xf32>
    %88 = tpu.matmul %51, %87, %cst_46 {dimension_numbers = #tpu.dot_dimension_numbers<[1], [0], [0], [1], [0, 0, 1, 1], [], []>} : vector<32x128xf32>, vector<128x128xf32>, vector<32x128xf32> -> vector<32x128xf32>
    %c0_47 = arith.constant 0 : index
    %c0_48 = arith.constant 0 : index
    %89 = vector.load %arg11[%c0_47, %c0_48] : memref<128x128xf32, #tpu.memory_space<vmem>>, vector<128x128xf32>
    %cst_49 = arith.constant dense<0.000000e+00> : vector<32x128xf32>
    %90 = tpu.matmul %86, %89, %cst_49 {dimension_numbers = #tpu.dot_dimension_numbers<[1], [0], [0], [1], [0, 0, 1, 1], [], []>} : vector<32x128xf32>, vector<128x128xf32>, vector<32x128xf32> -> vector<32x128xf32>
    %91 = arith.addf %88, %90 : vector<32x128xf32>
    %c0_50 = arith.constant 0 : index
    %c0_51 = arith.constant 0 : index
    %92 = vector.load %arg12[%c0_50, %c0_51] : memref<128x128xf32, #tpu.memory_space<vmem>>, vector<128x128xf32>
    %cst_52 = arith.constant dense<0.000000e+00> : vector<32x128xf32>
    %93 = tpu.matmul %91, %92, %cst_52 {dimension_numbers = #tpu.dot_dimension_numbers<[1], [0], [0], [1], [0, 0, 1, 1], [], []>} : vector<32x128xf32>, vector<128x128xf32>, vector<32x128xf32> -> vector<32x128xf32>
    %c0_53 = arith.constant 0 : index
    %c0_54 = arith.constant 0 : index
    %94 = vector.load %arg13[%c0_53, %c0_54] : memref<128x128xf32, #tpu.memory_space<vmem>>, vector<128x128xf32>
    %cst_55 = arith.constant dense<0.000000e+00> : vector<32x128xf32>
    %95 = tpu.matmul %1, %94, %cst_55 {dimension_numbers = #tpu.dot_dimension_numbers<[1], [0], [0], [1], [0, 0, 1, 1], [], []>} : vector<32x128xf32>, vector<128x128xf32>, vector<32x128xf32> -> vector<32x128xf32>
    %96 = arith.addf %93, %95 : vector<32x128xf32>
    %97 = math.tanh %96 : vector<32x128xf32>
    %c0_56 = arith.constant 0 : index
    %c0_57 = arith.constant 0 : index
    %98 = vector.load %arg14[%c0_56, %c0_57] : memref<32x128xf32, #tpu.memory_space<vmem>>, vector<32x128xf32>
    tpu.vector_store %arg14[%c0_56, %c0_57], %97 {strides = array<i32>} : memref<32x128xf32, #tpu.memory_space<vmem>>, vector<32x128xf32>,
    return
  }
  func.func @transform_0(%arg0: i32) -> (i32, i32, i32) {
    %c0_i32 = arith.constant 0 : i32
    %c0_i32_0 = arith.constant 0 : i32
    %c0_i32_1 = arith.constant 0 : i32
    return %arg0, %c0_i32, %c0_i32_0 : i32, i32, i32
  }
  func.func @transform_1(%arg0: i32) -> (i32, i32) {
    %c0_i32 = arith.constant 0 : i32
    %c0_i32_0 = arith.constant 0 : i32
    return %arg0, %c0_i32 : i32, i32
  }
  func.func @transform_2(%arg0: i32) -> (i32, i32) {
    %c0_i32 = arith.constant 0 : i32
    %c0_i32_0 = arith.constant 0 : i32
    return %arg0, %c0_i32 : i32, i32
  }
  func.func @transform_3(%arg0: i32) -> (i32, i32) {
    %c0_i32 = arith.constant 0 : i32
    %c0_i32_0 = arith.constant 0 : i32
    return %arg0, %c0_i32 : i32, i32
  }
  func.func @transform_4(%arg0: i32) -> (i32, i32) {
    %c0_i32 = arith.constant 0 : i32
    %c0_i32_0 = arith.constant 0 : i32
    %c0_i32_1 = arith.constant 0 : i32
    return %c0_i32, %c0_i32_0 : i32, i32
  }
  func.func @transform_5(%arg0: i32) -> (i32, i32) {
    %c0_i32 = arith.constant 0 : i32
    %c0_i32_0 = arith.constant 0 : i32
    %c0_i32_1 = arith.constant 0 : i32
    return %c0_i32, %c0_i32_0 : i32, i32
  }
  func.func @transform_6(%arg0: i32) -> (i32, i32) {
    %c0_i32 = arith.constant 0 : i32
    %c0_i32_0 = arith.constant 0 : i32
    %c0_i32_1 = arith.constant 0 : i32
    return %c0_i32, %c0_i32_0 : i32, i32
  }
  func.func @transform_7(%arg0: i32) -> (i32, i32) {
    %c0_i32 = arith.constant 0 : i32
    %c0_i32_0 = arith.constant 0 : i32
    %c0_i32_1 = arith.constant 0 : i32
    return %c0_i32, %c0_i32_0 : i32, i32
  }
  func.func @transform_8(%arg0: i32) -> (i32, i32) {
    %c0_i32 = arith.constant 0 : i32
    %c0_i32_0 = arith.constant 0 : i32
    %c0_i32_1 = arith.constant 0 : i32
    return %c0_i32, %c0_i32_0 : i32, i32
  }
  func.func @transform_9(%arg0: i32) -> (i32, i32) {
    %c0_i32 = arith.constant 0 : i32
    %c0_i32_0 = arith.constant 0 : i32
    %c0_i32_1 = arith.constant 0 : i32
    return %c0_i32, %c0_i32_0 : i32, i32
  }
  func.func @transform_10(%arg0: i32) -> (i32, i32) {
    %c0_i32 = arith.constant 0 : i32
    %c0_i32_0 = arith.constant 0 : i32
    %c0_i32_1 = arith.constant 0 : i32
    return %c0_i32, %c0_i32_0 : i32, i32
  }
  func.func @transform_11(%arg0: i32) -> (i32, i32) {
    %c0_i32 = arith.constant 0 : i32
    %c0_i32_0 = arith.constant 0 : i32
    %c0_i32_1 = arith.constant 0 : i32
    return %c0_i32, %c0_i32_0 : i32, i32
  }
  func.func @transform_12(%arg0: i32) -> (i32, i32) {
    %c0_i32 = arith.constant 0 : i32
    %c0_i32_0 = arith.constant 0 : i32
    %c0_i32_1 = arith.constant 0 : i32
    return %c0_i32, %c0_i32_0 : i32, i32
  }
  func.func @transform_13(%arg0: i32) -> (i32, i32) {
    %c0_i32 = arith.constant 0 : i32
    %c0_i32_0 = arith.constant 0 : i32
    return %arg0, %c0_i32 : i32, i32
  }
}

</mosaic_0001>

<llo_original>
// kernel: tpu_custom_call.1
$region0: #{tpu_custom_call.1}
  #allocation0 [shape = 'u32[]', space=smem, size = 0x4, offset = 0x4, fixed_abs, tag = 'smem constant byte address 0x4 - core index']
  #allocation1 [shape = 'u32[144,128]{1,0:T(1,128)}', space=vmem, size = 0x12000, scoped, tag = 'internal scratch']
  %s0 = inlined_call_operand.vmem [shape: f32[96,10,128], index: 0, kind: input, shape index: {}]
  %s1 = inlined_call_operand.vmem [shape: f32[96,128], index: 1, kind: input, shape index: {}]
  %s2 = inlined_call_operand.vmem [shape: s32[96,10], index: 2, kind: input, shape index: {}]
  %s3 = inlined_call_operand.vmem [shape: s32[96,1], index: 3, kind: input, shape index: {}]
  %s4 = inlined_call_operand.vmem [shape: f32[128,128], index: 4, kind: input, shape index: {}]
  %s5 = inlined_call_operand.vmem [shape: f32[128,128], index: 5, kind: input, shape index: {}]
  %s6 = inlined_call_operand.vmem [shape: f32[128,128], index: 6, kind: input, shape index: {}]
  %s7 = inlined_call_operand.vmem [shape: f32[128,50], index: 7, kind: input, shape index: {}]
  %s8 = inlined_call_operand.vmem [shape: f32[50,128], index: 8, kind: input, shape index: {}]
  %s9 = inlined_call_operand.vmem [shape: f32[128,128], index: 9, kind: input, shape index: {}]
  %s10 = inlined_call_operand.vmem [shape: f32[128,128], index: 10, kind: input, shape index: {}]
  %s11 = inlined_call_operand.vmem [shape: f32[128,128], index: 11, kind: input, shape index: {}]
  %s12 = inlined_call_operand.vmem [shape: f32[128,128], index: 12, kind: input, shape index: {}]
  %s13 = inlined_call_operand.hbm [shape: f32[96,128], index: 13, kind: output, shape index: {}]
  %s14 = sld [smem:[#allocation0]]
  $region85: #{tpu_custom_call.1} parent=0
    _
  %s16 = ssub.s32 1, %s14
  %s17 = scalar_select 0, %s16, %s14
  $region1: #{tpu_custom_call.1} parent=0
    #allocation2 [shape = 'u8[32768]{0}', space=vmem, size = 0x8000, scoped, tag = 'output window, operand 0']
    #allocation3 [shape = 's32[2]{0}', space=sflag, size = 0x8, scoped, tag = 'scoped memory for tpu_custom_call.1']
    %18 = vsyncpa [#allocation3], 0
    %s19 = scalar_lea.sflag [#allocation3], 1
    %20 = vsyncpa %s19, 0
    loop: start=0, step=1, limit=5
    $region2: #{tpu_custom_call.1} parent=1 // loop_pre_header
      _
    $region3: #{tpu_custom_call.1} parent=1 // loop_header
      %s22 = sphi 0, %s26
      %p23 = scmp.ge.s32.totalorder %s22, 5
      %s32 = sphi 0, %s34
      %s35 = sphi 0, %s32
      %s36 = sphi 0, %s35
      %s52 = sphi 0, %s36
      %s58 = sphi 0, %s60
      %s61 = sphi 0, %s58
      %s62 = sphi 0, %s61
      %s78 = sphi 0, %s62
      %s84 = sphi 0, %s86
      %s87 = sphi 0, %s84
      %s88 = sphi 0, %s87
      %s104 = sphi 0, %s88
      %s110 = sphi 0, %s112
      %s113 = sphi 0, %s110
      %s114 = sphi 0, %s113
      %s130 = sphi 0, %s114
      %s134 = sphi 0, %s134
      %s136 = sphi 0, %s134
      %s137 = sphi 0, %s136
      %s151 = sphi 0, %s137
      %s155 = sphi 0, %s155
      %s157 = sphi 0, %s155
      %s158 = sphi 0, %s157
      %s172 = sphi 0, %s158
      %s176 = sphi 0, %s176
      %s178 = sphi 0, %s176
      %s179 = sphi 0, %s178
      %s193 = sphi 0, %s179
      %s197 = sphi 0, %s197
      %s199 = sphi 0, %s197
      %s200 = sphi 0, %s199
      %s214 = sphi 0, %s200
      %s218 = sphi 0, %s218
      %s220 = sphi 0, %s218
      %s221 = sphi 0, %s220
      %s235 = sphi 0, %s221
      %s239 = sphi 0, %s239
      %s241 = sphi 0, %s239
      %s242 = sphi 0, %s241
      %s256 = sphi 0, %s242
      %s260 = sphi 0, %s260
      %s262 = sphi 0, %s260
      %s263 = sphi 0, %s262
      %s277 = sphi 0, %s263
      %s281 = sphi 0, %s281
      %s283 = sphi 0, %s281
      %s284 = sphi 0, %s283
      %s298 = sphi 0, %s284
      %s302 = sphi 0, %s302
      %s304 = sphi 0, %s302
      %s305 = sphi 0, %s304
      %s319 = sphi 0, %s305
      %s325 = sphi 0, %s327
      %s328 = sphi 0, %s325
      %s329 = sphi 0, %s328
      %s345 = sphi 0, %s329
    $region4: #{tpu_custom_call.1} parent=1 // loop_header_branch
      %25 = sbr.rel (%p23) target = $region8
    $region5: #{tpu_custom_call.1} parent=1 // loop_body
      %s27 = ssub.s32 %s22, 1
      %s28 = ssub.s32 %s22, 2
      %s29 = sadd.s32 %s22, 1
      %s30 = ssub.s32 %s22, %s29
      %p31 = scmp.eq.s32.totalorder %s30, 0
      %s33 = sadd.s32 %s32, 1
      %s34 = scalar_select %p31, %s32, %s33
      %p37 = pneg %p31
      %p38 = scmp.eq.s32.totalorder %s22, 2
      %p39 = por %p37, %p38
      %p40 = scmp.ne.s32.totalorder %s32, %s35
      %p41 = scmp.eq.s32.totalorder %s22, 0
      %p42 = por %p40, %p41
      %p43 = scmp.ne.s32.totalorder %s32, %s35
      %p44 = scmp.eq.s32.totalorder %s27, 2
      %p45 = por %p43, %p44
      %p46 = scmp.ne.s32.totalorder %s35, %s36
      %p47 = scmp.eq.s32.totalorder %s27, 0
      %p48 = por %p46, %p47
      %p49 = scmp.ne.s32.totalorder %s35, %s36
      %p50 = scmp.eq.s32.totalorder %s28, 2
      %p51 = por %p49, %p50
      %p53 = scmp.ne.s32.totalorder %s36, %s52
      %p54 = scmp.eq.s32.totalorder %s28, 0
      %p55 = por %p53, %p54
      %s56 = ssub.s32 %s22, %s29
      %p57 = scmp.eq.s32.totalorder %s56, 0
      %s59 = sadd.s32 %s58, 1
      %s60 = scalar_select %p57, %s58, %s59
      %p63 = pneg %p57
      %p64 = scmp.eq.s32.totalorder %s22, 2
      %p65 = por %p63, %p64
      %p66 = scmp.ne.s32.totalorder %s58, %s61
      %p67 = scmp.eq.s32.totalorder %s22, 0
      %p68 = por %p66, %p67
      %p69 = scmp.ne.s32.totalorder %s58, %s61
      %p70 = scmp.eq.s32.totalorder %s27, 2
      %p71 = por %p69, %p70
      %p72 = scmp.ne.s32.totalorder %s61, %s62
      %p73 = scmp.eq.s32.totalorder %s27, 0
      %p74 = por %p72, %p73
      %p75 = scmp.ne.s32.totalorder %s61, %s62
      %p76 = scmp.eq.s32.totalorder %s28, 2
      %p77 = por %p75, %p76
      %p79 = scmp.ne.s32.totalorder %s62, %s78
      %p80 = scmp.eq.s32.totalorder %s28, 0
      %p81 = por %p79, %p80
      %s82 = ssub.s32 %s22, %s29
      %p83 = scmp.eq.s32.totalorder %s82, 0
      %s85 = sadd.s32 %s84, 1
      %s86 = scalar_select %p83, %s84, %s85
      %p89 = pneg %p83
      %p90 = scmp.eq.s32.totalorder %s22, 2
      %p91 = por %p89, %p90
      %p92 = scmp.ne.s32.totalorder %s84, %s87
      %p93 = scmp.eq.s32.totalorder %s22, 0
      %p94 = por %p92, %p93
      %p95 = scmp.ne.s32.totalorder %s84, %s87
      %p96 = scmp.eq.s32.totalorder %s27, 2
      %p97 = por %p95, %p96
      %p98 = scmp.ne.s32.totalorder %s87, %s88
      %p99 = scmp.eq.s32.totalorder %s27, 0
      %p100 = por %p98, %p99
      %p101 = scmp.ne.s32.totalorder %s87, %s88
      %p102 = scmp.eq.s32.totalorder %s28, 2
      %p103 = por %p101, %p102
      %p105 = scmp.ne.s32.totalorder %s88, %s104
      %p106 = scmp.eq.s32.totalorder %s28, 0
      %p107 = por %p105, %p106
      %s108 = ssub.s32 %s22, %s29
      %p109 = scmp.eq.s32.totalorder %s108, 0
      %s111 = sadd.s32 %s110, 1
      %s112 = scalar_select %p109, %s110, %s111
      %p115 = pneg %p109
      %p116 = scmp.eq.s32.totalorder %s22, 2
      %p117 = por %p115, %p116
      %p118 = scmp.ne.s32.totalorder %s110, %s113
      %p119 = scmp.eq.s32.totalorder %s22, 0
      %p120 = por %p118, %p119
      %p121 = scmp.ne.s32.totalorder %s110, %s113
      %p122 = scmp.eq.s32.totalorder %s27, 2
      %p123 = por %p121, %p122
      %p124 = scmp.ne.s32.totalorder %s113, %s114
      %p125 = scmp.eq.s32.totalorder %s27, 0
      %p126 = por %p124, %p125
      %p127 = scmp.ne.s32.totalorder %s113, %s114
      %p128 = scmp.eq.s32.totalorder %s28, 2
      %p129 = por %p127, %p128
      %p131 = scmp.ne.s32.totalorder %s114, %s130
      %p132 = scmp.eq.s32.totalorder %s28, 0
      %p133 = por %p131, %p132
      %s135 = sadd.s32 %s134, 1
      %p138 = scmp.eq.s32.totalorder %s22, 2
      %p139 = scmp.ne.s32.totalorder %s134, %s136
      %p140 = scmp.eq.s32.totalorder %s22, 0
      %p141 = por %p139, %p140
      %p142 = scmp.ne.s32.totalorder %s134, %s136
      %p143 = scmp.eq.s32.totalorder %s27, 2
      %p144 = por %p142, %p143
      %p145 = scmp.ne.s32.totalorder %s136, %s137
      %p146 = scmp.eq.s32.totalorder %s27, 0
      %p147 = por %p145, %p146
      %p148 = scmp.ne.s32.totalorder %s136, %s137
      %p149 = scmp.eq.s32.totalorder %s28, 2
      %p150 = por %p148, %p149
      %p152 = scmp.ne.s32.totalorder %s137, %s151
      %p153 = scmp.eq.s32.totalorder %s28, 0
      %p154 = por %p152, %p153
      %s156 = sadd.s32 %s155, 1
      %p159 = scmp.eq.s32.totalorder %s22, 2
      %p160 = scmp.ne.s32.totalorder %s155, %s157
      %p161 = scmp.eq.s32.totalorder %s22, 0
      %p162 = por %p160, %p161
      %p163 = scmp.ne.s32.totalorder %s155, %s157
      %p164 = scmp.eq.s32.totalorder %s27, 2
      %p165 = por %p163, %p164
      %p166 = scmp.ne.s32.totalorder %s157, %s158
      %p167 = scmp.eq.s32.totalorder %s27, 0
      %p168 = por %p166, %p167
      %p169 = scmp.ne.s32.totalorder %s157, %s158
      %p170 = scmp.eq.s32.totalorder %s28, 2
      %p171 = por %p169, %p170
      %p173 = scmp.ne.s32.totalorder %s158, %s172
      %p174 = scmp.eq.s32.totalorder %s28, 0
      %p175 = por %p173, %p174
      %s177 = sadd.s32 %s176, 1
      %p180 = scmp.eq.s32.totalorder %s22, 2
      %p181 = scmp.ne.s32.totalorder %s176, %s178
      %p182 = scmp.eq.s32.totalorder %s22, 0
      %p183 = por %p181, %p182
      %p184 = scmp.ne.s32.totalorder %s176, %s178
      %p185 = scmp.eq.s32.totalorder %s27, 2
      %p186 = por %p184, %p185
      %p187 = scmp.ne.s32.totalorder %s178, %s179
      %p188 = scmp.eq.s32.totalorder %s27, 0
      %p189 = por %p187, %p188
      %p190 = scmp.ne.s32.totalorder %s178, %s179
      %p191 = scmp.eq.s32.totalorder %s28, 2
      %p192 = por %p190, %p191
      %p194 = scmp.ne.s32.totalorder %s179, %s193
      %p195 = scmp.eq.s32.totalorder %s28, 0
      %p196 = por %p194, %p195
      %s198 = sadd.s32 %s197, 1
      %p201 = scmp.eq.s32.totalorder %s22, 2
      %p202 = scmp.ne.s32.totalorder %s197, %s199
      %p203 = scmp.eq.s32.totalorder %s22, 0
      %p204 = por %p202, %p203
      %p205 = scmp.ne.s32.totalorder %s197, %s199
      %p206 = scmp.eq.s32.totalorder %s27, 2
      %p207 = por %p205, %p206
      %p208 = scmp.ne.s32.totalorder %s199, %s200
      %p209 = scmp.eq.s32.totalorder %s27, 0
      %p210 = por %p208, %p209
      %p211 = scmp.ne.s32.totalorder %s199, %s200
      %p212 = scmp.eq.s32.totalorder %s28, 2
      %p213 = por %p211, %p212
      %p215 = scmp.ne.s32.totalorder %s200, %s214
      %p216 = scmp.eq.s32.totalorder %s28, 0
      %p217 = por %p215, %p216
      %s219 = sadd.s32 %s218, 1
      %p222 = scmp.eq.s32.totalorder %s22, 2
      %p223 = scmp.ne.s32.totalorder %s218, %s220
      %p224 = scmp.eq.s32.totalorder %s22, 0
      %p225 = por %p223, %p224
      %p226 = scmp.ne.s32.totalorder %s218, %s220
      %p227 = scmp.eq.s32.totalorder %s27, 2
      %p228 = por %p226, %p227
      %p229 = scmp.ne.s32.totalorder %s220, %s221
      %p230 = scmp.eq.s32.totalorder %s27, 0
      %p231 = por %p229, %p230
      %p232 = scmp.ne.s32.totalorder %s220, %s221
      %p233 = scmp.eq.s32.totalorder %s28, 2
      %p234 = por %p232, %p233
      %p236 = scmp.ne.s32.totalorder %s221, %s235
      %p237 = scmp.eq.s32.totalorder %s28, 0
      %p238 = por %p236, %p237
      %s240 = sadd.s32 %s239, 1
      %p243 = scmp.eq.s32.totalorder %s22, 2
      %p244 = scmp.ne.s32.totalorder %s239, %s241
      %p245 = scmp.eq.s32.totalorder %s22, 0
      %p246 = por %p244, %p245
      %p247 = scmp.ne.s32.totalorder %s239, %s241
      %p248 = scmp.eq.s32.totalorder %s27, 2
      %p249 = por %p247, %p248
      %p250 = scmp.ne.s32.totalorder %s241, %s242
      %p251 = scmp.eq.s32.totalorder %s27, 0
      %p252 = por %p250, %p251
      %p253 = scmp.ne.s32.totalorder %s241, %s242
      %p254 = scmp.eq.s32.totalorder %s28, 2
      %p255 = por %p253, %p254
      %p257 = scmp.ne.s32.totalorder %s242, %s256
      %p258 = scmp.eq.s32.totalorder %s28, 0
      %p259 = por %p257, %p258
      %s261 = sadd.s32 %s260, 1
      %p264 = scmp.eq.s32.totalorder %s22, 2
      %p265 = scmp.ne.s32.totalorder %s260, %s262
      %p266 = scmp.eq.s32.totalorder %s22, 0
      %p267 = por %p265, %p266
      %p268 = scmp.ne.s32.totalorder %s260, %s262
      %p269 = scmp.eq.s32.totalorder %s27, 2
      %p270 = por %p268, %p269
      %p271 = scmp.ne.s32.totalorder %s262, %s263
      %p272 = scmp.eq.s32.totalorder %s27, 0
      %p273 = por %p271, %p272
      %p274 = scmp.ne.s32.totalorder %s262, %s263
      %p275 = scmp.eq.s32.totalorder %s28, 2
      %p276 = por %p274, %p275
      %p278 = scmp.ne.s32.totalorder %s263, %s277
      %p279 = scmp.eq.s32.totalorder %s28, 0
      %p280 = por %p278, %p279
      %s282 = sadd.s32 %s281, 1
      %p285 = scmp.eq.s32.totalorder %s22, 2
      %p286 = scmp.ne.s32.totalorder %s281, %s283
      %p287 = scmp.eq.s32.totalorder %s22, 0
      %p288 = por %p286, %p287
      %p289 = scmp.ne.s32.totalorder %s281, %s283
      %p290 = scmp.eq.s32.totalorder %s27, 2
      %p291 = por %p289, %p290
      %p292 = scmp.ne.s32.totalorder %s283, %s284
      %p293 = scmp.eq.s32.totalorder %s27, 0
      %p294 = por %p292, %p293
      %p295 = scmp.ne.s32.totalorder %s283, %s284
      %p296 = scmp.eq.s32.totalorder %s28, 2
      %p297 = por %p295, %p296
      %p299 = scmp.ne.s32.totalorder %s284, %s298
      %p300 = scmp.eq.s32.totalorder %s28, 0
      %p301 = por %p299, %p300
      %s303 = sadd.s32 %s302, 1
      %p306 = scmp.eq.s32.totalorder %s22, 2
      %p307 = scmp.ne.s32.totalorder %s302, %s304
      %p308 = scmp.eq.s32.totalorder %s22, 0
      %p309 = por %p307, %p308
      %p310 = scmp.ne.s32.totalorder %s302, %s304
      %p311 = scmp.eq.s32.totalorder %s27, 2
      %p312 = por %p310, %p311
      %p313 = scmp.ne.s32.totalorder %s304, %s305
      %p314 = scmp.eq.s32.totalorder %s27, 0
      %p315 = por %p313, %p314
      %p316 = scmp.ne.s32.totalorder %s304, %s305
      %p317 = scmp.eq.s32.totalorder %s28, 2
      %p318 = por %p316, %p317
      %p320 = scmp.ne.s32.totalorder %s305, %s319
      %p321 = scmp.eq.s32.totalorder %s28, 0
      %p322 = por %p320, %p321
      %s323 = ssub.s32 %s22, %s29
      %p324 = scmp.eq.s32.totalorder %s323, 0
      %s326 = sadd.s32 %s325, 1
      %s327 = scalar_select %p324, %s325, %s326
      %p330 = pneg %p324
      %p331 = scmp.eq.s32.totalorder %s22, 2
      %p332 = por %p330, %p331
      %p333 = scmp.ne.s32.totalorder %s325, %s328
      %p334 = scmp.eq.s32.totalorder %s22, 0
      %p335 = por %p333, %p334
      %p336 = scmp.ne.s32.totalorder %s325, %s328
      %p337 = scmp.eq.s32.totalorder %s27, 2
      %p338 = por %p336, %p337
      %p339 = scmp.ne.s32.totalorder %s328, %s329
      %p340 = scmp.eq.s32.totalorder %s27, 0
      %p341 = por %p339, %p340
      %p342 = scmp.ne.s32.totalorder %s328, %s329
      %p343 = scmp.eq.s32.totalorder %s28, 2
      %p344 = por %p342, %p343
      %p346 = scmp.ne.s32.totalorder %s329, %s345
      %p347 = scmp.eq.s32.totalorder %s28, 0
      %p348 = por %p346, %p347
      %p349 = scmp.le.s32.totalorder 1, %s22
      %p350 = scmp.lt.s32.totalorder %s22, 4
      %p351 = pnand %p349, %p350
      %p352 = pneg %p351
      // Predicated region
      $region9: #{tpu_custom_call.1} parent=5 // pred_check
        _
      $region10: #{tpu_custom_call.1} parent=5 // pred_check_branch
        %354 = sbr.rel (%p351) target = $region12
      $region11: #{tpu_custom_call.1} parent=5 // pred_region
        %s355 = ssub.s32 %s22, 1
        // Predicated region
        $region13: #{tpu_custom_call.1} parent=11 // pred_check
          %p356 = pneg %p147
        $region14: #{tpu_custom_call.1} parent=11 // pred_check_branch
          %358 = sbr.rel (%p356) target = $region16
        $region15: #{tpu_custom_call.1} parent=11 // pred_region
          _
        $region16: #{tpu_custom_call.1} parent=11 // pred_fallthru
          _
        // Predicated region
        $region17: #{tpu_custom_call.1} parent=11 // pred_check
          %p359 = pneg %p168
        $region18: #{tpu_custom_call.1} parent=11 // pred_check_branch
          %361 = sbr.rel (%p359) target = $region20
        $region19: #{tpu_custom_call.1} parent=11 // pred_region
          _
        $region20: #{tpu_custom_call.1} parent=11 // pred_fallthru
          _
        // Predicated region
        $region21: #{tpu_custom_call.1} parent=11 // pred_check
          %p362 = pneg %p189
        $region22: #{tpu_custom_call.1} parent=11 // pred_check_branch
          %364 = sbr.rel (%p362) target = $region24
        $region23: #{tpu_custom_call.1} parent=11 // pred_region
          _
        $region24: #{tpu_custom_call.1} parent=11 // pred_fallthru
          _
        // Predicated region
        $region25: #{tpu_custom_call.1} parent=11 // pred_check
          %p365 = pneg %p210
        $region26: #{tpu_custom_call.1} parent=11 // pred_check_branch
          %367 = sbr.rel (%p365) target = $region28
        $region27: #{tpu_custom_call.1} parent=11 // pred_region
          _
        $region28: #{tpu_custom_call.1} parent=11 // pred_fallthru
          _
        // Predicated region
        $region29: #{tpu_custom_call.1} parent=11 // pred_check
          %p368 = pneg %p231
        $region30: #{tpu_custom_call.1} parent=11 // pred_check_branch
          %370 = sbr.rel (%p368) target = $region32
        $region31: #{tpu_custom_call.1} parent=11 // pred_region
          _
        $region32: #{tpu_custom_call.1} parent=11 // pred_fallthru
          _
        // Predicated region
        $region33: #{tpu_custom_call.1} parent=11 // pred_check
          %p371 = pneg %p252
        $region34: #{tpu_custom_call.1} parent=11 // pred_check_branch
          %373 = sbr.rel (%p371) target = $region36
        $region35: #{tpu_custom_call.1} parent=11 // pred_region
          _
        $region36: #{tpu_custom_call.1} parent=11 // pred_fallthru
          _
        // Predicated region
        $region37: #{tpu_custom_call.1} parent=11 // pred_check
          %p374 = pneg %p273
        $region38: #{tpu_custom_call.1} parent=11 // pred_check_branch
          %376 = sbr.rel (%p374) target = $region40
        $region39: #{tpu_custom_call.1} parent=11 // pred_region
          _
        $region40: #{tpu_custom_call.1} parent=11 // pred_fallthru
          _
        // Predicated region
        $region41: #{tpu_custom_call.1} parent=11 // pred_check
          %p377 = pneg %p294
        $region42: #{tpu_custom_call.1} parent=11 // pred_check_branch
          %379 = sbr.rel (%p377) target = $region44
        $region43: #{tpu_custom_call.1} parent=11 // pred_region
          _
        $region44: #{tpu_custom_call.1} parent=11 // pred_fallthru
          _
        // Predicated region
        $region45: #{tpu_custom_call.1} parent=11 // pred_check
          %p380 = pneg %p315
        $region46: #{tpu_custom_call.1} parent=11 // pred_check_branch
          %382 = sbr.rel (%p380) target = $region48
        $region47: #{tpu_custom_call.1} parent=11 // pred_region
          _
        $region48: #{tpu_custom_call.1} parent=11 // pred_fallthru
          _
      $region12: #{tpu_custom_call.1} parent=5 // pred_fallthru
        _
      %p383 = scmp.lt.s32.totalorder %s22, 3
      // Predicated region
      $region49: #{tpu_custom_call.1} parent=5 // pred_check
        %p384 = pneg %p383
      $region50: #{tpu_custom_call.1} parent=5 // pred_check_branch
        %386 = sbr.rel (%p384) target = $region52
      $region51: #{tpu_custom_call.1} parent=5 // pred_region
        // Predicated region
        $region53: #{tpu_custom_call.1} parent=51 // pred_check
          %p387 = pneg %p42
        $region54: #{tpu_custom_call.1} parent=51 // pred_check_branch
          %389 = sbr.rel (%p387) target = $region56
        $region55: #{tpu_custom_call.1} parent=51 // pred_region
          %s390 = smul.u32 32, %s22
          %p391 = scmp.lt.s32.totalorder %s390, 95
          %s392 = scalar_select %p391, %s390, 95
          %s393 = smul.addr %s392, 2
          %s394 = smul.addr %s393, 8
          %s395 = scalar_lea.vmem %s0, %s394
          %s396 = smul.u32 32, %s22
        $region56: #{tpu_custom_call.1} parent=51 // pred_fallthru
          _
        // Predicated region
        $region57: #{tpu_custom_call.1} parent=51 // pred_check
          %p397 = pneg %p68
        $region58: #{tpu_custom_call.1} parent=51 // pred_check_branch
          %399 = sbr.rel (%p397) target = $region60
        $region59: #{tpu_custom_call.1} parent=51 // pred_region
          %s400 = smul.u32 4, %s22
          %p401 = scmp.lt.s32.totalorder %s400, 11
          %s402 = scalar_select %p401, %s400, 11
          %s403 = smul.addr %s402, 8
          %s404 = scalar_lea.vmem %s1, %s403
          %s405 = smul.u32 4, %s22
        $region60: #{tpu_custom_call.1} parent=51 // pred_fallthru
          _
        // Predicated region
        $region61: #{tpu_custom_call.1} parent=51 // pred_check
          %p406 = pneg %p94
        $region62: #{tpu_custom_call.1} parent=51 // pred_check_branch
          %408 = sbr.rel (%p406) target = $region64
        $region63: #{tpu_custom_call.1} parent=51 // pred_region
          %s409 = smul.u32 4, %s22
          %p410 = scmp.lt.s32.totalorder %s409, 11
          %s411 = scalar_select %p410, %s409, 11
          %s412 = smul.addr %s411, 8
          %s413 = scalar_lea.vmem %s2, %s412
          %s414 = smul.u32 4, %s22
        $region64: #{tpu_custom_call.1} parent=51 // pred_fallthru
          _
        // Predicated region
        $region65: #{tpu_custom_call.1} parent=51 // pred_check
          %p415 = pneg %p120
        $region66: #{tpu_custom_call.1} parent=51 // pred_check_branch
          %417 = sbr.rel (%p415) target = $region68
        $region67: #{tpu_custom_call.1} parent=51 // pred_region
          %s418 = smul.u32 4, %s22
          %p419 = scmp.lt.s32.totalorder %s418, 11
          %s420 = scalar_select %p419, %s418, 11
          %s421 = smul.addr %s420, 8
          %s422 = scalar_lea.vmem %s3, %s421
          %s423 = smul.u32 4, %s22
        $region68: #{tpu_custom_call.1} parent=51 // pred_fallthru
          _
      $region52: #{tpu_custom_call.1} parent=5 // pred_fallthru
        _
      %p424 = scmp.le.s32.totalorder 1, %s22
      %p425 = scmp.lt.s32.totalorder %s22, 4
      %p426 = pnand %p424, %p425
      %p427 = pneg %p426
      // Predicated region
      $region69: #{tpu_custom_call.1} parent=5 // pred_check
        _
      $region70: #{tpu_custom_call.1} parent=5 // pred_check_branch
        %429 = sbr.rel (%p426) target = $region72
      $region71: #{tpu_custom_call.1} parent=5 // pred_region
        %s430 = ssub.s32 %s22, 1
        %s431 = smul.u32 32, %s27
        %p432 = scmp.lt.s32.totalorder %s431, 95
        %s433 = scalar_select %p432, %s431, 95
        %s434 = smul.addr %s433, 2
        %s435 = smul.addr %s434, 8
        %s436 = scalar_lea.vmem %s0, %s435
        %p437 = pneg %p48
        %p438 = pneg %p45
        %s439 = smul.u32 4, %s27
        %p440 = scmp.lt.s32.totalorder %s439, 11
        %s441 = scalar_select %p440, %s439, 11
        %s442 = smul.addr %s441, 8
        %s443 = scalar_lea.vmem %s1, %s442
        %p444 = pneg %p74
        %p445 = pneg %p71
        %s446 = smul.u32 4, %s27
        %p447 = scmp.lt.s32.totalorder %s446, 11
        %s448 = scalar_select %p447, %s446, 11
        %s449 = smul.addr %s448, 8
        %s450 = scalar_lea.vmem %s2, %s449
        %p451 = pneg %p100
        %p452 = pneg %p97
        %s453 = smul.u32 4, %s27
        %p454 = scmp.lt.s32.totalorder %s453, 11
        %s455 = scalar_select %p454, %s453, 11
        %s456 = smul.addr %s455, 8
        %s457 = scalar_lea.vmem %s3, %s456
        %p458 = pneg %p126
        %p459 = pneg %p123
        %p460 = pneg %p147
        %p461 = pneg %p144
        %p462 = pneg %p168
        %p463 = pneg %p165
        %p464 = pneg %p189
        %p465 = pneg %p186
        %p466 = pneg %p210
        %p467 = pneg %p207
        %p468 = pneg %p231
        %p469 = pneg %p228
        %p470 = pneg %p252
        %p471 = pneg %p249
        %p472 = pneg %p273
        %p473 = pneg %p270
        %p474 = pneg %p294
        %p475 = pneg %p291
        %p476 = pneg %p315
        %p477 = pneg %p312
        %p478 = pneg %p341
        %p479 = pneg %p338
        %s480 = sand.u32 %s328, 1
        %s481 = scalar_lea.sflag [#allocation3], %s480
        %s482 = sand.u32 %s328, 1
        %s483 = smul.addr %s482, 32
        %s484 = scalar_lea.vmem [#allocation2], %s483
        %s485 = smul.u32 32, %s27
        %p486 = scmp.lt.s32.totalorder %s485, 95
        %s487 = scalar_select %p486, %s485, 95
        %s488 = smul.addr %s487, 2
        %s489 = smul.addr %s488, 8
        %s490 = scalar_lea.vmem %s0, %s489
        %s491 = smul.u32 32, %s27
        %s492 = smul.u32 4, %s27
        %p493 = scmp.lt.s32.totalorder %s492, 11
        %s494 = scalar_select %p493, %s492, 11
        %s495 = smul.addr %s494, 8
        %s496 = scalar_lea.vmem %s1, %s495
        %s497 = smul.u32 4, %s27
        %s498 = smul.u32 4, %s27
        %p499 = scmp.lt.s32.totalorder %s498, 11
        %s500 = scalar_select %p499, %s498, 11
        %s501 = smul.addr %s500, 8
        %s502 = scalar_lea.vmem %s2, %s501
        %s503 = smul.u32 4, %s27
        %s504 = smul.u32 4, %s27
        %p505 = scmp.lt.s32.totalorder %s504, 11
        %s506 = scalar_select %p505, %s504, 11
        %s507 = smul.addr %s506, 8
        %s508 = scalar_lea.vmem %s3, %s507
        %s509 = smul.u32 4, %s27
        %s510 = smul.u32 4, %s27
        %v511 = vld [vmem:[%s490] sm:$0xff]
        %v512 = vld [vmem:[%s490 + $0x8] sm:$0x3]
        %v513 = vld [vmem:[%s490 + $0x10] sm:$0xff]
        %v514 = vld [vmem:[%s490 + $0x18] sm:$0x3]
        %v515 = vld [vmem:[%s490 + $0x20] sm:$0xff]
        %v516 = vld [vmem:[%s490 + $0x28] sm:$0x3]
        %v517 = vld [vmem:[%s490 + $0x30] sm:$0xff]
        %v518 = vld [vmem:[%s490 + $0x38] sm:$0x3]
        %v519 = vld [vmem:[%s490 + $0x40] sm:$0xff]
        %v520 = vld [vmem:[%s490 + $0x48] sm:$0x3]
        %v521 = vld [vmem:[%s490 + $0x50] sm:$0xff]
        %v522 = vld [vmem:[%s490 + $0x58] sm:$0x3]
        %v523 = vld [vmem:[%s490 + $0x60] sm:$0xff]
        %v524 = vld [vmem:[%s490 + $0x68] sm:$0x3]
        %v525 = vld [vmem:[%s490 + $0x70] sm:$0xff]
        %v526 = vld [vmem:[%s490 + $0x78] sm:$0x3]
        %v527 = vld [vmem:[%s490 + $0x80] sm:$0xff]
        %v528 = vld [vmem:[%s490 + $0x88] sm:$0x3]
        %v529 = vld [vmem:[%s490 + $0x90] sm:$0xff]
        %v530 = vld [vmem:[%s490 + $0x98] sm:$0x3]
        %v531 = vld [vmem:[%s490 + $0xa0] sm:$0xff]
        %v532 = vld [vmem:[%s490 + $0xa8] sm:$0x3]
        %v533 = vld [vmem:[%s490 + $0xb0] sm:$0xff]
        %v534 = vld [vmem:[%s490 + $0xb8] sm:$0x3]
        %v535 = vld [vmem:[%s490 + $0xc0] sm:$0xff]
        %v536 = vld [vmem:[%s490 + $0xc8] sm:$0x3]
        %v537 = vld [vmem:[%s490 + $0xd0] sm:$0xff]
        %v538 = vld [vmem:[%s490 + $0xd8] sm:$0x3]
        %v539 = vld [vmem:[%s490 + $0xe0] sm:$0xff]
        %v540 = vld [vmem:[%s490 + $0xe8] sm:$0x3]
        %v541 = vld [vmem:[%s490 + $0xf0] sm:$0xff]
        %v542 = vld [vmem:[%s490 + $0xf8] sm:$0x3]
        %v543 = vld [vmem:[%s490 + $0x100] sm:$0xff]
        %v544 = vld [vmem:[%s490 + $0x108] sm:$0x3]
        %v545 = vld [vmem:[%s490 + $0x110] sm:$0xff]
        %v546 = vld [vmem:[%s490 + $0x118] sm:$0x3]
        %v547 = vld [vmem:[%s490 + $0x120] sm:$0xff]
        %v548 = vld [vmem:[%s490 + $0x128] sm:$0x3]
        %v549 = vld [vmem:[%s490 + $0x130] sm:$0xff]
        %v550 = vld [vmem:[%s490 + $0x138] sm:$0x3]
        %v551 = vld [vmem:[%s490 + $0x140] sm:$0xff]
        %v552 = vld [vmem:[%s490 + $0x148] sm:$0x3]
        %v553 = vld [vmem:[%s490 + $0x150] sm:$0xff]
        %v554 = vld [vmem:[%s490 + $0x158] sm:$0x3]
        %v555 = vld [vmem:[%s490 + $0x160] sm:$0xff]
        %v556 = vld [vmem:[%s490 + $0x168] sm:$0x3]
        %v557 = vld [vmem:[%s490 + $0x170] sm:$0xff]
        %v558 = vld [vmem:[%s490 + $0x178] sm:$0x3]
        %v559 = vld [vmem:[%s490 + $0x180] sm:$0xff]
        %v560 = vld [vmem:[%s490 + $0x188] sm:$0x3]
        %v561 = vld [vmem:[%s490 + $0x190] sm:$0xff]
        %v562 = vld [vmem:[%s490 + $0x198] sm:$0x3]
        %v563 = vld [vmem:[%s490 + $0x1a0] sm:$0xff]
        %v564 = vld [vmem:[%s490 + $0x1a8] sm:$0x3]
        %v565 = vld [vmem:[%s490 + $0x1b0] sm:$0xff]
        %v566 = vld [vmem:[%s490 + $0x1b8] sm:$0x3]
        %v567 = vld [vmem:[%s490 + $0x1c0] sm:$0xff]
        %v568 = vld [vmem:[%s490 + $0x1c8] sm:$0x3]
        %v569 = vld [vmem:[%s490 + $0x1d0] sm:$0xff]
        %v570 = vld [vmem:[%s490 + $0x1d8] sm:$0x3]
        %v571 = vld [vmem:[%s490 + $0x1e0] sm:$0xff]
        %v572 = vld [vmem:[%s490 + $0x1e8] sm:$0x3]
        %v573 = vld [vmem:[%s490 + $0x1f0] sm:$0xff]
        %v574 = vld [vmem:[%s490 + $0x1f8] sm:$0x3]
        %v575 = vld [vmem:[%s496] sm:$0xff]
        %v576 = vld [vmem:[%s496 + $0x8] sm:$0xff]
        %v577 = vld [vmem:[%s496 + $0x10] sm:$0xff]
        %v578 = vld [vmem:[%s496 + $0x18] sm:$0xff]
        %v579 = vld [vmem:[%s502] sm:$0xff]
        %v580 = vld [vmem:[%s502 + $0x8] sm:$0xff]
        %v581 = vld [vmem:[%s502 + $0x10] sm:$0xff]
        %v582 = vld [vmem:[%s502 + $0x18] sm:$0xff]
        %v583 = vld [vmem:[%s508] sm:$0xff]
        %v584 = vld [vmem:[%s508 + $0x8] sm:$0xff]
        %v585 = vld [vmem:[%s508 + $0x10] sm:$0xff]
        %v586 = vld [vmem:[%s508 + $0x18] sm:$0xff]
        %v587 = vld [vmem:[%s4] sm:$0xff]
        %v588 = vld [vmem:[%s4 + $0x8] sm:$0xff]
        %v589 = vld [vmem:[%s4 + $0x10] sm:$0xff]
        %v590 = vld [vmem:[%s4 + $0x18] sm:$0xff]
        %v591 = vld [vmem:[%s4 + $0x20] sm:$0xff]
        %v592 = vld [vmem:[%s4 + $0x28] sm:$0xff]
        %v593 = vld [vmem:[%s4 + $0x30] sm:$0xff]
        %v594 = vld [vmem:[%s4 + $0x38] sm:$0xff]
        %v595 = vld [vmem:[%s4 + $0x40] sm:$0xff]
        %v596 = vld [vmem:[%s4 + $0x48] sm:$0xff]
        %v597 = vld [vmem:[%s4 + $0x50] sm:$0xff]
        %v598 = vld [vmem:[%s4 + $0x58] sm:$0xff]
        %v599 = vld [vmem:[%s4 + $0x60] sm:$0xff]
        %v600 = vld [vmem:[%s4 + $0x68] sm:$0xff]
        %v601 = vld [vmem:[%s4 + $0x70] sm:$0xff]
        %v602 = vld [vmem:[%s4 + $0x78] sm:$0xff]
        %603 = vmatprep.subr.mxu0 0.0
        %604 = vmatpush1.msra.mxu0 %v587
        %605 = vmatprep.subr.mxu0 0.0
        %606 = vmatpush1.msra.mxu0 %v588
        %607 = vmatprep.subr.mxu0 0.0
        %608 = vmatpush1.msra.mxu0 %v589
        %609 = vmatprep.subr.mxu0 0.0
        %610 = vmatpush1.msra.mxu0 %v590
        %611 = vmatprep.subr.mxu0 0.0
        %612 = vmatpush1.msra.mxu0 %v591
        %613 = vmatprep.subr.mxu0 0.0
        %614 = vmatpush1.msra.mxu0 %v592
        %615 = vmatprep.subr.mxu0 0.0
        %616 = vmatpush1.msra.mxu0 %v593
        %617 = vmatprep.subr.mxu0 0.0
        %618 = vmatpush1.msra.mxu0 %v594
        %619 = vmatprep.subr.mxu0 0.0
        %620 = vmatpush1.msra.mxu0 %v595
        %621 = vmatprep.subr.mxu0 0.0
        %622 = vmatpush1.msra.mxu0 %v596
        %623 = vmatprep.subr.mxu0 0.0
        %624 = vmatpush1.msra.mxu0 %v597
        %625 = vmatprep.subr.mxu0 0.0
        %626 = vmatpush1.msra.mxu0 %v598
        %627 = vmatprep.subr.mxu0 0.0
        %628 = vmatpush1.msra.mxu0 %v599
        %629 = vmatprep.subr.mxu0 0.0
        %630 = vmatpush1.msra.mxu0 %v600
        %631 = vmatprep.subr.mxu0 0.0
        %632 = vmatpush1.msra.mxu0 %v601
        %633 = vmatprep.subr.mxu0 0.0
        %634 = vmatpush1.msra.mxu0 %v602
        %635 = vmatprep.subr.mxu0 0.0
        %636 = vmatpush1.msra.mxu0 0.0
        %637 = vmatprep.subr.mxu0 0.0
        %638 = vmatpush1.msra.mxu0 0.0
        %639 = vmatprep.subr.mxu0 0.0
        %640 = vmatpush1.msra.mxu0 0.0
        %641 = vmatprep.subr.mxu0 0.0
        %642 = vmatpush1.msra.mxu0 0.0
        %643 = vmatprep.subr.mxu0 0.0
        %644 = vmatpush1.msra.mxu0 0.0
        %645 = vmatprep.subr.mxu0 0.0
        %646 = vmatpush1.msra.mxu0 0.0
        %647 = vmatprep.subr.mxu0 0.0
        %648 = vmatpush1.msra.mxu0 0.0
        %649 = vmatprep.subr.mxu0 0.0
        %650 = vmatpush1.msra.mxu0 0.0
        %651 = vmatprep.subr.mxu0 0.0
        %652 = vmatpush1.msra.mxu0 0.0
        %653 = vmatprep.subr.mxu0 0.0
        %654 = vmatpush1.msra.mxu0 0.0
        %655 = vmatprep.subr.mxu0 0.0
        %656 = vmatpush1.msra.mxu0 0.0
        %657 = vmatprep.subr.mxu0 0.0
        %658 = vmatpush1.msra.mxu0 0.0
        %659 = vmatprep.subr.mxu0 0.0
        %660 = vmatpush1.msra.mxu0 0.0
        %661 = vmatprep.subr.mxu0 0.0
        %662 = vmatpush1.msra.mxu0 0.0
        %663 = vmatprep.subr.mxu0 0.0
        %664 = vmatpush1.msra.mxu0 0.0
        %665 = vmatprep.subr.mxu0 0.0
        %666 = vmatpush1.msra.mxu0 0.0
        %667 = vmatprep.mubr.f32.mxu0 0.0
        %668 = vmatmul.mubr.f32.gmra.mrb[0].mxu0 %v575
        %v669 = vpop.f32.mrb[0].mxu0
        %v670 = vadd.f32 0.0, %v669
        %v671 = vpop.f32.mrb[0].mxu0
        %672 = vmatprep.mubr.f32.mxu0 0.0
        %673 = vmatmul.mubr.f32.gmra.mrb[0].mxu0 %v576
        %v674 = vpop.f32.mrb[0].mxu0
        %v675 = vadd.f32 0.0, %v674
        %v676 = vpop.f32.mrb[0].mxu0
        %677 = vmatprep.mubr.f32.mxu0 0.0
        %678 = vmatmul.mubr.f32.gmra.mrb[0].mxu0 %v577
        %v679 = vpop.f32.mrb[0].mxu0
        %v680 = vadd.f32 0.0, %v679
        %v681 = vpop.f32.mrb[0].mxu0
        %682 = vmatprep.mubr.f32.mxu0 0.0
        %683 = vmatmul.mubr.f32.gmra.mrb[0].mxu0 %v578
        %v684 = vpop.f32.mrb[0].mxu0
        %v685 = vadd.f32 0.0, %v684
        %v686 = vpop.f32.mrb[0].mxu0
        %687 = vdwg.mxu0
        %v688 = vld [vmem:[%s6] sm:$0xff]
        %v689 = vld [vmem:[%s6 + $0x8] sm:$0xff]
        %v690 = vld [vmem:[%s6 + $0x10] sm:$0xff]
        %v691 = vld [vmem:[%s6 + $0x18] sm:$0xff]
        %v692 = vld [vmem:[%s6 + $0x20] sm:$0xff]
        %v693 = vld [vmem:[%s6 + $0x28] sm:$0xff]
        %v694 = vld [vmem:[%s6 + $0x30] sm:$0xff]
        %v695 = vld [vmem:[%s6 + $0x38] sm:$0xff]
        %v696 = vld [vmem:[%s6 + $0x40] sm:$0xff]
        %v697 = vld [vmem:[%s6 + $0x48] sm:$0xff]
        %v698 = vld [vmem:[%s6 + $0x50] sm:$0xff]
        %v699 = vld [vmem:[%s6 + $0x58] sm:$0xff]
        %v700 = vld [vmem:[%s6 + $0x60] sm:$0xff]
        %v701 = vld [vmem:[%s6 + $0x68] sm:$0xff]
        %v702 = vld [vmem:[%s6 + $0x70] sm:$0xff]
        %v703 = vld [vmem:[%s6 + $0x78] sm:$0xff]
        %704 = vmatprep.subr.mxu0 0.0
        %705 = vmatpush1.msra.mxu0 %v688
        %706 = vmatprep.subr.mxu0 0.0
        %707 = vmatpush1.msra.mxu0 %v689
        %708 = vmatprep.subr.mxu0 0.0
        %709 = vmatpush1.msra.mxu0 %v690
        %710 = vmatprep.subr.mxu0 0.0
        %711 = vmatpush1.msra.mxu0 %v691
        %712 = vmatprep.subr.mxu0 0.0
        %713 = vmatpush1.msra.mxu0 %v692
        %714 = vmatprep.subr.mxu0 0.0
        %715 = vmatpush1.msra.mxu0 %v693
        %716 = vmatprep.subr.mxu0 0.0
        %717 = vmatpush1.msra.mxu0 %v694
        %718 = vmatprep.subr.mxu0 0.0
        %719 = vmatpush1.msra.mxu0 %v695
        %720 = vmatprep.subr.mxu0 0.0
        %721 = vmatpush1.msra.mxu0 %v696
        %722 = vmatprep.subr.mxu0 0.0
        %723 = vmatpush1.msra.mxu0 %v697
        %724 = vmatprep.subr.mxu0 0.0
        %725 = vmatpush1.msra.mxu0 %v698
        %726 = vmatprep.subr.mxu0 0.0
        %727 = vmatpush1.msra.mxu0 %v699
        %728 = vmatprep.subr.mxu0 0.0
        %729 = vmatpush1.msra.mxu0 %v700
        %730 = vmatprep.subr.mxu0 0.0
        %731 = vmatpush1.msra.mxu0 %v701
        %732 = vmatprep.subr.mxu0 0.0
        %733 = vmatpush1.msra.mxu0 %v702
        %734 = vmatprep.subr.mxu0 0.0
        %735 = vmatpush1.msra.mxu0 %v703
        %736 = vmatprep.subr.mxu0 0.0
        %737 = vmatpush1.msra.mxu0 0.0
        %738 = vmatprep.subr.mxu0 0.0
        %739 = vmatpush1.msra.mxu0 0.0
        %740 = vmatprep.subr.mxu0 0.0
        %741 = vmatpush1.msra.mxu0 0.0
        %742 = vmatprep.subr.mxu0 0.0
        %743 = vmatpush1.msra.mxu0 0.0
        %744 = vmatprep.subr.mxu0 0.0
        %745 = vmatpush1.msra.mxu0 0.0
        %746 = vmatprep.subr.mxu0 0.0
        %747 = vmatpush1.msra.mxu0 0.0
        %748 = vmatprep.subr.mxu0 0.0
        %749 = vmatpush1.msra.mxu0 0.0
        %750 = vmatprep.subr.mxu0 0.0
        %751 = vmatpush1.msra.mxu0 0.0
        %752 = vmatprep.subr.mxu0 0.0
        %753 = vmatpush1.msra.mxu0 0.0
        %754 = vmatprep.subr.mxu0 0.0
        %755 = vmatpush1.msra.mxu0 0.0
        %756 = vmatprep.subr.mxu0 0.0
        %757 = vmatpush1.msra.mxu0 0.0
        %758 = vmatprep.subr.mxu0 0.0
        %759 = vmatpush1.msra.mxu0 0.0
        %760 = vmatprep.subr.mxu0 0.0
        %761 = vmatpush1.msra.mxu0 0.0
        %762 = vmatprep.subr.mxu0 0.0
        %763 = vmatpush1.msra.mxu0 0.0
        %764 = vmatprep.subr.mxu0 0.0
        %765 = vmatpush1.msra.mxu0 0.0
        %766 = vmatprep.subr.mxu0 0.0
        %767 = vmatpush1.msra.mxu0 0.0
        %768 = vmatprep.mubr.f32.mxu0 0.0
        %769 = vmatmul.mubr.f32.gmra.mrb[0].mxu0 %v670
        %v770 = vpop.f32.mrb[0].mxu0
        %v771 = vadd.f32 0.0, %v770
        %v772 = vpop.f32.mrb[0].mxu0
        %773 = vmatprep.mubr.f32.mxu0 0.0
        %774 = vmatmul.mubr.f32.gmra.mrb[0].mxu0 %v675
        %v775 = vpop.f32.mrb[0].mxu0
        %v776 = vadd.f32 0.0, %v775
        %v777 = vpop.f32.mrb[0].mxu0
        %778 = vmatprep.mubr.f32.mxu0 0.0
        %779 = vmatmul.mubr.f32.gmra.mrb[0].mxu0 %v680
        %v780 = vpop.f32.mrb[0].mxu0
        %v781 = vadd.f32 0.0, %v780
        %v782 = vpop.f32.mrb[0].mxu0
        %783 = vmatprep.mubr.f32.mxu0 0.0
        %784 = vmatmul.mubr.f32.gmra.mrb[0].mxu0 %v685
        %v785 = vpop.f32.mrb[0].mxu0
        %v786 = vadd.f32 0.0, %v785
        %v787 = vpop.f32.mrb[0].mxu0
        %788 = vdwg.mxu0
        %v789 = vld [vmem:[%s7] sm:$0xff]
        %v790 = vld [vmem:[%s7 + $0x8] sm:$0xff]
        %v791 = vld [vmem:[%s7 + $0x10] sm:$0xff]
        %v792 = vld [vmem:[%s7 + $0x18] sm:$0xff]
        %v793 = vld [vmem:[%s7 + $0x20] sm:$0xff]
        %v794 = vld [vmem:[%s7 + $0x28] sm:$0xff]
        %v795 = vld [vmem:[%s7 + $0x30] sm:$0xff]
        %v796 = vld [vmem:[%s7 + $0x38] sm:$0xff]
        %v797 = vld [vmem:[%s7 + $0x40] sm:$0xff]
        %v798 = vld [vmem:[%s7 + $0x48] sm:$0xff]
        %v799 = vld [vmem:[%s7 + $0x50] sm:$0xff]
        %v800 = vld [vmem:[%s7 + $0x58] sm:$0xff]
        %v801 = vld [vmem:[%s7 + $0x60] sm:$0xff]
        %v802 = vld [vmem:[%s7 + $0x68] sm:$0xff]
        %v803 = vld [vmem:[%s7 + $0x70] sm:$0xff]
        %v804 = vld [vmem:[%s7 + $0x78] sm:$0xff]
        %805 = vmatprep.subr.mxu0 0.0
        %806 = vmatpush1.msra.mxu0 %v789
        %807 = vmatprep.subr.mxu0 0.0
        %808 = vmatpush1.msra.mxu0 %v790
        %809 = vmatprep.subr.mxu0 0.0
        %810 = vmatpush1.msra.mxu0 %v791
        %811 = vmatprep.subr.mxu0 0.0
        %812 = vmatpush1.msra.mxu0 %v792
        %813 = vmatprep.subr.mxu0 0.0
        %814 = vmatpush1.msra.mxu0 %v793
        %815 = vmatprep.subr.mxu0 0.0
        %816 = vmatpush1.msra.mxu0 %v794
        %817 = vmatprep.subr.mxu0 0.0
        %818 = vmatpush1.msra.mxu0 %v795
        %819 = vmatprep.subr.mxu0 0.0
        %820 = vmatpush1.msra.mxu0 %v796
        %821 = vmatprep.subr.mxu0 0.0
        %822 = vmatpush1.msra.mxu0 %v797
        %823 = vmatprep.subr.mxu0 0.0
        %824 = vmatpush1.msra.mxu0 %v798
        %825 = vmatprep.subr.mxu0 0.0
        %826 = vmatpush1.msra.mxu0 %v799
        %827 = vmatprep.subr.mxu0 0.0
        %828 = vmatpush1.msra.mxu0 %v800
        %829 = vmatprep.subr.mxu0 0.0
        %830 = vmatpush1.msra.mxu0 %v801
        %831 = vmatprep.subr.mxu0 0.0
        %832 = vmatpush1.msra.mxu0 %v802
        %833 = vmatprep.subr.mxu0 0.0
        %834 = vmatpush1.msra.mxu0 %v803
        %835 = vmatprep.subr.mxu0 0.0
        %836 = vmatpush1.msra.mxu0 %v804
        %837 = vmatprep.subr.mxu0 0.0
        %838 = vmatpush1.msra.mxu0 0.0
        %839 = vmatprep.subr.mxu0 0.0
        %840 = vmatpush1.msra.mxu0 0.0
        %841 = vmatprep.subr.mxu0 0.0
        %842 = vmatpush1.msra.mxu0 0.0
        %843 = vmatprep.subr.mxu0 0.0
        %844 = vmatpush1.msra.mxu0 0.0
        %845 = vmatprep.subr.mxu0 0.0
        %846 = vmatpush1.msra.mxu0 0.0
        %847 = vmatprep.subr.mxu0 0.0
        %848 = vmatpush1.msra.mxu0 0.0
        %849 = vmatprep.subr.mxu0 0.0
        %850 = vmatpush1.msra.mxu0 0.0
        %851 = vmatprep.subr.mxu0 0.0
        %852 = vmatpush1.msra.mxu0 0.0
        %853 = vmatprep.subr.mxu0 0.0
        %854 = vmatpush1.msra.mxu0 0.0
        %855 = vmatprep.subr.mxu0 0.0
        %856 = vmatpush1.msra.mxu0 0.0
        %857 = vmatprep.subr.mxu0 0.0
        %858 = vmatpush1.msra.mxu0 0.0
        %859 = vmatprep.subr.mxu0 0.0
        %860 = vmatpush1.msra.mxu0 0.0
        %861 = vmatprep.subr.mxu0 0.0
        %862 = vmatpush1.msra.mxu0 0.0
        %863 = vmatprep.subr.mxu0 0.0
        %864 = vmatpush1.msra.mxu0 0.0
        %865 = vmatprep.subr.mxu0 0.0
        %866 = vmatpush1.msra.mxu0 0.0
        %867 = vmatprep.subr.mxu0 0.0
        %868 = vmatpush1.msra.mxu0 0.0
        %869 = vmatprep.mubr.f32.mxu0 0.0
        %870 = vmatmul.mubr.f32.gmra.mrb[0].mxu0 %v670
        %v871 = vpop.f32.mrb[0].mxu0
        %v872 = vadd.f32 0.0, %v871
        %v873 = vpop.f32.mrb[0].mxu0
        %874 = vmatprep.mubr.f32.mxu0 0.0
        %875 = vmatmul.mubr.f32.gmra.mrb[0].mxu0 %v675
        %v876 = vpop.f32.mrb[0].mxu0
        %v877 = vadd.f32 0.0, %v876
        %v878 = vpop.f32.mrb[0].mxu0
        %879 = vmatprep.mubr.f32.mxu0 0.0
        %880 = vmatmul.mubr.f32.gmra.mrb[0].mxu0 %v680
        %v881 = vpop.f32.mrb[0].mxu0
        %v882 = vadd.f32 0.0, %v881
        %v883 = vpop.f32.mrb[0].mxu0
        %884 = vmatprep.mubr.f32.mxu0 0.0
        %885 = vmatmul.mubr.f32.gmra.mrb[0].mxu0 %v685
        %v886 = vpop.f32.mrb[0].mxu0
        %v887 = vadd.f32 0.0, %v886
        %v888 = vpop.f32.mrb[0].mxu0
        %889 = vdwg.mxu0
        %v890 = vlaneseq
        %v891 = vand.u32 %v890, 127
        %v892 = vlaneseq
        %v893 = vshrl.u32 %v892, 7
        %v894 = vsub.s32 0, %v893
        %v895 = vrot.slane %v579, %v894
        %897 = vbcast.lane.b32.xlu0 %v895, 256
        %v898 = vpop.permute.xlu0 %897
        %s900 = sor.u32 256, 8
        %901 = vbcast.lane.b32.xlu0 %v895, %s900
        %v902 = vpop.permute.xlu0 %901
        %v903 = vlaneseq
        %v904 = vshrl.u32 %v903, 7
        %v905 = vsub.s32 1, %v904
        %v906 = vrot.slane %v579, %v905
        %908 = vbcast.lane.b32.xlu0 %v906, 256
        %v909 = vpop.permute.xlu0 %908
        %s911 = sor.u32 256, 8
        %912 = vbcast.lane.b32.xlu0 %v906, %s911
        %v913 = vpop.permute.xlu0 %912
        %v914 = vlaneseq
        %v915 = vshrl.u32 %v914, 7
        %v916 = vsub.s32 2, %v915
        %v917 = vrot.slane %v579, %v916
        %919 = vbcast.lane.b32.xlu0 %v917, 256
        %v920 = vpop.permute.xlu0 %919
        %s922 = sor.u32 256, 8
        %923 = vbcast.lane.b32.xlu0 %v917, %s922
        %v924 = vpop.permute.xlu0 %923
        %v925 = vlaneseq
        %v926 = vshrl.u32 %v925, 7
        %v927 = vsub.s32 3, %v926
        %v928 = vrot.slane %v579, %v927
        %930 = vbcast.lane.b32.xlu0 %v928, 256
        %v931 = vpop.permute.xlu0 %930
        %s933 = sor.u32 256, 8
        %934 = vbcast.lane.b32.xlu0 %v928, %s933
        %v935 = vpop.permute.xlu0 %934
        %v936 = vlaneseq
        %v937 = vshrl.u32 %v936, 7
        %v938 = vsub.s32 4, %v937
        %v939 = vrot.slane %v579, %v938
        %941 = vbcast.lane.b32.xlu0 %v939, 256
        %v942 = vpop.permute.xlu0 %941
        %s944 = sor.u32 256, 8
        %945 = vbcast.lane.b32.xlu0 %v939, %s944
        %v946 = vpop.permute.xlu0 %945
        %v947 = vlaneseq
        %v948 = vshrl.u32 %v947, 7
        %v949 = vsub.s32 5, %v948
        %v950 = vrot.slane %v579, %v949
        %952 = vbcast.lane.b32.xlu0 %v950, 256
        %v953 = vpop.permute.xlu0 %952
        %s955 = sor.u32 256, 8
        %956 = vbcast.lane.b32.xlu0 %v950, %s955
        %v957 = vpop.permute.xlu0 %956
        %v958 = vlaneseq
        %v959 = vshrl.u32 %v958, 7
        %v960 = vsub.s32 6, %v959
        %v961 = vrot.slane %v579, %v960
        %963 = vbcast.lane.b32.xlu0 %v961, 256
        %v964 = vpop.permute.xlu0 %963
        %s966 = sor.u32 256, 8
        %967 = vbcast.lane.b32.xlu0 %v961, %s966
        %v968 = vpop.permute.xlu0 %967
        %v969 = vlaneseq
        %v970 = vshrl.u32 %v969, 7
        %v971 = vsub.s32 7, %v970
        %v972 = vrot.slane %v579, %v971
        %974 = vbcast.lane.b32.xlu0 %v972, 256
        %v975 = vpop.permute.xlu0 %974
        %s977 = sor.u32 256, 8
        %978 = vbcast.lane.b32.xlu0 %v972, %s977
        %v979 = vpop.permute.xlu0 %978
        %v980 = vlaneseq
        %v981 = vshrl.u32 %v980, 7
        %v982 = vsub.s32 0, %v981
        %v983 = vrot.slane %v580, %v982
        %985 = vbcast.lane.b32.xlu0 %v983, 256
        %v986 = vpop.permute.xlu0 %985
        %s988 = sor.u32 256, 8
        %989 = vbcast.lane.b32.xlu0 %v983, %s988
        %v990 = vpop.permute.xlu0 %989
        %v991 = vlaneseq
        %v992 = vshrl.u32 %v991, 7
        %v993 = vsub.s32 1, %v992
        %v994 = vrot.slane %v580, %v993
        %996 = vbcast.lane.b32.xlu0 %v994, 256
        %v997 = vpop.permute.xlu0 %996
        %s999 = sor.u32 256, 8
        %1000 = vbcast.lane.b32.xlu0 %v994, %s999
        %v1001 = vpop.permute.xlu0 %1000
        %v1002 = vlaneseq
        %v1003 = vshrl.u32 %v1002, 7
        %v1004 = vsub.s32 2, %v1003
        %v1005 = vrot.slane %v580, %v1004
        %1007 = vbcast.lane.b32.xlu0 %v1005, 256
        %v1008 = vpop.permute.xlu0 %1007
        %s1010 = sor.u32 256, 8
        %1011 = vbcast.lane.b32.xlu0 %v1005, %s1010
        %v1012 = vpop.permute.xlu0 %1011
        %v1013 = vlaneseq
        %v1014 = vshrl.u32 %v1013, 7
        %v1015 = vsub.s32 3, %v1014
        %v1016 = vrot.slane %v580, %v1015
        %1018 = vbcast.lane.b32.xlu0 %v1016, 256
        %v1019 = vpop.permute.xlu0 %1018
        %s1021 = sor.u32 256, 8
        %1022 = vbcast.lane.b32.xlu0 %v1016, %s1021
        %v1023 = vpop.permute.xlu0 %1022
        %v1024 = vlaneseq
        %v1025 = vshrl.u32 %v1024, 7
        %v1026 = vsub.s32 4, %v1025
        %v1027 = vrot.slane %v580, %v1026
        %1029 = vbcast.lane.b32.xlu0 %v1027, 256
        %v1030 = vpop.permute.xlu0 %1029
        %s1032 = sor.u32 256, 8
        %1033 = vbcast.lane.b32.xlu0 %v1027, %s1032
        %v1034 = vpop.permute.xlu0 %1033
        %v1035 = vlaneseq
        %v1036 = vshrl.u32 %v1035, 7
        %v1037 = vsub.s32 5, %v1036
        %v1038 = vrot.slane %v580, %v1037
        %1040 = vbcast.lane.b32.xlu0 %v1038, 256
        %v1041 = vpop.permute.xlu0 %1040
        %s1043 = sor.u32 256, 8
        %1044 = vbcast.lane.b32.xlu0 %v1038, %s1043
        %v1045 = vpop.permute.xlu0 %1044
        %v1046 = vlaneseq
        %v1047 = vshrl.u32 %v1046, 7
        %v1048 = vsub.s32 6, %v1047
        %v1049 = vrot.slane %v580, %v1048
        %1051 = vbcast.lane.b32.xlu0 %v1049, 256
        %v1052 = vpop.permute.xlu0 %1051
        %s1054 = sor.u32 256, 8
        %1055 = vbcast.lane.b32.xlu0 %v1049, %s1054
        %v1056 = vpop.permute.xlu0 %1055
        %v1057 = vlaneseq
        %v1058 = vshrl.u32 %v1057, 7
        %v1059 = vsub.s32 7, %v1058
        %v1060 = vrot.slane %v580, %v1059
        %1062 = vbcast.lane.b32.xlu0 %v1060, 256
        %v1063 = vpop.permute.xlu0 %1062
        %s1065 = sor.u32 256, 8
        %1066 = vbcast.lane.b32.xlu0 %v1060, %s1065
        %v1067 = vpop.permute.xlu0 %1066
        %v1068 = vlaneseq
        %v1069 = vshrl.u32 %v1068, 7
        %v1070 = vsub.s32 0, %v1069
        %v1071 = vrot.slane %v581, %v1070
        %1073 = vbcast.lane.b32.xlu0 %v1071, 256
        %v1074 = vpop.permute.xlu0 %1073
        %s1076 = sor.u32 256, 8
        %1077 = vbcast.lane.b32.xlu0 %v1071, %s1076
        %v1078 = vpop.permute.xlu0 %1077
        %v1079 = vlaneseq
        %v1080 = vshrl.u32 %v1079, 7
        %v1081 = vsub.s32 1, %v1080
        %v1082 = vrot.slane %v581, %v1081
        %1084 = vbcast.lane.b32.xlu0 %v1082, 256
        %v1085 = vpop.permute.xlu0 %1084
        %s1087 = sor.u32 256, 8
        %1088 = vbcast.lane.b32.xlu0 %v1082, %s1087
        %v1089 = vpop.permute.xlu0 %1088
        %v1090 = vlaneseq
        %v1091 = vshrl.u32 %v1090, 7
        %v1092 = vsub.s32 2, %v1091
        %v1093 = vrot.slane %v581, %v1092
        %1095 = vbcast.lane.b32.xlu0 %v1093, 256
        %v1096 = vpop.permute.xlu0 %1095
        %s1098 = sor.u32 256, 8
        %1099 = vbcast.lane.b32.xlu0 %v1093, %s1098
        %v1100 = vpop.permute.xlu0 %1099
        %v1101 = vlaneseq
        %v1102 = vshrl.u32 %v1101, 7
        %v1103 = vsub.s32 3, %v1102
        %v1104 = vrot.slane %v581, %v1103
        %1106 = vbcast.lane.b32.xlu0 %v1104, 256
        %v1107 = vpop.permute.xlu0 %1106
        %s1109 = sor.u32 256, 8
        %1110 = vbcast.lane.b32.xlu0 %v1104, %s1109
        %v1111 = vpop.permute.xlu0 %1110
        %v1112 = vlaneseq
        %v1113 = vshrl.u32 %v1112, 7
        %v1114 = vsub.s32 4, %v1113
        %v1115 = vrot.slane %v581, %v1114
        %1117 = vbcast.lane.b32.xlu0 %v1115, 256
        %v1118 = vpop.permute.xlu0 %1117
        %s1120 = sor.u32 256, 8
        %1121 = vbcast.lane.b32.xlu0 %v1115, %s1120
        %v1122 = vpop.permute.xlu0 %1121
        %v1123 = vlaneseq
        %v1124 = vshrl.u32 %v1123, 7
        %v1125 = vsub.s32 5, %v1124
        %v1126 = vrot.slane %v581, %v1125
        %1128 = vbcast.lane.b32.xlu0 %v1126, 256
        %v1129 = vpop.permute.xlu0 %1128
        %s1131 = sor.u32 256, 8
        %1132 = vbcast.lane.b32.xlu0 %v1126, %s1131
        %v1133 = vpop.permute.xlu0 %1132
        %v1134 = vlaneseq
        %v1135 = vshrl.u32 %v1134, 7
        %v1136 = vsub.s32 6, %v1135
        %v1137 = vrot.slane %v581, %v1136
        %1139 = vbcast.lane.b32.xlu0 %v1137, 256
        %v1140 = vpop.permute.xlu0 %1139
        %s1142 = sor.u32 256, 8
        %1143 = vbcast.lane.b32.xlu0 %v1137, %s1142
        %v1144 = vpop.permute.xlu0 %1143
        %v1145 = vlaneseq
        %v1146 = vshrl.u32 %v1145, 7
        %v1147 = vsub.s32 7, %v1146
        %v1148 = vrot.slane %v581, %v1147
        %1150 = vbcast.lane.b32.xlu0 %v1148, 256
        %v1151 = vpop.permute.xlu0 %1150
        %s1153 = sor.u32 256, 8
        %1154 = vbcast.lane.b32.xlu0 %v1148, %s1153
        %v1155 = vpop.permute.xlu0 %1154
        %v1156 = vlaneseq
        %v1157 = vshrl.u32 %v1156, 7
        %v1158 = vsub.s32 0, %v1157
        %v1159 = vrot.slane %v582, %v1158
        %1161 = vbcast.lane.b32.xlu0 %v1159, 256
        %v1162 = vpop.permute.xlu0 %1161
        %s1164 = sor.u32 256, 8
        %1165 = vbcast.lane.b32.xlu0 %v1159, %s1164
        %v1166 = vpop.permute.xlu0 %1165
        %v1167 = vlaneseq
        %v1168 = vshrl.u32 %v1167, 7
        %v1169 = vsub.s32 1, %v1168
        %v1170 = vrot.slane %v582, %v1169
        %1172 = vbcast.lane.b32.xlu0 %v1170, 256
        %v1173 = vpop.permute.xlu0 %1172
        %s1175 = sor.u32 256, 8
        %1176 = vbcast.lane.b32.xlu0 %v1170, %s1175
        %v1177 = vpop.permute.xlu0 %1176
        %v1178 = vlaneseq
        %v1179 = vshrl.u32 %v1178, 7
        %v1180 = vsub.s32 2, %v1179
        %v1181 = vrot.slane %v582, %v1180
        %1183 = vbcast.lane.b32.xlu0 %v1181, 256
        %v1184 = vpop.permute.xlu0 %1183
        %s1186 = sor.u32 256, 8
        %1187 = vbcast.lane.b32.xlu0 %v1181, %s1186
        %v1188 = vpop.permute.xlu0 %1187
        %v1189 = vlaneseq
        %v1190 = vshrl.u32 %v1189, 7
        %v1191 = vsub.s32 3, %v1190
        %v1192 = vrot.slane %v582, %v1191
        %1194 = vbcast.lane.b32.xlu0 %v1192, 256
        %v1195 = vpop.permute.xlu0 %1194
        %s1197 = sor.u32 256, 8
        %1198 = vbcast.lane.b32.xlu0 %v1192, %s1197
        %v1199 = vpop.permute.xlu0 %1198
        %v1200 = vlaneseq
        %v1201 = vshrl.u32 %v1200, 7
        %v1202 = vsub.s32 4, %v1201
        %v1203 = vrot.slane %v582, %v1202
        %1205 = vbcast.lane.b32.xlu0 %v1203, 256
        %v1206 = vpop.permute.xlu0 %1205
        %s1208 = sor.u32 256, 8
        %1209 = vbcast.lane.b32.xlu0 %v1203, %s1208
        %v1210 = vpop.permute.xlu0 %1209
        %v1211 = vlaneseq
        %v1212 = vshrl.u32 %v1211, 7
        %v1213 = vsub.s32 5, %v1212
        %v1214 = vrot.slane %v582, %v1213
        %1216 = vbcast.lane.b32.xlu0 %v1214, 256
        %v1217 = vpop.permute.xlu0 %1216
        %s1219 = sor.u32 256, 8
        %1220 = vbcast.lane.b32.xlu0 %v1214, %s1219
        %v1221 = vpop.permute.xlu0 %1220
        %v1222 = vlaneseq
        %v1223 = vshrl.u32 %v1222, 7
        %v1224 = vsub.s32 6, %v1223
        %v1225 = vrot.slane %v582, %v1224
        %1227 = vbcast.lane.b32.xlu0 %v1225, 256
        %v1228 = vpop.permute.xlu0 %1227
        %s1230 = sor.u32 256, 8
        %1231 = vbcast.lane.b32.xlu0 %v1225, %s1230
        %v1232 = vpop.permute.xlu0 %1231
        %v1233 = vlaneseq
        %v1234 = vshrl.u32 %v1233, 7
        %v1235 = vsub.s32 7, %v1234
        %v1236 = vrot.slane %v582, %v1235
        %1238 = vbcast.lane.b32.xlu0 %v1236, 256
        %v1239 = vpop.permute.xlu0 %1238
        %s1241 = sor.u32 256, 8
        %1242 = vbcast.lane.b32.xlu0 %v1236, %s1241
        %v1243 = vpop.permute.xlu0 %1242
        %vm1244 = vcmp.eq.s32.totalorder %v898, %v891
        %vm1245 = vcmp.eq.s32.totalorder %v902, %v891
        %vm1246 = vcmp.eq.s32.totalorder %v909, %v891
        %vm1247 = vcmp.eq.s32.totalorder %v913, %v891
        %vm1248 = vcmp.eq.s32.totalorder %v920, %v891
        %vm1249 = vcmp.eq.s32.totalorder %v924, %v891
        %vm1250 = vcmp.eq.s32.totalorder %v931, %v891
        %vm1251 = vcmp.eq.s32.totalorder %v935, %v891
        %vm1252 = vcmp.eq.s32.totalorder %v942, %v891
        %vm1253 = vcmp.eq.s32.totalorder %v946, %v891
        %vm1254 = vcmp.eq.s32.totalorder %v953, %v891
        %vm1255 = vcmp.eq.s32.totalorder %v957, %v891
        %vm1256 = vcmp.eq.s32.totalorder %v964, %v891
        %vm1257 = vcmp.eq.s32.totalorder %v968, %v891
        %vm1258 = vcmp.eq.s32.totalorder %v975, %v891
        %vm1259 = vcmp.eq.s32.totalorder %v979, %v891
        %vm1260 = vcmp.eq.s32.totalorder %v986, %v891
        %vm1261 = vcmp.eq.s32.totalorder %v990, %v891
        %vm1262 = vcmp.eq.s32.totalorder %v997, %v891
        %vm1263 = vcmp.eq.s32.totalorder %v1001, %v891
        %vm1264 = vcmp.eq.s32.totalorder %v1008, %v891
        %vm1265 = vcmp.eq.s32.totalorder %v1012, %v891
        %vm1266 = vcmp.eq.s32.totalorder %v1019, %v891
        %vm1267 = vcmp.eq.s32.totalorder %v1023, %v891
        %vm1268 = vcmp.eq.s32.totalorder %v1030, %v891
        %vm1269 = vcmp.eq.s32.totalorder %v1034, %v891
        %vm1270 = vcmp.eq.s32.totalorder %v1041, %v891
        %vm1271 = vcmp.eq.s32.totalorder %v1045, %v891
        %vm1272 = vcmp.eq.s32.totalorder %v1052, %v891
        %vm1273 = vcmp.eq.s32.totalorder %v1056, %v891
        %vm1274 = vcmp.eq.s32.totalorder %v1063, %v891
        %vm1275 = vcmp.eq.s32.totalorder %v1067, %v891
        %vm1276 = vcmp.eq.s32.totalorder %v1074, %v891
        %vm1277 = vcmp.eq.s32.totalorder %v1078, %v891
        %vm1278 = vcmp.eq.s32.totalorder %v1085, %v891
        %vm1279 = vcmp.eq.s32.totalorder %v1089, %v891
        %vm1280 = vcmp.eq.s32.totalorder %v1096, %v891
        %vm1281 = vcmp.eq.s32.totalorder %v1100, %v891
        %vm1282 = vcmp.eq.s32.totalorder %v1107, %v891
        %vm1283 = vcmp.eq.s32.totalorder %v1111, %v891
        %vm1284 = vcmp.eq.s32.totalorder %v1118, %v891
        %vm1285 = vcmp.eq.s32.totalorder %v1122, %v891
        %vm1286 = vcmp.eq.s32.totalorder %v1129, %v891
        %vm1287 = vcmp.eq.s32.totalorder %v1133, %v891
        %vm1288 = vcmp.eq.s32.totalorder %v1140, %v891
        %vm1289 = vcmp.eq.s32.totalorder %v1144, %v891
        %vm1290 = vcmp.eq.s32.totalorder %v1151, %v891
        %vm1291 = vcmp.eq.s32.totalorder %v1155, %v891
        %vm1292 = vcmp.eq.s32.totalorder %v1162, %v891
        %vm1293 = vcmp.eq.s32.totalorder %v1166, %v891
        %vm1294 = vcmp.eq.s32.totalorder %v1173, %v891
        %vm1295 = vcmp.eq.s32.totalorder %v1177, %v891
        %vm1296 = vcmp.eq.s32.totalorder %v1184, %v891
        %vm1297 = vcmp.eq.s32.totalorder %v1188, %v891
        %vm1298 = vcmp.eq.s32.totalorder %v1195, %v891
        %vm1299 = vcmp.eq.s32.totalorder %v1199, %v891
        %vm1300 = vcmp.eq.s32.totalorder %v1206, %v891
        %vm1301 = vcmp.eq.s32.totalorder %v1210, %v891
        %vm1302 = vcmp.eq.s32.totalorder %v1217, %v891
        %vm1303 = vcmp.eq.s32.totalorder %v1221, %v891
        %vm1304 = vcmp.eq.s32.totalorder %v1228, %v891
        %vm1305 = vcmp.eq.s32.totalorder %v1232, %v891
        %vm1306 = vcmp.eq.s32.totalorder %v1239, %v891
        %vm1307 = vcmp.eq.s32.totalorder %v1243, %v891
        %v1308 = vsel %vm1244, 1, 0
        %v1309 = vsel %vm1245, 1, 0
        %v1310 = vsel %vm1246, 1, 0
        %v1311 = vsel %vm1247, 1, 0
        %v1312 = vsel %vm1248, 1, 0
        %v1313 = vsel %vm1249, 1, 0
        %v1314 = vsel %vm1250, 1, 0
        %v1315 = vsel %vm1251, 1, 0
        %v1316 = vsel %vm1252, 1, 0
        %v1317 = vsel %vm1253, 1, 0
        %v1318 = vsel %vm1254, 1, 0
        %v1319 = vsel %vm1255, 1, 0
        %v1320 = vsel %vm1256, 1, 0
        %v1321 = vsel %vm1257, 1, 0
        %v1322 = vsel %vm1258, 1, 0
        %v1323 = vsel %vm1259, 1, 0
        %v1324 = vsel %vm1260, 1, 0
        %v1325 = vsel %vm1261, 1, 0
        %v1326 = vsel %vm1262, 1, 0
        %v1327 = vsel %vm1263, 1, 0
        %v1328 = vsel %vm1264, 1, 0
        %v1329 = vsel %vm1265, 1, 0
        %v1330 = vsel %vm1266, 1, 0
        %v1331 = vsel %vm1267, 1, 0
        %v1332 = vsel %vm1268, 1, 0
        %v1333 = vsel %vm1269, 1, 0
        %v1334 = vsel %vm1270, 1, 0
        %v1335 = vsel %vm1271, 1, 0
        %v1336 = vsel %vm1272, 1, 0
        %v1337 = vsel %vm1273, 1, 0
        %v1338 = vsel %vm1274, 1, 0
        %v1339 = vsel %vm1275, 1, 0
        %v1340 = vsel %vm1276, 1, 0
        %v1341 = vsel %vm1277, 1, 0
        %v1342 = vsel %vm1278, 1, 0
        %v1343 = vsel %vm1279, 1, 0
        %v1344 = vsel %vm1280, 1, 0
        %v1345 = vsel %vm1281, 1, 0
        %v1346 = vsel %vm1282, 1, 0
        %v1347 = vsel %vm1283, 1, 0
        %v1348 = vsel %vm1284, 1, 0
        %v1349 = vsel %vm1285, 1, 0
        %v1350 = vsel %vm1286, 1, 0
        %v1351 = vsel %vm1287, 1, 0
        %v1352 = vsel %vm1288, 1, 0
        %v1353 = vsel %vm1289, 1, 0
        %v1354 = vsel %vm1290, 1, 0
        %v1355 = vsel %vm1291, 1, 0
        %v1356 = vsel %vm1292, 1, 0
        %v1357 = vsel %vm1293, 1, 0
        %v1358 = vsel %vm1294, 1, 0
        %v1359 = vsel %vm1295, 1, 0
        %v1360 = vsel %vm1296, 1, 0
        %v1361 = vsel %vm1297, 1, 0
        %v1362 = vsel %vm1298, 1, 0
        %v1363 = vsel %vm1299, 1, 0
        %v1364 = vsel %vm1300, 1, 0
        %v1365 = vsel %vm1301, 1, 0
        %v1366 = vsel %vm1302, 1, 0
        %v1367 = vsel %vm1303, 1, 0
        %v1368 = vsel %vm1304, 1, 0
        %v1369 = vsel %vm1305, 1, 0
        %v1370 = vsel %vm1306, 1, 0
        %v1371 = vsel %vm1307, 1, 0
        %v1372 = vcvt.s32.f32 %v1308
        %v1373 = vcvt.s32.f32 %v1309
        %v1374 = vcvt.s32.f32 %v1310
        %v1375 = vcvt.s32.f32 %v1311
        %v1376 = vcvt.s32.f32 %v1312
        %v1377 = vcvt.s32.f32 %v1313
        %v1378 = vcvt.s32.f32 %v1314
        %v1379 = vcvt.s32.f32 %v1315
        %v1380 = vcvt.s32.f32 %v1316
        %v1381 = vcvt.s32.f32 %v1317
        %v1382 = vcvt.s32.f32 %v1318
        %v1383 = vcvt.s32.f32 %v1319
        %v1384 = vcvt.s32.f32 %v1320
        %v1385 = vcvt.s32.f32 %v1321
        %v1386 = vcvt.s32.f32 %v1322
        %v1387 = vcvt.s32.f32 %v1323
        %v1388 = vcvt.s32.f32 %v1324
        %v1389 = vcvt.s32.f32 %v1325
        %v1390 = vcvt.s32.f32 %v1326
        %v1391 = vcvt.s32.f32 %v1327
        %v1392 = vcvt.s32.f32 %v1328
        %v1393 = vcvt.s32.f32 %v1329
        %v1394 = vcvt.s32.f32 %v1330
        %v1395 = vcvt.s32.f32 %v1331
        %v1396 = vcvt.s32.f32 %v1332
        %v1397 = vcvt.s32.f32 %v1333
        %v1398 = vcvt.s32.f32 %v1334
        %v1399 = vcvt.s32.f32 %v1335
        %v1400 = vcvt.s32.f32 %v1336
        %v1401 = vcvt.s32.f32 %v1337
        %v1402 = vcvt.s32.f32 %v1338
        %v1403 = vcvt.s32.f32 %v1339
        %v1404 = vcvt.s32.f32 %v1340
        %v1405 = vcvt.s32.f32 %v1341
        %v1406 = vcvt.s32.f32 %v1342
        %v1407 = vcvt.s32.f32 %v1343
        %v1408 = vcvt.s32.f32 %v1344
        %v1409 = vcvt.s32.f32 %v1345
        %v1410 = vcvt.s32.f32 %v1346
        %v1411 = vcvt.s32.f32 %v1347
        %v1412 = vcvt.s32.f32 %v1348
        %v1413 = vcvt.s32.f32 %v1349
        %v1414 = vcvt.s32.f32 %v1350
        %v1415 = vcvt.s32.f32 %v1351
        %v1416 = vcvt.s32.f32 %v1352
        %v1417 = vcvt.s32.f32 %v1353
        %v1418 = vcvt.s32.f32 %v1354
        %v1419 = vcvt.s32.f32 %v1355
        %v1420 = vcvt.s32.f32 %v1356
        %v1421 = vcvt.s32.f32 %v1357
        %v1422 = vcvt.s32.f32 %v1358
        %v1423 = vcvt.s32.f32 %v1359
        %v1424 = vcvt.s32.f32 %v1360
        %v1425 = vcvt.s32.f32 %v1361
        %v1426 = vcvt.s32.f32 %v1362
        %v1427 = vcvt.s32.f32 %v1363
        %v1428 = vcvt.s32.f32 %v1364
        %v1429 = vcvt.s32.f32 %v1365
        %v1430 = vcvt.s32.f32 %v1366
        %v1431 = vcvt.s32.f32 %v1367
        %v1432 = vcvt.s32.f32 %v1368
        %v1433 = vcvt.s32.f32 %v1369
        %v1434 = vcvt.s32.f32 %v1370
        %v1435 = vcvt.s32.f32 %v1371
        %v1440 = vcombine.high %v872, %v872
        %v1442 = vunpack.c.l.s4 1966171168
        %v1443 = vunpack.c.0.s8 %v1442
        %v1444 = vlaneseq
        %v1445 = vshrl.u32 %v1444, 7
        %v1446 = vsub.s32 %v1443, %v1445
        %v1447 = vrot.slane %v872, %v1446
        %v1449 = vunpack.c.l.s4 1966171168
        %v1450 = vunpack.c.0.s8 %v1449
        %v1451 = vlaneseq
        %v1452 = vshrl.u32 %v1451, 7
        %v1453 = vsub.s32 %v1450, %v1452
        %v1454 = vrot.slane %v1440, %v1453
        %v1455 = vcombine.high %v1447, %v1447
        %v1456 = vcombine.high %v1454, %v1454
        %v1458 = vunpack.c.l.s4 1966171168
        %v1459 = vunpack.c.0.s8 %v1458
        %v1460 = vlaneseq
        %v1461 = vshrl.u32 %v1460, 7
        %v1462 = vsub.s32 %v1459, %v1461
        %v1463 = vrot.slane %v1447, %v1462
        %v1465 = vunpack.c.l.s4 1966171168
        %v1466 = vunpack.c.0.s8 %v1465
        %v1467 = vlaneseq
        %v1468 = vshrl.u32 %v1467, 7
        %v1469 = vsub.s32 %v1466, %v1468
        %v1470 = vrot.slane %v1454, %v1469
        %v1472 = vunpack.c.l.s4 1966171168
        %v1473 = vunpack.c.0.s8 %v1472
        %v1474 = vlaneseq
        %v1475 = vshrl.u32 %v1474, 7
        %v1476 = vsub.s32 %v1473, %v1475
        %v1477 = vrot.slane %v1455, %v1476
        %v1479 = vunpack.c.l.s4 1966171168
        %v1480 = vunpack.c.0.s8 %v1479
        %v1481 = vlaneseq
        %v1482 = vshrl.u32 %v1481, 7
        %v1483 = vsub.s32 %v1480, %v1482
        %v1484 = vrot.slane %v1456, %v1483
        %v1485 = vcombine.high %v1463, %v1463
        %v1486 = vcombine.high %v1470, %v1470
        %v1487 = vcombine.high %v1477, %v1477
        %v1488 = vcombine.high %v1484, %v1484
        %v1489 = vcombine.high %v877, %v877
        %v1491 = vunpack.c.l.s4 1966171168
        %v1492 = vunpack.c.0.s8 %v1491
        %v1493 = vlaneseq
        %v1494 = vshrl.u32 %v1493, 7
        %v1495 = vsub.s32 %v1492, %v1494
        %v1496 = vrot.slane %v877, %v1495
        %v1498 = vunpack.c.l.s4 1966171168
        %v1499 = vunpack.c.0.s8 %v1498
        %v1500 = vlaneseq
        %v1501 = vshrl.u32 %v1500, 7
        %v1502 = vsub.s32 %v1499, %v1501
        %v1503 = vrot.slane %v1489, %v1502
        %v1504 = vcombine.high %v1496, %v1496
        %v1505 = vcombine.high %v1503, %v1503
        %v1507 = vunpack.c.l.s4 1966171168
        %v1508 = vunpack.c.0.s8 %v1507
        %v1509 = vlaneseq
        %v1510 = vshrl.u32 %v1509, 7
        %v1511 = vsub.s32 %v1508, %v1510
        %v1512 = vrot.slane %v1496, %v1511
        %v1514 = vunpack.c.l.s4 1966171168
        %v1515 = vunpack.c.0.s8 %v1514
        %v1516 = vlaneseq
        %v1517 = vshrl.u32 %v1516, 7
        %v1518 = vsub.s32 %v1515, %v1517
        %v1519 = vrot.slane %v1503, %v1518
        %v1521 = vunpack.c.l.s4 1966171168
        %v1522 = vunpack.c.0.s8 %v1521
        %v1523 = vlaneseq
        %v1524 = vshrl.u32 %v1523, 7
        %v1525 = vsub.s32 %v1522, %v1524
        %v1526 = vrot.slane %v1504, %v1525
        %v1528 = vunpack.c.l.s4 1966171168
        %v1529 = vunpack.c.0.s8 %v1528
        %v1530 = vlaneseq
        %v1531 = vshrl.u32 %v1530, 7
        %v1532 = vsub.s32 %v1529, %v1531
        %v1533 = vrot.slane %v1505, %v1532
        %v1534 = vcombine.high %v1512, %v1512
        %v1535 = vcombine.high %v1519, %v1519
        %v1536 = vcombine.high %v1526, %v1526
        %v1537 = vcombine.high %v1533, %v1533
        %v1538 = vcombine.high %v882, %v882
        %v1540 = vunpack.c.l.s4 1966171168
        %v1541 = vunpack.c.0.s8 %v1540
        %v1542 = vlaneseq
        %v1543 = vshrl.u32 %v1542, 7
        %v1544 = vsub.s32 %v1541, %v1543
        %v1545 = vrot.slane %v882, %v1544
        %v1547 = vunpack.c.l.s4 1966171168
        %v1548 = vunpack.c.0.s8 %v1547
        %v1549 = vlaneseq
        %v1550 = vshrl.u32 %v1549, 7
        %v1551 = vsub.s32 %v1548, %v1550
        %v1552 = vrot.slane %v1538, %v1551
        %v1553 = vcombine.high %v1545, %v1545
        %v1554 = vcombine.high %v1552, %v1552
        %v1556 = vunpack.c.l.s4 1966171168
        %v1557 = vunpack.c.0.s8 %v1556
        %v1558 = vlaneseq
        %v1559 = vshrl.u32 %v1558, 7
        %v1560 = vsub.s32 %v1557, %v1559
        %v1561 = vrot.slane %v1545, %v1560
        %v1563 = vunpack.c.l.s4 1966171168
        %v1564 = vunpack.c.0.s8 %v1563
        %v1565 = vlaneseq
        %v1566 = vshrl.u32 %v1565, 7
        %v1567 = vsub.s32 %v1564, %v1566
        %v1568 = vrot.slane %v1552, %v1567
        %v1570 = vunpack.c.l.s4 1966171168
        %v1571 = vunpack.c.0.s8 %v1570
        %v1572 = vlaneseq
        %v1573 = vshrl.u32 %v1572, 7
        %v1574 = vsub.s32 %v1571, %v1573
        %v1575 = vrot.slane %v1553, %v1574
        %v1577 = vunpack.c.l.s4 1966171168
        %v1578 = vunpack.c.0.s8 %v1577
        %v1579 = vlaneseq
        %v1580 = vshrl.u32 %v1579, 7
        %v1581 = vsub.s32 %v1578, %v1580
        %v1582 = vrot.slane %v1554, %v1581
        %v1583 = vcombine.high %v1561, %v1561
        %v1584 = vcombine.high %v1568, %v1568
        %v1585 = vcombine.high %v1575, %v1575
        %v1586 = vcombine.high %v1582, %v1582
        %v1587 = vcombine.high %v887, %v887
        %v1589 = vunpack.c.l.s4 1966171168
        %v1590 = vunpack.c.0.s8 %v1589
        %v1591 = vlaneseq
        %v1592 = vshrl.u32 %v1591, 7
        %v1593 = vsub.s32 %v1590, %v1592
        %v1594 = vrot.slane %v887, %v1593
        %v1596 = vunpack.c.l.s4 1966171168
        %v1597 = vunpack.c.0.s8 %v1596
        %v1598 = vlaneseq
        %v1599 = vshrl.u32 %v1598, 7
        %v1600 = vsub.s32 %v1597, %v1599
        %v1601 = vrot.slane %v1587, %v1600
        %v1602 = vcombine.high %v1594, %v1594
        %v1603 = vcombine.high %v1601, %v1601
        %v1605 = vunpack.c.l.s4 1966171168
        %v1606 = vunpack.c.0.s8 %v1605
        %v1607 = vlaneseq
        %v1608 = vshrl.u32 %v1607, 7
        %v1609 = vsub.s32 %v1606, %v1608
        %v1610 = vrot.slane %v1594, %v1609
        %v1612 = vunpack.c.l.s4 1966171168
        %v1613 = vunpack.c.0.s8 %v1612
        %v1614 = vlaneseq
        %v1615 = vshrl.u32 %v1614, 7
        %v1616 = vsub.s32 %v1613, %v1615
        %v1617 = vrot.slane %v1601, %v1616
        %v1619 = vunpack.c.l.s4 1966171168
        %v1620 = vunpack.c.0.s8 %v1619
        %v1621 = vlaneseq
        %v1622 = vshrl.u32 %v1621, 7
        %v1623 = vsub.s32 %v1620, %v1622
        %v1624 = vrot.slane %v1602, %v1623
        %v1626 = vunpack.c.l.s4 1966171168
        %v1627 = vunpack.c.0.s8 %v1626
        %v1628 = vlaneseq
        %v1629 = vshrl.u32 %v1628, 7
        %v1630 = vsub.s32 %v1627, %v1629
        %v1631 = vrot.slane %v1603, %v1630
        %v1632 = vcombine.high %v1610, %v1610
        %v1633 = vcombine.high %v1617, %v1617
        %v1634 = vcombine.high %v1624, %v1624
        %v1635 = vcombine.high %v1631, %v1631
        %v1636 = vlaneseq
        %v1637 = vshrl.u32 %v1636, 7
        %v1638 = vsub.s32 0, %v1637
        %v1639 = vrot.slane %v1463, %v1638
        %v1640 = vlaneseq
        %v1641 = vshrl.u32 %v1640, 7
        %v1642 = vsub.s32 0, %v1641
        %v1643 = vrot.slane %v1477, %v1642
        %v1644 = vlaneseq
        %v1645 = vshrl.u32 %v1644, 7
        %v1646 = vsub.s32 0, %v1645
        %v1647 = vrot.slane %v1485, %v1646
        %v1648 = vlaneseq
        %v1649 = vshrl.u32 %v1648, 7
        %v1650 = vsub.s32 0, %v1649
        %v1651 = vrot.slane %v1487, %v1650
        %v1652 = vlaneseq
        %v1653 = vshrl.u32 %v1652, 7
        %v1654 = vsub.s32 0, %v1653
        %v1655 = vrot.slane %v1470, %v1654
        %v1656 = vlaneseq
        %v1657 = vshrl.u32 %v1656, 7
        %v1658 = vsub.s32 0, %v1657
        %v1659 = vrot.slane %v1484, %v1658
        %v1660 = vlaneseq
        %v1661 = vshrl.u32 %v1660, 7
        %v1662 = vsub.s32 0, %v1661
        %v1663 = vrot.slane %v1486, %v1662
        %v1664 = vlaneseq
        %v1665 = vshrl.u32 %v1664, 7
        %v1666 = vsub.s32 0, %v1665
        %v1667 = vrot.slane %v1488, %v1666
        %v1668 = vlaneseq
        %v1669 = vshrl.u32 %v1668, 7
        %v1670 = vsub.s32 0, %v1669
        %v1671 = vrot.slane %v1512, %v1670
        %v1672 = vlaneseq
        %v1673 = vshrl.u32 %v1672, 7
        %v1674 = vsub.s32 0, %v1673
        %v1675 = vrot.slane %v1526, %v1674
        %v1676 = vlaneseq
        %v1677 = vshrl.u32 %v1676, 7
        %v1678 = vsub.s32 0, %v1677
        %v1679 = vrot.slane %v1534, %v1678
        %v1680 = vlaneseq
        %v1681 = vshrl.u32 %v1680, 7
        %v1682 = vsub.s32 0, %v1681
        %v1683 = vrot.slane %v1536, %v1682
        %v1684 = vlaneseq
        %v1685 = vshrl.u32 %v1684, 7
        %v1686 = vsub.s32 0, %v1685
        %v1687 = vrot.slane %v1519, %v1686
        %v1688 = vlaneseq
        %v1689 = vshrl.u32 %v1688, 7
        %v1690 = vsub.s32 0, %v1689
        %v1691 = vrot.slane %v1533, %v1690
        %v1692 = vlaneseq
        %v1693 = vshrl.u32 %v1692, 7
        %v1694 = vsub.s32 0, %v1693
        %v1695 = vrot.slane %v1535, %v1694
        %v1696 = vlaneseq
        %v1697 = vshrl.u32 %v1696, 7
        %v1698 = vsub.s32 0, %v1697
        %v1699 = vrot.slane %v1537, %v1698
        %v1700 = vlaneseq
        %v1701 = vshrl.u32 %v1700, 7
        %v1702 = vsub.s32 0, %v1701
        %v1703 = vrot.slane %v1561, %v1702
        %v1704 = vlaneseq
        %v1705 = vshrl.u32 %v1704, 7
        %v1706 = vsub.s32 0, %v1705
        %v1707 = vrot.slane %v1575, %v1706
        %v1708 = vlaneseq
        %v1709 = vshrl.u32 %v1708, 7
        %v1710 = vsub.s32 0, %v1709
        %v1711 = vrot.slane %v1583, %v1710
        %v1712 = vlaneseq
        %v1713 = vshrl.u32 %v1712, 7
        %v1714 = vsub.s32 0, %v1713
        %v1715 = vrot.slane %v1585, %v1714
        %v1716 = vlaneseq
        %v1717 = vshrl.u32 %v1716, 7
        %v1718 = vsub.s32 0, %v1717
        %v1719 = vrot.slane %v1568, %v1718
        %v1720 = vlaneseq
        %v1721 = vshrl.u32 %v1720, 7
        %v1722 = vsub.s32 0, %v1721
        %v1723 = vrot.slane %v1582, %v1722
        %v1724 = vlaneseq
        %v1725 = vshrl.u32 %v1724, 7
        %v1726 = vsub.s32 0, %v1725
        %v1727 = vrot.slane %v1584, %v1726
        %v1728 = vlaneseq
        %v1729 = vshrl.u32 %v1728, 7
        %v1730 = vsub.s32 0, %v1729
        %v1731 = vrot.slane %v1586, %v1730
        %v1732 = vlaneseq
        %v1733 = vshrl.u32 %v1732, 7
        %v1734 = vsub.s32 0, %v1733
        %v1735 = vrot.slane %v1610, %v1734
        %v1736 = vlaneseq
        %v1737 = vshrl.u32 %v1736, 7
        %v1738 = vsub.s32 0, %v1737
        %v1739 = vrot.slane %v1624, %v1738
        %v1740 = vlaneseq
        %v1741 = vshrl.u32 %v1740, 7
        %v1742 = vsub.s32 0, %v1741
        %v1743 = vrot.slane %v1632, %v1742
        %v1744 = vlaneseq
        %v1745 = vshrl.u32 %v1744, 7
        %v1746 = vsub.s32 0, %v1745
        %v1747 = vrot.slane %v1634, %v1746
        %v1748 = vlaneseq
        %v1749 = vshrl.u32 %v1748, 7
        %v1750 = vsub.s32 0, %v1749
        %v1751 = vrot.slane %v1617, %v1750
        %v1752 = vlaneseq
        %v1753 = vshrl.u32 %v1752, 7
        %v1754 = vsub.s32 0, %v1753
        %v1755 = vrot.slane %v1631, %v1754
        %v1756 = vlaneseq
        %v1757 = vshrl.u32 %v1756, 7
        %v1758 = vsub.s32 0, %v1757
        %v1759 = vrot.slane %v1633, %v1758
        %v1760 = vlaneseq
        %v1761 = vshrl.u32 %v1760, 7
        %v1762 = vsub.s32 0, %v1761
        %v1763 = vrot.slane %v1635, %v1762
        %v1796 = vmul.f32 %v1372, %v1639
        %v1797 = vmul.f32 %v1373, %v1639
        %v1798 = vmul.f32 %v1374, %v1643
        %v1799 = vmul.f32 %v1375, %v1643
        %v1800 = vmul.f32 %v1376, %v1647
        %v1801 = vmul.f32 %v1377, %v1647
        %v1802 = vmul.f32 %v1378, %v1651
        %v1803 = vmul.f32 %v1379, %v1651
        %v1804 = vmul.f32 %v1380, %v1655
        %v1805 = vmul.f32 %v1381, %v1655
        %v1806 = vmul.f32 %v1382, %v1659
        %v1807 = vmul.f32 %v1383, %v1659
        %v1808 = vmul.f32 %v1384, %v1663
        %v1809 = vmul.f32 %v1385, %v1663
        %v1810 = vmul.f32 %v1386, %v1667
        %v1811 = vmul.f32 %v1387, %v1667
        %v1812 = vmul.f32 %v1388, %v1671
        %v1813 = vmul.f32 %v1389, %v1671
        %v1814 = vmul.f32 %v1390, %v1675
        %v1815 = vmul.f32 %v1391, %v1675
        %v1816 = vmul.f32 %v1392, %v1679
        %v1817 = vmul.f32 %v1393, %v1679
        %v1818 = vmul.f32 %v1394, %v1683
        %v1819 = vmul.f32 %v1395, %v1683
        %v1820 = vmul.f32 %v1396, %v1687
        %v1821 = vmul.f32 %v1397, %v1687
        %v1822 = vmul.f32 %v1398, %v1691
        %v1823 = vmul.f32 %v1399, %v1691
        %v1824 = vmul.f32 %v1400, %v1695
        %v1825 = vmul.f32 %v1401, %v1695
        %v1826 = vmul.f32 %v1402, %v1699
        %v1827 = vmul.f32 %v1403, %v1699
        %v1828 = vmul.f32 %v1404, %v1703
        %v1829 = vmul.f32 %v1405, %v1703
        %v1830 = vmul.f32 %v1406, %v1707
        %v1831 = vmul.f32 %v1407, %v1707
        %v1832 = vmul.f32 %v1408, %v1711
        %v1833 = vmul.f32 %v1409, %v1711
        %v1834 = vmul.f32 %v1410, %v1715
        %v1835 = vmul.f32 %v1411, %v1715
        %v1836 = vmul.f32 %v1412, %v1719
        %v1837 = vmul.f32 %v1413, %v1719
        %v1838 = vmul.f32 %v1414, %v1723
        %v1839 = vmul.f32 %v1415, %v1723
        %v1840 = vmul.f32 %v1416, %v1727
        %v1841 = vmul.f32 %v1417, %v1727
        %v1842 = vmul.f32 %v1418, %v1731
        %v1843 = vmul.f32 %v1419, %v1731
        %v1844 = vmul.f32 %v1420, %v1735
        %v1845 = vmul.f32 %v1421, %v1735
        %v1846 = vmul.f32 %v1422, %v1739
        %v1847 = vmul.f32 %v1423, %v1739
        %v1848 = vmul.f32 %v1424, %v1743
        %v1849 = vmul.f32 %v1425, %v1743
        %v1850 = vmul.f32 %v1426, %v1747
        %v1851 = vmul.f32 %v1427, %v1747
        %v1852 = vmul.f32 %v1428, %v1751
        %v1853 = vmul.f32 %v1429, %v1751
        %v1854 = vmul.f32 %v1430, %v1755
        %v1855 = vmul.f32 %v1431, %v1755
        %v1856 = vmul.f32 %v1432, %v1759
        %v1857 = vmul.f32 %v1433, %v1759
        %v1858 = vmul.f32 %v1434, %v1763
        %v1859 = vmul.f32 %v1435, %v1763
        %vm1860 = vcmask 408576
        %v1861 = vsel %vm1860, %v1796, 0.0
        %1862 = vadd.xlane.f32.xlu0 %v1861
        %v1863 = vpop.xlane.xlu0 %1862
        %vm1864 = vcmask 402432
        %v1865 = vsel %vm1864, %v1797, 0.0
        %1866 = vadd.xlane.f32.xlu0 %v1865
        %v1867 = vpop.xlane.xlu0 %1866
        %v1868 = vsel %vm1860, %v1798, 0.0
        %1869 = vadd.xlane.f32.xlu0 %v1868
        %v1870 = vpop.xlane.xlu0 %1869
        %v1871 = vsel %vm1864, %v1799, 0.0
        %1872 = vadd.xlane.f32.xlu0 %v1871
        %v1873 = vpop.xlane.xlu0 %1872
        %v1874 = vsel %vm1860, %v1800, 0.0
        %1875 = vadd.xlane.f32.xlu0 %v1874
        %v1876 = vpop.xlane.xlu0 %1875
        %v1877 = vsel %vm1864, %v1801, 0.0
        %1878 = vadd.xlane.f32.xlu0 %v1877
        %v1879 = vpop.xlane.xlu0 %1878
        %v1880 = vsel %vm1860, %v1802, 0.0
        %1881 = vadd.xlane.f32.xlu0 %v1880
        %v1882 = vpop.xlane.xlu0 %1881
        %v1883 = vsel %vm1864, %v1803, 0.0
        %1884 = vadd.xlane.f32.xlu0 %v1883
        %v1885 = vpop.xlane.xlu0 %1884
        %v1886 = vsel %vm1860, %v1804, 0.0
        %1887 = vadd.xlane.f32.xlu0 %v1886
        %v1888 = vpop.xlane.xlu0 %1887
        %v1889 = vsel %vm1864, %v1805, 0.0
        %1890 = vadd.xlane.f32.xlu0 %v1889
        %v1891 = vpop.xlane.xlu0 %1890
        %v1892 = vsel %vm1860, %v1806, 0.0
        %1893 = vadd.xlane.f32.xlu0 %v1892
        %v1894 = vpop.xlane.xlu0 %1893
        %v1895 = vsel %vm1864, %v1807, 0.0
        %1896 = vadd.xlane.f32.xlu0 %v1895
        %v1897 = vpop.xlane.xlu0 %1896
        %v1898 = vsel %vm1860, %v1808, 0.0
        %1899 = vadd.xlane.f32.xlu0 %v1898
        %v1900 = vpop.xlane.xlu0 %1899
        %v1901 = vsel %vm1864, %v1809, 0.0
        %1902 = vadd.xlane.f32.xlu0 %v1901
        %v1903 = vpop.xlane.xlu0 %1902
        %v1904 = vsel %vm1860, %v1810, 0.0
        %1905 = vadd.xlane.f32.xlu0 %v1904
        %v1906 = vpop.xlane.xlu0 %1905
        %v1907 = vsel %vm1864, %v1811, 0.0
        %1908 = vadd.xlane.f32.xlu0 %v1907
        %v1909 = vpop.xlane.xlu0 %1908
        %v1910 = vsel %vm1860, %v1812, 0.0
        %1911 = vadd.xlane.f32.xlu0 %v1910
        %v1912 = vpop.xlane.xlu0 %1911
        %v1913 = vsel %vm1864, %v1813, 0.0
        %1914 = vadd.xlane.f32.xlu0 %v1913
        %v1915 = vpop.xlane.xlu0 %1914
        %v1916 = vsel %vm1860, %v1814, 0.0
        %1917 = vadd.xlane.f32.xlu0 %v1916
        %v1918 = vpop.xlane.xlu0 %1917
        %v1919 = vsel %vm1864, %v1815, 0.0
        %1920 = vadd.xlane.f32.xlu0 %v1919
        %v1921 = vpop.xlane.xlu0 %1920
        %v1922 = vsel %vm1860, %v1816, 0.0
        %1923 = vadd.xlane.f32.xlu0 %v1922
        %v1924 = vpop.xlane.xlu0 %1923
        %v1925 = vsel %vm1864, %v1817, 0.0
        %1926 = vadd.xlane.f32.xlu0 %v1925
        %v1927 = vpop.xlane.xlu0 %1926
        %v1928 = vsel %vm1860, %v1818, 0.0
        %1929 = vadd.xlane.f32.xlu0 %v1928
        %v1930 = vpop.xlane.xlu0 %1929
        %v1931 = vsel %vm1864, %v1819, 0.0
        %1932 = vadd.xlane.f32.xlu0 %v1931
        %v1933 = vpop.xlane.xlu0 %1932
        %v1934 = vsel %vm1860, %v1820, 0.0
        %1935 = vadd.xlane.f32.xlu0 %v1934
        %v1936 = vpop.xlane.xlu0 %1935
        %v1937 = vsel %vm1864, %v1821, 0.0
        %1938 = vadd.xlane.f32.xlu0 %v1937
        %v1939 = vpop.xlane.xlu0 %1938
        %v1940 = vsel %vm1860, %v1822, 0.0
        %1941 = vadd.xlane.f32.xlu0 %v1940
        %v1942 = vpop.xlane.xlu0 %1941
        %v1943 = vsel %vm1864, %v1823, 0.0
        %1944 = vadd.xlane.f32.xlu0 %v1943
        %v1945 = vpop.xlane.xlu0 %1944
        %v1946 = vsel %vm1860, %v1824, 0.0
        %1947 = vadd.xlane.f32.xlu0 %v1946
        %v1948 = vpop.xlane.xlu0 %1947
        %v1949 = vsel %vm1864, %v1825, 0.0
        %1950 = vadd.xlane.f32.xlu0 %v1949
        %v1951 = vpop.xlane.xlu0 %1950
        %v1952 = vsel %vm1860, %v1826, 0.0
        %1953 = vadd.xlane.f32.xlu0 %v1952
        %v1954 = vpop.xlane.xlu0 %1953
        %v1955 = vsel %vm1864, %v1827, 0.0
        %1956 = vadd.xlane.f32.xlu0 %v1955
        %v1957 = vpop.xlane.xlu0 %1956
        %v1958 = vsel %vm1860, %v1828, 0.0
        %1959 = vadd.xlane.f32.xlu0 %v1958
        %v1960 = vpop.xlane.xlu0 %1959
        %v1961 = vsel %vm1864, %v1829, 0.0
        %1962 = vadd.xlane.f32.xlu0 %v1961
        %v1963 = vpop.xlane.xlu0 %1962
        %v1964 = vsel %vm1860, %v1830, 0.0
        %1965 = vadd.xlane.f32.xlu0 %v1964
        %v1966 = vpop.xlane.xlu0 %1965
        %v1967 = vsel %vm1864, %v1831, 0.0
        %1968 = vadd.xlane.f32.xlu0 %v1967
        %v1969 = vpop.xlane.xlu0 %1968
        %v1970 = vsel %vm1860, %v1832, 0.0
        %1971 = vadd.xlane.f32.xlu0 %v1970
        %v1972 = vpop.xlane.xlu0 %1971
        %v1973 = vsel %vm1864, %v1833, 0.0
        %1974 = vadd.xlane.f32.xlu0 %v1973
        %v1975 = vpop.xlane.xlu0 %1974
        %v1976 = vsel %vm1860, %v1834, 0.0
        %1977 = vadd.xlane.f32.xlu0 %v1976
        %v1978 = vpop.xlane.xlu0 %1977
        %v1979 = vsel %vm1864, %v1835, 0.0
        %1980 = vadd.xlane.f32.xlu0 %v1979
        %v1981 = vpop.xlane.xlu0 %1980
        %v1982 = vsel %vm1860, %v1836, 0.0
        %1983 = vadd.xlane.f32.xlu0 %v1982
        %v1984 = vpop.xlane.xlu0 %1983
        %v1985 = vsel %vm1864, %v1837, 0.0
        %1986 = vadd.xlane.f32.xlu0 %v1985
        %v1987 = vpop.xlane.xlu0 %1986
        %v1988 = vsel %vm1860, %v1838, 0.0
        %1989 = vadd.xlane.f32.xlu0 %v1988
        %v1990 = vpop.xlane.xlu0 %1989
        %v1991 = vsel %vm1864, %v1839, 0.0
        %1992 = vadd.xlane.f32.xlu0 %v1991
        %v1993 = vpop.xlane.xlu0 %1992
        %v1994 = vsel %vm1860, %v1840, 0.0
        %1995 = vadd.xlane.f32.xlu0 %v1994
        %v1996 = vpop.xlane.xlu0 %1995
        %v1997 = vsel %vm1864, %v1841, 0.0
        %1998 = vadd.xlane.f32.xlu0 %v1997
        %v1999 = vpop.xlane.xlu0 %1998
        %v2000 = vsel %vm1860, %v1842, 0.0
        %2001 = vadd.xlane.f32.xlu0 %v2000
        %v2002 = vpop.xlane.xlu0 %2001
        %v2003 = vsel %vm1864, %v1843, 0.0
        %2004 = vadd.xlane.f32.xlu0 %v2003
        %v2005 = vpop.xlane.xlu0 %2004
        %v2006 = vsel %vm1860, %v1844, 0.0
        %2007 = vadd.xlane.f32.xlu0 %v2006
        %v2008 = vpop.xlane.xlu0 %2007
        %v2009 = vsel %vm1864, %v1845, 0.0
        %2010 = vadd.xlane.f32.xlu0 %v2009
        %v2011 = vpop.xlane.xlu0 %2010
        %v2012 = vsel %vm1860, %v1846, 0.0
        %2013 = vadd.xlane.f32.xlu0 %v2012
        %v2014 = vpop.xlane.xlu0 %2013
        %v2015 = vsel %vm1864, %v1847, 0.0
        %2016 = vadd.xlane.f32.xlu0 %v2015
        %v2017 = vpop.xlane.xlu0 %2016
        %v2018 = vsel %vm1860, %v1848, 0.0
        %2019 = vadd.xlane.f32.xlu0 %v2018
        %v2020 = vpop.xlane.xlu0 %2019
        %v2021 = vsel %vm1864, %v1849, 0.0
        %2022 = vadd.xlane.f32.xlu0 %v2021
        %v2023 = vpop.xlane.xlu0 %2022
        %v2024 = vsel %vm1860, %v1850, 0.0
        %2025 = vadd.xlane.f32.xlu0 %v2024
        %v2026 = vpop.xlane.xlu0 %2025
        %v2027 = vsel %vm1864, %v1851, 0.0
        %2028 = vadd.xlane.f32.xlu0 %v2027
        %v2029 = vpop.xlane.xlu0 %2028
        %v2030 = vsel %vm1860, %v1852, 0.0
        %2031 = vadd.xlane.f32.xlu0 %v2030
        %v2032 = vpop.xlane.xlu0 %2031
        %v2033 = vsel %vm1864, %v1853, 0.0
        %2034 = vadd.xlane.f32.xlu0 %v2033
        %v2035 = vpop.xlane.xlu0 %2034
        %v2036 = vsel %vm1860, %v1854, 0.0
        %2037 = vadd.xlane.f32.xlu0 %v2036
        %v2038 = vpop.xlane.xlu0 %2037
        %v2039 = vsel %vm1864, %v1855, 0.0
        %2040 = vadd.xlane.f32.xlu0 %v2039
        %v2041 = vpop.xlane.xlu0 %2040
        %v2042 = vsel %vm1860, %v1856, 0.0
        %2043 = vadd.xlane.f32.xlu0 %v2042
        %v2044 = vpop.xlane.xlu0 %2043
        %v2045 = vsel %vm1864, %v1857, 0.0
        %2046 = vadd.xlane.f32.xlu0 %v2045
        %v2047 = vpop.xlane.xlu0 %2046
        %v2048 = vsel %vm1860, %v1858, 0.0
        %2049 = vadd.xlane.f32.xlu0 %v2048
        %v2050 = vpop.xlane.xlu0 %2049
        %v2051 = vsel %vm1864, %v1859, 0.0
        %2052 = vadd.xlane.f32.xlu0 %v2051
        %v2053 = vpop.xlane.xlu0 %2052
        %v2058 = vcombine.high %v771, %v771
        %v2060 = vunpack.c.l.s4 1966171168
        %v2061 = vunpack.c.0.s8 %v2060
        %v2062 = vlaneseq
        %v2063 = vshrl.u32 %v2062, 7
        %v2064 = vsub.s32 %v2061, %v2063
        %v2065 = vrot.slane %v771, %v2064
        %v2067 = vunpack.c.l.s4 1966171168
        %v2068 = vunpack.c.0.s8 %v2067
        %v2069 = vlaneseq
        %v2070 = vshrl.u32 %v2069, 7
        %v2071 = vsub.s32 %v2068, %v2070
        %v2072 = vrot.slane %v2058, %v2071
        %v2073 = vcombine.high %v2065, %v2065
        %v2074 = vcombine.high %v2072, %v2072
        %v2076 = vunpack.c.l.s4 1966171168
        %v2077 = vunpack.c.0.s8 %v2076
        %v2078 = vlaneseq
        %v2079 = vshrl.u32 %v2078, 7
        %v2080 = vsub.s32 %v2077, %v2079
        %v2081 = vrot.slane %v2065, %v2080
        %v2083 = vunpack.c.l.s4 1966171168
        %v2084 = vunpack.c.0.s8 %v2083
        %v2085 = vlaneseq
        %v2086 = vshrl.u32 %v2085, 7
        %v2087 = vsub.s32 %v2084, %v2086
        %v2088 = vrot.slane %v2072, %v2087
        %v2090 = vunpack.c.l.s4 1966171168
        %v2091 = vunpack.c.0.s8 %v2090
        %v2092 = vlaneseq
        %v2093 = vshrl.u32 %v2092, 7
        %v2094 = vsub.s32 %v2091, %v2093
        %v2095 = vrot.slane %v2073, %v2094
        %v2097 = vunpack.c.l.s4 1966171168
        %v2098 = vunpack.c.0.s8 %v2097
        %v2099 = vlaneseq
        %v2100 = vshrl.u32 %v2099, 7
        %v2101 = vsub.s32 %v2098, %v2100
        %v2102 = vrot.slane %v2074, %v2101
        %v2103 = vcombine.high %v2081, %v2081
        %v2104 = vcombine.high %v2088, %v2088
        %v2105 = vcombine.high %v2095, %v2095
        %v2106 = vcombine.high %v2102, %v2102
        %v2107 = vcombine.high %v776, %v776
        %v2109 = vunpack.c.l.s4 1966171168
        %v2110 = vunpack.c.0.s8 %v2109
        %v2111 = vlaneseq
        %v2112 = vshrl.u32 %v2111, 7
        %v2113 = vsub.s32 %v2110, %v2112
        %v2114 = vrot.slane %v776, %v2113
        %v2116 = vunpack.c.l.s4 1966171168
        %v2117 = vunpack.c.0.s8 %v2116
        %v2118 = vlaneseq
        %v2119 = vshrl.u32 %v2118, 7
        %v2120 = vsub.s32 %v2117, %v2119
        %v2121 = vrot.slane %v2107, %v2120
        %v2122 = vcombine.high %v2114, %v2114
        %v2123 = vcombine.high %v2121, %v2121
        %v2125 = vunpack.c.l.s4 1966171168
        %v2126 = vunpack.c.0.s8 %v2125
        %v2127 = vlaneseq
        %v2128 = vshrl.u32 %v2127, 7
        %v2129 = vsub.s32 %v2126, %v2128
        %v2130 = vrot.slane %v2114, %v2129
        %v2132 = vunpack.c.l.s4 1966171168
        %v2133 = vunpack.c.0.s8 %v2132
        %v2134 = vlaneseq
        %v2135 = vshrl.u32 %v2134, 7
        %v2136 = vsub.s32 %v2133, %v2135
        %v2137 = vrot.slane %v2121, %v2136
        %v2139 = vunpack.c.l.s4 1966171168
        %v2140 = vunpack.c.0.s8 %v2139
        %v2141 = vlaneseq
        %v2142 = vshrl.u32 %v2141, 7
        %v2143 = vsub.s32 %v2140, %v2142
        %v2144 = vrot.slane %v2122, %v2143
        %v2146 = vunpack.c.l.s4 1966171168
        %v2147 = vunpack.c.0.s8 %v2146
        %v2148 = vlaneseq
        %v2149 = vshrl.u32 %v2148, 7
        %v2150 = vsub.s32 %v2147, %v2149
        %v2151 = vrot.slane %v2123, %v2150
        %v2152 = vcombine.high %v2130, %v2130
        %v2153 = vcombine.high %v2137, %v2137
        %v2154 = vcombine.high %v2144, %v2144
        %v2155 = vcombine.high %v2151, %v2151
        %v2156 = vcombine.high %v781, %v781
        %v2158 = vunpack.c.l.s4 1966171168
        %v2159 = vunpack.c.0.s8 %v2158
        %v2160 = vlaneseq
        %v2161 = vshrl.u32 %v2160, 7
        %v2162 = vsub.s32 %v2159, %v2161
        %v2163 = vrot.slane %v781, %v2162
        %v2165 = vunpack.c.l.s4 1966171168
        %v2166 = vunpack.c.0.s8 %v2165
        %v2167 = vlaneseq
        %v2168 = vshrl.u32 %v2167, 7
        %v2169 = vsub.s32 %v2166, %v2168
        %v2170 = vrot.slane %v2156, %v2169
        %v2171 = vcombine.high %v2163, %v2163
        %v2172 = vcombine.high %v2170, %v2170
        %v2174 = vunpack.c.l.s4 1966171168
        %v2175 = vunpack.c.0.s8 %v2174
        %v2176 = vlaneseq
        %v2177 = vshrl.u32 %v2176, 7
        %v2178 = vsub.s32 %v2175, %v2177
        %v2179 = vrot.slane %v2163, %v2178
        %v2181 = vunpack.c.l.s4 1966171168
        %v2182 = vunpack.c.0.s8 %v2181
        %v2183 = vlaneseq
        %v2184 = vshrl.u32 %v2183, 7
        %v2185 = vsub.s32 %v2182, %v2184
        %v2186 = vrot.slane %v2170, %v2185
        %v2188 = vunpack.c.l.s4 1966171168
        %v2189 = vunpack.c.0.s8 %v2188
        %v2190 = vlaneseq
        %v2191 = vshrl.u32 %v2190, 7
        %v2192 = vsub.s32 %v2189, %v2191
        %v2193 = vrot.slane %v2171, %v2192
        %v2195 = vunpack.c.l.s4 1966171168
        %v2196 = vunpack.c.0.s8 %v2195
        %v2197 = vlaneseq
        %v2198 = vshrl.u32 %v2197, 7
        %v2199 = vsub.s32 %v2196, %v2198
        %v2200 = vrot.slane %v2172, %v2199
        %v2201 = vcombine.high %v2179, %v2179
        %v2202 = vcombine.high %v2186, %v2186
        %v2203 = vcombine.high %v2193, %v2193
        %v2204 = vcombine.high %v2200, %v2200
        %v2205 = vcombine.high %v786, %v786
        %v2207 = vunpack.c.l.s4 1966171168
        %v2208 = vunpack.c.0.s8 %v2207
        %v2209 = vlaneseq
        %v2210 = vshrl.u32 %v2209, 7
        %v2211 = vsub.s32 %v2208, %v2210
        %v2212 = vrot.slane %v786, %v2211
        %v2214 = vunpack.c.l.s4 1966171168
        %v2215 = vunpack.c.0.s8 %v2214
        %v2216 = vlaneseq
        %v2217 = vshrl.u32 %v2216, 7
        %v2218 = vsub.s32 %v2215, %v2217
        %v2219 = vrot.slane %v2205, %v2218
        %v2220 = vcombine.high %v2212, %v2212
        %v2221 = vcombine.high %v2219, %v2219
        %v2223 = vunpack.c.l.s4 1966171168
        %v2224 = vunpack.c.0.s8 %v2223
        %v2225 = vlaneseq
        %v2226 = vshrl.u32 %v2225, 7
        %v2227 = vsub.s32 %v2224, %v2226
        %v2228 = vrot.slane %v2212, %v2227
        %v2230 = vunpack.c.l.s4 1966171168
        %v2231 = vunpack.c.0.s8 %v2230
        %v2232 = vlaneseq
        %v2233 = vshrl.u32 %v2232, 7
        %v2234 = vsub.s32 %v2231, %v2233
        %v2235 = vrot.slane %v2219, %v2234
        %v2237 = vunpack.c.l.s4 1966171168
        %v2238 = vunpack.c.0.s8 %v2237
        %v2239 = vlaneseq
        %v2240 = vshrl.u32 %v2239, 7
        %v2241 = vsub.s32 %v2238, %v2240
        %v2242 = vrot.slane %v2220, %v2241
        %v2244 = vunpack.c.l.s4 1966171168
        %v2245 = vunpack.c.0.s8 %v2244
        %v2246 = vlaneseq
        %v2247 = vshrl.u32 %v2246, 7
        %v2248 = vsub.s32 %v2245, %v2247
        %v2249 = vrot.slane %v2221, %v2248
        %v2250 = vcombine.high %v2228, %v2228
        %v2251 = vcombine.high %v2235, %v2235
        %v2252 = vcombine.high %v2242, %v2242
        %v2253 = vcombine.high %v2249, %v2249
        %v2254 = vlaneseq
        %v2255 = vshrl.u32 %v2254, 7
        %v2256 = vsub.s32 0, %v2255
        %v2257 = vrot.slane %v2081, %v2256
        %v2258 = vlaneseq
        %v2259 = vshrl.u32 %v2258, 7
        %v2260 = vsub.s32 0, %v2259
        %v2261 = vrot.slane %v2095, %v2260
        %v2262 = vlaneseq
        %v2263 = vshrl.u32 %v2262, 7
        %v2264 = vsub.s32 0, %v2263
        %v2265 = vrot.slane %v2103, %v2264
        %v2266 = vlaneseq
        %v2267 = vshrl.u32 %v2266, 7
        %v2268 = vsub.s32 0, %v2267
        %v2269 = vrot.slane %v2105, %v2268
        %v2270 = vlaneseq
        %v2271 = vshrl.u32 %v2270, 7
        %v2272 = vsub.s32 0, %v2271
        %v2273 = vrot.slane %v2088, %v2272
        %v2274 = vlaneseq
        %v2275 = vshrl.u32 %v2274, 7
        %v2276 = vsub.s32 0, %v2275
        %v2277 = vrot.slane %v2102, %v2276
        %v2278 = vlaneseq
        %v2279 = vshrl.u32 %v2278, 7
        %v2280 = vsub.s32 0, %v2279
        %v2281 = vrot.slane %v2104, %v2280
        %v2282 = vlaneseq
        %v2283 = vshrl.u32 %v2282, 7
        %v2284 = vsub.s32 0, %v2283
        %v2285 = vrot.slane %v2106, %v2284
        %v2286 = vlaneseq
        %v2287 = vshrl.u32 %v2286, 7
        %v2288 = vsub.s32 0, %v2287
        %v2289 = vrot.slane %v2130, %v2288
        %v2290 = vlaneseq
        %v2291 = vshrl.u32 %v2290, 7
        %v2292 = vsub.s32 0, %v2291
        %v2293 = vrot.slane %v2144, %v2292
        %v2294 = vlaneseq
        %v2295 = vshrl.u32 %v2294, 7
        %v2296 = vsub.s32 0, %v2295
        %v2297 = vrot.slane %v2152, %v2296
        %v2298 = vlaneseq
        %v2299 = vshrl.u32 %v2298, 7
        %v2300 = vsub.s32 0, %v2299
        %v2301 = vrot.slane %v2154, %v2300
        %v2302 = vlaneseq
        %v2303 = vshrl.u32 %v2302, 7
        %v2304 = vsub.s32 0, %v2303
        %v2305 = vrot.slane %v2137, %v2304
        %v2306 = vlaneseq
        %v2307 = vshrl.u32 %v2306, 7
        %v2308 = vsub.s32 0, %v2307
        %v2309 = vrot.slane %v2151, %v2308
        %v2310 = vlaneseq
        %v2311 = vshrl.u32 %v2310, 7
        %v2312 = vsub.s32 0, %v2311
        %v2313 = vrot.slane %v2153, %v2312
        %v2314 = vlaneseq
        %v2315 = vshrl.u32 %v2314, 7
        %v2316 = vsub.s32 0, %v2315
        %v2317 = vrot.slane %v2155, %v2316
        %v2318 = vlaneseq
        %v2319 = vshrl.u32 %v2318, 7
        %v2320 = vsub.s32 0, %v2319
        %v2321 = vrot.slane %v2179, %v2320
        %v2322 = vlaneseq
        %v2323 = vshrl.u32 %v2322, 7
        %v2324 = vsub.s32 0, %v2323
        %v2325 = vrot.slane %v2193, %v2324
        %v2326 = vlaneseq
        %v2327 = vshrl.u32 %v2326, 7
        %v2328 = vsub.s32 0, %v2327
        %v2329 = vrot.slane %v2201, %v2328
        %v2330 = vlaneseq
        %v2331 = vshrl.u32 %v2330, 7
        %v2332 = vsub.s32 0, %v2331
        %v2333 = vrot.slane %v2203, %v2332
        %v2334 = vlaneseq
        %v2335 = vshrl.u32 %v2334, 7
        %v2336 = vsub.s32 0, %v2335
        %v2337 = vrot.slane %v2186, %v2336
        %v2338 = vlaneseq
        %v2339 = vshrl.u32 %v2338, 7
        %v2340 = vsub.s32 0, %v2339
        %v2341 = vrot.slane %v2200, %v2340
        %v2342 = vlaneseq
        %v2343 = vshrl.u32 %v2342, 7
        %v2344 = vsub.s32 0, %v2343
        %v2345 = vrot.slane %v2202, %v2344
        %v2346 = vlaneseq
        %v2347 = vshrl.u32 %v2346, 7
        %v2348 = vsub.s32 0, %v2347
        %v2349 = vrot.slane %v2204, %v2348
        %v2350 = vlaneseq
        %v2351 = vshrl.u32 %v2350, 7
        %v2352 = vsub.s32 0, %v2351
        %v2353 = vrot.slane %v2228, %v2352
        %v2354 = vlaneseq
        %v2355 = vshrl.u32 %v2354, 7
        %v2356 = vsub.s32 0, %v2355
        %v2357 = vrot.slane %v2242, %v2356
        %v2358 = vlaneseq
        %v2359 = vshrl.u32 %v2358, 7
        %v2360 = vsub.s32 0, %v2359
        %v2361 = vrot.slane %v2250, %v2360
        %v2362 = vlaneseq
        %v2363 = vshrl.u32 %v2362, 7
        %v2364 = vsub.s32 0, %v2363
        %v2365 = vrot.slane %v2252, %v2364
        %v2366 = vlaneseq
        %v2367 = vshrl.u32 %v2366, 7
        %v2368 = vsub.s32 0, %v2367
        %v2369 = vrot.slane %v2235, %v2368
        %v2370 = vlaneseq
        %v2371 = vshrl.u32 %v2370, 7
        %v2372 = vsub.s32 0, %v2371
        %v2373 = vrot.slane %v2249, %v2372
        %v2374 = vlaneseq
        %v2375 = vshrl.u32 %v2374, 7
        %v2376 = vsub.s32 0, %v2375
        %v2377 = vrot.slane %v2251, %v2376
        %v2378 = vlaneseq
        %v2379 = vshrl.u32 %v2378, 7
        %v2380 = vsub.s32 0, %v2379
        %v2381 = vrot.slane %v2253, %v2380
        %v2414 = vmul.f32 %v511, %v2257
        %v2415 = vmul.f32 %v512, %v2257
        %v2416 = vmul.f32 %v513, %v2261
        %v2417 = vmul.f32 %v514, %v2261
        %v2418 = vmul.f32 %v515, %v2265
        %v2419 = vmul.f32 %v516, %v2265
        %v2420 = vmul.f32 %v517, %v2269
        %v2421 = vmul.f32 %v518, %v2269
        %v2422 = vmul.f32 %v519, %v2273
        %v2423 = vmul.f32 %v520, %v2273
        %v2424 = vmul.f32 %v521, %v2277
        %v2425 = vmul.f32 %v522, %v2277
        %v2426 = vmul.f32 %v523, %v2281
        %v2427 = vmul.f32 %v524, %v2281
        %v2428 = vmul.f32 %v525, %v2285
        %v2429 = vmul.f32 %v526, %v2285
        %v2430 = vmul.f32 %v527, %v2289
        %v2431 = vmul.f32 %v528, %v2289
        %v2432 = vmul.f32 %v529, %v2293
        %v2433 = vmul.f32 %v530, %v2293
        %v2434 = vmul.f32 %v531, %v2297
        %v2435 = vmul.f32 %v532, %v2297
        %v2436 = vmul.f32 %v533, %v2301
        %v2437 = vmul.f32 %v534, %v2301
        %v2438 = vmul.f32 %v535, %v2305
        %v2439 = vmul.f32 %v536, %v2305
        %v2440 = vmul.f32 %v537, %v2309
        %v2441 = vmul.f32 %v538, %v2309
        %v2442 = vmul.f32 %v539, %v2313
        %v2443 = vmul.f32 %v540, %v2313
        %v2444 = vmul.f32 %v541, %v2317
        %v2445 = vmul.f32 %v542, %v2317
        %v2446 = vmul.f32 %v543, %v2321
        %v2447 = vmul.f32 %v544, %v2321
        %v2448 = vmul.f32 %v545, %v2325
        %v2449 = vmul.f32 %v546, %v2325
        %v2450 = vmul.f32 %v547, %v2329
        %v2451 = vmul.f32 %v548, %v2329
        %v2452 = vmul.f32 %v549, %v2333
        %v2453 = vmul.f32 %v550, %v2333
        %v2454 = vmul.f32 %v551, %v2337
        %v2455 = vmul.f32 %v552, %v2337
        %v2456 = vmul.f32 %v553, %v2341
        %v2457 = vmul.f32 %v554, %v2341
        %v2458 = vmul.f32 %v555, %v2345
        %v2459 = vmul.f32 %v556, %v2345
        %v2460 = vmul.f32 %v557, %v2349
        %v2461 = vmul.f32 %v558, %v2349
        %v2462 = vmul.f32 %v559, %v2353
        %v2463 = vmul.f32 %v560, %v2353
        %v2464 = vmul.f32 %v561, %v2357
        %v2465 = vmul.f32 %v562, %v2357
        %v2466 = vmul.f32 %v563, %v2361
        %v2467 = vmul.f32 %v564, %v2361
        %v2468 = vmul.f32 %v565, %v2365
        %v2469 = vmul.f32 %v566, %v2365
        %v2470 = vmul.f32 %v567, %v2369
        %v2471 = vmul.f32 %v568, %v2369
        %v2472 = vmul.f32 %v569, %v2373
        %v2473 = vmul.f32 %v570, %v2373
        %v2474 = vmul.f32 %v571, %v2377
        %v2475 = vmul.f32 %v572, %v2377
        %v2476 = vmul.f32 %v573, %v2381
        %v2477 = vmul.f32 %v574, %v2381
        %2478 = vadd.xlane.f32.xlu0 %v2414
        %v2479 = vpop.xlane.xlu0 %2478
        %vm2480 = vcmask 1041408
        %v2481 = vsel %vm2480, %v2415, 0.0
        %2482 = vadd.xlane.f32.xlu0 %v2481
        %v2483 = vpop.xlane.xlu0 %2482
        %2484 = vadd.xlane.f32.xlu0 %v2416
        %v2485 = vpop.xlane.xlu0 %2484
        %v2486 = vsel %vm2480, %v2417, 0.0
        %2487 = vadd.xlane.f32.xlu0 %v2486
        %v2488 = vpop.xlane.xlu0 %2487
        %2489 = vadd.xlane.f32.xlu0 %v2418
        %v2490 = vpop.xlane.xlu0 %2489
        %v2491 = vsel %vm2480, %v2419, 0.0
        %2492 = vadd.xlane.f32.xlu0 %v2491
        %v2493 = vpop.xlane.xlu0 %2492
        %2494 = vadd.xlane.f32.xlu0 %v2420
        %v2495 = vpop.xlane.xlu0 %2494
        %v2496 = vsel %vm2480, %v2421, 0.0
        %2497 = vadd.xlane.f32.xlu0 %v2496
        %v2498 = vpop.xlane.xlu0 %2497
        %2499 = vadd.xlane.f32.xlu0 %v2422
        %v2500 = vpop.xlane.xlu0 %2499
        %v2501 = vsel %vm2480, %v2423, 0.0
        %2502 = vadd.xlane.f32.xlu0 %v2501
        %v2503 = vpop.xlane.xlu0 %2502
        %2504 = vadd.xlane.f32.xlu0 %v2424
        %v2505 = vpop.xlane.xlu0 %2504
        %v2506 = vsel %vm2480, %v2425, 0.0
        %2507 = vadd.xlane.f32.xlu0 %v2506
        %v2508 = vpop.xlane.xlu0 %2507
        %2509 = vadd.xlane.f32.xlu0 %v2426
        %v2510 = vpop.xlane.xlu0 %2509
        %v2511 = vsel %vm2480, %v2427, 0.0
        %2512 = vadd.xlane.f32.xlu0 %v2511
        %v2513 = vpop.xlane.xlu0 %2512
        %2514 = vadd.xlane.f32.xlu0 %v2428
        %v2515 = vpop.xlane.xlu0 %2514
        %v2516 = vsel %vm2480, %v2429, 0.0
        %2517 = vadd.xlane.f32.xlu0 %v2516
        %v2518 = vpop.xlane.xlu0 %2517
        %2519 = vadd.xlane.f32.xlu0 %v2430
        %v2520 = vpop.xlane.xlu0 %2519
        %v2521 = vsel %vm2480, %v2431, 0.0
        %2522 = vadd.xlane.f32.xlu0 %v2521
        %v2523 = vpop.xlane.xlu0 %2522
        %2524 = vadd.xlane.f32.xlu0 %v2432
        %v2525 = vpop.xlane.xlu0 %2524
        %v2526 = vsel %vm2480, %v2433, 0.0
        %2527 = vadd.xlane.f32.xlu0 %v2526
        %v2528 = vpop.xlane.xlu0 %2527
        %2529 = vadd.xlane.f32.xlu0 %v2434
        %v2530 = vpop.xlane.xlu0 %2529
        %v2531 = vsel %vm2480, %v2435, 0.0
        %2532 = vadd.xlane.f32.xlu0 %v2531
        %v2533 = vpop.xlane.xlu0 %2532
        %2534 = vadd.xlane.f32.xlu0 %v2436
        %v2535 = vpop.xlane.xlu0 %2534
        %v2536 = vsel %vm2480, %v2437, 0.0
        %2537 = vadd.xlane.f32.xlu0 %v2536
        %v2538 = vpop.xlane.xlu0 %2537
        %2539 = vadd.xlane.f32.xlu0 %v2438
        %v2540 = vpop.xlane.xlu0 %2539
        %v2541 = vsel %vm2480, %v2439, 0.0
        %2542 = vadd.xlane.f32.xlu0 %v2541
        %v2543 = vpop.xlane.xlu0 %2542
        %2544 = vadd.xlane.f32.xlu0 %v2440
        %v2545 = vpop.xlane.xlu0 %2544
        %v2546 = vsel %vm2480, %v2441, 0.0
        %2547 = vadd.xlane.f32.xlu0 %v2546
        %v2548 = vpop.xlane.xlu0 %2547
        %2549 = vadd.xlane.f32.xlu0 %v2442
        %v2550 = vpop.xlane.xlu0 %2549
        %v2551 = vsel %vm2480, %v2443, 0.0
        %2552 = vadd.xlane.f32.xlu0 %v2551
        %v2553 = vpop.xlane.xlu0 %2552
        %2554 = vadd.xlane.f32.xlu0 %v2444
        %v2555 = vpop.xlane.xlu0 %2554
        %v2556 = vsel %vm2480, %v2445, 0.0
        %2557 = vadd.xlane.f32.xlu0 %v2556
        %v2558 = vpop.xlane.xlu0 %2557
        %2559 = vadd.xlane.f32.xlu0 %v2446
        %v2560 = vpop.xlane.xlu0 %2559
        %v2561 = vsel %vm2480, %v2447, 0.0
        %2562 = vadd.xlane.f32.xlu0 %v2561
        %v2563 = vpop.xlane.xlu0 %2562
        %2564 = vadd.xlane.f32.xlu0 %v2448
        %v2565 = vpop.xlane.xlu0 %2564
        %v2566 = vsel %vm2480, %v2449, 0.0
        %2567 = vadd.xlane.f32.xlu0 %v2566
        %v2568 = vpop.xlane.xlu0 %2567
        %2569 = vadd.xlane.f32.xlu0 %v2450
        %v2570 = vpop.xlane.xlu0 %2569
        %v2571 = vsel %vm2480, %v2451, 0.0
        %2572 = vadd.xlane.f32.xlu0 %v2571
        %v2573 = vpop.xlane.xlu0 %2572
        %2574 = vadd.xlane.f32.xlu0 %v2452
        %v2575 = vpop.xlane.xlu0 %2574
        %v2576 = vsel %vm2480, %v2453, 0.0
        %2577 = vadd.xlane.f32.xlu0 %v2576
        %v2578 = vpop.xlane.xlu0 %2577
        %2579 = vadd.xlane.f32.xlu0 %v2454
        %v2580 = vpop.xlane.xlu0 %2579
        %v2581 = vsel %vm2480, %v2455, 0.0
        %2582 = vadd.xlane.f32.xlu0 %v2581
        %v2583 = vpop.xlane.xlu0 %2582
        %2584 = vadd.xlane.f32.xlu0 %v2456
        %v2585 = vpop.xlane.xlu0 %2584
        %v2586 = vsel %vm2480, %v2457, 0.0
        %2587 = vadd.xlane.f32.xlu0 %v2586
        %v2588 = vpop.xlane.xlu0 %2587
        %2589 = vadd.xlane.f32.xlu0 %v2458
        %v2590 = vpop.xlane.xlu0 %2589
        %v2591 = vsel %vm2480, %v2459, 0.0
        %2592 = vadd.xlane.f32.xlu0 %v2591
        %v2593 = vpop.xlane.xlu0 %2592
        %2594 = vadd.xlane.f32.xlu0 %v2460
        %v2595 = vpop.xlane.xlu0 %2594
        %v2596 = vsel %vm2480, %v2461, 0.0
        %2597 = vadd.xlane.f32.xlu0 %v2596
        %v2598 = vpop.xlane.xlu0 %2597
        %2599 = vadd.xlane.f32.xlu0 %v2462
        %v2600 = vpop.xlane.xlu0 %2599
        %v2601 = vsel %vm2480, %v2463, 0.0
        %2602 = vadd.xlane.f32.xlu0 %v2601
        %v2603 = vpop.xlane.xlu0 %2602
        %2604 = vadd.xlane.f32.xlu0 %v2464
        %v2605 = vpop.xlane.xlu0 %2604
        %v2606 = vsel %vm2480, %v2465, 0.0
        %2607 = vadd.xlane.f32.xlu0 %v2606
        %v2608 = vpop.xlane.xlu0 %2607
        %2609 = vadd.xlane.f32.xlu0 %v2466
        %v2610 = vpop.xlane.xlu0 %2609
        %v2611 = vsel %vm2480, %v2467, 0.0
        %2612 = vadd.xlane.f32.xlu0 %v2611
        %v2613 = vpop.xlane.xlu0 %2612
        %2614 = vadd.xlane.f32.xlu0 %v2468
        %v2615 = vpop.xlane.xlu0 %2614
        %v2616 = vsel %vm2480, %v2469, 0.0
        %2617 = vadd.xlane.f32.xlu0 %v2616
        %v2618 = vpop.xlane.xlu0 %2617
        %2619 = vadd.xlane.f32.xlu0 %v2470
        %v2620 = vpop.xlane.xlu0 %2619
        %v2621 = vsel %vm2480, %v2471, 0.0
        %2622 = vadd.xlane.f32.xlu0 %v2621
        %v2623 = vpop.xlane.xlu0 %2622
        %2624 = vadd.xlane.f32.xlu0 %v2472
        %v2625 = vpop.xlane.xlu0 %2624
        %v2626 = vsel %vm2480, %v2473, 0.0
        %2627 = vadd.xlane.f32.xlu0 %v2626
        %v2628 = vpop.xlane.xlu0 %2627
        %2629 = vadd.xlane.f32.xlu0 %v2474
        %v2630 = vpop.xlane.xlu0 %2629
        %v2631 = vsel %vm2480, %v2475, 0.0
        %2632 = vadd.xlane.f32.xlu0 %v2631
        %v2633 = vpop.xlane.xlu0 %2632
        %2634 = vadd.xlane.f32.xlu0 %v2476
        %v2635 = vpop.xlane.xlu0 %2634
        %v2636 = vsel %vm2480, %v2477, 0.0
        %2637 = vadd.xlane.f32.xlu0 %v2636
        %v2638 = vpop.xlane.xlu0 %2637
        %v2639 = vadd.f32 %v1863, %v2479
        %v2640 = vadd.f32 %v1867, %v2483
        %v2641 = vadd.f32 %v1870, %v2485
        %v2642 = vadd.f32 %v1873, %v2488
        %v2643 = vadd.f32 %v1876, %v2490
        %v2644 = vadd.f32 %v1879, %v2493
        %v2645 = vadd.f32 %v1882, %v2495
        %v2646 = vadd.f32 %v1885, %v2498
        %v2647 = vadd.f32 %v1888, %v2500
        %v2648 = vadd.f32 %v1891, %v2503
        %v2649 = vadd.f32 %v1894, %v2505
        %v2650 = vadd.f32 %v1897, %v2508
        %v2651 = vadd.f32 %v1900, %v2510
        %v2652 = vadd.f32 %v1903, %v2513
        %v2653 = vadd.f32 %v1906, %v2515
        %v2654 = vadd.f32 %v1909, %v2518
        %v2655 = vadd.f32 %v1912, %v2520
        %v2656 = vadd.f32 %v1915, %v2523
        %v2657 = vadd.f32 %v1918, %v2525
        %v2658 = vadd.f32 %v1921, %v2528
        %v2659 = vadd.f32 %v1924, %v2530
        %v2660 = vadd.f32 %v1927, %v2533
        %v2661 = vadd.f32 %v1930, %v2535
        %v2662 = vadd.f32 %v1933, %v2538
        %v2663 = vadd.f32 %v1936, %v2540
        %v2664 = vadd.f32 %v1939, %v2543
        %v2665 = vadd.f32 %v1942, %v2545
        %v2666 = vadd.f32 %v1945, %v2548
        %v2667 = vadd.f32 %v1948, %v2550
        %v2668 = vadd.f32 %v1951, %v2553
        %v2669 = vadd.f32 %v1954, %v2555
        %v2670 = vadd.f32 %v1957, %v2558
        %v2671 = vadd.f32 %v1960, %v2560
        %v2672 = vadd.f32 %v1963, %v2563
        %v2673 = vadd.f32 %v1966, %v2565
        %v2674 = vadd.f32 %v1969, %v2568
        %v2675 = vadd.f32 %v1972, %v2570
        %v2676 = vadd.f32 %v1975, %v2573
        %v2677 = vadd.f32 %v1978, %v2575
        %v2678 = vadd.f32 %v1981, %v2578
        %v2679 = vadd.f32 %v1984, %v2580
        %v2680 = vadd.f32 %v1987, %v2583
        %v2681 = vadd.f32 %v1990, %v2585
        %v2682 = vadd.f32 %v1993, %v2588
        %v2683 = vadd.f32 %v1996, %v2590
        %v2684 = vadd.f32 %v1999, %v2593
        %v2685 = vadd.f32 %v2002, %v2595
        %v2686 = vadd.f32 %v2005, %v2598
        %v2687 = vadd.f32 %v2008, %v2600
        %v2688 = vadd.f32 %v2011, %v2603
        %v2689 = vadd.f32 %v2014, %v2605
        %v2690 = vadd.f32 %v2017, %v2608
        %v2691 = vadd.f32 %v2020, %v2610
        %v2692 = vadd.f32 %v2023, %v2613
        %v2693 = vadd.f32 %v2026, %v2615
        %v2694 = vadd.f32 %v2029, %v2618
        %v2695 = vadd.f32 %v2032, %v2620
        %v2696 = vadd.f32 %v2035, %v2623
        %v2697 = vadd.f32 %v2038, %v2625
        %v2698 = vadd.f32 %v2041, %v2628
        %v2699 = vadd.f32 %v2044, %v2630
        %v2700 = vadd.f32 %v2047, %v2633
        %v2701 = vadd.f32 %v2050, %v2635
        %v2702 = vadd.f32 %v2053, %v2638
        %v2703 = vmul.f32 %v2639, 0.088388346
        %v2704 = vmul.f32 %v2640, 0.088388346
        %v2705 = vmul.f32 %v2641, 0.088388346
        %v2706 = vmul.f32 %v2642, 0.088388346
        %v2707 = vmul.f32 %v2643, 0.088388346
        %v2708 = vmul.f32 %v2644, 0.088388346
        %v2709 = vmul.f32 %v2645, 0.088388346
        %v2710 = vmul.f32 %v2646, 0.088388346
        %v2711 = vmul.f32 %v2647, 0.088388346
        %v2712 = vmul.f32 %v2648, 0.088388346
        %v2713 = vmul.f32 %v2649, 0.088388346
        %v2714 = vmul.f32 %v2650, 0.088388346
        %v2715 = vmul.f32 %v2651, 0.088388346
        %v2716 = vmul.f32 %v2652, 0.088388346
        %v2717 = vmul.f32 %v2653, 0.088388346
        %v2718 = vmul.f32 %v2654, 0.088388346
        %v2719 = vmul.f32 %v2655, 0.088388346
        %v2720 = vmul.f32 %v2656, 0.088388346
        %v2721 = vmul.f32 %v2657, 0.088388346
        %v2722 = vmul.f32 %v2658, 0.088388346
        %v2723 = vmul.f32 %v2659, 0.088388346
        %v2724 = vmul.f32 %v2660, 0.088388346
        %v2725 = vmul.f32 %v2661, 0.088388346
        %v2726 = vmul.f32 %v2662, 0.088388346
        %v2727 = vmul.f32 %v2663, 0.088388346
        %v2728 = vmul.f32 %v2664, 0.088388346
        %v2729 = vmul.f32 %v2665, 0.088388346
        %v2730 = vmul.f32 %v2666, 0.088388346
        %v2731 = vmul.f32 %v2667, 0.088388346
        %v2732 = vmul.f32 %v2668, 0.088388346
        %v2733 = vmul.f32 %v2669, 0.088388346
        %v2734 = vmul.f32 %v2670, 0.088388346
        %v2735 = vmul.f32 %v2671, 0.088388346
        %v2736 = vmul.f32 %v2672, 0.088388346
        %v2737 = vmul.f32 %v2673, 0.088388346
        %v2738 = vmul.f32 %v2674, 0.088388346
        %v2739 = vmul.f32 %v2675, 0.088388346
        %v2740 = vmul.f32 %v2676, 0.088388346
        %v2741 = vmul.f32 %v2677, 0.088388346
        %v2742 = vmul.f32 %v2678, 0.088388346
        %v2743 = vmul.f32 %v2679, 0.088388346
        %v2744 = vmul.f32 %v2680, 0.088388346
        %v2745 = vmul.f32 %v2681, 0.088388346
        %v2746 = vmul.f32 %v2682, 0.088388346
        %v2747 = vmul.f32 %v2683, 0.088388346
        %v2748 = vmul.f32 %v2684, 0.088388346
        %v2749 = vmul.f32 %v2685, 0.088388346
        %v2750 = vmul.f32 %v2686, 0.088388346
        %v2751 = vmul.f32 %v2687, 0.088388346
        %v2752 = vmul.f32 %v2688, 0.088388346
        %v2753 = vmul.f32 %v2689, 0.088388346
        %v2754 = vmul.f32 %v2690, 0.088388346
        %v2755 = vmul.f32 %v2691, 0.088388346
        %v2756 = vmul.f32 %v2692, 0.088388346
        %v2757 = vmul.f32 %v2693, 0.088388346
        %v2758 = vmul.f32 %v2694, 0.088388346
        %v2759 = vmul.f32 %v2695, 0.088388346
        %v2760 = vmul.f32 %v2696, 0.088388346
        %v2761 = vmul.f32 %v2697, 0.088388346
        %v2762 = vmul.f32 %v2698, 0.088388346
        %v2763 = vmul.f32 %v2699, 0.088388346
        %v2764 = vmul.f32 %v2700, 0.088388346
        %v2765 = vmul.f32 %v2701, 0.088388346
        %v2766 = vmul.f32 %v2702, 0.088388346
        %v2831 = vlaneseq
        %v2832 = vshrl.u32 %v2831, 7
        %v2833 = vsub.s32 %v891, %v2832
        %v2834 = vrot.slane %v2703, %v2833
        %v2835 = vadd.s32 %v891, 4294967288
        %v2836 = vlaneseq
        %v2837 = vshrl.u32 %v2836, 7
        %v2838 = vsub.s32 %v2835, %v2837
        %v2839 = vrot.slane %v2704, %v2838
        %vm2840 = vcmask 130112
        %v2841 = vsel %vm2840, %v2839, %v2834
        %v2842 = vlaneseq
        %v2843 = vshrl.u32 %v2842, 7
        %v2844 = vsub.s32 %v891, %v2843
        %v2845 = vrot.slane %v2705, %v2844
        %v2846 = vlaneseq
        %v2847 = vshrl.u32 %v2846, 7
        %v2848 = vsub.s32 %v2835, %v2847
        %v2849 = vrot.slane %v2706, %v2848
        %v2850 = vsel %vm2840, %v2849, %v2845
        %v2851 = vlaneseq
        %v2852 = vshrl.u32 %v2851, 7
        %v2853 = vsub.s32 %v891, %v2852
        %v2854 = vrot.slane %v2707, %v2853
        %v2855 = vlaneseq
        %v2856 = vshrl.u32 %v2855, 7
        %v2857 = vsub.s32 %v2835, %v2856
        %v2858 = vrot.slane %v2708, %v2857
        %v2859 = vsel %vm2840, %v2858, %v2854
        %v2860 = vlaneseq
        %v2861 = vshrl.u32 %v2860, 7
        %v2862 = vsub.s32 %v891, %v2861
        %v2863 = vrot.slane %v2709, %v2862
        %v2864 = vlaneseq
        %v2865 = vshrl.u32 %v2864, 7
        %v2866 = vsub.s32 %v2835, %v2865
        %v2867 = vrot.slane %v2710, %v2866
        %v2868 = vsel %vm2840, %v2867, %v2863
        %v2869 = vlaneseq
        %v2870 = vshrl.u32 %v2869, 7
        %v2871 = vsub.s32 %v891, %v2870
        %v2872 = vrot.slane %v2711, %v2871
        %v2873 = vlaneseq
        %v2874 = vshrl.u32 %v2873, 7
        %v2875 = vsub.s32 %v2835, %v2874
        %v2876 = vrot.slane %v2712, %v2875
        %v2877 = vsel %vm2840, %v2876, %v2872
        %v2878 = vlaneseq
        %v2879 = vshrl.u32 %v2878, 7
        %v2880 = vsub.s32 %v891, %v2879
        %v2881 = vrot.slane %v2713, %v2880
        %v2882 = vlaneseq
        %v2883 = vshrl.u32 %v2882, 7
        %v2884 = vsub.s32 %v2835, %v2883
        %v2885 = vrot.slane %v2714, %v2884
        %v2886 = vsel %vm2840, %v2885, %v2881
        %v2887 = vlaneseq
        %v2888 = vshrl.u32 %v2887, 7
        %v2889 = vsub.s32 %v891, %v2888
        %v2890 = vrot.slane %v2715, %v2889
        %v2891 = vlaneseq
        %v2892 = vshrl.u32 %v2891, 7
        %v2893 = vsub.s32 %v2835, %v2892
        %v2894 = vrot.slane %v2716, %v2893
        %v2895 = vsel %vm2840, %v2894, %v2890
        %v2896 = vlaneseq
        %v2897 = vshrl.u32 %v2896, 7
        %v2898 = vsub.s32 %v891, %v2897
        %v2899 = vrot.slane %v2717, %v2898
        %v2900 = vlaneseq
        %v2901 = vshrl.u32 %v2900, 7
        %v2902 = vsub.s32 %v2835, %v2901
        %v2903 = vrot.slane %v2718, %v2902
        %v2904 = vsel %vm2840, %v2903, %v2899
        %v2905 = vlaneseq
        %v2906 = vshrl.u32 %v2905, 7
        %v2907 = vsub.s32 %v891, %v2906
        %v2908 = vrot.slane %v2719, %v2907
        %v2909 = vlaneseq
        %v2910 = vshrl.u32 %v2909, 7
        %v2911 = vsub.s32 %v2835, %v2910
        %v2912 = vrot.slane %v2720, %v2911
        %v2913 = vsel %vm2840, %v2912, %v2908
        %v2914 = vlaneseq
        %v2915 = vshrl.u32 %v2914, 7
        %v2916 = vsub.s32 %v891, %v2915
        %v2917 = vrot.slane %v2721, %v2916
        %v2918 = vlaneseq
        %v2919 = vshrl.u32 %v2918, 7
        %v2920 = vsub.s32 %v2835, %v2919
        %v2921 = vrot.slane %v2722, %v2920
        %v2922 = vsel %vm2840, %v2921, %v2917
        %v2923 = vlaneseq
        %v2924 = vshrl.u32 %v2923, 7
        %v2925 = vsub.s32 %v891, %v2924
        %v2926 = vrot.slane %v2723, %v2925
        %v2927 = vlaneseq
        %v2928 = vshrl.u32 %v2927, 7
        %v2929 = vsub.s32 %v2835, %v2928
        %v2930 = vrot.slane %v2724, %v2929
        %v2931 = vsel %vm2840, %v2930, %v2926
        %v2932 = vlaneseq
        %v2933 = vshrl.u32 %v2932, 7
        %v2934 = vsub.s32 %v891, %v2933
        %v2935 = vrot.slane %v2725, %v2934
        %v2936 = vlaneseq
        %v2937 = vshrl.u32 %v2936, 7
        %v2938 = vsub.s32 %v2835, %v2937
        %v2939 = vrot.slane %v2726, %v2938
        %v2940 = vsel %vm2840, %v2939, %v2935
        %v2941 = vlaneseq
        %v2942 = vshrl.u32 %v2941, 7
        %v2943 = vsub.s32 %v891, %v2942
        %v2944 = vrot.slane %v2727, %v2943
        %v2945 = vlaneseq
        %v2946 = vshrl.u32 %v2945, 7
        %v2947 = vsub.s32 %v2835, %v2946
        %v2948 = vrot.slane %v2728, %v2947
        %v2949 = vsel %vm2840, %v2948, %v2944
        %v2950 = vlaneseq
        %v2951 = vshrl.u32 %v2950, 7
        %v2952 = vsub.s32 %v891, %v2951
        %v2953 = vrot.slane %v2729, %v2952
        %v2954 = vlaneseq
        %v2955 = vshrl.u32 %v2954, 7
        %v2956 = vsub.s32 %v2835, %v2955
        %v2957 = vrot.slane %v2730, %v2956
        %v2958 = vsel %vm2840, %v2957, %v2953
        %v2959 = vlaneseq
        %v2960 = vshrl.u32 %v2959, 7
        %v2961 = vsub.s32 %v891, %v2960
        %v2962 = vrot.slane %v2731, %v2961
        %v2963 = vlaneseq
        %v2964 = vshrl.u32 %v2963, 7
        %v2965 = vsub.s32 %v2835, %v2964
        %v2966 = vrot.slane %v2732, %v2965
        %v2967 = vsel %vm2840, %v2966, %v2962
        %v2968 = vlaneseq
        %v2969 = vshrl.u32 %v2968, 7
        %v2970 = vsub.s32 %v891, %v2969
        %v2971 = vrot.slane %v2733, %v2970
        %v2972 = vlaneseq
        %v2973 = vshrl.u32 %v2972, 7
        %v2974 = vsub.s32 %v2835, %v2973
        %v2975 = vrot.slane %v2734, %v2974
        %v2976 = vsel %vm2840, %v2975, %v2971
        %v2977 = vlaneseq
        %v2978 = vshrl.u32 %v2977, 7
        %v2979 = vsub.s32 %v891, %v2978
        %v2980 = vrot.slane %v2735, %v2979
        %v2981 = vlaneseq
        %v2982 = vshrl.u32 %v2981, 7
        %v2983 = vsub.s32 %v2835, %v2982
        %v2984 = vrot.slane %v2736, %v2983
        %v2985 = vsel %vm2840, %v2984, %v2980
        %v2986 = vlaneseq
        %v2987 = vshrl.u32 %v2986, 7
        %v2988 = vsub.s32 %v891, %v2987
        %v2989 = vrot.slane %v2737, %v2988
        %v2990 = vlaneseq
        %v2991 = vshrl.u32 %v2990, 7
        %v2992 = vsub.s32 %v2835, %v2991
        %v2993 = vrot.slane %v2738, %v2992
        %v2994 = vsel %vm2840, %v2993, %v2989
        %v2995 = vlaneseq
        %v2996 = vshrl.u32 %v2995, 7
        %v2997 = vsub.s32 %v891, %v2996
        %v2998 = vrot.slane %v2739, %v2997
        %v2999 = vlaneseq
        %v3000 = vshrl.u32 %v2999, 7
        %v3001 = vsub.s32 %v2835, %v3000
        %v3002 = vrot.slane %v2740, %v3001
        %v3003 = vsel %vm2840, %v3002, %v2998
        %v3004 = vlaneseq
        %v3005 = vshrl.u32 %v3004, 7
        %v3006 = vsub.s32 %v891, %v3005
        %v3007 = vrot.slane %v2741, %v3006
        %v3008 = vlaneseq
        %v3009 = vshrl.u32 %v3008, 7
        %v3010 = vsub.s32 %v2835, %v3009
        %v3011 = vrot.slane %v2742, %v3010
        %v3012 = vsel %vm2840, %v3011, %v3007
        %v3013 = vlaneseq
        %v3014 = vshrl.u32 %v3013, 7
        %v3015 = vsub.s32 %v891, %v3014
        %v3016 = vrot.slane %v2743, %v3015
        %v3017 = vlaneseq
        %v3018 = vshrl.u32 %v3017, 7
        %v3019 = vsub.s32 %v2835, %v3018
        %v3020 = vrot.slane %v2744, %v3019
        %v3021 = vsel %vm2840, %v3020, %v3016
        %v3022 = vlaneseq
        %v3023 = vshrl.u32 %v3022, 7
        %v3024 = vsub.s32 %v891, %v3023
        %v3025 = vrot.slane %v2745, %v3024
        %v3026 = vlaneseq
        %v3027 = vshrl.u32 %v3026, 7
        %v3028 = vsub.s32 %v2835, %v3027
        %v3029 = vrot.slane %v2746, %v3028
        %v3030 = vsel %vm2840, %v3029, %v3025
        %v3031 = vlaneseq
        %v3032 = vshrl.u32 %v3031, 7
        %v3033 = vsub.s32 %v891, %v3032
        %v3034 = vrot.slane %v2747, %v3033
        %v3035 = vlaneseq
        %v3036 = vshrl.u32 %v3035, 7
        %v3037 = vsub.s32 %v2835, %v3036
        %v3038 = vrot.slane %v2748, %v3037
        %v3039 = vsel %vm2840, %v3038, %v3034
        %v3040 = vlaneseq
        %v3041 = vshrl.u32 %v3040, 7
        %v3042 = vsub.s32 %v891, %v3041
        %v3043 = vrot.slane %v2749, %v3042
        %v3044 = vlaneseq
        %v3045 = vshrl.u32 %v3044, 7
        %v3046 = vsub.s32 %v2835, %v3045
        %v3047 = vrot.slane %v2750, %v3046
        %v3048 = vsel %vm2840, %v3047, %v3043
        %v3049 = vlaneseq
        %v3050 = vshrl.u32 %v3049, 7
        %v3051 = vsub.s32 %v891, %v3050
        %v3052 = vrot.slane %v2751, %v3051
        %v3053 = vlaneseq
        %v3054 = vshrl.u32 %v3053, 7
        %v3055 = vsub.s32 %v2835, %v3054
        %v3056 = vrot.slane %v2752, %v3055
        %v3057 = vsel %vm2840, %v3056, %v3052
        %v3058 = vlaneseq
        %v3059 = vshrl.u32 %v3058, 7
        %v3060 = vsub.s32 %v891, %v3059
        %v3061 = vrot.slane %v2753, %v3060
        %v3062 = vlaneseq
        %v3063 = vshrl.u32 %v3062, 7
        %v3064 = vsub.s32 %v2835, %v3063
        %v3065 = vrot.slane %v2754, %v3064
        %v3066 = vsel %vm2840, %v3065, %v3061
        %v3067 = vlaneseq
        %v3068 = vshrl.u32 %v3067, 7
        %v3069 = vsub.s32 %v891, %v3068
        %v3070 = vrot.slane %v2755, %v3069
        %v3071 = vlaneseq
        %v3072 = vshrl.u32 %v3071, 7
        %v3073 = vsub.s32 %v2835, %v3072
        %v3074 = vrot.slane %v2756, %v3073
        %v3075 = vsel %vm2840, %v3074, %v3070
        %v3076 = vlaneseq
        %v3077 = vshrl.u32 %v3076, 7
        %v3078 = vsub.s32 %v891, %v3077
        %v3079 = vrot.slane %v2757, %v3078
        %v3080 = vlaneseq
        %v3081 = vshrl.u32 %v3080, 7
        %v3082 = vsub.s32 %v2835, %v3081
        %v3083 = vrot.slane %v2758, %v3082
        %v3084 = vsel %vm2840, %v3083, %v3079
        %v3085 = vlaneseq
        %v3086 = vshrl.u32 %v3085, 7
        %v3087 = vsub.s32 %v891, %v3086
        %v3088 = vrot.slane %v2759, %v3087
        %v3089 = vlaneseq
        %v3090 = vshrl.u32 %v3089, 7
        %v3091 = vsub.s32 %v2835, %v3090
        %v3092 = vrot.slane %v2760, %v3091
        %v3093 = vsel %vm2840, %v3092, %v3088
        %v3094 = vlaneseq
        %v3095 = vshrl.u32 %v3094, 7
        %v3096 = vsub.s32 %v891, %v3095
        %v3097 = vrot.slane %v2761, %v3096
        %v3098 = vlaneseq
        %v3099 = vshrl.u32 %v3098, 7
        %v3100 = vsub.s32 %v2835, %v3099
        %v3101 = vrot.slane %v2762, %v3100
        %v3102 = vsel %vm2840, %v3101, %v3097
        %v3103 = vlaneseq
        %v3104 = vshrl.u32 %v3103, 7
        %v3105 = vsub.s32 %v891, %v3104
        %v3106 = vrot.slane %v2763, %v3105
        %v3107 = vlaneseq
        %v3108 = vshrl.u32 %v3107, 7
        %v3109 = vsub.s32 %v2835, %v3108
        %v3110 = vrot.slane %v2764, %v3109
        %v3111 = vsel %vm2840, %v3110, %v3106
        %v3112 = vlaneseq
        %v3113 = vshrl.u32 %v3112, 7
        %v3114 = vsub.s32 %v891, %v3113
        %v3115 = vrot.slane %v2765, %v3114
        %v3116 = vlaneseq
        %v3117 = vshrl.u32 %v3116, 7
        %v3118 = vsub.s32 %v2835, %v3117
        %v3119 = vrot.slane %v2766, %v3118
        %v3120 = vsel %vm2840, %v3119, %v3115
        %vm3121 = vcmask 1041409
        %v3122 = vsel %vm3121, %v2850, %v2841
        %vm3123 = vcmask 1042434
        %v3124 = vsel %vm3123, %v2859, %v3122
        %vm3125 = vcmask 1043459
        %v3126 = vsel %vm3125, %v2868, %v3124
        %vm3127 = vcmask 1044484
        %v3128 = vsel %vm3127, %v2877, %v3126
        %vm3129 = vcmask 1045509
        %v3130 = vsel %vm3129, %v2886, %v3128
        %vm3131 = vcmask 1046534
        %v3132 = vsel %vm3131, %v2895, %v3130
        %vm3133 = vcmask 1047559
        %v3134 = vsel %vm3133, %v2904, %v3132
        %v3135 = vsel %vm3121, %v2922, %v2913
        %v3136 = vsel %vm3123, %v2931, %v3135
        %v3137 = vsel %vm3125, %v2940, %v3136
        %v3138 = vsel %vm3127, %v2949, %v3137
        %v3139 = vsel %vm3129, %v2958, %v3138
        %v3140 = vsel %vm3131, %v2967, %v3139
        %v3141 = vsel %vm3133, %v2976, %v3140
        %v3142 = vsel %vm3121, %v2994, %v2985
        %v3143 = vsel %vm3123, %v3003, %v3142
        %v3144 = vsel %vm3125, %v3012, %v3143
        %v3145 = vsel %vm3127, %v3021, %v3144
        %v3146 = vsel %vm3129, %v3030, %v3145
        %v3147 = vsel %vm3131, %v3039, %v3146
        %v3148 = vsel %vm3133, %v3048, %v3147
        %v3149 = vsel %vm3121, %v3066, %v3057
        %v3150 = vsel %vm3123, %v3075, %v3149
        %v3151 = vsel %vm3125, %v3084, %v3150
        %v3152 = vsel %vm3127, %v3093, %v3151
        %v3153 = vsel %vm3129, %v3102, %v3152
        %v3154 = vsel %vm3131, %v3111, %v3153
        %v3155 = vsel %vm3133, %v3120, %v3154
        %vm3160 = vcmask 80896
        %v3161 = vsel %vm3160, %v3134, -inf
        %3162 = vmax.xlane.f32.xlu0 %v3161
        %v3163 = vpop.xlane.xlu0 %3162
        %v3164 = vsel %vm3160, %v3141, -inf
        %3165 = vmax.xlane.f32.xlu0 %v3164
        %v3166 = vpop.xlane.xlu0 %3165
        %v3167 = vsel %vm3160, %v3148, -inf
        %3168 = vmax.xlane.f32.xlu0 %v3167
        %v3169 = vpop.xlane.xlu0 %3168
        %v3170 = vsel %vm3160, %v3155, -inf
        %3171 = vmax.xlane.f32.xlu0 %v3170
        %v3172 = vpop.xlane.xlu0 %3171
        %v3177 = vlaneseq
        %v3178 = vshrl.u32 %v3177, 7
        %v3179 = vsub.s32 0, %v3178
        %v3180 = vrot.slane %v3163, %v3179
        %v3181 = vlaneseq
        %v3182 = vshrl.u32 %v3181, 7
        %v3183 = vsub.s32 1, %v3182
        %v3184 = vrot.slane %v3163, %v3183
        %v3185 = vlaneseq
        %v3186 = vshrl.u32 %v3185, 7
        %v3187 = vsub.s32 2, %v3186
        %v3188 = vrot.slane %v3163, %v3187
        %v3189 = vlaneseq
        %v3190 = vshrl.u32 %v3189, 7
        %v3191 = vsub.s32 3, %v3190
        %v3192 = vrot.slane %v3163, %v3191
        %v3193 = vlaneseq
        %v3194 = vshrl.u32 %v3193, 7
        %v3195 = vsub.s32 4, %v3194
        %v3196 = vrot.slane %v3163, %v3195
        %v3197 = vlaneseq
        %v3198 = vshrl.u32 %v3197, 7
        %v3199 = vsub.s32 5, %v3198
        %v3200 = vrot.slane %v3163, %v3199
        %v3201 = vlaneseq
        %v3202 = vshrl.u32 %v3201, 7
        %v3203 = vsub.s32 6, %v3202
        %v3204 = vrot.slane %v3163, %v3203
        %v3205 = vlaneseq
        %v3206 = vshrl.u32 %v3205, 7
        %v3207 = vsub.s32 7, %v3206
        %v3208 = vrot.slane %v3163, %v3207
        %v3209 = vlaneseq
        %v3210 = vshrl.u32 %v3209, 7
        %v3211 = vsub.s32 0, %v3210
        %v3212 = vrot.slane %v3166, %v3211
        %v3213 = vlaneseq
        %v3214 = vshrl.u32 %v3213, 7
        %v3215 = vsub.s32 1, %v3214
        %v3216 = vrot.slane %v3166, %v3215
        %v3217 = vlaneseq
        %v3218 = vshrl.u32 %v3217, 7
        %v3219 = vsub.s32 2, %v3218
        %v3220 = vrot.slane %v3166, %v3219
        %v3221 = vlaneseq
        %v3222 = vshrl.u32 %v3221, 7
        %v3223 = vsub.s32 3, %v3222
        %v3224 = vrot.slane %v3166, %v3223
        %v3225 = vlaneseq
        %v3226 = vshrl.u32 %v3225, 7
        %v3227 = vsub.s32 4, %v3226
        %v3228 = vrot.slane %v3166, %v3227
        %v3229 = vlaneseq
        %v3230 = vshrl.u32 %v3229, 7
        %v3231 = vsub.s32 5, %v3230
        %v3232 = vrot.slane %v3166, %v3231
        %v3233 = vlaneseq
        %v3234 = vshrl.u32 %v3233, 7
        %v3235 = vsub.s32 6, %v3234
        %v3236 = vrot.slane %v3166, %v3235
        %v3237 = vlaneseq
        %v3238 = vshrl.u32 %v3237, 7
        %v3239 = vsub.s32 7, %v3238
        %v3240 = vrot.slane %v3166, %v3239
        %v3241 = vlaneseq
        %v3242 = vshrl.u32 %v3241, 7
        %v3243 = vsub.s32 0, %v3242
        %v3244 = vrot.slane %v3169, %v3243
        %v3245 = vlaneseq
        %v3246 = vshrl.u32 %v3245, 7
        %v3247 = vsub.s32 1, %v3246
        %v3248 = vrot.slane %v3169, %v3247
        %v3249 = vlaneseq
        %v3250 = vshrl.u32 %v3249, 7
        %v3251 = vsub.s32 2, %v3250
        %v3252 = vrot.slane %v3169, %v3251
        %v3253 = vlaneseq
        %v3254 = vshrl.u32 %v3253, 7
        %v3255 = vsub.s32 3, %v3254
        %v3256 = vrot.slane %v3169, %v3255
        %v3257 = vlaneseq
        %v3258 = vshrl.u32 %v3257, 7
        %v3259 = vsub.s32 4, %v3258
        %v3260 = vrot.slane %v3169, %v3259
        %v3261 = vlaneseq
        %v3262 = vshrl.u32 %v3261, 7
        %v3263 = vsub.s32 5, %v3262
        %v3264 = vrot.slane %v3169, %v3263
        %v3265 = vlaneseq
        %v3266 = vshrl.u32 %v3265, 7
        %v3267 = vsub.s32 6, %v3266
        %v3268 = vrot.slane %v3169, %v3267
        %v3269 = vlaneseq
        %v3270 = vshrl.u32 %v3269, 7
        %v3271 = vsub.s32 7, %v3270
        %v3272 = vrot.slane %v3169, %v3271
        %v3273 = vlaneseq
        %v3274 = vshrl.u32 %v3273, 7
        %v3275 = vsub.s32 0, %v3274
        %v3276 = vrot.slane %v3172, %v3275
        %v3277 = vlaneseq
        %v3278 = vshrl.u32 %v3277, 7
        %v3279 = vsub.s32 1, %v3278
        %v3280 = vrot.slane %v3172, %v3279
        %v3281 = vlaneseq
        %v3282 = vshrl.u32 %v3281, 7
        %v3283 = vsub.s32 2, %v3282
        %v3284 = vrot.slane %v3172, %v3283
        %v3285 = vlaneseq
        %v3286 = vshrl.u32 %v3285, 7
        %v3287 = vsub.s32 3, %v3286
        %v3288 = vrot.slane %v3172, %v3287
        %v3289 = vlaneseq
        %v3290 = vshrl.u32 %v3289, 7
        %v3291 = vsub.s32 4, %v3290
        %v3292 = vrot.slane %v3172, %v3291
        %v3293 = vlaneseq
        %v3294 = vshrl.u32 %v3293, 7
        %v3295 = vsub.s32 5, %v3294
        %v3296 = vrot.slane %v3172, %v3295
        %v3297 = vlaneseq
        %v3298 = vshrl.u32 %v3297, 7
        %v3299 = vsub.s32 6, %v3298
        %v3300 = vrot.slane %v3172, %v3299
        %v3301 = vlaneseq
        %v3302 = vshrl.u32 %v3301, 7
        %v3303 = vsub.s32 7, %v3302
        %v3304 = vrot.slane %v3172, %v3303
        %v3337 = vsub.f32 %v2703, %v3180
        %v3338 = vsub.f32 %v2704, %v3180
        %v3339 = vsub.f32 %v2705, %v3184
        %v3340 = vsub.f32 %v2706, %v3184
        %v3341 = vsub.f32 %v2707, %v3188
        %v3342 = vsub.f32 %v2708, %v3188
        %v3343 = vsub.f32 %v2709, %v3192
        %v3344 = vsub.f32 %v2710, %v3192
        %v3345 = vsub.f32 %v2711, %v3196
        %v3346 = vsub.f32 %v2712, %v3196
        %v3347 = vsub.f32 %v2713, %v3200
        %v3348 = vsub.f32 %v2714, %v3200
        %v3349 = vsub.f32 %v2715, %v3204
        %v3350 = vsub.f32 %v2716, %v3204
        %v3351 = vsub.f32 %v2717, %v3208
        %v3352 = vsub.f32 %v2718, %v3208
        %v3353 = vsub.f32 %v2719, %v3212
        %v3354 = vsub.f32 %v2720, %v3212
        %v3355 = vsub.f32 %v2721, %v3216
        %v3356 = vsub.f32 %v2722, %v3216
        %v3357 = vsub.f32 %v2723, %v3220
        %v3358 = vsub.f32 %v2724, %v3220
        %v3359 = vsub.f32 %v2725, %v3224
        %v3360 = vsub.f32 %v2726, %v3224
        %v3361 = vsub.f32 %v2727, %v3228
        %v3362 = vsub.f32 %v2728, %v3228
        %v3363 = vsub.f32 %v2729, %v3232
        %v3364 = vsub.f32 %v2730, %v3232
        %v3365 = vsub.f32 %v2731, %v3236
        %v3366 = vsub.f32 %v2732, %v3236
        %v3367 = vsub.f32 %v2733, %v3240
        %v3368 = vsub.f32 %v2734, %v3240
        %v3369 = vsub.f32 %v2735, %v3244
        %v3370 = vsub.f32 %v2736, %v3244
        %v3371 = vsub.f32 %v2737, %v3248
        %v3372 = vsub.f32 %v2738, %v3248
        %v3373 = vsub.f32 %v2739, %v3252
        %v3374 = vsub.f32 %v2740, %v3252
        %v3375 = vsub.f32 %v2741, %v3256
        %v3376 = vsub.f32 %v2742, %v3256
        %v3377 = vsub.f32 %v2743, %v3260
        %v3378 = vsub.f32 %v2744, %v3260
        %v3379 = vsub.f32 %v2745, %v3264
        %v3380 = vsub.f32 %v2746, %v3264
        %v3381 = vsub.f32 %v2747, %v3268
        %v3382 = vsub.f32 %v2748, %v3268
        %v3383 = vsub.f32 %v2749, %v3272
        %v3384 = vsub.f32 %v2750, %v3272
        %v3385 = vsub.f32 %v2751, %v3276
        %v3386 = vsub.f32 %v2752, %v3276
        %v3387 = vsub.f32 %v2753, %v3280
        %v3388 = vsub.f32 %v2754, %v3280
        %v3389 = vsub.f32 %v2755, %v3284
        %v3390 = vsub.f32 %v2756, %v3284
        %v3391 = vsub.f32 %v2757, %v3288
        %v3392 = vsub.f32 %v2758, %v3288
        %v3393 = vsub.f32 %v2759, %v3292
        %v3394 = vsub.f32 %v2760, %v3292
        %v3395 = vsub.f32 %v2761, %v3296
        %v3396 = vsub.f32 %v2762, %v3296
        %v3397 = vsub.f32 %v2763, %v3300
        %v3398 = vsub.f32 %v2764, %v3300
        %v3399 = vsub.f32 %v2765, %v3304
        %v3400 = vsub.f32 %v2766, %v3304
        %v3401 = vmul.f32 %v3337, 1.442695
        %v3402 = vpow.pop %v3401
        %v3403 = vmul.f32 %v3338, 1.442695
        %v3404 = vpow.pop %v3403
        %v3405 = vmul.f32 %v3339, 1.442695
        %v3406 = vpow.pop %v3405
        %v3407 = vmul.f32 %v3340, 1.442695
        %v3408 = vpow.pop %v3407
        %v3409 = vmul.f32 %v3341, 1.442695
        %v3410 = vpow.pop %v3409
        %v3411 = vmul.f32 %v3342, 1.442695
        %v3412 = vpow.pop %v3411
        %v3413 = vmul.f32 %v3343, 1.442695
        %v3414 = vpow.pop %v3413
        %v3415 = vmul.f32 %v3344, 1.442695
        %v3416 = vpow.pop %v3415
        %v3417 = vmul.f32 %v3345, 1.442695
        %v3418 = vpow.pop %v3417
        %v3419 = vmul.f32 %v3346, 1.442695
        %v3420 = vpow.pop %v3419
        %v3421 = vmul.f32 %v3347, 1.442695
        %v3422 = vpow.pop %v3421
        %v3423 = vmul.f32 %v3348, 1.442695
        %v3424 = vpow.pop %v3423
        %v3425 = vmul.f32 %v3349, 1.442695
        %v3426 = vpow.pop %v3425
        %v3427 = vmul.f32 %v3350, 1.442695
        %v3428 = vpow.pop %v3427
        %v3429 = vmul.f32 %v3351, 1.442695
        %v3430 = vpow.pop %v3429
        %v3431 = vmul.f32 %v3352, 1.442695
        %v3432 = vpow.pop %v3431
        %v3433 = vmul.f32 %v3353, 1.442695
        %v3434 = vpow.pop %v3433
        %v3435 = vmul.f32 %v3354, 1.442695
        %v3436 = vpow.pop %v3435
        %v3437 = vmul.f32 %v3355, 1.442695
        %v3438 = vpow.pop %v3437
        %v3439 = vmul.f32 %v3356, 1.442695
        %v3440 = vpow.pop %v3439
        %v3441 = vmul.f32 %v3357, 1.442695
        %v3442 = vpow.pop %v3441
        %v3443 = vmul.f32 %v3358, 1.442695
        %v3444 = vpow.pop %v3443
        %v3445 = vmul.f32 %v3359, 1.442695
        %v3446 = vpow.pop %v3445
        %v3447 = vmul.f32 %v3360, 1.442695
        %v3448 = vpow.pop %v3447
        %v3449 = vmul.f32 %v3361, 1.442695
        %v3450 = vpow.pop %v3449
        %v3451 = vmul.f32 %v3362, 1.442695
        %v3452 = vpow.pop %v3451
        %v3453 = vmul.f32 %v3363, 1.442695
        %v3454 = vpow.pop %v3453
        %v3455 = vmul.f32 %v3364, 1.442695
        %v3456 = vpow.pop %v3455
        %v3457 = vmul.f32 %v3365, 1.442695
        %v3458 = vpow.pop %v3457
        %v3459 = vmul.f32 %v3366, 1.442695
        %v3460 = vpow.pop %v3459
        %v3461 = vmul.f32 %v3367, 1.442695
        %v3462 = vpow.pop %v3461
        %v3463 = vmul.f32 %v3368, 1.442695
        %v3464 = vpow.pop %v3463
        %v3465 = vmul.f32 %v3369, 1.442695
        %v3466 = vpow.pop %v3465
        %v3467 = vmul.f32 %v3370, 1.442695
        %v3468 = vpow.pop %v3467
        %v3469 = vmul.f32 %v3371, 1.442695
        %v3470 = vpow.pop %v3469
        %v3471 = vmul.f32 %v3372, 1.442695
        %v3472 = vpow.pop %v3471
        %v3473 = vmul.f32 %v3373, 1.442695
        %v3474 = vpow.pop %v3473
        %v3475 = vmul.f32 %v3374, 1.442695
        %v3476 = vpow.pop %v3475
        %v3477 = vmul.f32 %v3375, 1.442695
        %v3478 = vpow.pop %v3477
        %v3479 = vmul.f32 %v3376, 1.442695
        %v3480 = vpow.pop %v3479
        %v3481 = vmul.f32 %v3377, 1.442695
        %v3482 = vpow.pop %v3481
        %v3483 = vmul.f32 %v3378, 1.442695
        %v3484 = vpow.pop %v3483
        %v3485 = vmul.f32 %v3379, 1.442695
        %v3486 = vpow.pop %v3485
        %v3487 = vmul.f32 %v3380, 1.442695
        %v3488 = vpow.pop %v3487
        %v3489 = vmul.f32 %v3381, 1.442695
        %v3490 = vpow.pop %v3489
        %v3491 = vmul.f32 %v3382, 1.442695
        %v3492 = vpow.pop %v3491
        %v3493 = vmul.f32 %v3383, 1.442695
        %v3494 = vpow.pop %v3493
        %v3495 = vmul.f32 %v3384, 1.442695
        %v3496 = vpow.pop %v3495
        %v3497 = vmul.f32 %v3385, 1.442695
        %v3498 = vpow.pop %v3497
        %v3499 = vmul.f32 %v3386, 1.442695
        %v3500 = vpow.pop %v3499
        %v3501 = vmul.f32 %v3387, 1.442695
        %v3502 = vpow.pop %v3501
        %v3503 = vmul.f32 %v3388, 1.442695
        %v3504 = vpow.pop %v3503
        %v3505 = vmul.f32 %v3389, 1.442695
        %v3506 = vpow.pop %v3505
        %v3507 = vmul.f32 %v3390, 1.442695
        %v3508 = vpow.pop %v3507
        %v3509 = vmul.f32 %v3391, 1.442695
        %v3510 = vpow.pop %v3509
        %v3511 = vmul.f32 %v3392, 1.442695
        %v3512 = vpow.pop %v3511
        %v3513 = vmul.f32 %v3393, 1.442695
        %v3514 = vpow.pop %v3513
        %v3515 = vmul.f32 %v3394, 1.442695
        %v3516 = vpow.pop %v3515
        %v3517 = vmul.f32 %v3395, 1.442695
        %v3518 = vpow.pop %v3517
        %v3519 = vmul.f32 %v3396, 1.442695
        %v3520 = vpow.pop %v3519
        %v3521 = vmul.f32 %v3397, 1.442695
        %v3522 = vpow.pop %v3521
        %v3523 = vmul.f32 %v3398, 1.442695
        %v3524 = vpow.pop %v3523
        %v3525 = vmul.f32 %v3399, 1.442695
        %v3526 = vpow.pop %v3525
        %v3527 = vmul.f32 %v3400, 1.442695
        %v3528 = vpow.pop %v3527
        %3593 = vset.pattern.permute.xlu0 0
        %3594 = vperm.xlu0 %3593, %v3402
        %v3595 = vpop.permute.xlu0 %3594
        %3596 = vset.pattern.permute.xlu0 0
        %3597 = vperm.xlu0 %3596, %v3404
        %v3598 = vpop.permute.xlu0 %3597
        %3599 = vset.pattern.permute.xlu0 0
        %3600 = vperm.xlu0 %3599, %v3406
        %v3601 = vpop.permute.xlu0 %3600
        %3602 = vset.pattern.permute.xlu0 0
        %3603 = vperm.xlu0 %3602, %v3408
        %v3604 = vpop.permute.xlu0 %3603
        %3605 = vset.pattern.permute.xlu0 0
        %3606 = vperm.xlu0 %3605, %v3410
        %v3607 = vpop.permute.xlu0 %3606
        %3608 = vset.pattern.permute.xlu0 0
        %3609 = vperm.xlu0 %3608, %v3412
        %v3610 = vpop.permute.xlu0 %3609
        %3611 = vset.pattern.permute.xlu0 0
        %3612 = vperm.xlu0 %3611, %v3414
        %v3613 = vpop.permute.xlu0 %3612
        %3614 = vset.pattern.permute.xlu0 0
        %3615 = vperm.xlu0 %3614, %v3416
        %v3616 = vpop.permute.xlu0 %3615
        %3617 = vset.pattern.permute.xlu0 0
        %3618 = vperm.xlu0 %3617, %v3418
        %v3619 = vpop.permute.xlu0 %3618
        %3620 = vset.pattern.permute.xlu0 0
        %3621 = vperm.xlu0 %3620, %v3420
        %v3622 = vpop.permute.xlu0 %3621
        %3623 = vset.pattern.permute.xlu0 0
        %3624 = vperm.xlu0 %3623, %v3422
        %v3625 = vpop.permute.xlu0 %3624
        %3626 = vset.pattern.permute.xlu0 0
        %3627 = vperm.xlu0 %3626, %v3424
        %v3628 = vpop.permute.xlu0 %3627
        %3629 = vset.pattern.permute.xlu0 0
        %3630 = vperm.xlu0 %3629, %v3426
        %v3631 = vpop.permute.xlu0 %3630
        %3632 = vset.pattern.permute.xlu0 0
        %3633 = vperm.xlu0 %3632, %v3428
        %v3634 = vpop.permute.xlu0 %3633
        %3635 = vset.pattern.permute.xlu0 0
        %3636 = vperm.xlu0 %3635, %v3430
        %v3637 = vpop.permute.xlu0 %3636
        %3638 = vset.pattern.permute.xlu0 0
        %3639 = vperm.xlu0 %3638, %v3432
        %v3640 = vpop.permute.xlu0 %3639
        %3641 = vset.pattern.permute.xlu0 0
        %3642 = vperm.xlu0 %3641, %v3434
        %v3643 = vpop.permute.xlu0 %3642
        %3644 = vset.pattern.permute.xlu0 0
        %3645 = vperm.xlu0 %3644, %v3436
        %v3646 = vpop.permute.xlu0 %3645
        %3647 = vset.pattern.permute.xlu0 0
        %3648 = vperm.xlu0 %3647, %v3438
        %v3649 = vpop.permute.xlu0 %3648
        %3650 = vset.pattern.permute.xlu0 0
        %3651 = vperm.xlu0 %3650, %v3440
        %v3652 = vpop.permute.xlu0 %3651
        %3653 = vset.pattern.permute.xlu0 0
        %3654 = vperm.xlu0 %3653, %v3442
        %v3655 = vpop.permute.xlu0 %3654
        %3656 = vset.pattern.permute.xlu0 0
        %3657 = vperm.xlu0 %3656, %v3444
        %v3658 = vpop.permute.xlu0 %3657
        %3659 = vset.pattern.permute.xlu0 0
        %3660 = vperm.xlu0 %3659, %v3446
        %v3661 = vpop.permute.xlu0 %3660
        %3662 = vset.pattern.permute.xlu0 0
        %3663 = vperm.xlu0 %3662, %v3448
        %v3664 = vpop.permute.xlu0 %3663
        %3665 = vset.pattern.permute.xlu0 0
        %3666 = vperm.xlu0 %3665, %v3450
        %v3667 = vpop.permute.xlu0 %3666
        %3668 = vset.pattern.permute.xlu0 0
        %3669 = vperm.xlu0 %3668, %v3452
        %v3670 = vpop.permute.xlu0 %3669
        %3671 = vset.pattern.permute.xlu0 0
        %3672 = vperm.xlu0 %3671, %v3454
        %v3673 = vpop.permute.xlu0 %3672
        %3674 = vset.pattern.permute.xlu0 0
        %3675 = vperm.xlu0 %3674, %v3456
        %v3676 = vpop.permute.xlu0 %3675
        %3677 = vset.pattern.permute.xlu0 0
        %3678 = vperm.xlu0 %3677, %v3458
        %v3679 = vpop.permute.xlu0 %3678
        %3680 = vset.pattern.permute.xlu0 0
        %3681 = vperm.xlu0 %3680, %v3460
        %v3682 = vpop.permute.xlu0 %3681
        %3683 = vset.pattern.permute.xlu0 0
        %3684 = vperm.xlu0 %3683, %v3462
        %v3685 = vpop.permute.xlu0 %3684
        %3686 = vset.pattern.permute.xlu0 0
        %3687 = vperm.xlu0 %3686, %v3464
        %v3688 = vpop.permute.xlu0 %3687
        %3689 = vset.pattern.permute.xlu0 0
        %3690 = vperm.xlu0 %3689, %v3466
        %v3691 = vpop.permute.xlu0 %3690
        %3692 = vset.pattern.permute.xlu0 0
        %3693 = vperm.xlu0 %3692, %v3468
        %v3694 = vpop.permute.xlu0 %3693
        %3695 = vset.pattern.permute.xlu0 0
        %3696 = vperm.xlu0 %3695, %v3470
        %v3697 = vpop.permute.xlu0 %3696
        %3698 = vset.pattern.permute.xlu0 0
        %3699 = vperm.xlu0 %3698, %v3472
        %v3700 = vpop.permute.xlu0 %3699
        %3701 = vset.pattern.permute.xlu0 0
        %3702 = vperm.xlu0 %3701, %v3474
        %v3703 = vpop.permute.xlu0 %3702
        %3704 = vset.pattern.permute.xlu0 0
        %3705 = vperm.xlu0 %3704, %v3476
        %v3706 = vpop.permute.xlu0 %3705
        %3707 = vset.pattern.permute.xlu0 0
        %3708 = vperm.xlu0 %3707, %v3478
        %v3709 = vpop.permute.xlu0 %3708
        %3710 = vset.pattern.permute.xlu0 0
        %3711 = vperm.xlu0 %3710, %v3480
        %v3712 = vpop.permute.xlu0 %3711
        %3713 = vset.pattern.permute.xlu0 0
        %3714 = vperm.xlu0 %3713, %v3482
        %v3715 = vpop.permute.xlu0 %3714
        %3716 = vset.pattern.permute.xlu0 0
        %3717 = vperm.xlu0 %3716, %v3484
        %v3718 = vpop.permute.xlu0 %3717
        %3719 = vset.pattern.permute.xlu0 0
        %3720 = vperm.xlu0 %3719, %v3486
        %v3721 = vpop.permute.xlu0 %3720
        %3722 = vset.pattern.permute.xlu0 0
        %3723 = vperm.xlu0 %3722, %v3488
        %v3724 = vpop.permute.xlu0 %3723
        %3725 = vset.pattern.permute.xlu0 0
        %3726 = vperm.xlu0 %3725, %v3490
        %v3727 = vpop.permute.xlu0 %3726
        %3728 = vset.pattern.permute.xlu0 0
        %3729 = vperm.xlu0 %3728, %v3492
        %v3730 = vpop.permute.xlu0 %3729
        %3731 = vset.pattern.permute.xlu0 0
        %3732 = vperm.xlu0 %3731, %v3494
        %v3733 = vpop.permute.xlu0 %3732
        %3734 = vset.pattern.permute.xlu0 0
        %3735 = vperm.xlu0 %3734, %v3496
        %v3736 = vpop.permute.xlu0 %3735
        %3737 = vset.pattern.permute.xlu0 0
        %3738 = vperm.xlu0 %3737, %v3498
        %v3739 = vpop.permute.xlu0 %3738
        %3740 = vset.pattern.permute.xlu0 0
        %3741 = vperm.xlu0 %3740, %v3500
        %v3742 = vpop.permute.xlu0 %3741
        %3743 = vset.pattern.permute.xlu0 0
        %3744 = vperm.xlu0 %3743, %v3502
        %v3745 = vpop.permute.xlu0 %3744
        %3746 = vset.pattern.permute.xlu0 0
        %3747 = vperm.xlu0 %3746, %v3504
        %v3748 = vpop.permute.xlu0 %3747
        %3749 = vset.pattern.permute.xlu0 0
        %3750 = vperm.xlu0 %3749, %v3506
        %v3751 = vpop.permute.xlu0 %3750
        %3752 = vset.pattern.permute.xlu0 0
        %3753 = vperm.xlu0 %3752, %v3508
        %v3754 = vpop.permute.xlu0 %3753
        %3755 = vset.pattern.permute.xlu0 0
        %3756 = vperm.xlu0 %3755, %v3510
        %v3757 = vpop.permute.xlu0 %3756
        %3758 = vset.pattern.permute.xlu0 0
        %3759 = vperm.xlu0 %3758, %v3512
        %v3760 = vpop.permute.xlu0 %3759
        %3761 = vset.pattern.permute.xlu0 0
        %3762 = vperm.xlu0 %3761, %v3514
        %v3763 = vpop.permute.xlu0 %3762
        %3764 = vset.pattern.permute.xlu0 0
        %3765 = vperm.xlu0 %3764, %v3516
        %v3766 = vpop.permute.xlu0 %3765
        %3767 = vset.pattern.permute.xlu0 0
        %3768 = vperm.xlu0 %3767, %v3518
        %v3769 = vpop.permute.xlu0 %3768
        %3770 = vset.pattern.permute.xlu0 0
        %3771 = vperm.xlu0 %3770, %v3520
        %v3772 = vpop.permute.xlu0 %3771
        %3773 = vset.pattern.permute.xlu0 0
        %3774 = vperm.xlu0 %3773, %v3522
        %v3775 = vpop.permute.xlu0 %3774
        %3776 = vset.pattern.permute.xlu0 0
        %3777 = vperm.xlu0 %3776, %v3524
        %v3778 = vpop.permute.xlu0 %3777
        %3779 = vset.pattern.permute.xlu0 0
        %3780 = vperm.xlu0 %3779, %v3526
        %v3781 = vpop.permute.xlu0 %3780
        %3782 = vset.pattern.permute.xlu0 0
        %3783 = vperm.xlu0 %3782, %v3528
        %v3784 = vpop.permute.xlu0 %3783
        %v3785 = vlaneseq
        %v3786 = vshrl.u32 %v3785, 7
        %v3787 = vsub.s32 %v891, %v3786
        %v3788 = vrot.slane %v3595, %v3787
        %v3789 = vlaneseq
        %v3790 = vshrl.u32 %v3789, 7
        %v3791 = vsub.s32 %v2835, %v3790
        %v3792 = vrot.slane %v3598, %v3791
        %v3793 = vsel %vm2840, %v3792, %v3788
        %v3794 = vlaneseq
        %v3795 = vshrl.u32 %v3794, 7
        %v3796 = vsub.s32 %v891, %v3795
        %v3797 = vrot.slane %v3601, %v3796
        %v3798 = vlaneseq
        %v3799 = vshrl.u32 %v3798, 7
        %v3800 = vsub.s32 %v2835, %v3799
        %v3801 = vrot.slane %v3604, %v3800
        %v3802 = vsel %vm2840, %v3801, %v3797
        %v3803 = vlaneseq
        %v3804 = vshrl.u32 %v3803, 7
        %v3805 = vsub.s32 %v891, %v3804
        %v3806 = vrot.slane %v3607, %v3805
        %v3807 = vlaneseq
        %v3808 = vshrl.u32 %v3807, 7
        %v3809 = vsub.s32 %v2835, %v3808
        %v3810 = vrot.slane %v3610, %v3809
        %v3811 = vsel %vm2840, %v3810, %v3806
        %v3812 = vlaneseq
        %v3813 = vshrl.u32 %v3812, 7
        %v3814 = vsub.s32 %v891, %v3813
        %v3815 = vrot.slane %v3613, %v3814
        %v3816 = vlaneseq
        %v3817 = vshrl.u32 %v3816, 7
        %v3818 = vsub.s32 %v2835, %v3817
        %v3819 = vrot.slane %v3616, %v3818
        %v3820 = vsel %vm2840, %v3819, %v3815
        %v3821 = vlaneseq
        %v3822 = vshrl.u32 %v3821, 7
        %v3823 = vsub.s32 %v891, %v3822
        %v3824 = vrot.slane %v3619, %v3823
        %v3825 = vlaneseq
        %v3826 = vshrl.u32 %v3825, 7
        %v3827 = vsub.s32 %v2835, %v3826
        %v3828 = vrot.slane %v3622, %v3827
        %v3829 = vsel %vm2840, %v3828, %v3824
        %v3830 = vlaneseq
        %v3831 = vshrl.u32 %v3830, 7
        %v3832 = vsub.s32 %v891, %v3831
        %v3833 = vrot.slane %v3625, %v3832
        %v3834 = vlaneseq
        %v3835 = vshrl.u32 %v3834, 7
        %v3836 = vsub.s32 %v2835, %v3835
        %v3837 = vrot.slane %v3628, %v3836
        %v3838 = vsel %vm2840, %v3837, %v3833
        %v3839 = vlaneseq
        %v3840 = vshrl.u32 %v3839, 7
        %v3841 = vsub.s32 %v891, %v3840
        %v3842 = vrot.slane %v3631, %v3841
        %v3843 = vlaneseq
        %v3844 = vshrl.u32 %v3843, 7
        %v3845 = vsub.s32 %v2835, %v3844
        %v3846 = vrot.slane %v3634, %v3845
        %v3847 = vsel %vm2840, %v3846, %v3842
        %v3848 = vlaneseq
        %v3849 = vshrl.u32 %v3848, 7
        %v3850 = vsub.s32 %v891, %v3849
        %v3851 = vrot.slane %v3637, %v3850
        %v3852 = vlaneseq
        %v3853 = vshrl.u32 %v3852, 7
        %v3854 = vsub.s32 %v2835, %v3853
        %v3855 = vrot.slane %v3640, %v3854
        %v3856 = vsel %vm2840, %v3855, %v3851
        %v3857 = vlaneseq
        %v3858 = vshrl.u32 %v3857, 7
        %v3859 = vsub.s32 %v891, %v3858
        %v3860 = vrot.slane %v3643, %v3859
        %v3861 = vlaneseq
        %v3862 = vshrl.u32 %v3861, 7
        %v3863 = vsub.s32 %v2835, %v3862
        %v3864 = vrot.slane %v3646, %v3863
        %v3865 = vsel %vm2840, %v3864, %v3860
        %v3866 = vlaneseq
        %v3867 = vshrl.u32 %v3866, 7
        %v3868 = vsub.s32 %v891, %v3867
        %v3869 = vrot.slane %v3649, %v3868
        %v3870 = vlaneseq
        %v3871 = vshrl.u32 %v3870, 7
        %v3872 = vsub.s32 %v2835, %v3871
        %v3873 = vrot.slane %v3652, %v3872
        %v3874 = vsel %vm2840, %v3873, %v3869
        %v3875 = vlaneseq
        %v3876 = vshrl.u32 %v3875, 7
        %v3877 = vsub.s32 %v891, %v3876
        %v3878 = vrot.slane %v3655, %v3877
        %v3879 = vlaneseq
        %v3880 = vshrl.u32 %v3879, 7
        %v3881 = vsub.s32 %v2835, %v3880
        %v3882 = vrot.slane %v3658, %v3881
        %v3883 = vsel %vm2840, %v3882, %v3878
        %v3884 = vlaneseq
        %v3885 = vshrl.u32 %v3884, 7
        %v3886 = vsub.s32 %v891, %v3885
        %v3887 = vrot.slane %v3661, %v3886
        %v3888 = vlaneseq
        %v3889 = vshrl.u32 %v3888, 7
        %v3890 = vsub.s32 %v2835, %v3889
        %v3891 = vrot.slane %v3664, %v3890
        %v3892 = vsel %vm2840, %v3891, %v3887
        %v3893 = vlaneseq
        %v3894 = vshrl.u32 %v3893, 7
        %v3895 = vsub.s32 %v891, %v3894
        %v3896 = vrot.slane %v3667, %v3895
        %v3897 = vlaneseq
        %v3898 = vshrl.u32 %v3897, 7
        %v3899 = vsub.s32 %v2835, %v3898
        %v3900 = vrot.slane %v3670, %v3899
        %v3901 = vsel %vm2840, %v3900, %v3896
        %v3902 = vlaneseq
        %v3903 = vshrl.u32 %v3902, 7
        %v3904 = vsub.s32 %v891, %v3903
        %v3905 = vrot.slane %v3673, %v3904
        %v3906 = vlaneseq
        %v3907 = vshrl.u32 %v3906, 7
        %v3908 = vsub.s32 %v2835, %v3907
        %v3909 = vrot.slane %v3676, %v3908
        %v3910 = vsel %vm2840, %v3909, %v3905
        %v3911 = vlaneseq
        %v3912 = vshrl.u32 %v3911, 7
        %v3913 = vsub.s32 %v891, %v3912
        %v3914 = vrot.slane %v3679, %v3913
        %v3915 = vlaneseq
        %v3916 = vshrl.u32 %v3915, 7
        %v3917 = vsub.s32 %v2835, %v3916
        %v3918 = vrot.slane %v3682, %v3917
        %v3919 = vsel %vm2840, %v3918, %v3914
        %v3920 = vlaneseq
        %v3921 = vshrl.u32 %v3920, 7
        %v3922 = vsub.s32 %v891, %v3921
        %v3923 = vrot.slane %v3685, %v3922
        %v3924 = vlaneseq
        %v3925 = vshrl.u32 %v3924, 7
        %v3926 = vsub.s32 %v2835, %v3925
        %v3927 = vrot.slane %v3688, %v3926
        %v3928 = vsel %vm2840, %v3927, %v3923
        %v3929 = vlaneseq
        %v3930 = vshrl.u32 %v3929, 7
        %v3931 = vsub.s32 %v891, %v3930
        %v3932 = vrot.slane %v3691, %v3931
        %v3933 = vlaneseq
        %v3934 = vshrl.u32 %v3933, 7
        %v3935 = vsub.s32 %v2835, %v3934
        %v3936 = vrot.slane %v3694, %v3935
        %v3937 = vsel %vm2840, %v3936, %v3932
        %v3938 = vlaneseq
        %v3939 = vshrl.u32 %v3938, 7
        %v3940 = vsub.s32 %v891, %v3939
        %v3941 = vrot.slane %v3697, %v3940
        %v3942 = vlaneseq
        %v3943 = vshrl.u32 %v3942, 7
        %v3944 = vsub.s32 %v2835, %v3943
        %v3945 = vrot.slane %v3700, %v3944
        %v3946 = vsel %vm2840, %v3945, %v3941
        %v3947 = vlaneseq
        %v3948 = vshrl.u32 %v3947, 7
        %v3949 = vsub.s32 %v891, %v3948
        %v3950 = vrot.slane %v3703, %v3949
        %v3951 = vlaneseq
        %v3952 = vshrl.u32 %v3951, 7
        %v3953 = vsub.s32 %v2835, %v3952
        %v3954 = vrot.slane %v3706, %v3953
        %v3955 = vsel %vm2840, %v3954, %v3950
        %v3956 = vlaneseq
        %v3957 = vshrl.u32 %v3956, 7
        %v3958 = vsub.s32 %v891, %v3957
        %v3959 = vrot.slane %v3709, %v3958
        %v3960 = vlaneseq
        %v3961 = vshrl.u32 %v3960, 7
        %v3962 = vsub.s32 %v2835, %v3961
        %v3963 = vrot.slane %v3712, %v3962
        %v3964 = vsel %vm2840, %v3963, %v3959
        %v3965 = vlaneseq
        %v3966 = vshrl.u32 %v3965, 7
        %v3967 = vsub.s32 %v891, %v3966
        %v3968 = vrot.slane %v3715, %v3967
        %v3969 = vlaneseq
        %v3970 = vshrl.u32 %v3969, 7
        %v3971 = vsub.s32 %v2835, %v3970
        %v3972 = vrot.slane %v3718, %v3971
        %v3973 = vsel %vm2840, %v3972, %v3968
        %v3974 = vlaneseq
        %v3975 = vshrl.u32 %v3974, 7
        %v3976 = vsub.s32 %v891, %v3975
        %v3977 = vrot.slane %v3721, %v3976
        %v3978 = vlaneseq
        %v3979 = vshrl.u32 %v3978, 7
        %v3980 = vsub.s32 %v2835, %v3979
        %v3981 = vrot.slane %v3724, %v3980
        %v3982 = vsel %vm2840, %v3981, %v3977
        %v3983 = vlaneseq
        %v3984 = vshrl.u32 %v3983, 7
        %v3985 = vsub.s32 %v891, %v3984
        %v3986 = vrot.slane %v3727, %v3985
        %v3987 = vlaneseq
        %v3988 = vshrl.u32 %v3987, 7
        %v3989 = vsub.s32 %v2835, %v3988
        %v3990 = vrot.slane %v3730, %v3989
        %v3991 = vsel %vm2840, %v3990, %v3986
        %v3992 = vlaneseq
        %v3993 = vshrl.u32 %v3992, 7
        %v3994 = vsub.s32 %v891, %v3993
        %v3995 = vrot.slane %v3733, %v3994
        %v3996 = vlaneseq
        %v3997 = vshrl.u32 %v3996, 7
        %v3998 = vsub.s32 %v2835, %v3997
        %v3999 = vrot.slane %v3736, %v3998
        %v4000 = vsel %vm2840, %v3999, %v3995
        %v4001 = vlaneseq
        %v4002 = vshrl.u32 %v4001, 7
        %v4003 = vsub.s32 %v891, %v4002
        %v4004 = vrot.slane %v3739, %v4003
        %v4005 = vlaneseq
        %v4006 = vshrl.u32 %v4005, 7
        %v4007 = vsub.s32 %v2835, %v4006
        %v4008 = vrot.slane %v3742, %v4007
        %v4009 = vsel %vm2840, %v4008, %v4004
        %v4010 = vlaneseq
        %v4011 = vshrl.u32 %v4010, 7
        %v4012 = vsub.s32 %v891, %v4011
        %v4013 = vrot.slane %v3745, %v4012
        %v4014 = vlaneseq
        %v4015 = vshrl.u32 %v4014, 7
        %v4016 = vsub.s32 %v2835, %v4015
        %v4017 = vrot.slane %v3748, %v4016
        %v4018 = vsel %vm2840, %v4017, %v4013
        %v4019 = vlaneseq
        %v4020 = vshrl.u32 %v4019, 7
        %v4021 = vsub.s32 %v891, %v4020
        %v4022 = vrot.slane %v3751, %v4021
        %v4023 = vlaneseq
        %v4024 = vshrl.u32 %v4023, 7
        %v4025 = vsub.s32 %v2835, %v4024
        %v4026 = vrot.slane %v3754, %v4025
        %v4027 = vsel %vm2840, %v4026, %v4022
        %v4028 = vlaneseq
        %v4029 = vshrl.u32 %v4028, 7
        %v4030 = vsub.s32 %v891, %v4029
        %v4031 = vrot.slane %v3757, %v4030
        %v4032 = vlaneseq
        %v4033 = vshrl.u32 %v4032, 7
        %v4034 = vsub.s32 %v2835, %v4033
        %v4035 = vrot.slane %v3760, %v4034
        %v4036 = vsel %vm2840, %v4035, %v4031
        %v4037 = vlaneseq
        %v4038 = vshrl.u32 %v4037, 7
        %v4039 = vsub.s32 %v891, %v4038
        %v4040 = vrot.slane %v3763, %v4039
        %v4041 = vlaneseq
        %v4042 = vshrl.u32 %v4041, 7
        %v4043 = vsub.s32 %v2835, %v4042
        %v4044 = vrot.slane %v3766, %v4043
        %v4045 = vsel %vm2840, %v4044, %v4040
        %v4046 = vlaneseq
        %v4047 = vshrl.u32 %v4046, 7
        %v4048 = vsub.s32 %v891, %v4047
        %v4049 = vrot.slane %v3769, %v4048
        %v4050 = vlaneseq
        %v4051 = vshrl.u32 %v4050, 7
        %v4052 = vsub.s32 %v2835, %v4051
        %v4053 = vrot.slane %v3772, %v4052
        %v4054 = vsel %vm2840, %v4053, %v4049
        %v4055 = vlaneseq
        %v4056 = vshrl.u32 %v4055, 7
        %v4057 = vsub.s32 %v891, %v4056
        %v4058 = vrot.slane %v3775, %v4057
        %v4059 = vlaneseq
        %v4060 = vshrl.u32 %v4059, 7
        %v4061 = vsub.s32 %v2835, %v4060
        %v4062 = vrot.slane %v3778, %v4061
        %v4063 = vsel %vm2840, %v4062, %v4058
        %v4064 = vlaneseq
        %v4065 = vshrl.u32 %v4064, 7
        %v4066 = vsub.s32 %v891, %v4065
        %v4067 = vrot.slane %v3781, %v4066
        %v4068 = vlaneseq
        %v4069 = vshrl.u32 %v4068, 7
        %v4070 = vsub.s32 %v2835, %v4069
        %v4071 = vrot.slane %v3784, %v4070
        %v4072 = vsel %vm2840, %v4071, %v4067
        %v4073 = vsel %vm3121, %v3802, %v3793
        %v4074 = vsel %vm3123, %v3811, %v4073
        %v4075 = vsel %vm3125, %v3820, %v4074
        %v4076 = vsel %vm3127, %v3829, %v4075
        %v4077 = vsel %vm3129, %v3838, %v4076
        %v4078 = vsel %vm3131, %v3847, %v4077
        %v4079 = vsel %vm3133, %v3856, %v4078
        %v4080 = vsel %vm3121, %v3874, %v3865
        %v4081 = vsel %vm3123, %v3883, %v4080
        %v4082 = vsel %vm3125, %v3892, %v4081
        %v4083 = vsel %vm3127, %v3901, %v4082
        %v4084 = vsel %vm3129, %v3910, %v4083
        %v4085 = vsel %vm3131, %v3919, %v4084
        %v4086 = vsel %vm3133, %v3928, %v4085
        %v4087 = vsel %vm3121, %v3946, %v3937
        %v4088 = vsel %vm3123, %v3955, %v4087
        %v4089 = vsel %vm3125, %v3964, %v4088
        %v4090 = vsel %vm3127, %v3973, %v4089
        %v4091 = vsel %vm3129, %v3982, %v4090
        %v4092 = vsel %vm3131, %v3991, %v4091
        %v4093 = vsel %vm3133, %v4000, %v4092
        %v4094 = vsel %vm3121, %v4018, %v4009
        %v4095 = vsel %vm3123, %v4027, %v4094
        %v4096 = vsel %vm3125, %v4036, %v4095
        %v4097 = vsel %vm3127, %v4045, %v4096
        %v4098 = vsel %vm3129, %v4054, %v4097
        %v4099 = vsel %vm3131, %v4063, %v4098
        %v4100 = vsel %vm3133, %v4072, %v4099
        %v4105 = vsel %vm3160, %v4079, 0.0
        %4106 = vadd.xlane.f32.xlu0 %v4105
        %v4107 = vpop.xlane.xlu0 %4106
        %v4108 = vsel %vm3160, %v4086, 0.0
        %4109 = vadd.xlane.f32.xlu0 %v4108
        %v4110 = vpop.xlane.xlu0 %4109
        %v4111 = vsel %vm3160, %v4093, 0.0
        %4112 = vadd.xlane.f32.xlu0 %v4111
        %v4113 = vpop.xlane.xlu0 %4112
        %v4114 = vsel %vm3160, %v4100, 0.0
        %4115 = vadd.xlane.f32.xlu0 %v4114
        %v4116 = vpop.xlane.xlu0 %4115
        %v4117 = vrcp.pop %v4107
        %v4118 = vrcp.pop %v4110
        %v4119 = vrcp.pop %v4113
        %v4120 = vrcp.pop %v4116
        %v4125 = vlaneseq
        %v4126 = vshrl.u32 %v4125, 7
        %v4127 = vsub.s32 0, %v4126
        %v4128 = vrot.slane %v4117, %v4127
        %v4129 = vlaneseq
        %v4130 = vshrl.u32 %v4129, 7
        %v4131 = vsub.s32 1, %v4130
        %v4132 = vrot.slane %v4117, %v4131
        %v4133 = vlaneseq
        %v4134 = vshrl.u32 %v4133, 7
        %v4135 = vsub.s32 2, %v4134
        %v4136 = vrot.slane %v4117, %v4135
        %v4137 = vlaneseq
        %v4138 = vshrl.u32 %v4137, 7
        %v4139 = vsub.s32 3, %v4138
        %v4140 = vrot.slane %v4117, %v4139
        %v4141 = vlaneseq
        %v4142 = vshrl.u32 %v4141, 7
        %v4143 = vsub.s32 4, %v4142
        %v4144 = vrot.slane %v4117, %v4143
        %v4145 = vlaneseq
        %v4146 = vshrl.u32 %v4145, 7
        %v4147 = vsub.s32 5, %v4146
        %v4148 = vrot.slane %v4117, %v4147
        %v4149 = vlaneseq
        %v4150 = vshrl.u32 %v4149, 7
        %v4151 = vsub.s32 6, %v4150
        %v4152 = vrot.slane %v4117, %v4151
        %v4153 = vlaneseq
        %v4154 = vshrl.u32 %v4153, 7
        %v4155 = vsub.s32 7, %v4154
        %v4156 = vrot.slane %v4117, %v4155
        %v4157 = vlaneseq
        %v4158 = vshrl.u32 %v4157, 7
        %v4159 = vsub.s32 0, %v4158
        %v4160 = vrot.slane %v4118, %v4159
        %v4161 = vlaneseq
        %v4162 = vshrl.u32 %v4161, 7
        %v4163 = vsub.s32 1, %v4162
        %v4164 = vrot.slane %v4118, %v4163
        %v4165 = vlaneseq
        %v4166 = vshrl.u32 %v4165, 7
        %v4167 = vsub.s32 2, %v4166
        %v4168 = vrot.slane %v4118, %v4167
        %v4169 = vlaneseq
        %v4170 = vshrl.u32 %v4169, 7
        %v4171 = vsub.s32 3, %v4170
        %v4172 = vrot.slane %v4118, %v4171
        %v4173 = vlaneseq
        %v4174 = vshrl.u32 %v4173, 7
        %v4175 = vsub.s32 4, %v4174
        %v4176 = vrot.slane %v4118, %v4175
        %v4177 = vlaneseq
        %v4178 = vshrl.u32 %v4177, 7
        %v4179 = vsub.s32 5, %v4178
        %v4180 = vrot.slane %v4118, %v4179
        %v4181 = vlaneseq
        %v4182 = vshrl.u32 %v4181, 7
        %v4183 = vsub.s32 6, %v4182
        %v4184 = vrot.slane %v4118, %v4183
        %v4185 = vlaneseq
        %v4186 = vshrl.u32 %v4185, 7
        %v4187 = vsub.s32 7, %v4186
        %v4188 = vrot.slane %v4118, %v4187
        %v4189 = vlaneseq
        %v4190 = vshrl.u32 %v4189, 7
        %v4191 = vsub.s32 0, %v4190
        %v4192 = vrot.slane %v4119, %v4191
        %v4193 = vlaneseq
        %v4194 = vshrl.u32 %v4193, 7
        %v4195 = vsub.s32 1, %v4194
        %v4196 = vrot.slane %v4119, %v4195
        %v4197 = vlaneseq
        %v4198 = vshrl.u32 %v4197, 7
        %v4199 = vsub.s32 2, %v4198
        %v4200 = vrot.slane %v4119, %v4199
        %v4201 = vlaneseq
        %v4202 = vshrl.u32 %v4201, 7
        %v4203 = vsub.s32 3, %v4202
        %v4204 = vrot.slane %v4119, %v4203
        %v4205 = vlaneseq
        %v4206 = vshrl.u32 %v4205, 7
        %v4207 = vsub.s32 4, %v4206
        %v4208 = vrot.slane %v4119, %v4207
        %v4209 = vlaneseq
        %v4210 = vshrl.u32 %v4209, 7
        %v4211 = vsub.s32 5, %v4210
        %v4212 = vrot.slane %v4119, %v4211
        %v4213 = vlaneseq
        %v4214 = vshrl.u32 %v4213, 7
        %v4215 = vsub.s32 6, %v4214
        %v4216 = vrot.slane %v4119, %v4215
        %v4217 = vlaneseq
        %v4218 = vshrl.u32 %v4217, 7
        %v4219 = vsub.s32 7, %v4218
        %v4220 = vrot.slane %v4119, %v4219
        %v4221 = vlaneseq
        %v4222 = vshrl.u32 %v4221, 7
        %v4223 = vsub.s32 0, %v4222
        %v4224 = vrot.slane %v4120, %v4223
        %v4225 = vlaneseq
        %v4226 = vshrl.u32 %v4225, 7
        %v4227 = vsub.s32 1, %v4226
        %v4228 = vrot.slane %v4120, %v4227
        %v4229 = vlaneseq
        %v4230 = vshrl.u32 %v4229, 7
        %v4231 = vsub.s32 2, %v4230
        %v4232 = vrot.slane %v4120, %v4231
        %v4233 = vlaneseq
        %v4234 = vshrl.u32 %v4233, 7
        %v4235 = vsub.s32 3, %v4234
        %v4236 = vrot.slane %v4120, %v4235
        %v4237 = vlaneseq
        %v4238 = vshrl.u32 %v4237, 7
        %v4239 = vsub.s32 4, %v4238
        %v4240 = vrot.slane %v4120, %v4239
        %v4241 = vlaneseq
        %v4242 = vshrl.u32 %v4241, 7
        %v4243 = vsub.s32 5, %v4242
        %v4244 = vrot.slane %v4120, %v4243
        %v4245 = vlaneseq
        %v4246 = vshrl.u32 %v4245, 7
        %v4247 = vsub.s32 6, %v4246
        %v4248 = vrot.slane %v4120, %v4247
        %v4249 = vlaneseq
        %v4250 = vshrl.u32 %v4249, 7
        %v4251 = vsub.s32 7, %v4250
        %v4252 = vrot.slane %v4120, %v4251
        %v4285 = vmul.f32 %v3402, %v4128
        %v4286 = vmul.f32 %v3404, %v4128
        %v4287 = vmul.f32 %v3406, %v4132
        %v4288 = vmul.f32 %v3408, %v4132
        %v4289 = vmul.f32 %v3410, %v4136
        %v4290 = vmul.f32 %v3412, %v4136
        %v4291 = vmul.f32 %v3414, %v4140
        %v4292 = vmul.f32 %v3416, %v4140
        %v4293 = vmul.f32 %v3418, %v4144
        %v4294 = vmul.f32 %v3420, %v4144
        %v4295 = vmul.f32 %v3422, %v4148
        %v4296 = vmul.f32 %v3424, %v4148
        %v4297 = vmul.f32 %v3426, %v4152
        %v4298 = vmul.f32 %v3428, %v4152
        %v4299 = vmul.f32 %v3430, %v4156
        %v4300 = vmul.f32 %v3432, %v4156
        %v4301 = vmul.f32 %v3434, %v4160
        %v4302 = vmul.f32 %v3436, %v4160
        %v4303 = vmul.f32 %v3438, %v4164
        %v4304 = vmul.f32 %v3440, %v4164
        %v4305 = vmul.f32 %v3442, %v4168
        %v4306 = vmul.f32 %v3444, %v4168
        %v4307 = vmul.f32 %v3446, %v4172
        %v4308 = vmul.f32 %v3448, %v4172
        %v4309 = vmul.f32 %v3450, %v4176
        %v4310 = vmul.f32 %v3452, %v4176
        %v4311 = vmul.f32 %v3454, %v4180
        %v4312 = vmul.f32 %v3456, %v4180
        %v4313 = vmul.f32 %v3458, %v4184
        %v4314 = vmul.f32 %v3460, %v4184
        %v4315 = vmul.f32 %v3462, %v4188
        %v4316 = vmul.f32 %v3464, %v4188
        %v4317 = vmul.f32 %v3466, %v4192
        %v4318 = vmul.f32 %v3468, %v4192
        %v4319 = vmul.f32 %v3470, %v4196
        %v4320 = vmul.f32 %v3472, %v4196
        %v4321 = vmul.f32 %v3474, %v4200
        %v4322 = vmul.f32 %v3476, %v4200
        %v4323 = vmul.f32 %v3478, %v4204
        %v4324 = vmul.f32 %v3480, %v4204
        %v4325 = vmul.f32 %v3482, %v4208
        %v4326 = vmul.f32 %v3484, %v4208
        %v4327 = vmul.f32 %v3486, %v4212
        %v4328 = vmul.f32 %v3488, %v4212
        %v4329 = vmul.f32 %v3490, %v4216
        %v4330 = vmul.f32 %v3492, %v4216
        %v4331 = vmul.f32 %v3494, %v4220
        %v4332 = vmul.f32 %v3496, %v4220
        %v4333 = vmul.f32 %v3498, %v4224
        %v4334 = vmul.f32 %v3500, %v4224
        %v4335 = vmul.f32 %v3502, %v4228
        %v4336 = vmul.f32 %v3504, %v4228
        %v4337 = vmul.f32 %v3506, %v4232
        %v4338 = vmul.f32 %v3508, %v4232
        %v4339 = vmul.f32 %v3510, %v4236
        %v4340 = vmul.f32 %v3512, %v4236
        %v4341 = vmul.f32 %v3514, %v4240
        %v4342 = vmul.f32 %v3516, %v4240
        %v4343 = vmul.f32 %v3518, %v4244
        %v4344 = vmul.f32 %v3520, %v4244
        %v4345 = vmul.f32 %v3522, %v4248
        %v4346 = vmul.f32 %v3524, %v4248
        %v4347 = vmul.f32 %v3526, %v4252
        %v4348 = vmul.f32 %v3528, %v4252
        %4350 = vset.pattern.permute.xlu0 0
        %4351 = vperm.xlu0 %4350, %v4285
        %v4352 = vpop.permute.xlu0 %4351
        %4355 = vset.pattern.permute.xlu0 0
        %4356 = vperm.xlu0 %4355, %v4286
        %v4357 = vpop.permute.xlu0 %4356
        %4360 = vset.pattern.permute.xlu0 0
        %4361 = vperm.xlu0 %4360, %v4287
        %v4362 = vpop.permute.xlu0 %4361
        %4365 = vset.pattern.permute.xlu0 0
        %4366 = vperm.xlu0 %4365, %v4288
        %v4367 = vpop.permute.xlu0 %4366
        %4370 = vset.pattern.permute.xlu0 0
        %4371 = vperm.xlu0 %4370, %v4289
        %v4372 = vpop.permute.xlu0 %4371
        %4375 = vset.pattern.permute.xlu0 0
        %4376 = vperm.xlu0 %4375, %v4290
        %v4377 = vpop.permute.xlu0 %4376
        %4380 = vset.pattern.permute.xlu0 0
        %4381 = vperm.xlu0 %4380, %v4291
        %v4382 = vpop.permute.xlu0 %4381
        %4385 = vset.pattern.permute.xlu0 0
        %4386 = vperm.xlu0 %4385, %v4292
        %v4387 = vpop.permute.xlu0 %4386
        %4390 = vset.pattern.permute.xlu0 0
        %4391 = vperm.xlu0 %4390, %v4293
        %v4392 = vpop.permute.xlu0 %4391
        %4395 = vset.pattern.permute.xlu0 0
        %4396 = vperm.xlu0 %4395, %v4294
        %v4397 = vpop.permute.xlu0 %4396
        %4400 = vset.pattern.permute.xlu0 0
        %4401 = vperm.xlu0 %4400, %v4295
        %v4402 = vpop.permute.xlu0 %4401
        %4405 = vset.pattern.permute.xlu0 0
        %4406 = vperm.xlu0 %4405, %v4296
        %v4407 = vpop.permute.xlu0 %4406
        %4410 = vset.pattern.permute.xlu0 0
        %4411 = vperm.xlu0 %4410, %v4297
        %v4412 = vpop.permute.xlu0 %4411
        %4415 = vset.pattern.permute.xlu0 0
        %4416 = vperm.xlu0 %4415, %v4298
        %v4417 = vpop.permute.xlu0 %4416
        %4420 = vset.pattern.permute.xlu0 0
        %4421 = vperm.xlu0 %4420, %v4299
        %v4422 = vpop.permute.xlu0 %4421
        %4425 = vset.pattern.permute.xlu0 0
        %4426 = vperm.xlu0 %4425, %v4300
        %v4427 = vpop.permute.xlu0 %4426
        %4430 = vset.pattern.permute.xlu0 0
        %4431 = vperm.xlu0 %4430, %v4301
        %v4432 = vpop.permute.xlu0 %4431
        %4435 = vset.pattern.permute.xlu0 0
        %4436 = vperm.xlu0 %4435, %v4302
        %v4437 = vpop.permute.xlu0 %4436
        %4440 = vset.pattern.permute.xlu0 0
        %4441 = vperm.xlu0 %4440, %v4303
        %v4442 = vpop.permute.xlu0 %4441
        %4445 = vset.pattern.permute.xlu0 0
        %4446 = vperm.xlu0 %4445, %v4304
        %v4447 = vpop.permute.xlu0 %4446
        %4450 = vset.pattern.permute.xlu0 0
        %4451 = vperm.xlu0 %4450, %v4305
        %v4452 = vpop.permute.xlu0 %4451
        %4455 = vset.pattern.permute.xlu0 0
        %4456 = vperm.xlu0 %4455, %v4306
        %v4457 = vpop.permute.xlu0 %4456
        %4460 = vset.pattern.permute.xlu0 0
        %4461 = vperm.xlu0 %4460, %v4307
        %v4462 = vpop.permute.xlu0 %4461
        %4465 = vset.pattern.permute.xlu0 0
        %4466 = vperm.xlu0 %4465, %v4308
        %v4467 = vpop.permute.xlu0 %4466
        %4470 = vset.pattern.permute.xlu0 0
        %4471 = vperm.xlu0 %4470, %v4309
        %v4472 = vpop.permute.xlu0 %4471
        %4475 = vset.pattern.permute.xlu0 0
        %4476 = vperm.xlu0 %4475, %v4310
        %v4477 = vpop.permute.xlu0 %4476
        %4480 = vset.pattern.permute.xlu0 0
        %4481 = vperm.xlu0 %4480, %v4311
        %v4482 = vpop.permute.xlu0 %4481
        %4485 = vset.pattern.permute.xlu0 0
        %4486 = vperm.xlu0 %4485, %v4312
        %v4487 = vpop.permute.xlu0 %4486
        %4490 = vset.pattern.permute.xlu0 0
        %4491 = vperm.xlu0 %4490, %v4313
        %v4492 = vpop.permute.xlu0 %4491
        %4495 = vset.pattern.permute.xlu0 0
        %4496 = vperm.xlu0 %4495, %v4314
        %v4497 = vpop.permute.xlu0 %4496
        %4500 = vset.pattern.permute.xlu0 0
        %4501 = vperm.xlu0 %4500, %v4315
        %v4502 = vpop.permute.xlu0 %4501
        %4505 = vset.pattern.permute.xlu0 0
        %4506 = vperm.xlu0 %4505, %v4316
        %v4507 = vpop.permute.xlu0 %4506
        %4510 = vset.pattern.permute.xlu0 0
        %4511 = vperm.xlu0 %4510, %v4317
        %v4512 = vpop.permute.xlu0 %4511
        %4515 = vset.pattern.permute.xlu0 0
        %4516 = vperm.xlu0 %4515, %v4318
        %v4517 = vpop.permute.xlu0 %4516
        %4520 = vset.pattern.permute.xlu0 0
        %4521 = vperm.xlu0 %4520, %v4319
        %v4522 = vpop.permute.xlu0 %4521
        %4525 = vset.pattern.permute.xlu0 0
        %4526 = vperm.xlu0 %4525, %v4320
        %v4527 = vpop.permute.xlu0 %4526
        %4530 = vset.pattern.permute.xlu0 0
        %4531 = vperm.xlu0 %4530, %v4321
        %v4532 = vpop.permute.xlu0 %4531
        %4535 = vset.pattern.permute.xlu0 0
        %4536 = vperm.xlu0 %4535, %v4322
        %v4537 = vpop.permute.xlu0 %4536
        %4540 = vset.pattern.permute.xlu0 0
        %4541 = vperm.xlu0 %4540, %v4323
        %v4542 = vpop.permute.xlu0 %4541
        %4545 = vset.pattern.permute.xlu0 0
        %4546 = vperm.xlu0 %4545, %v4324
        %v4547 = vpop.permute.xlu0 %4546
        %4550 = vset.pattern.permute.xlu0 0
        %4551 = vperm.xlu0 %4550, %v4325
        %v4552 = vpop.permute.xlu0 %4551
        %4555 = vset.pattern.permute.xlu0 0
        %4556 = vperm.xlu0 %4555, %v4326
        %v4557 = vpop.permute.xlu0 %4556
        %4560 = vset.pattern.permute.xlu0 0
        %4561 = vperm.xlu0 %4560, %v4327
        %v4562 = vpop.permute.xlu0 %4561
        %4565 = vset.pattern.permute.xlu0 0
        %4566 = vperm.xlu0 %4565, %v4328
        %v4567 = vpop.permute.xlu0 %4566
        %4570 = vset.pattern.permute.xlu0 0
        %4571 = vperm.xlu0 %4570, %v4329
        %v4572 = vpop.permute.xlu0 %4571
        %4575 = vset.pattern.permute.xlu0 0
        %4576 = vperm.xlu0 %4575, %v4330
        %v4577 = vpop.permute.xlu0 %4576
        %4580 = vset.pattern.permute.xlu0 0
        %4581 = vperm.xlu0 %4580, %v4331
        %v4582 = vpop.permute.xlu0 %4581
        %4585 = vset.pattern.permute.xlu0 0
        %4586 = vperm.xlu0 %4585, %v4332
        %v4587 = vpop.permute.xlu0 %4586
        %4590 = vset.pattern.permute.xlu0 0
        %4591 = vperm.xlu0 %4590, %v4333
        %v4592 = vpop.permute.xlu0 %4591
        %4595 = vset.pattern.permute.xlu0 0
        %4596 = vperm.xlu0 %4595, %v4334
        %v4597 = vpop.permute.xlu0 %4596
        %4600 = vset.pattern.permute.xlu0 0
        %4601 = vperm.xlu0 %4600, %v4335
        %v4602 = vpop.permute.xlu0 %4601
        %4605 = vset.pattern.permute.xlu0 0
        %4606 = vperm.xlu0 %4605, %v4336
        %v4607 = vpop.permute.xlu0 %4606
        %4610 = vset.pattern.permute.xlu0 0
        %4611 = vperm.xlu0 %4610, %v4337
        %v4612 = vpop.permute.xlu0 %4611
        %4615 = vset.pattern.permute.xlu0 0
        %4616 = vperm.xlu0 %4615, %v4338
        %v4617 = vpop.permute.xlu0 %4616
        %4620 = vset.pattern.permute.xlu0 0
        %4621 = vperm.xlu0 %4620, %v4339
        %v4622 = vpop.permute.xlu0 %4621
        %4625 = vset.pattern.permute.xlu0 0
        %4626 = vperm.xlu0 %4625, %v4340
        %v4627 = vpop.permute.xlu0 %4626
        %4630 = vset.pattern.permute.xlu0 0
        %4631 = vperm.xlu0 %4630, %v4341
        %v4632 = vpop.permute.xlu0 %4631
        %4635 = vset.pattern.permute.xlu0 0
        %4636 = vperm.xlu0 %4635, %v4342
        %v4637 = vpop.permute.xlu0 %4636
        %4640 = vset.pattern.permute.xlu0 0
        %4641 = vperm.xlu0 %4640, %v4343
        %v4642 = vpop.permute.xlu0 %4641
        %4645 = vset.pattern.permute.xlu0 0
        %4646 = vperm.xlu0 %4645, %v4344
        %v4647 = vpop.permute.xlu0 %4646
        %4650 = vset.pattern.permute.xlu0 0
        %4651 = vperm.xlu0 %4650, %v4345
        %v4652 = vpop.permute.xlu0 %4651
        %4655 = vset.pattern.permute.xlu0 0
        %4656 = vperm.xlu0 %4655, %v4346
        %v4657 = vpop.permute.xlu0 %4656
        %4660 = vset.pattern.permute.xlu0 0
        %4661 = vperm.xlu0 %4660, %v4347
        %v4662 = vpop.permute.xlu0 %4661
        %4665 = vset.pattern.permute.xlu0 0
        %4666 = vperm.xlu0 %4665, %v4348
        %v4667 = vpop.permute.xlu0 %4666
        %v4669 = vmul.f32 %v4352, %v511
        %v4670 = vmul.f32 %v4357, %v512
        %v4671 = vmul.f32 %v4362, %v513
        %v4672 = vmul.f32 %v4367, %v514
        %v4673 = vmul.f32 %v4372, %v515
        %v4674 = vmul.f32 %v4377, %v516
        %v4675 = vmul.f32 %v4382, %v517
        %v4676 = vmul.f32 %v4387, %v518
        %v4677 = vmul.f32 %v4392, %v519
        %v4678 = vmul.f32 %v4397, %v520
        %v4679 = vmul.f32 %v4402, %v521
        %v4680 = vmul.f32 %v4407, %v522
        %v4681 = vmul.f32 %v4412, %v523
        %v4682 = vmul.f32 %v4417, %v524
        %v4683 = vmul.f32 %v4422, %v525
        %v4684 = vmul.f32 %v4427, %v526
        %v4685 = vmul.f32 %v4432, %v527
        %v4686 = vmul.f32 %v4437, %v528
        %v4687 = vmul.f32 %v4442, %v529
        %v4688 = vmul.f32 %v4447, %v530
        %v4689 = vmul.f32 %v4452, %v531
        %v4690 = vmul.f32 %v4457, %v532
        %v4691 = vmul.f32 %v4462, %v533
        %v4692 = vmul.f32 %v4467, %v534
        %v4693 = vmul.f32 %v4472, %v535
        %v4694 = vmul.f32 %v4477, %v536
        %v4695 = vmul.f32 %v4482, %v537
        %v4696 = vmul.f32 %v4487, %v538
        %v4697 = vmul.f32 %v4492, %v539
        %v4698 = vmul.f32 %v4497, %v540
        %v4699 = vmul.f32 %v4502, %v541
        %v4700 = vmul.f32 %v4507, %v542
        %v4701 = vmul.f32 %v4512, %v543
        %v4702 = vmul.f32 %v4517, %v544
        %v4703 = vmul.f32 %v4522, %v545
        %v4704 = vmul.f32 %v4527, %v546
        %v4705 = vmul.f32 %v4532, %v547
        %v4706 = vmul.f32 %v4537, %v548
        %v4707 = vmul.f32 %v4542, %v549
        %v4708 = vmul.f32 %v4547, %v550
        %v4709 = vmul.f32 %v4552, %v551
        %v4710 = vmul.f32 %v4557, %v552
        %v4711 = vmul.f32 %v4562, %v553
        %v4712 = vmul.f32 %v4567, %v554
        %v4713 = vmul.f32 %v4572, %v555
        %v4714 = vmul.f32 %v4577, %v556
        %v4715 = vmul.f32 %v4582, %v557
        %v4716 = vmul.f32 %v4587, %v558
        %v4717 = vmul.f32 %v4592, %v559
        %v4718 = vmul.f32 %v4597, %v560
        %v4719 = vmul.f32 %v4602, %v561
        %v4720 = vmul.f32 %v4607, %v562
        %v4721 = vmul.f32 %v4612, %v563
        %v4722 = vmul.f32 %v4617, %v564
        %v4723 = vmul.f32 %v4622, %v565
        %v4724 = vmul.f32 %v4627, %v566
        %v4725 = vmul.f32 %v4632, %v567
        %v4726 = vmul.f32 %v4637, %v568
        %v4727 = vmul.f32 %v4642, %v569
        %v4728 = vmul.f32 %v4647, %v570
        %v4729 = vmul.f32 %v4652, %v571
        %v4730 = vmul.f32 %v4657, %v572
        %v4731 = vmul.f32 %v4662, %v573
        %v4732 = vmul.f32 %v4667, %v574
        %v4733 = vsel %vm2480, %v4670, 0.0
        %v4734 = vadd.f32 %v4669, %v4733
        %v4735 = vrot.slane %v4734, 4
        %v4736 = vadd.f32 %v4734, %v4735
        %v4737 = vrot.slane %v4736, 2
        %v4738 = vadd.f32 %v4736, %v4737
        %v4739 = vrot.slane %v4738, 1
        %v4740 = vadd.f32 %v4738, %v4739
        %v4741 = vsel %vm2480, %v4672, 0.0
        %v4742 = vadd.f32 %v4671, %v4741
        %v4743 = vrot.slane %v4742, 4
        %v4744 = vadd.f32 %v4742, %v4743
        %v4745 = vrot.slane %v4744, 2
        %v4746 = vadd.f32 %v4744, %v4745
        %v4747 = vrot.slane %v4746, 1
        %v4748 = vadd.f32 %v4746, %v4747
        %v4749 = vsel %vm2480, %v4674, 0.0
        %v4750 = vadd.f32 %v4673, %v4749
        %v4751 = vrot.slane %v4750, 4
        %v4752 = vadd.f32 %v4750, %v4751
        %v4753 = vrot.slane %v4752, 2
        %v4754 = vadd.f32 %v4752, %v4753
        %v4755 = vrot.slane %v4754, 1
        %v4756 = vadd.f32 %v4754, %v4755
        %v4757 = vsel %vm2480, %v4676, 0.0
        %v4758 = vadd.f32 %v4675, %v4757
        %v4759 = vrot.slane %v4758, 4
        %v4760 = vadd.f32 %v4758, %v4759
        %v4761 = vrot.slane %v4760, 2
        %v4762 = vadd.f32 %v4760, %v4761
        %v4763 = vrot.slane %v4762, 1
        %v4764 = vadd.f32 %v4762, %v4763
        %v4765 = vsel %vm2480, %v4678, 0.0
        %v4766 = vadd.f32 %v4677, %v4765
        %v4767 = vrot.slane %v4766, 4
        %v4768 = vadd.f32 %v4766, %v4767
        %v4769 = vrot.slane %v4768, 2
        %v4770 = vadd.f32 %v4768, %v4769
        %v4771 = vrot.slane %v4770, 1
        %v4772 = vadd.f32 %v4770, %v4771
        %v4773 = vsel %vm2480, %v4680, 0.0
        %v4774 = vadd.f32 %v4679, %v4773
        %v4775 = vrot.slane %v4774, 4
        %v4776 = vadd.f32 %v4774, %v4775
        %v4777 = vrot.slane %v4776, 2
        %v4778 = vadd.f32 %v4776, %v4777
        %v4779 = vrot.slane %v4778, 1
        %v4780 = vadd.f32 %v4778, %v4779
        %v4781 = vsel %vm2480, %v4682, 0.0
        %v4782 = vadd.f32 %v4681, %v4781
        %v4783 = vrot.slane %v4782, 4
        %v4784 = vadd.f32 %v4782, %v4783
        %v4785 = vrot.slane %v4784, 2
        %v4786 = vadd.f32 %v4784, %v4785
        %v4787 = vrot.slane %v4786, 1
        %v4788 = vadd.f32 %v4786, %v4787
        %v4789 = vsel %vm2480, %v4684, 0.0
        %v4790 = vadd.f32 %v4683, %v4789
        %v4791 = vrot.slane %v4790, 4
        %v4792 = vadd.f32 %v4790, %v4791
        %v4793 = vrot.slane %v4792, 2
        %v4794 = vadd.f32 %v4792, %v4793
        %v4795 = vrot.slane %v4794, 1
        %v4796 = vadd.f32 %v4794, %v4795
        %v4797 = vsel %vm2480, %v4686, 0.0
        %v4798 = vadd.f32 %v4685, %v4797
        %v4799 = vrot.slane %v4798, 4
        %v4800 = vadd.f32 %v4798, %v4799
        %v4801 = vrot.slane %v4800, 2
        %v4802 = vadd.f32 %v4800, %v4801
        %v4803 = vrot.slane %v4802, 1
        %v4804 = vadd.f32 %v4802, %v4803
        %v4805 = vsel %vm2480, %v4688, 0.0
        %v4806 = vadd.f32 %v4687, %v4805
        %v4807 = vrot.slane %v4806, 4
        %v4808 = vadd.f32 %v4806, %v4807
        %v4809 = vrot.slane %v4808, 2
        %v4810 = vadd.f32 %v4808, %v4809
        %v4811 = vrot.slane %v4810, 1
        %v4812 = vadd.f32 %v4810, %v4811
        %v4813 = vsel %vm2480, %v4690, 0.0
        %v4814 = vadd.f32 %v4689, %v4813
        %v4815 = vrot.slane %v4814, 4
        %v4816 = vadd.f32 %v4814, %v4815
        %v4817 = vrot.slane %v4816, 2
        %v4818 = vadd.f32 %v4816, %v4817
        %v4819 = vrot.slane %v4818, 1
        %v4820 = vadd.f32 %v4818, %v4819
        %v4821 = vsel %vm2480, %v4692, 0.0
        %v4822 = vadd.f32 %v4691, %v4821
        %v4823 = vrot.slane %v4822, 4
        %v4824 = vadd.f32 %v4822, %v4823
        %v4825 = vrot.slane %v4824, 2
        %v4826 = vadd.f32 %v4824, %v4825
        %v4827 = vrot.slane %v4826, 1
        %v4828 = vadd.f32 %v4826, %v4827
        %v4829 = vsel %vm2480, %v4694, 0.0
        %v4830 = vadd.f32 %v4693, %v4829
        %v4831 = vrot.slane %v4830, 4
        %v4832 = vadd.f32 %v4830, %v4831
        %v4833 = vrot.slane %v4832, 2
        %v4834 = vadd.f32 %v4832, %v4833
        %v4835 = vrot.slane %v4834, 1
        %v4836 = vadd.f32 %v4834, %v4835
        %v4837 = vsel %vm2480, %v4696, 0.0
        %v4838 = vadd.f32 %v4695, %v4837
        %v4839 = vrot.slane %v4838, 4
        %v4840 = vadd.f32 %v4838, %v4839
        %v4841 = vrot.slane %v4840, 2
        %v4842 = vadd.f32 %v4840, %v4841
        %v4843 = vrot.slane %v4842, 1
        %v4844 = vadd.f32 %v4842, %v4843
        %v4845 = vsel %vm2480, %v4698, 0.0
        %v4846 = vadd.f32 %v4697, %v4845
        %v4847 = vrot.slane %v4846, 4
        %v4848 = vadd.f32 %v4846, %v4847
        %v4849 = vrot.slane %v4848, 2
        %v4850 = vadd.f32 %v4848, %v4849
        %v4851 = vrot.slane %v4850, 1
        %v4852 = vadd.f32 %v4850, %v4851
        %v4853 = vsel %vm2480, %v4700, 0.0
        %v4854 = vadd.f32 %v4699, %v4853
        %v4855 = vrot.slane %v4854, 4
        %v4856 = vadd.f32 %v4854, %v4855
        %v4857 = vrot.slane %v4856, 2
        %v4858 = vadd.f32 %v4856, %v4857
        %v4859 = vrot.slane %v4858, 1
        %v4860 = vadd.f32 %v4858, %v4859
        %v4861 = vsel %vm2480, %v4702, 0.0
        %v4862 = vadd.f32 %v4701, %v4861
        %v4863 = vrot.slane %v4862, 4
        %v4864 = vadd.f32 %v4862, %v4863
        %v4865 = vrot.slane %v4864, 2
        %v4866 = vadd.f32 %v4864, %v4865
        %v4867 = vrot.slane %v4866, 1
        %v4868 = vadd.f32 %v4866, %v4867
        %v4869 = vsel %vm2480, %v4704, 0.0
        %v4870 = vadd.f32 %v4703, %v4869
        %v4871 = vrot.slane %v4870, 4
        %v4872 = vadd.f32 %v4870, %v4871
        %v4873 = vrot.slane %v4872, 2
        %v4874 = vadd.f32 %v4872, %v4873
        %v4875 = vrot.slane %v4874, 1
        %v4876 = vadd.f32 %v4874, %v4875
        %v4877 = vsel %vm2480, %v4706, 0.0
        %v4878 = vadd.f32 %v4705, %v4877
        %v4879 = vrot.slane %v4878, 4
        %v4880 = vadd.f32 %v4878, %v4879
        %v4881 = vrot.slane %v4880, 2
        %v4882 = vadd.f32 %v4880, %v4881
        %v4883 = vrot.slane %v4882, 1
        %v4884 = vadd.f32 %v4882, %v4883
        %v4885 = vsel %vm2480, %v4708, 0.0
        %v4886 = vadd.f32 %v4707, %v4885
        %v4887 = vrot.slane %v4886, 4
        %v4888 = vadd.f32 %v4886, %v4887
        %v4889 = vrot.slane %v4888, 2
        %v4890 = vadd.f32 %v4888, %v4889
        %v4891 = vrot.slane %v4890, 1
        %v4892 = vadd.f32 %v4890, %v4891
        %v4893 = vsel %vm2480, %v4710, 0.0
        %v4894 = vadd.f32 %v4709, %v4893
        %v4895 = vrot.slane %v4894, 4
        %v4896 = vadd.f32 %v4894, %v4895
        %v4897 = vrot.slane %v4896, 2
        %v4898 = vadd.f32 %v4896, %v4897
        %v4899 = vrot.slane %v4898, 1
        %v4900 = vadd.f32 %v4898, %v4899
        %v4901 = vsel %vm2480, %v4712, 0.0
        %v4902 = vadd.f32 %v4711, %v4901
        %v4903 = vrot.slane %v4902, 4
        %v4904 = vadd.f32 %v4902, %v4903
        %v4905 = vrot.slane %v4904, 2
        %v4906 = vadd.f32 %v4904, %v4905
        %v4907 = vrot.slane %v4906, 1
        %v4908 = vadd.f32 %v4906, %v4907
        %v4909 = vsel %vm2480, %v4714, 0.0
        %v4910 = vadd.f32 %v4713, %v4909
        %v4911 = vrot.slane %v4910, 4
        %v4912 = vadd.f32 %v4910, %v4911
        %v4913 = vrot.slane %v4912, 2
        %v4914 = vadd.f32 %v4912, %v4913
        %v4915 = vrot.slane %v4914, 1
        %v4916 = vadd.f32 %v4914, %v4915
        %v4917 = vsel %vm2480, %v4716, 0.0
        %v4918 = vadd.f32 %v4715, %v4917
        %v4919 = vrot.slane %v4918, 4
        %v4920 = vadd.f32 %v4918, %v4919
        %v4921 = vrot.slane %v4920, 2
        %v4922 = vadd.f32 %v4920, %v4921
        %v4923 = vrot.slane %v4922, 1
        %v4924 = vadd.f32 %v4922, %v4923
        %v4925 = vsel %vm2480, %v4718, 0.0
        %v4926 = vadd.f32 %v4717, %v4925
        %v4927 = vrot.slane %v4926, 4
        %v4928 = vadd.f32 %v4926, %v4927
        %v4929 = vrot.slane %v4928, 2
        %v4930 = vadd.f32 %v4928, %v4929
        %v4931 = vrot.slane %v4930, 1
        %v4932 = vadd.f32 %v4930, %v4931
        %v4933 = vsel %vm2480, %v4720, 0.0
        %v4934 = vadd.f32 %v4719, %v4933
        %v4935 = vrot.slane %v4934, 4
        %v4936 = vadd.f32 %v4934, %v4935
        %v4937 = vrot.slane %v4936, 2
        %v4938 = vadd.f32 %v4936, %v4937
        %v4939 = vrot.slane %v4938, 1
        %v4940 = vadd.f32 %v4938, %v4939
        %v4941 = vsel %vm2480, %v4722, 0.0
        %v4942 = vadd.f32 %v4721, %v4941
        %v4943 = vrot.slane %v4942, 4
        %v4944 = vadd.f32 %v4942, %v4943
        %v4945 = vrot.slane %v4944, 2
        %v4946 = vadd.f32 %v4944, %v4945
        %v4947 = vrot.slane %v4946, 1
        %v4948 = vadd.f32 %v4946, %v4947
        %v4949 = vsel %vm2480, %v4724, 0.0
        %v4950 = vadd.f32 %v4723, %v4949
        %v4951 = vrot.slane %v4950, 4
        %v4952 = vadd.f32 %v4950, %v4951
        %v4953 = vrot.slane %v4952, 2
        %v4954 = vadd.f32 %v4952, %v4953
        %v4955 = vrot.slane %v4954, 1
        %v4956 = vadd.f32 %v4954, %v4955
        %v4957 = vsel %vm2480, %v4726, 0.0
        %v4958 = vadd.f32 %v4725, %v4957
        %v4959 = vrot.slane %v4958, 4
        %v4960 = vadd.f32 %v4958, %v4959
        %v4961 = vrot.slane %v4960, 2
        %v4962 = vadd.f32 %v4960, %v4961
        %v4963 = vrot.slane %v4962, 1
        %v4964 = vadd.f32 %v4962, %v4963
        %v4965 = vsel %vm2480, %v4728, 0.0
        %v4966 = vadd.f32 %v4727, %v4965
        %v4967 = vrot.slane %v4966, 4
        %v4968 = vadd.f32 %v4966, %v4967
        %v4969 = vrot.slane %v4968, 2
        %v4970 = vadd.f32 %v4968, %v4969
        %v4971 = vrot.slane %v4970, 1
        %v4972 = vadd.f32 %v4970, %v4971
        %v4973 = vsel %vm2480, %v4730, 0.0
        %v4974 = vadd.f32 %v4729, %v4973
        %v4975 = vrot.slane %v4974, 4
        %v4976 = vadd.f32 %v4974, %v4975
        %v4977 = vrot.slane %v4976, 2
        %v4978 = vadd.f32 %v4976, %v4977
        %v4979 = vrot.slane %v4978, 1
        %v4980 = vadd.f32 %v4978, %v4979
        %v4981 = vsel %vm2480, %v4732, 0.0
        %v4982 = vadd.f32 %v4731, %v4981
        %v4983 = vrot.slane %v4982, 4
        %v4984 = vadd.f32 %v4982, %v4983
        %v4985 = vrot.slane %v4984, 2
        %v4986 = vadd.f32 %v4984, %v4985
        %v4987 = vrot.slane %v4986, 1
        %v4988 = vadd.f32 %v4986, %v4987
        %v4989 = vmul.f32 %v4352, %v1372
        %v4990 = vmul.f32 %v4357, %v1373
        %v4991 = vmul.f32 %v4362, %v1374
        %v4992 = vmul.f32 %v4367, %v1375
        %v4993 = vmul.f32 %v4372, %v1376
        %v4994 = vmul.f32 %v4377, %v1377
        %v4995 = vmul.f32 %v4382, %v1378
        %v4996 = vmul.f32 %v4387, %v1379
        %v4997 = vmul.f32 %v4392, %v1380
        %v4998 = vmul.f32 %v4397, %v1381
        %v4999 = vmul.f32 %v4402, %v1382
        %v5000 = vmul.f32 %v4407, %v1383
        %v5001 = vmul.f32 %v4412, %v1384
        %v5002 = vmul.f32 %v4417, %v1385
        %v5003 = vmul.f32 %v4422, %v1386
        %v5004 = vmul.f32 %v4427, %v1387
        %v5005 = vmul.f32 %v4432, %v1388
        %v5006 = vmul.f32 %v4437, %v1389
        %v5007 = vmul.f32 %v4442, %v1390
        %v5008 = vmul.f32 %v4447, %v1391
        %v5009 = vmul.f32 %v4452, %v1392
        %v5010 = vmul.f32 %v4457, %v1393
        %v5011 = vmul.f32 %v4462, %v1394
        %v5012 = vmul.f32 %v4467, %v1395
        %v5013 = vmul.f32 %v4472, %v1396
        %v5014 = vmul.f32 %v4477, %v1397
        %v5015 = vmul.f32 %v4482, %v1398
        %v5016 = vmul.f32 %v4487, %v1399
        %v5017 = vmul.f32 %v4492, %v1400
        %v5018 = vmul.f32 %v4497, %v1401
        %v5019 = vmul.f32 %v4502, %v1402
        %v5020 = vmul.f32 %v4507, %v1403
        %v5021 = vmul.f32 %v4512, %v1404
        %v5022 = vmul.f32 %v4517, %v1405
        %v5023 = vmul.f32 %v4522, %v1406
        %v5024 = vmul.f32 %v4527, %v1407
        %v5025 = vmul.f32 %v4532, %v1408
        %v5026 = vmul.f32 %v4537, %v1409
        %v5027 = vmul.f32 %v4542, %v1410
        %v5028 = vmul.f32 %v4547, %v1411
        %v5029 = vmul.f32 %v4552, %v1412
        %v5030 = vmul.f32 %v4557, %v1413
        %v5031 = vmul.f32 %v4562, %v1414
        %v5032 = vmul.f32 %v4567, %v1415
        %v5033 = vmul.f32 %v4572, %v1416
        %v5034 = vmul.f32 %v4577, %v1417
        %v5035 = vmul.f32 %v4582, %v1418
        %v5036 = vmul.f32 %v4587, %v1419
        %v5037 = vmul.f32 %v4592, %v1420
        %v5038 = vmul.f32 %v4597, %v1421
        %v5039 = vmul.f32 %v4602, %v1422
        %v5040 = vmul.f32 %v4607, %v1423
        %v5041 = vmul.f32 %v4612, %v1424
        %v5042 = vmul.f32 %v4617, %v1425
        %v5043 = vmul.f32 %v4622, %v1426
        %v5044 = vmul.f32 %v4627, %v1427
        %v5045 = vmul.f32 %v4632, %v1428
        %v5046 = vmul.f32 %v4637, %v1429
        %v5047 = vmul.f32 %v4642, %v1430
        %v5048 = vmul.f32 %v4647, %v1431
        %v5049 = vmul.f32 %v4652, %v1432
        %v5050 = vmul.f32 %v4657, %v1433
        %v5051 = vmul.f32 %v4662, %v1434
        %v5052 = vmul.f32 %v4667, %v1435
        %v5053 = vsel %vm1860, %v4989, 0.0
        %v5054 = vsel %vm1864, %v4990, 0.0
        %v5055 = vadd.f32 %v5053, %v5054
        %v5056 = vrot.slane %v5055, 4
        %v5057 = vadd.f32 %v5055, %v5056
        %v5058 = vrot.slane %v5057, 2
        %v5059 = vadd.f32 %v5057, %v5058
        %v5060 = vrot.slane %v5059, 1
        %v5061 = vadd.f32 %v5059, %v5060
        %v5062 = vsel %vm1860, %v4991, 0.0
        %v5063 = vsel %vm1864, %v4992, 0.0
        %v5064 = vadd.f32 %v5062, %v5063
        %v5065 = vrot.slane %v5064, 4
        %v5066 = vadd.f32 %v5064, %v5065
        %v5067 = vrot.slane %v5066, 2
        %v5068 = vadd.f32 %v5066, %v5067
        %v5069 = vrot.slane %v5068, 1
        %v5070 = vadd.f32 %v5068, %v5069
        %v5071 = vsel %vm1860, %v4993, 0.0
        %v5072 = vsel %vm1864, %v4994, 0.0
        %v5073 = vadd.f32 %v5071, %v5072
        %v5074 = vrot.slane %v5073, 4
        %v5075 = vadd.f32 %v5073, %v5074
        %v5076 = vrot.slane %v5075, 2
        %v5077 = vadd.f32 %v5075, %v5076
        %v5078 = vrot.slane %v5077, 1
        %v5079 = vadd.f32 %v5077, %v5078
        %v5080 = vsel %vm1860, %v4995, 0.0
        %v5081 = vsel %vm1864, %v4996, 0.0
        %v5082 = vadd.f32 %v5080, %v5081
        %v5083 = vrot.slane %v5082, 4
        %v5084 = vadd.f32 %v5082, %v5083
        %v5085 = vrot.slane %v5084, 2
        %v5086 = vadd.f32 %v5084, %v5085
        %v5087 = vrot.slane %v5086, 1
        %v5088 = vadd.f32 %v5086, %v5087
        %v5089 = vsel %vm1860, %v4997, 0.0
        %v5090 = vsel %vm1864, %v4998, 0.0
        %v5091 = vadd.f32 %v5089, %v5090
        %v5092 = vrot.slane %v5091, 4
        %v5093 = vadd.f32 %v5091, %v5092
        %v5094 = vrot.slane %v5093, 2
        %v5095 = vadd.f32 %v5093, %v5094
        %v5096 = vrot.slane %v5095, 1
        %v5097 = vadd.f32 %v5095, %v5096
        %v5098 = vsel %vm1860, %v4999, 0.0
        %v5099 = vsel %vm1864, %v5000, 0.0
        %v5100 = vadd.f32 %v5098, %v5099
        %v5101 = vrot.slane %v5100, 4
        %v5102 = vadd.f32 %v5100, %v5101
        %v5103 = vrot.slane %v5102, 2
        %v5104 = vadd.f32 %v5102, %v5103
        %v5105 = vrot.slane %v5104, 1
        %v5106 = vadd.f32 %v5104, %v5105
        %v5107 = vsel %vm1860, %v5001, 0.0
        %v5108 = vsel %vm1864, %v5002, 0.0
        %v5109 = vadd.f32 %v5107, %v5108
        %v5110 = vrot.slane %v5109, 4
        %v5111 = vadd.f32 %v5109, %v5110
        %v5112 = vrot.slane %v5111, 2
        %v5113 = vadd.f32 %v5111, %v5112
        %v5114 = vrot.slane %v5113, 1
        %v5115 = vadd.f32 %v5113, %v5114
        %v5116 = vsel %vm1860, %v5003, 0.0
        %v5117 = vsel %vm1864, %v5004, 0.0
        %v5118 = vadd.f32 %v5116, %v5117
        %v5119 = vrot.slane %v5118, 4
        %v5120 = vadd.f32 %v5118, %v5119
        %v5121 = vrot.slane %v5120, 2
        %v5122 = vadd.f32 %v5120, %v5121
        %v5123 = vrot.slane %v5122, 1
        %v5124 = vadd.f32 %v5122, %v5123
        %v5125 = vsel %vm1860, %v5005, 0.0
        %v5126 = vsel %vm1864, %v5006, 0.0
        %v5127 = vadd.f32 %v5125, %v5126
        %v5128 = vrot.slane %v5127, 4
        %v5129 = vadd.f32 %v5127, %v5128
        %v5130 = vrot.slane %v5129, 2
        %v5131 = vadd.f32 %v5129, %v5130
        %v5132 = vrot.slane %v5131, 1
        %v5133 = vadd.f32 %v5131, %v5132
        %v5134 = vsel %vm1860, %v5007, 0.0
        %v5135 = vsel %vm1864, %v5008, 0.0
        %v5136 = vadd.f32 %v5134, %v5135
        %v5137 = vrot.slane %v5136, 4
        %v5138 = vadd.f32 %v5136, %v5137
        %v5139 = vrot.slane %v5138, 2
        %v5140 = vadd.f32 %v5138, %v5139
        %v5141 = vrot.slane %v5140, 1
        %v5142 = vadd.f32 %v5140, %v5141
        %v5143 = vsel %vm1860, %v5009, 0.0
        %v5144 = vsel %vm1864, %v5010, 0.0
        %v5145 = vadd.f32 %v5143, %v5144
        %v5146 = vrot.slane %v5145, 4
        %v5147 = vadd.f32 %v5145, %v5146
        %v5148 = vrot.slane %v5147, 2
        %v5149 = vadd.f32 %v5147, %v5148
        %v5150 = vrot.slane %v5149, 1
        %v5151 = vadd.f32 %v5149, %v5150
        %v5152 = vsel %vm1860, %v5011, 0.0
        %v5153 = vsel %vm1864, %v5012, 0.0
        %v5154 = vadd.f32 %v5152, %v5153
        %v5155 = vrot.slane %v5154, 4
        %v5156 = vadd.f32 %v5154, %v5155
        %v5157 = vrot.slane %v5156, 2
        %v5158 = vadd.f32 %v5156, %v5157
        %v5159 = vrot.slane %v5158, 1
        %v5160 = vadd.f32 %v5158, %v5159
        %v5161 = vsel %vm1860, %v5013, 0.0
        %v5162 = vsel %vm1864, %v5014, 0.0
        %v5163 = vadd.f32 %v5161, %v5162
        %v5164 = vrot.slane %v5163, 4
        %v5165 = vadd.f32 %v5163, %v5164
        %v5166 = vrot.slane %v5165, 2
        %v5167 = vadd.f32 %v5165, %v5166
        %v5168 = vrot.slane %v5167, 1
        %v5169 = vadd.f32 %v5167, %v5168
        %v5170 = vsel %vm1860, %v5015, 0.0
        %v5171 = vsel %vm1864, %v5016, 0.0
        %v5172 = vadd.f32 %v5170, %v5171
        %v5173 = vrot.slane %v5172, 4
        %v5174 = vadd.f32 %v5172, %v5173
        %v5175 = vrot.slane %v5174, 2
        %v5176 = vadd.f32 %v5174, %v5175
        %v5177 = vrot.slane %v5176, 1
        %v5178 = vadd.f32 %v5176, %v5177
        %v5179 = vsel %vm1860, %v5017, 0.0
        %v5180 = vsel %vm1864, %v5018, 0.0
        %v5181 = vadd.f32 %v5179, %v5180
        %v5182 = vrot.slane %v5181, 4
        %v5183 = vadd.f32 %v5181, %v5182
        %v5184 = vrot.slane %v5183, 2
        %v5185 = vadd.f32 %v5183, %v5184
        %v5186 = vrot.slane %v5185, 1
        %v5187 = vadd.f32 %v5185, %v5186
        %v5188 = vsel %vm1860, %v5019, 0.0
        %v5189 = vsel %vm1864, %v5020, 0.0
        %v5190 = vadd.f32 %v5188, %v5189
        %v5191 = vrot.slane %v5190, 4
        %v5192 = vadd.f32 %v5190, %v5191
        %v5193 = vrot.slane %v5192, 2
        %v5194 = vadd.f32 %v5192, %v5193
        %v5195 = vrot.slane %v5194, 1
        %v5196 = vadd.f32 %v5194, %v5195
        %v5197 = vsel %vm1860, %v5021, 0.0
        %v5198 = vsel %vm1864, %v5022, 0.0
        %v5199 = vadd.f32 %v5197, %v5198
        %v5200 = vrot.slane %v5199, 4
        %v5201 = vadd.f32 %v5199, %v5200
        %v5202 = vrot.slane %v5201, 2
        %v5203 = vadd.f32 %v5201, %v5202
        %v5204 = vrot.slane %v5203, 1
        %v5205 = vadd.f32 %v5203, %v5204
        %v5206 = vsel %vm1860, %v5023, 0.0
        %v5207 = vsel %vm1864, %v5024, 0.0
        %v5208 = vadd.f32 %v5206, %v5207
        %v5209 = vrot.slane %v5208, 4
        %v5210 = vadd.f32 %v5208, %v5209
        %v5211 = vrot.slane %v5210, 2
        %v5212 = vadd.f32 %v5210, %v5211
        %v5213 = vrot.slane %v5212, 1
        %v5214 = vadd.f32 %v5212, %v5213
        %v5215 = vsel %vm1860, %v5025, 0.0
        %v5216 = vsel %vm1864, %v5026, 0.0
        %v5217 = vadd.f32 %v5215, %v5216
        %v5218 = vrot.slane %v5217, 4
        %v5219 = vadd.f32 %v5217, %v5218
        %v5220 = vrot.slane %v5219, 2
        %v5221 = vadd.f32 %v5219, %v5220
        %v5222 = vrot.slane %v5221, 1
        %v5223 = vadd.f32 %v5221, %v5222
        %v5224 = vsel %vm1860, %v5027, 0.0
        %v5225 = vsel %vm1864, %v5028, 0.0
        %v5226 = vadd.f32 %v5224, %v5225
        %v5227 = vrot.slane %v5226, 4
        %v5228 = vadd.f32 %v5226, %v5227
        %v5229 = vrot.slane %v5228, 2
        %v5230 = vadd.f32 %v5228, %v5229
        %v5231 = vrot.slane %v5230, 1
        %v5232 = vadd.f32 %v5230, %v5231
        %v5233 = vsel %vm1860, %v5029, 0.0
        %v5234 = vsel %vm1864, %v5030, 0.0
        %v5235 = vadd.f32 %v5233, %v5234
        %v5236 = vrot.slane %v5235, 4
        %v5237 = vadd.f32 %v5235, %v5236
        %v5238 = vrot.slane %v5237, 2
        %v5239 = vadd.f32 %v5237, %v5238
        %v5240 = vrot.slane %v5239, 1
        %v5241 = vadd.f32 %v5239, %v5240
        %v5242 = vsel %vm1860, %v5031, 0.0
        %v5243 = vsel %vm1864, %v5032, 0.0
        %v5244 = vadd.f32 %v5242, %v5243
        %v5245 = vrot.slane %v5244, 4
        %v5246 = vadd.f32 %v5244, %v5245
        %v5247 = vrot.slane %v5246, 2
        %v5248 = vadd.f32 %v5246, %v5247
        %v5249 = vrot.slane %v5248, 1
        %v5250 = vadd.f32 %v5248, %v5249
        %v5251 = vsel %vm1860, %v5033, 0.0
        %v5252 = vsel %vm1864, %v5034, 0.0
        %v5253 = vadd.f32 %v5251, %v5252
        %v5254 = vrot.slane %v5253, 4
        %v5255 = vadd.f32 %v5253, %v5254
        %v5256 = vrot.slane %v5255, 2
        %v5257 = vadd.f32 %v5255, %v5256
        %v5258 = vrot.slane %v5257, 1
        %v5259 = vadd.f32 %v5257, %v5258
        %v5260 = vsel %vm1860, %v5035, 0.0
        %v5261 = vsel %vm1864, %v5036, 0.0
        %v5262 = vadd.f32 %v5260, %v5261
        %v5263 = vrot.slane %v5262, 4
        %v5264 = vadd.f32 %v5262, %v5263
        %v5265 = vrot.slane %v5264, 2
        %v5266 = vadd.f32 %v5264, %v5265
        %v5267 = vrot.slane %v5266, 1
        %v5268 = vadd.f32 %v5266, %v5267
        %v5269 = vsel %vm1860, %v5037, 0.0
        %v5270 = vsel %vm1864, %v5038, 0.0
        %v5271 = vadd.f32 %v5269, %v5270
        %v5272 = vrot.slane %v5271, 4
        %v5273 = vadd.f32 %v5271, %v5272
        %v5274 = vrot.slane %v5273, 2
        %v5275 = vadd.f32 %v5273, %v5274
        %v5276 = vrot.slane %v5275, 1
        %v5277 = vadd.f32 %v5275, %v5276
        %v5278 = vsel %vm1860, %v5039, 0.0
        %v5279 = vsel %vm1864, %v5040, 0.0
        %v5280 = vadd.f32 %v5278, %v5279
        %v5281 = vrot.slane %v5280, 4
        %v5282 = vadd.f32 %v5280, %v5281
        %v5283 = vrot.slane %v5282, 2
        %v5284 = vadd.f32 %v5282, %v5283
        %v5285 = vrot.slane %v5284, 1
        %v5286 = vadd.f32 %v5284, %v5285
        %v5287 = vsel %vm1860, %v5041, 0.0
        %v5288 = vsel %vm1864, %v5042, 0.0
        %v5289 = vadd.f32 %v5287, %v5288
        %v5290 = vrot.slane %v5289, 4
        %v5291 = vadd.f32 %v5289, %v5290
        %v5292 = vrot.slane %v5291, 2
        %v5293 = vadd.f32 %v5291, %v5292
        %v5294 = vrot.slane %v5293, 1
        %v5295 = vadd.f32 %v5293, %v5294
        %v5296 = vsel %vm1860, %v5043, 0.0
        %v5297 = vsel %vm1864, %v5044, 0.0
        %v5298 = vadd.f32 %v5296, %v5297
        %v5299 = vrot.slane %v5298, 4
        %v5300 = vadd.f32 %v5298, %v5299
        %v5301 = vrot.slane %v5300, 2
        %v5302 = vadd.f32 %v5300, %v5301
        %v5303 = vrot.slane %v5302, 1
        %v5304 = vadd.f32 %v5302, %v5303
        %v5305 = vsel %vm1860, %v5045, 0.0
        %v5306 = vsel %vm1864, %v5046, 0.0
        %v5307 = vadd.f32 %v5305, %v5306
        %v5308 = vrot.slane %v5307, 4
        %v5309 = vadd.f32 %v5307, %v5308
        %v5310 = vrot.slane %v5309, 2
        %v5311 = vadd.f32 %v5309, %v5310
        %v5312 = vrot.slane %v5311, 1
        %v5313 = vadd.f32 %v5311, %v5312
        %v5314 = vsel %vm1860, %v5047, 0.0
        %v5315 = vsel %vm1864, %v5048, 0.0
        %v5316 = vadd.f32 %v5314, %v5315
        %v5317 = vrot.slane %v5316, 4
        %v5318 = vadd.f32 %v5316, %v5317
        %v5319 = vrot.slane %v5318, 2
        %v5320 = vadd.f32 %v5318, %v5319
        %v5321 = vrot.slane %v5320, 1
        %v5322 = vadd.f32 %v5320, %v5321
        %v5323 = vsel %vm1860, %v5049, 0.0
        %v5324 = vsel %vm1864, %v5050, 0.0
        %v5325 = vadd.f32 %v5323, %v5324
        %v5326 = vrot.slane %v5325, 4
        %v5327 = vadd.f32 %v5325, %v5326
        %v5328 = vrot.slane %v5327, 2
        %v5329 = vadd.f32 %v5327, %v5328
        %v5330 = vrot.slane %v5329, 1
        %v5331 = vadd.f32 %v5329, %v5330
        %v5332 = vsel %vm1860, %v5051, 0.0
        %v5333 = vsel %vm1864, %v5052, 0.0
        %v5334 = vadd.f32 %v5332, %v5333
        %v5335 = vrot.slane %v5334, 4
        %v5336 = vadd.f32 %v5334, %v5335
        %v5337 = vrot.slane %v5336, 2
        %v5338 = vadd.f32 %v5336, %v5337
        %v5339 = vrot.slane %v5338, 1
        %v5340 = vadd.f32 %v5338, %v5339
        %v5341 = vld [vmem:[%s5] sm:$0xff]
        %v5342 = vld [vmem:[%s5 + $0x8] sm:$0xff]
        %v5343 = vld [vmem:[%s5 + $0x10] sm:$0xff]
        %v5344 = vld [vmem:[%s5 + $0x18] sm:$0xff]
        %v5345 = vld [vmem:[%s5 + $0x20] sm:$0xff]
        %v5346 = vld [vmem:[%s5 + $0x28] sm:$0xff]
        %v5347 = vld [vmem:[%s5 + $0x30] sm:$0xff]
        %v5348 = vld [vmem:[%s5 + $0x38] sm:$0xff]
        %v5349 = vld [vmem:[%s5 + $0x40] sm:$0xff]
        %v5350 = vld [vmem:[%s5 + $0x48] sm:$0xff]
        %v5351 = vld [vmem:[%s5 + $0x50] sm:$0xff]
        %v5352 = vld [vmem:[%s5 + $0x58] sm:$0xff]
        %v5353 = vld [vmem:[%s5 + $0x60] sm:$0xff]
        %v5354 = vld [vmem:[%s5 + $0x68] sm:$0xff]
        %v5355 = vld [vmem:[%s5 + $0x70] sm:$0xff]
        %v5356 = vld [vmem:[%s5 + $0x78] sm:$0xff]
        %v5357 = vld [vmem:[%s8] sm:$0xff]
        %v5358 = vld [vmem:[%s8 + $0x8] sm:$0xff]
        %v5359 = vld [vmem:[%s8 + $0x10] sm:$0xff]
        %v5360 = vld [vmem:[%s8 + $0x18] sm:$0xff]
        %v5361 = vld [vmem:[%s8 + $0x20] sm:$0xff]
        %v5362 = vld [vmem:[%s8 + $0x28] sm:$0xff]
        %v5363 = vld [vmem:[%s8 + $0x30] sm:$0x3]
        %v5396 = vsel %vm3121, %v5070, %v5061
        %v5397 = vsel %vm3123, %v5079, %v5396
        %v5398 = vsel %vm3125, %v5088, %v5397
        %v5399 = vsel %vm3127, %v5097, %v5398
        %v5400 = vsel %vm3129, %v5106, %v5399
        %v5401 = vsel %vm3131, %v5115, %v5400
        %v5402 = vsel %vm3133, %v5124, %v5401
        %v5403 = vsel %vm3121, %v5142, %v5133
        %v5404 = vsel %vm3123, %v5151, %v5403
        %v5405 = vsel %vm3125, %v5160, %v5404
        %v5406 = vsel %vm3127, %v5169, %v5405
        %v5407 = vsel %vm3129, %v5178, %v5406
        %v5408 = vsel %vm3131, %v5187, %v5407
        %v5409 = vsel %vm3133, %v5196, %v5408
        %v5410 = vsel %vm3121, %v5214, %v5205
        %v5411 = vsel %vm3123, %v5223, %v5410
        %v5412 = vsel %vm3125, %v5232, %v5411
        %v5413 = vsel %vm3127, %v5241, %v5412
        %v5414 = vsel %vm3129, %v5250, %v5413
        %v5415 = vsel %vm3131, %v5259, %v5414
        %v5416 = vsel %vm3133, %v5268, %v5415
        %v5417 = vsel %vm3121, %v5286, %v5277
        %v5418 = vsel %vm3123, %v5295, %v5417
        %v5419 = vsel %vm3125, %v5304, %v5418
        %v5420 = vsel %vm3127, %v5313, %v5419
        %v5421 = vsel %vm3129, %v5322, %v5420
        %v5422 = vsel %vm3131, %v5331, %v5421
        %v5423 = vsel %vm3133, %v5340, %v5422
        %v5424 = vsel %vm1860, %v5402, 0
        %v5426 = vsel %vm1860, %v5409, 0
        %v5428 = vsel %vm1860, %v5416, 0
        %v5430 = vsel %vm1860, %v5423, 0
        %v5433 = vsel %vm2480, %v5363, 0
        %5435 = vmatprep.subr.mxu0 0.0
        %5436 = vmatpush1.msra.mxu0 %v5357
        %5437 = vmatprep.subr.mxu0 0.0
        %5438 = vmatpush1.msra.mxu0 %v5358
        %5439 = vmatprep.subr.mxu0 0.0
        %5440 = vmatpush1.msra.mxu0 %v5359
        %5441 = vmatprep.subr.mxu0 0.0
        %5442 = vmatpush1.msra.mxu0 %v5360
        %5443 = vmatprep.subr.mxu0 0.0
        %5444 = vmatpush1.msra.mxu0 %v5361
        %5445 = vmatprep.subr.mxu0 0.0
        %5446 = vmatpush1.msra.mxu0 %v5362
        %5447 = vmatprep.subr.mxu0 0.0
        %5448 = vmatpush1.msra.mxu0 %v5433
        %5449 = vmatprep.subr.mxu0 0.0
        %5450 = vmatpush1.msra.mxu0 0.0
        %5451 = vmatprep.subr.mxu0 0.0
        %5452 = vmatpush1.msra.mxu0 0.0
        %5453 = vmatprep.subr.mxu0 0.0
        %5454 = vmatpush1.msra.mxu0 0.0
        %5455 = vmatprep.subr.mxu0 0.0
        %5456 = vmatpush1.msra.mxu0 0.0
        %5457 = vmatprep.subr.mxu0 0.0
        %5458 = vmatpush1.msra.mxu0 0.0
        %5459 = vmatprep.subr.mxu0 0.0
        %5460 = vmatpush1.msra.mxu0 0.0
        %5461 = vmatprep.subr.mxu0 0.0
        %5462 = vmatpush1.msra.mxu0 0.0
        %5463 = vmatprep.subr.mxu0 0.0
        %5464 = vmatpush1.msra.mxu0 0.0
        %5465 = vmatprep.subr.mxu0 0.0
        %5466 = vmatpush1.msra.mxu0 0.0
        %5467 = vmatprep.subr.mxu0 0.0
        %5468 = vmatpush1.msra.mxu0 0.0
        %5469 = vmatprep.subr.mxu0 0.0
        %5470 = vmatpush1.msra.mxu0 0.0
        %5471 = vmatprep.subr.mxu0 0.0
        %5472 = vmatpush1.msra.mxu0 0.0
        %5473 = vmatprep.subr.mxu0 0.0
        %5474 = vmatpush1.msra.mxu0 0.0
        %5475 = vmatprep.subr.mxu0 0.0
        %5476 = vmatpush1.msra.mxu0 0.0
        %5477 = vmatprep.subr.mxu0 0.0
        %5478 = vmatpush1.msra.mxu0 0.0
        %5479 = vmatprep.subr.mxu0 0.0
        %5480 = vmatpush1.msra.mxu0 0.0
        %5481 = vmatprep.subr.mxu0 0.0
        %5482 = vmatpush1.msra.mxu0 0.0
        %5483 = vmatprep.subr.mxu0 0.0
        %5484 = vmatpush1.msra.mxu0 0.0
        %5485 = vmatprep.subr.mxu0 0.0
        %5486 = vmatpush1.msra.mxu0 0.0
        %5487 = vmatprep.subr.mxu0 0.0
        %5488 = vmatpush1.msra.mxu0 0.0
        %5489 = vmatprep.subr.mxu0 0.0
        %5490 = vmatpush1.msra.mxu0 0.0
        %5491 = vmatprep.subr.mxu0 0.0
        %5492 = vmatpush1.msra.mxu0 0.0
        %5493 = vmatprep.subr.mxu0 0.0
        %5494 = vmatpush1.msra.mxu0 0.0
        %5495 = vmatprep.subr.mxu0 0.0
        %5496 = vmatpush1.msra.mxu0 0.0
        %5497 = vmatprep.subr.mxu0 0.0
        %5498 = vmatpush1.msra.mxu0 0.0
        %5499 = vmatprep.mubr.f32.mxu0 0.0
        %5500 = vmatmul.mubr.f32.gmra.mrb[0].mxu0 %v5424
        %v5501 = vpop.f32.mrb[0].mxu0
        %v5502 = vadd.f32 0.0, %v5501
        %v5503 = vpop.f32.mrb[0].mxu0
        %5504 = vmatprep.mubr.f32.mxu0 0.0
        %5505 = vmatmul.mubr.f32.gmra.mrb[0].mxu0 %v5426
        %v5506 = vpop.f32.mrb[0].mxu0
        %v5507 = vadd.f32 0.0, %v5506
        %v5508 = vpop.f32.mrb[0].mxu0
        %5509 = vmatprep.mubr.f32.mxu0 0.0
        %5510 = vmatmul.mubr.f32.gmra.mrb[0].mxu0 %v5428
        %v5511 = vpop.f32.mrb[0].mxu0
        %v5512 = vadd.f32 0.0, %v5511
        %v5513 = vpop.f32.mrb[0].mxu0
        %5514 = vmatprep.mubr.f32.mxu0 0.0
        %5515 = vmatmul.mubr.f32.gmra.mrb[0].mxu0 %v5430
        %v5516 = vpop.f32.mrb[0].mxu0
        %v5517 = vadd.f32 0.0, %v5516
        %v5518 = vpop.f32.mrb[0].mxu0
        %5519 = vdwg.mxu0
        %v5552 = vsel %vm3121, %v4748, %v4740
        %v5553 = vsel %vm3123, %v4756, %v5552
        %v5554 = vsel %vm3125, %v4764, %v5553
        %v5555 = vsel %vm3127, %v4772, %v5554
        %v5556 = vsel %vm3129, %v4780, %v5555
        %v5557 = vsel %vm3131, %v4788, %v5556
        %v5558 = vsel %vm3133, %v4796, %v5557
        %v5559 = vsel %vm3121, %v4812, %v4804
        %v5560 = vsel %vm3123, %v4820, %v5559
        %v5561 = vsel %vm3125, %v4828, %v5560
        %v5562 = vsel %vm3127, %v4836, %v5561
        %v5563 = vsel %vm3129, %v4844, %v5562
        %v5564 = vsel %vm3131, %v4852, %v5563
        %v5565 = vsel %vm3133, %v4860, %v5564
        %v5566 = vsel %vm3121, %v4876, %v4868
        %v5567 = vsel %vm3123, %v4884, %v5566
        %v5568 = vsel %vm3125, %v4892, %v5567
        %v5569 = vsel %vm3127, %v4900, %v5568
        %v5570 = vsel %vm3129, %v4908, %v5569
        %v5571 = vsel %vm3131, %v4916, %v5570
        %v5572 = vsel %vm3133, %v4924, %v5571
        %v5573 = vsel %vm3121, %v4940, %v4932
        %v5574 = vsel %vm3123, %v4948, %v5573
        %v5575 = vsel %vm3125, %v4956, %v5574
        %v5576 = vsel %vm3127, %v4964, %v5575
        %v5577 = vsel %vm3129, %v4972, %v5576
        %v5578 = vsel %vm3131, %v4980, %v5577
        %v5579 = vsel %vm3133, %v4988, %v5578
        %5584 = vmatprep.subr.mxu0 0.0
        %5585 = vmatpush1.msra.mxu0 %v5341
        %5586 = vmatprep.subr.mxu0 0.0
        %5587 = vmatpush1.msra.mxu0 %v5342
        %5588 = vmatprep.subr.mxu0 0.0
        %5589 = vmatpush1.msra.mxu0 %v5343
        %5590 = vmatprep.subr.mxu0 0.0
        %5591 = vmatpush1.msra.mxu0 %v5344
        %5592 = vmatprep.subr.mxu0 0.0
        %5593 = vmatpush1.msra.mxu0 %v5345
        %5594 = vmatprep.subr.mxu0 0.0
        %5595 = vmatpush1.msra.mxu0 %v5346
        %5596 = vmatprep.subr.mxu0 0.0
        %5597 = vmatpush1.msra.mxu0 %v5347
        %5598 = vmatprep.subr.mxu0 0.0
        %5599 = vmatpush1.msra.mxu0 %v5348
        %5600 = vmatprep.subr.mxu0 0.0
        %5601 = vmatpush1.msra.mxu0 %v5349
        %5602 = vmatprep.subr.mxu0 0.0
        %5603 = vmatpush1.msra.mxu0 %v5350
        %5604 = vmatprep.subr.mxu0 0.0
        %5605 = vmatpush1.msra.mxu0 %v5351
        %5606 = vmatprep.subr.mxu0 0.0
        %5607 = vmatpush1.msra.mxu0 %v5352
        %5608 = vmatprep.subr.mxu0 0.0
        %5609 = vmatpush1.msra.mxu0 %v5353
        %5610 = vmatprep.subr.mxu0 0.0
        %5611 = vmatpush1.msra.mxu0 %v5354
        %5612 = vmatprep.subr.mxu0 0.0
        %5613 = vmatpush1.msra.mxu0 %v5355
        %5614 = vmatprep.subr.mxu0 0.0
        %5615 = vmatpush1.msra.mxu0 %v5356
        %5616 = vmatprep.subr.mxu0 0.0
        %5617 = vmatpush1.msra.mxu0 0.0
        %5618 = vmatprep.subr.mxu0 0.0
        %5619 = vmatpush1.msra.mxu0 0.0
        %5620 = vmatprep.subr.mxu0 0.0
        %5621 = vmatpush1.msra.mxu0 0.0
        %5622 = vmatprep.subr.mxu0 0.0
        %5623 = vmatpush1.msra.mxu0 0.0
        %5624 = vmatprep.subr.mxu0 0.0
        %5625 = vmatpush1.msra.mxu0 0.0
        %5626 = vmatprep.subr.mxu0 0.0
        %5627 = vmatpush1.msra.mxu0 0.0
        %5628 = vmatprep.subr.mxu0 0.0
        %5629 = vmatpush1.msra.mxu0 0.0
        %5630 = vmatprep.subr.mxu0 0.0
        %5631 = vmatpush1.msra.mxu0 0.0
        %5632 = vmatprep.subr.mxu0 0.0
        %5633 = vmatpush1.msra.mxu0 0.0
        %5634 = vmatprep.subr.mxu0 0.0
        %5635 = vmatpush1.msra.mxu0 0.0
        %5636 = vmatprep.subr.mxu0 0.0
        %5637 = vmatpush1.msra.mxu0 0.0
        %5638 = vmatprep.subr.mxu0 0.0
        %5639 = vmatpush1.msra.mxu0 0.0
        %5640 = vmatprep.subr.mxu0 0.0
        %5641 = vmatpush1.msra.mxu0 0.0
        %5642 = vmatprep.subr.mxu0 0.0
        %5643 = vmatpush1.msra.mxu0 0.0
        %5644 = vmatprep.subr.mxu0 0.0
        %5645 = vmatpush1.msra.mxu0 0.0
        %5646 = vmatprep.subr.mxu0 0.0
        %5647 = vmatpush1.msra.mxu0 0.0
        %5648 = vmatprep.mubr.f32.mxu0 0.0
        %5649 = vmatmul.mubr.f32.gmra.mrb[0].mxu0 %v5558
        %v5650 = vpop.f32.mrb[0].mxu0
        %v5651 = vadd.f32 %v5502, %v5650
        %v5652 = vpop.f32.mrb[0].mxu0
        %5653 = vmatprep.mubr.f32.mxu0 0.0
        %5654 = vmatmul.mubr.f32.gmra.mrb[0].mxu0 %v5565
        %v5655 = vpop.f32.mrb[0].mxu0
        %v5656 = vadd.f32 %v5507, %v5655
        %v5657 = vpop.f32.mrb[0].mxu0
        %5658 = vmatprep.mubr.f32.mxu0 0.0
        %5659 = vmatmul.mubr.f32.gmra.mrb[0].mxu0 %v5572
        %v5660 = vpop.f32.mrb[0].mxu0
        %v5661 = vadd.f32 %v5512, %v5660
        %v5662 = vpop.f32.mrb[0].mxu0
        %5663 = vmatprep.mubr.f32.mxu0 0.0
        %5664 = vmatmul.mubr.f32.gmra.mrb[0].mxu0 %v5579
        %v5665 = vpop.f32.mrb[0].mxu0
        %v5666 = vadd.f32 %v5517, %v5665
        %v5667 = vpop.f32.mrb[0].mxu0
        %5668 = vdwg.mxu0
        %5669 = vset.pattern.permute.xlu0 0
        %5670 = vperm.xlu0 %5669, %v583
        %v5671 = vpop.permute.xlu0 %5670
        %5672 = vset.pattern.permute.xlu0 0
        %5673 = vperm.xlu0 %5672, %v584
        %v5674 = vpop.permute.xlu0 %5673
        %5675 = vset.pattern.permute.xlu0 0
        %5676 = vperm.xlu0 %5675, %v585
        %v5677 = vpop.permute.xlu0 %5676
        %5678 = vset.pattern.permute.xlu0 0
        %5679 = vperm.xlu0 %5678, %v586
        %v5680 = vpop.permute.xlu0 %5679
        %vm5681 = vcmp.eq.s32.totalorder %v5671, %v891
        %vm5682 = vcmp.eq.s32.totalorder %v5674, %v891
        %vm5683 = vcmp.eq.s32.totalorder %v5677, %v891
        %vm5684 = vcmp.eq.s32.totalorder %v5680, %v891
        %v5685 = vsel %vm5681, 1, 0
        %v5686 = vsel %vm5682, 1, 0
        %v5687 = vsel %vm5683, 1, 0
        %v5688 = vsel %vm5684, 1, 0
        %v5689 = vcvt.s32.f32 %v5685
        %v5690 = vcvt.s32.f32 %v5686
        %v5691 = vcvt.s32.f32 %v5687
        %v5692 = vcvt.s32.f32 %v5688
        %v5693 = vlaneseq
        %v5694 = vshrl.u32 %v5693, 7
        %v5695 = vsub.s32 0, %v5694
        %v5696 = vrot.slane %v5689, %v5695
        %5698 = vbcast.lane.b32.xlu0 %v5696, 256
        %v5699 = vpop.permute.xlu0 %5698
        %s5701 = sor.u32 256, 8
        %5702 = vbcast.lane.b32.xlu0 %v5696, %s5701
        %v5703 = vpop.permute.xlu0 %5702
        %v5704 = vlaneseq
        %v5705 = vshrl.u32 %v5704, 7
        %v5706 = vsub.s32 1, %v5705
        %v5707 = vrot.slane %v5689, %v5706
        %5709 = vbcast.lane.b32.xlu0 %v5707, 256
        %v5710 = vpop.permute.xlu0 %5709
        %s5712 = sor.u32 256, 8
        %5713 = vbcast.lane.b32.xlu0 %v5707, %s5712
        %v5714 = vpop.permute.xlu0 %5713
        %v5715 = vlaneseq
        %v5716 = vshrl.u32 %v5715, 7
        %v5717 = vsub.s32 2, %v5716
        %v5718 = vrot.slane %v5689, %v5717
        %5720 = vbcast.lane.b32.xlu0 %v5718, 256
        %v5721 = vpop.permute.xlu0 %5720
        %s5723 = sor.u32 256, 8
        %5724 = vbcast.lane.b32.xlu0 %v5718, %s5723
        %v5725 = vpop.permute.xlu0 %5724
        %v5726 = vlaneseq
        %v5727 = vshrl.u32 %v5726, 7
        %v5728 = vsub.s32 3, %v5727
        %v5729 = vrot.slane %v5689, %v5728
        %5731 = vbcast.lane.b32.xlu0 %v5729, 256
        %v5732 = vpop.permute.xlu0 %5731
        %s5734 = sor.u32 256, 8
        %5735 = vbcast.lane.b32.xlu0 %v5729, %s5734
        %v5736 = vpop.permute.xlu0 %5735
        %v5737 = vlaneseq
        %v5738 = vshrl.u32 %v5737, 7
        %v5739 = vsub.s32 4, %v5738
        %v5740 = vrot.slane %v5689, %v5739
        %5742 = vbcast.lane.b32.xlu0 %v5740, 256
        %v5743 = vpop.permute.xlu0 %5742
        %s5745 = sor.u32 256, 8
        %5746 = vbcast.lane.b32.xlu0 %v5740, %s5745
        %v5747 = vpop.permute.xlu0 %5746
        %v5748 = vlaneseq
        %v5749 = vshrl.u32 %v5748, 7
        %v5750 = vsub.s32 5, %v5749
        %v5751 = vrot.slane %v5689, %v5750
        %5753 = vbcast.lane.b32.xlu0 %v5751, 256
        %v5754 = vpop.permute.xlu0 %5753
        %s5756 = sor.u32 256, 8
        %5757 = vbcast.lane.b32.xlu0 %v5751, %s5756
        %v5758 = vpop.permute.xlu0 %5757
        %v5759 = vlaneseq
        %v5760 = vshrl.u32 %v5759, 7
        %v5761 = vsub.s32 6, %v5760
        %v5762 = vrot.slane %v5689, %v5761
        %5764 = vbcast.lane.b32.xlu0 %v5762, 256
        %v5765 = vpop.permute.xlu0 %5764
        %s5767 = sor.u32 256, 8
        %5768 = vbcast.lane.b32.xlu0 %v5762, %s5767
        %v5769 = vpop.permute.xlu0 %5768
        %v5770 = vlaneseq
        %v5771 = vshrl.u32 %v5770, 7
        %v5772 = vsub.s32 7, %v5771
        %v5773 = vrot.slane %v5689, %v5772
        %5775 = vbcast.lane.b32.xlu0 %v5773, 256
        %v5776 = vpop.permute.xlu0 %5775
        %s5778 = sor.u32 256, 8
        %5779 = vbcast.lane.b32.xlu0 %v5773, %s5778
        %v5780 = vpop.permute.xlu0 %5779
        %v5781 = vlaneseq
        %v5782 = vshrl.u32 %v5781, 7
        %v5783 = vsub.s32 0, %v5782
        %v5784 = vrot.slane %v5690, %v5783
        %5786 = vbcast.lane.b32.xlu0 %v5784, 256
        %v5787 = vpop.permute.xlu0 %5786
        %s5789 = sor.u32 256, 8
        %5790 = vbcast.lane.b32.xlu0 %v5784, %s5789
        %v5791 = vpop.permute.xlu0 %5790
        %v5792 = vlaneseq
        %v5793 = vshrl.u32 %v5792, 7
        %v5794 = vsub.s32 1, %v5793
        %v5795 = vrot.slane %v5690, %v5794
        %5797 = vbcast.lane.b32.xlu0 %v5795, 256
        %v5798 = vpop.permute.xlu0 %5797
        %s5800 = sor.u32 256, 8
        %5801 = vbcast.lane.b32.xlu0 %v5795, %s5800
        %v5802 = vpop.permute.xlu0 %5801
        %v5803 = vlaneseq
        %v5804 = vshrl.u32 %v5803, 7
        %v5805 = vsub.s32 2, %v5804
        %v5806 = vrot.slane %v5690, %v5805
        %5808 = vbcast.lane.b32.xlu0 %v5806, 256
        %v5809 = vpop.permute.xlu0 %5808
        %s5811 = sor.u32 256, 8
        %5812 = vbcast.lane.b32.xlu0 %v5806, %s5811
        %v5813 = vpop.permute.xlu0 %5812
        %v5814 = vlaneseq
        %v5815 = vshrl.u32 %v5814, 7
        %v5816 = vsub.s32 3, %v5815
        %v5817 = vrot.slane %v5690, %v5816
        %5819 = vbcast.lane.b32.xlu0 %v5817, 256
        %v5820 = vpop.permute.xlu0 %5819
        %s5822 = sor.u32 256, 8
        %5823 = vbcast.lane.b32.xlu0 %v5817, %s5822
        %v5824 = vpop.permute.xlu0 %5823
        %v5825 = vlaneseq
        %v5826 = vshrl.u32 %v5825, 7
        %v5827 = vsub.s32 4, %v5826
        %v5828 = vrot.slane %v5690, %v5827
        %5830 = vbcast.lane.b32.xlu0 %v5828, 256
        %v5831 = vpop.permute.xlu0 %5830
        %s5833 = sor.u32 256, 8
        %5834 = vbcast.lane.b32.xlu0 %v5828, %s5833
        %v5835 = vpop.permute.xlu0 %5834
        %v5836 = vlaneseq
        %v5837 = vshrl.u32 %v5836, 7
        %v5838 = vsub.s32 5, %v5837
        %v5839 = vrot.slane %v5690, %v5838
        %5841 = vbcast.lane.b32.xlu0 %v5839, 256
        %v5842 = vpop.permute.xlu0 %5841
        %s5844 = sor.u32 256, 8
        %5845 = vbcast.lane.b32.xlu0 %v5839, %s5844
        %v5846 = vpop.permute.xlu0 %5845
        %v5847 = vlaneseq
        %v5848 = vshrl.u32 %v5847, 7
        %v5849 = vsub.s32 6, %v5848
        %v5850 = vrot.slane %v5690, %v5849
        %5852 = vbcast.lane.b32.xlu0 %v5850, 256
        %v5853 = vpop.permute.xlu0 %5852
        %s5855 = sor.u32 256, 8
        %5856 = vbcast.lane.b32.xlu0 %v5850, %s5855
        %v5857 = vpop.permute.xlu0 %5856
        %v5858 = vlaneseq
        %v5859 = vshrl.u32 %v5858, 7
        %v5860 = vsub.s32 7, %v5859
        %v5861 = vrot.slane %v5690, %v5860
        %5863 = vbcast.lane.b32.xlu0 %v5861, 256
        %v5864 = vpop.permute.xlu0 %5863
        %s5866 = sor.u32 256, 8
        %5867 = vbcast.lane.b32.xlu0 %v5861, %s5866
        %v5868 = vpop.permute.xlu0 %5867
        %v5869 = vlaneseq
        %v5870 = vshrl.u32 %v5869, 7
        %v5871 = vsub.s32 0, %v5870
        %v5872 = vrot.slane %v5691, %v5871
        %5874 = vbcast.lane.b32.xlu0 %v5872, 256
        %v5875 = vpop.permute.xlu0 %5874
        %s5877 = sor.u32 256, 8
        %5878 = vbcast.lane.b32.xlu0 %v5872, %s5877
        %v5879 = vpop.permute.xlu0 %5878
        %v5880 = vlaneseq
        %v5881 = vshrl.u32 %v5880, 7
        %v5882 = vsub.s32 1, %v5881
        %v5883 = vrot.slane %v5691, %v5882
        %5885 = vbcast.lane.b32.xlu0 %v5883, 256
        %v5886 = vpop.permute.xlu0 %5885
        %s5888 = sor.u32 256, 8
        %5889 = vbcast.lane.b32.xlu0 %v5883, %s5888
        %v5890 = vpop.permute.xlu0 %5889
        %v5891 = vlaneseq
        %v5892 = vshrl.u32 %v5891, 7
        %v5893 = vsub.s32 2, %v5892
        %v5894 = vrot.slane %v5691, %v5893
        %5896 = vbcast.lane.b32.xlu0 %v5894, 256
        %v5897 = vpop.permute.xlu0 %5896
        %s5899 = sor.u32 256, 8
        %5900 = vbcast.lane.b32.xlu0 %v5894, %s5899
        %v5901 = vpop.permute.xlu0 %5900
        %v5902 = vlaneseq
        %v5903 = vshrl.u32 %v5902, 7
        %v5904 = vsub.s32 3, %v5903
        %v5905 = vrot.slane %v5691, %v5904
        %5907 = vbcast.lane.b32.xlu0 %v5905, 256
        %v5908 = vpop.permute.xlu0 %5907
        %s5910 = sor.u32 256, 8
        %5911 = vbcast.lane.b32.xlu0 %v5905, %s5910
        %v5912 = vpop.permute.xlu0 %5911
        %v5913 = vlaneseq
        %v5914 = vshrl.u32 %v5913, 7
        %v5915 = vsub.s32 4, %v5914
        %v5916 = vrot.slane %v5691, %v5915
        %5918 = vbcast.lane.b32.xlu0 %v5916, 256
        %v5919 = vpop.permute.xlu0 %5918
        %s5921 = sor.u32 256, 8
        %5922 = vbcast.lane.b32.xlu0 %v5916, %s5921
        %v5923 = vpop.permute.xlu0 %5922
        %v5924 = vlaneseq
        %v5925 = vshrl.u32 %v5924, 7
        %v5926 = vsub.s32 5, %v5925
        %v5927 = vrot.slane %v5691, %v5926
        %5929 = vbcast.lane.b32.xlu0 %v5927, 256
        %v5930 = vpop.permute.xlu0 %5929
        %s5932 = sor.u32 256, 8
        %5933 = vbcast.lane.b32.xlu0 %v5927, %s5932
        %v5934 = vpop.permute.xlu0 %5933
        %v5935 = vlaneseq
        %v5936 = vshrl.u32 %v5935, 7
        %v5937 = vsub.s32 6, %v5936
        %v5938 = vrot.slane %v5691, %v5937
        %5940 = vbcast.lane.b32.xlu0 %v5938, 256
        %v5941 = vpop.permute.xlu0 %5940
        %s5943 = sor.u32 256, 8
        %5944 = vbcast.lane.b32.xlu0 %v5938, %s5943
        %v5945 = vpop.permute.xlu0 %5944
        %v5946 = vlaneseq
        %v5947 = vshrl.u32 %v5946, 7
        %v5948 = vsub.s32 7, %v5947
        %v5949 = vrot.slane %v5691, %v5948
        %5951 = vbcast.lane.b32.xlu0 %v5949, 256
        %v5952 = vpop.permute.xlu0 %5951
        %s5954 = sor.u32 256, 8
        %5955 = vbcast.lane.b32.xlu0 %v5949, %s5954
        %v5956 = vpop.permute.xlu0 %5955
        %v5957 = vlaneseq
        %v5958 = vshrl.u32 %v5957, 7
        %v5959 = vsub.s32 0, %v5958
        %v5960 = vrot.slane %v5692, %v5959
        %5962 = vbcast.lane.b32.xlu0 %v5960, 256
        %v5963 = vpop.permute.xlu0 %5962
        %s5965 = sor.u32 256, 8
        %5966 = vbcast.lane.b32.xlu0 %v5960, %s5965
        %v5967 = vpop.permute.xlu0 %5966
        %v5968 = vlaneseq
        %v5969 = vshrl.u32 %v5968, 7
        %v5970 = vsub.s32 1, %v5969
        %v5971 = vrot.slane %v5692, %v5970
        %5973 = vbcast.lane.b32.xlu0 %v5971, 256
        %v5974 = vpop.permute.xlu0 %5973
        %s5976 = sor.u32 256, 8
        %5977 = vbcast.lane.b32.xlu0 %v5971, %s5976
        %v5978 = vpop.permute.xlu0 %5977
        %v5979 = vlaneseq
        %v5980 = vshrl.u32 %v5979, 7
        %v5981 = vsub.s32 2, %v5980
        %v5982 = vrot.slane %v5692, %v5981
        %5984 = vbcast.lane.b32.xlu0 %v5982, 256
        %v5985 = vpop.permute.xlu0 %5984
        %s5987 = sor.u32 256, 8
        %5988 = vbcast.lane.b32.xlu0 %v5982, %s5987
        %v5989 = vpop.permute.xlu0 %5988
        %v5990 = vlaneseq
        %v5991 = vshrl.u32 %v5990, 7
        %v5992 = vsub.s32 3, %v5991
        %v5993 = vrot.slane %v5692, %v5992
        %5995 = vbcast.lane.b32.xlu0 %v5993, 256
        %v5996 = vpop.permute.xlu0 %5995
        %s5998 = sor.u32 256, 8
        %5999 = vbcast.lane.b32.xlu0 %v5993, %s5998
        %v6000 = vpop.permute.xlu0 %5999
        %v6001 = vlaneseq
        %v6002 = vshrl.u32 %v6001, 7
        %v6003 = vsub.s32 4, %v6002
        %v6004 = vrot.slane %v5692, %v6003
        %6006 = vbcast.lane.b32.xlu0 %v6004, 256
        %v6007 = vpop.permute.xlu0 %6006
        %s6009 = sor.u32 256, 8
        %6010 = vbcast.lane.b32.xlu0 %v6004, %s6009
        %v6011 = vpop.permute.xlu0 %6010
        %v6012 = vlaneseq
        %v6013 = vshrl.u32 %v6012, 7
        %v6014 = vsub.s32 5, %v6013
        %v6015 = vrot.slane %v5692, %v6014
        %6017 = vbcast.lane.b32.xlu0 %v6015, 256
        %v6018 = vpop.permute.xlu0 %6017
        %s6020 = sor.u32 256, 8
        %6021 = vbcast.lane.b32.xlu0 %v6015, %s6020
        %v6022 = vpop.permute.xlu0 %6021
        %v6023 = vlaneseq
        %v6024 = vshrl.u32 %v6023, 7
        %v6025 = vsub.s32 6, %v6024
        %v6026 = vrot.slane %v5692, %v6025
        %6028 = vbcast.lane.b32.xlu0 %v6026, 256
        %v6029 = vpop.permute.xlu0 %6028
        %s6031 = sor.u32 256, 8
        %6032 = vbcast.lane.b32.xlu0 %v6026, %s6031
        %v6033 = vpop.permute.xlu0 %6032
        %v6034 = vlaneseq
        %v6035 = vshrl.u32 %v6034, 7
        %v6036 = vsub.s32 7, %v6035
        %v6037 = vrot.slane %v5692, %v6036
        %6039 = vbcast.lane.b32.xlu0 %v6037, 256
        %v6040 = vpop.permute.xlu0 %6039
        %s6042 = sor.u32 256, 8
        %6043 = vbcast.lane.b32.xlu0 %v6037, %s6042
        %v6044 = vpop.permute.xlu0 %6043
        %v6045 = vmul.f32 %v5699, %v511
        %v6046 = vmul.f32 %v5703, %v512
        %v6047 = vmul.f32 %v5710, %v513
        %v6048 = vmul.f32 %v5714, %v514
        %v6049 = vmul.f32 %v5721, %v515
        %v6050 = vmul.f32 %v5725, %v516
        %v6051 = vmul.f32 %v5732, %v517
        %v6052 = vmul.f32 %v5736, %v518
        %v6053 = vmul.f32 %v5743, %v519
        %v6054 = vmul.f32 %v5747, %v520
        %v6055 = vmul.f32 %v5754, %v521
        %v6056 = vmul.f32 %v5758, %v522
        %v6057 = vmul.f32 %v5765, %v523
        %v6058 = vmul.f32 %v5769, %v524
        %v6059 = vmul.f32 %v5776, %v525
        %v6060 = vmul.f32 %v5780, %v526
        %v6061 = vmul.f32 %v5787, %v527
        %v6062 = vmul.f32 %v5791, %v528
        %v6063 = vmul.f32 %v5798, %v529
        %v6064 = vmul.f32 %v5802, %v530
        %v6065 = vmul.f32 %v5809, %v531
        %v6066 = vmul.f32 %v5813, %v532
        %v6067 = vmul.f32 %v5820, %v533
        %v6068 = vmul.f32 %v5824, %v534
        %v6069 = vmul.f32 %v5831, %v535
        %v6070 = vmul.f32 %v5835, %v536
        %v6071 = vmul.f32 %v5842, %v537
        %v6072 = vmul.f32 %v5846, %v538
        %v6073 = vmul.f32 %v5853, %v539
        %v6074 = vmul.f32 %v5857, %v540
        %v6075 = vmul.f32 %v5864, %v541
        %v6076 = vmul.f32 %v5868, %v542
        %v6077 = vmul.f32 %v5875, %v543
        %v6078 = vmul.f32 %v5879, %v544
        %v6079 = vmul.f32 %v5886, %v545
        %v6080 = vmul.f32 %v5890, %v546
        %v6081 = vmul.f32 %v5897, %v547
        %v6082 = vmul.f32 %v5901, %v548
        %v6083 = vmul.f32 %v5908, %v549
        %v6084 = vmul.f32 %v5912, %v550
        %v6085 = vmul.f32 %v5919, %v551
        %v6086 = vmul.f32 %v5923, %v552
        %v6087 = vmul.f32 %v5930, %v553
        %v6088 = vmul.f32 %v5934, %v554
        %v6089 = vmul.f32 %v5941, %v555
        %v6090 = vmul.f32 %v5945, %v556
        %v6091 = vmul.f32 %v5952, %v557
        %v6092 = vmul.f32 %v5956, %v558
        %v6093 = vmul.f32 %v5963, %v559
        %v6094 = vmul.f32 %v5967, %v560
        %v6095 = vmul.f32 %v5974, %v561
        %v6096 = vmul.f32 %v5978, %v562
        %v6097 = vmul.f32 %v5985, %v563
        %v6098 = vmul.f32 %v5989, %v564
        %v6099 = vmul.f32 %v5996, %v565
        %v6100 = vmul.f32 %v6000, %v566
        %v6101 = vmul.f32 %v6007, %v567
        %v6102 = vmul.f32 %v6011, %v568
        %v6103 = vmul.f32 %v6018, %v569
        %v6104 = vmul.f32 %v6022, %v570
        %v6105 = vmul.f32 %v6029, %v571
        %v6106 = vmul.f32 %v6033, %v572
        %v6107 = vmul.f32 %v6040, %v573
        %v6108 = vmul.f32 %v6044, %v574
        %v6109 = vsel %vm2480, %v6046, 0.0
        %v6110 = vadd.f32 %v6045, %v6109
        %v6111 = vrot.slane %v6110, 4
        %v6112 = vadd.f32 %v6110, %v6111
        %v6113 = vrot.slane %v6112, 2
        %v6114 = vadd.f32 %v6112, %v6113
        %v6115 = vrot.slane %v6114, 1
        %v6116 = vadd.f32 %v6114, %v6115
        %v6117 = vsel %vm2480, %v6048, 0.0
        %v6118 = vadd.f32 %v6047, %v6117
        %v6119 = vrot.slane %v6118, 4
        %v6120 = vadd.f32 %v6118, %v6119
        %v6121 = vrot.slane %v6120, 2
        %v6122 = vadd.f32 %v6120, %v6121
        %v6123 = vrot.slane %v6122, 1
        %v6124 = vadd.f32 %v6122, %v6123
        %v6125 = vsel %vm2480, %v6050, 0.0
        %v6126 = vadd.f32 %v6049, %v6125
        %v6127 = vrot.slane %v6126, 4
        %v6128 = vadd.f32 %v6126, %v6127
        %v6129 = vrot.slane %v6128, 2
        %v6130 = vadd.f32 %v6128, %v6129
        %v6131 = vrot.slane %v6130, 1
        %v6132 = vadd.f32 %v6130, %v6131
        %v6133 = vsel %vm2480, %v6052, 0.0
        %v6134 = vadd.f32 %v6051, %v6133
        %v6135 = vrot.slane %v6134, 4
        %v6136 = vadd.f32 %v6134, %v6135
        %v6137 = vrot.slane %v6136, 2
        %v6138 = vadd.f32 %v6136, %v6137
        %v6139 = vrot.slane %v6138, 1
        %v6140 = vadd.f32 %v6138, %v6139
        %v6141 = vsel %vm2480, %v6054, 0.0
        %v6142 = vadd.f32 %v6053, %v6141
        %v6143 = vrot.slane %v6142, 4
        %v6144 = vadd.f32 %v6142, %v6143
        %v6145 = vrot.slane %v6144, 2
        %v6146 = vadd.f32 %v6144, %v6145
        %v6147 = vrot.slane %v6146, 1
        %v6148 = vadd.f32 %v6146, %v6147
        %v6149 = vsel %vm2480, %v6056, 0.0
        %v6150 = vadd.f32 %v6055, %v6149
        %v6151 = vrot.slane %v6150, 4
        %v6152 = vadd.f32 %v6150, %v6151
        %v6153 = vrot.slane %v6152, 2
        %v6154 = vadd.f32 %v6152, %v6153
        %v6155 = vrot.slane %v6154, 1
        %v6156 = vadd.f32 %v6154, %v6155
        %v6157 = vsel %vm2480, %v6058, 0.0
        %v6158 = vadd.f32 %v6057, %v6157
        %v6159 = vrot.slane %v6158, 4
        %v6160 = vadd.f32 %v6158, %v6159
        %v6161 = vrot.slane %v6160, 2
        %v6162 = vadd.f32 %v6160, %v6161
        %v6163 = vrot.slane %v6162, 1
        %v6164 = vadd.f32 %v6162, %v6163
        %v6165 = vsel %vm2480, %v6060, 0.0
        %v6166 = vadd.f32 %v6059, %v6165
        %v6167 = vrot.slane %v6166, 4
        %v6168 = vadd.f32 %v6166, %v6167
        %v6169 = vrot.slane %v6168, 2
        %v6170 = vadd.f32 %v6168, %v6169
        %v6171 = vrot.slane %v6170, 1
        %v6172 = vadd.f32 %v6170, %v6171
        %v6173 = vsel %vm2480, %v6062, 0.0
        %v6174 = vadd.f32 %v6061, %v6173
        %v6175 = vrot.slane %v6174, 4
        %v6176 = vadd.f32 %v6174, %v6175
        %v6177 = vrot.slane %v6176, 2
        %v6178 = vadd.f32 %v6176, %v6177
        %v6179 = vrot.slane %v6178, 1
        %v6180 = vadd.f32 %v6178, %v6179
        %v6181 = vsel %vm2480, %v6064, 0.0
        %v6182 = vadd.f32 %v6063, %v6181
        %v6183 = vrot.slane %v6182, 4
        %v6184 = vadd.f32 %v6182, %v6183
        %v6185 = vrot.slane %v6184, 2
        %v6186 = vadd.f32 %v6184, %v6185
        %v6187 = vrot.slane %v6186, 1
        %v6188 = vadd.f32 %v6186, %v6187
        %v6189 = vsel %vm2480, %v6066, 0.0
        %v6190 = vadd.f32 %v6065, %v6189
        %v6191 = vrot.slane %v6190, 4
        %v6192 = vadd.f32 %v6190, %v6191
        %v6193 = vrot.slane %v6192, 2
        %v6194 = vadd.f32 %v6192, %v6193
        %v6195 = vrot.slane %v6194, 1
        %v6196 = vadd.f32 %v6194, %v6195
        %v6197 = vsel %vm2480, %v6068, 0.0
        %v6198 = vadd.f32 %v6067, %v6197
        %v6199 = vrot.slane %v6198, 4
        %v6200 = vadd.f32 %v6198, %v6199
        %v6201 = vrot.slane %v6200, 2
        %v6202 = vadd.f32 %v6200, %v6201
        %v6203 = vrot.slane %v6202, 1
        %v6204 = vadd.f32 %v6202, %v6203
        %v6205 = vsel %vm2480, %v6070, 0.0
        %v6206 = vadd.f32 %v6069, %v6205
        %v6207 = vrot.slane %v6206, 4
        %v6208 = vadd.f32 %v6206, %v6207
        %v6209 = vrot.slane %v6208, 2
        %v6210 = vadd.f32 %v6208, %v6209
        %v6211 = vrot.slane %v6210, 1
        %v6212 = vadd.f32 %v6210, %v6211
        %v6213 = vsel %vm2480, %v6072, 0.0
        %v6214 = vadd.f32 %v6071, %v6213
        %v6215 = vrot.slane %v6214, 4
        %v6216 = vadd.f32 %v6214, %v6215
        %v6217 = vrot.slane %v6216, 2
        %v6218 = vadd.f32 %v6216, %v6217
        %v6219 = vrot.slane %v6218, 1
        %v6220 = vadd.f32 %v6218, %v6219
        %v6221 = vsel %vm2480, %v6074, 0.0
        %v6222 = vadd.f32 %v6073, %v6221
        %v6223 = vrot.slane %v6222, 4
        %v6224 = vadd.f32 %v6222, %v6223
        %v6225 = vrot.slane %v6224, 2
        %v6226 = vadd.f32 %v6224, %v6225
        %v6227 = vrot.slane %v6226, 1
        %v6228 = vadd.f32 %v6226, %v6227
        %v6229 = vsel %vm2480, %v6076, 0.0
        %v6230 = vadd.f32 %v6075, %v6229
        %v6231 = vrot.slane %v6230, 4
        %v6232 = vadd.f32 %v6230, %v6231
        %v6233 = vrot.slane %v6232, 2
        %v6234 = vadd.f32 %v6232, %v6233
        %v6235 = vrot.slane %v6234, 1
        %v6236 = vadd.f32 %v6234, %v6235
        %v6237 = vsel %vm2480, %v6078, 0.0
        %v6238 = vadd.f32 %v6077, %v6237
        %v6239 = vrot.slane %v6238, 4
        %v6240 = vadd.f32 %v6238, %v6239
        %v6241 = vrot.slane %v6240, 2
        %v6242 = vadd.f32 %v6240, %v6241
        %v6243 = vrot.slane %v6242, 1
        %v6244 = vadd.f32 %v6242, %v6243
        %v6245 = vsel %vm2480, %v6080, 0.0
        %v6246 = vadd.f32 %v6079, %v6245
        %v6247 = vrot.slane %v6246, 4
        %v6248 = vadd.f32 %v6246, %v6247
        %v6249 = vrot.slane %v6248, 2
        %v6250 = vadd.f32 %v6248, %v6249
        %v6251 = vrot.slane %v6250, 1
        %v6252 = vadd.f32 %v6250, %v6251
        %v6253 = vsel %vm2480, %v6082, 0.0
        %v6254 = vadd.f32 %v6081, %v6253
        %v6255 = vrot.slane %v6254, 4
        %v6256 = vadd.f32 %v6254, %v6255
        %v6257 = vrot.slane %v6256, 2
        %v6258 = vadd.f32 %v6256, %v6257
        %v6259 = vrot.slane %v6258, 1
        %v6260 = vadd.f32 %v6258, %v6259
        %v6261 = vsel %vm2480, %v6084, 0.0
        %v6262 = vadd.f32 %v6083, %v6261
        %v6263 = vrot.slane %v6262, 4
        %v6264 = vadd.f32 %v6262, %v6263
        %v6265 = vrot.slane %v6264, 2
        %v6266 = vadd.f32 %v6264, %v6265
        %v6267 = vrot.slane %v6266, 1
        %v6268 = vadd.f32 %v6266, %v6267
        %v6269 = vsel %vm2480, %v6086, 0.0
        %v6270 = vadd.f32 %v6085, %v6269
        %v6271 = vrot.slane %v6270, 4
        %v6272 = vadd.f32 %v6270, %v6271
        %v6273 = vrot.slane %v6272, 2
        %v6274 = vadd.f32 %v6272, %v6273
        %v6275 = vrot.slane %v6274, 1
        %v6276 = vadd.f32 %v6274, %v6275
        %v6277 = vsel %vm2480, %v6088, 0.0
        %v6278 = vadd.f32 %v6087, %v6277
        %v6279 = vrot.slane %v6278, 4
        %v6280 = vadd.f32 %v6278, %v6279
        %v6281 = vrot.slane %v6280, 2
        %v6282 = vadd.f32 %v6280, %v6281
        %v6283 = vrot.slane %v6282, 1
        %v6284 = vadd.f32 %v6282, %v6283
        %v6285 = vsel %vm2480, %v6090, 0.0
        %v6286 = vadd.f32 %v6089, %v6285
        %v6287 = vrot.slane %v6286, 4
        %v6288 = vadd.f32 %v6286, %v6287
        %v6289 = vrot.slane %v6288, 2
        %v6290 = vadd.f32 %v6288, %v6289
        %v6291 = vrot.slane %v6290, 1
        %v6292 = vadd.f32 %v6290, %v6291
        %v6293 = vsel %vm2480, %v6092, 0.0
        %v6294 = vadd.f32 %v6091, %v6293
        %v6295 = vrot.slane %v6294, 4
        %v6296 = vadd.f32 %v6294, %v6295
        %v6297 = vrot.slane %v6296, 2
        %v6298 = vadd.f32 %v6296, %v6297
        %v6299 = vrot.slane %v6298, 1
        %v6300 = vadd.f32 %v6298, %v6299
        %v6301 = vsel %vm2480, %v6094, 0.0
        %v6302 = vadd.f32 %v6093, %v6301
        %v6303 = vrot.slane %v6302, 4
        %v6304 = vadd.f32 %v6302, %v6303
        %v6305 = vrot.slane %v6304, 2
        %v6306 = vadd.f32 %v6304, %v6305
        %v6307 = vrot.slane %v6306, 1
        %v6308 = vadd.f32 %v6306, %v6307
        %v6309 = vsel %vm2480, %v6096, 0.0
        %v6310 = vadd.f32 %v6095, %v6309
        %v6311 = vrot.slane %v6310, 4
        %v6312 = vadd.f32 %v6310, %v6311
        %v6313 = vrot.slane %v6312, 2
        %v6314 = vadd.f32 %v6312, %v6313
        %v6315 = vrot.slane %v6314, 1
        %v6316 = vadd.f32 %v6314, %v6315
        %v6317 = vsel %vm2480, %v6098, 0.0
        %v6318 = vadd.f32 %v6097, %v6317
        %v6319 = vrot.slane %v6318, 4
        %v6320 = vadd.f32 %v6318, %v6319
        %v6321 = vrot.slane %v6320, 2
        %v6322 = vadd.f32 %v6320, %v6321
        %v6323 = vrot.slane %v6322, 1
        %v6324 = vadd.f32 %v6322, %v6323
        %v6325 = vsel %vm2480, %v6100, 0.0
        %v6326 = vadd.f32 %v6099, %v6325
        %v6327 = vrot.slane %v6326, 4
        %v6328 = vadd.f32 %v6326, %v6327
        %v6329 = vrot.slane %v6328, 2
        %v6330 = vadd.f32 %v6328, %v6329
        %v6331 = vrot.slane %v6330, 1
        %v6332 = vadd.f32 %v6330, %v6331
        %v6333 = vsel %vm2480, %v6102, 0.0
        %v6334 = vadd.f32 %v6101, %v6333
        %v6335 = vrot.slane %v6334, 4
        %v6336 = vadd.f32 %v6334, %v6335
        %v6337 = vrot.slane %v6336, 2
        %v6338 = vadd.f32 %v6336, %v6337
        %v6339 = vrot.slane %v6338, 1
        %v6340 = vadd.f32 %v6338, %v6339
        %v6341 = vsel %vm2480, %v6104, 0.0
        %v6342 = vadd.f32 %v6103, %v6341
        %v6343 = vrot.slane %v6342, 4
        %v6344 = vadd.f32 %v6342, %v6343
        %v6345 = vrot.slane %v6344, 2
        %v6346 = vadd.f32 %v6344, %v6345
        %v6347 = vrot.slane %v6346, 1
        %v6348 = vadd.f32 %v6346, %v6347
        %v6349 = vsel %vm2480, %v6106, 0.0
        %v6350 = vadd.f32 %v6105, %v6349
        %v6351 = vrot.slane %v6350, 4
        %v6352 = vadd.f32 %v6350, %v6351
        %v6353 = vrot.slane %v6352, 2
        %v6354 = vadd.f32 %v6352, %v6353
        %v6355 = vrot.slane %v6354, 1
        %v6356 = vadd.f32 %v6354, %v6355
        %v6357 = vsel %vm2480, %v6108, 0.0
        %v6358 = vadd.f32 %v6107, %v6357
        %v6359 = vrot.slane %v6358, 4
        %v6360 = vadd.f32 %v6358, %v6359
        %v6361 = vrot.slane %v6360, 2
        %v6362 = vadd.f32 %v6360, %v6361
        %v6363 = vrot.slane %v6362, 1
        %v6364 = vadd.f32 %v6362, %v6363
        %v6397 = vsel %vm3121, %v6124, %v6116
        %v6398 = vsel %vm3123, %v6132, %v6397
        %v6399 = vsel %vm3125, %v6140, %v6398
        %v6400 = vsel %vm3127, %v6148, %v6399
        %v6401 = vsel %vm3129, %v6156, %v6400
        %v6402 = vsel %vm3131, %v6164, %v6401
        %v6403 = vsel %vm3133, %v6172, %v6402
        %v6404 = vsel %vm3121, %v6188, %v6180
        %v6405 = vsel %vm3123, %v6196, %v6404
        %v6406 = vsel %vm3125, %v6204, %v6405
        %v6407 = vsel %vm3127, %v6212, %v6406
        %v6408 = vsel %vm3129, %v6220, %v6407
        %v6409 = vsel %vm3131, %v6228, %v6408
        %v6410 = vsel %vm3133, %v6236, %v6409
        %v6411 = vsel %vm3121, %v6252, %v6244
        %v6412 = vsel %vm3123, %v6260, %v6411
        %v6413 = vsel %vm3125, %v6268, %v6412
        %v6414 = vsel %vm3127, %v6276, %v6413
        %v6415 = vsel %vm3129, %v6284, %v6414
        %v6416 = vsel %vm3131, %v6292, %v6415
        %v6417 = vsel %vm3133, %v6300, %v6416
        %v6418 = vsel %vm3121, %v6316, %v6308
        %v6419 = vsel %vm3123, %v6324, %v6418
        %v6420 = vsel %vm3125, %v6332, %v6419
        %v6421 = vsel %vm3127, %v6340, %v6420
        %v6422 = vsel %vm3129, %v6348, %v6421
        %v6423 = vsel %vm3131, %v6356, %v6422
        %v6424 = vsel %vm3133, %v6364, %v6423
        %6429 = vmatprep.subr.mxu0 0.0
        %6430 = vmatpush1.msra.mxu0 %v5341
        %6431 = vmatprep.subr.mxu0 0.0
        %6432 = vmatpush1.msra.mxu0 %v5342
        %6433 = vmatprep.subr.mxu0 0.0
        %6434 = vmatpush1.msra.mxu0 %v5343
        %6435 = vmatprep.subr.mxu0 0.0
        %6436 = vmatpush1.msra.mxu0 %v5344
        %6437 = vmatprep.subr.mxu0 0.0
        %6438 = vmatpush1.msra.mxu0 %v5345
        %6439 = vmatprep.subr.mxu0 0.0
        %6440 = vmatpush1.msra.mxu0 %v5346
        %6441 = vmatprep.subr.mxu0 0.0
        %6442 = vmatpush1.msra.mxu0 %v5347
        %6443 = vmatprep.subr.mxu0 0.0
        %6444 = vmatpush1.msra.mxu0 %v5348
        %6445 = vmatprep.subr.mxu0 0.0
        %6446 = vmatpush1.msra.mxu0 %v5349
        %6447 = vmatprep.subr.mxu0 0.0
        %6448 = vmatpush1.msra.mxu0 %v5350
        %6449 = vmatprep.subr.mxu0 0.0
        %6450 = vmatpush1.msra.mxu0 %v5351
        %6451 = vmatprep.subr.mxu0 0.0
        %6452 = vmatpush1.msra.mxu0 %v5352
        %6453 = vmatprep.subr.mxu0 0.0
        %6454 = vmatpush1.msra.mxu0 %v5353
        %6455 = vmatprep.subr.mxu0 0.0
        %6456 = vmatpush1.msra.mxu0 %v5354
        %6457 = vmatprep.subr.mxu0 0.0
        %6458 = vmatpush1.msra.mxu0 %v5355
        %6459 = vmatprep.subr.mxu0 0.0
        %6460 = vmatpush1.msra.mxu0 %v5356
        %6461 = vmatprep.subr.mxu0 0.0
        %6462 = vmatpush1.msra.mxu0 0.0
        %6463 = vmatprep.subr.mxu0 0.0
        %6464 = vmatpush1.msra.mxu0 0.0
        %6465 = vmatprep.subr.mxu0 0.0
        %6466 = vmatpush1.msra.mxu0 0.0
        %6467 = vmatprep.subr.mxu0 0.0
        %6468 = vmatpush1.msra.mxu0 0.0
        %6469 = vmatprep.subr.mxu0 0.0
        %6470 = vmatpush1.msra.mxu0 0.0
        %6471 = vmatprep.subr.mxu0 0.0
        %6472 = vmatpush1.msra.mxu0 0.0
        %6473 = vmatprep.subr.mxu0 0.0
        %6474 = vmatpush1.msra.mxu0 0.0
        %6475 = vmatprep.subr.mxu0 0.0
        %6476 = vmatpush1.msra.mxu0 0.0
        %6477 = vmatprep.subr.mxu0 0.0
        %6478 = vmatpush1.msra.mxu0 0.0
        %6479 = vmatprep.subr.mxu0 0.0
        %6480 = vmatpush1.msra.mxu0 0.0
        %6481 = vmatprep.subr.mxu0 0.0
        %6482 = vmatpush1.msra.mxu0 0.0
        %6483 = vmatprep.subr.mxu0 0.0
        %6484 = vmatpush1.msra.mxu0 0.0
        %6485 = vmatprep.subr.mxu0 0.0
        %6486 = vmatpush1.msra.mxu0 0.0
        %6487 = vmatprep.subr.mxu0 0.0
        %6488 = vmatpush1.msra.mxu0 0.0
        %6489 = vmatprep.subr.mxu0 0.0
        %6490 = vmatpush1.msra.mxu0 0.0
        %6491 = vmatprep.subr.mxu0 0.0
        %6492 = vmatpush1.msra.mxu0 0.0
        %6493 = vmatprep.mubr.f32.mxu0 0.0
        %6494 = vmatmul.mubr.f32.gmra.mrb[0].mxu0 %v6403
        %v6495 = vpop.f32.mrb[0].mxu0
        %v6496 = vadd.f32 0.0, %v6495
        %v6497 = vpop.f32.mrb[0].mxu0
        %6498 = vmatprep.mubr.f32.mxu0 0.0
        %6499 = vmatmul.mubr.f32.gmra.mrb[0].mxu0 %v6410
        %v6500 = vpop.f32.mrb[0].mxu0
        %v6501 = vadd.f32 0.0, %v6500
        %v6502 = vpop.f32.mrb[0].mxu0
        %6503 = vmatprep.mubr.f32.mxu0 0.0
        %6504 = vmatmul.mubr.f32.gmra.mrb[0].mxu0 %v6417
        %v6505 = vpop.f32.mrb[0].mxu0
        %v6506 = vadd.f32 0.0, %v6505
        %v6507 = vpop.f32.mrb[0].mxu0
        %6508 = vmatprep.mubr.f32.mxu0 0.0
        %6509 = vmatmul.mubr.f32.gmra.mrb[0].mxu0 %v6424
        %v6510 = vpop.f32.mrb[0].mxu0
        %v6511 = vadd.f32 0.0, %v6510
        %v6512 = vpop.f32.mrb[0].mxu0
        %6513 = vdwg.mxu0
        %6514 = vmatprep.subr.mxu0 0.0
        %6515 = vmatpush1.msra.mxu0 %v688
        %6516 = vmatprep.subr.mxu0 0.0
        %6517 = vmatpush1.msra.mxu0 %v689
        %6518 = vmatprep.subr.mxu0 0.0
        %6519 = vmatpush1.msra.mxu0 %v690
        %6520 = vmatprep.subr.mxu0 0.0
        %6521 = vmatpush1.msra.mxu0 %v691
        %6522 = vmatprep.subr.mxu0 0.0
        %6523 = vmatpush1.msra.mxu0 %v692
        %6524 = vmatprep.subr.mxu0 0.0
        %6525 = vmatpush1.msra.mxu0 %v693
        %6526 = vmatprep.subr.mxu0 0.0
        %6527 = vmatpush1.msra.mxu0 %v694
        %6528 = vmatprep.subr.mxu0 0.0
        %6529 = vmatpush1.msra.mxu0 %v695
        %6530 = vmatprep.subr.mxu0 0.0
        %6531 = vmatpush1.msra.mxu0 %v696
        %6532 = vmatprep.subr.mxu0 0.0
        %6533 = vmatpush1.msra.mxu0 %v697
        %6534 = vmatprep.subr.mxu0 0.0
        %6535 = vmatpush1.msra.mxu0 %v698
        %6536 = vmatprep.subr.mxu0 0.0
        %6537 = vmatpush1.msra.mxu0 %v699
        %6538 = vmatprep.subr.mxu0 0.0
        %6539 = vmatpush1.msra.mxu0 %v700
        %6540 = vmatprep.subr.mxu0 0.0
        %6541 = vmatpush1.msra.mxu0 %v701
        %6542 = vmatprep.subr.mxu0 0.0
        %6543 = vmatpush1.msra.mxu0 %v702
        %6544 = vmatprep.subr.mxu0 0.0
        %6545 = vmatpush1.msra.mxu0 %v703
        %6546 = vmatprep.subr.mxu0 0.0
        %6547 = vmatpush1.msra.mxu0 0.0
        %6548 = vmatprep.subr.mxu0 0.0
        %6549 = vmatpush1.msra.mxu0 0.0
        %6550 = vmatprep.subr.mxu0 0.0
        %6551 = vmatpush1.msra.mxu0 0.0
        %6552 = vmatprep.subr.mxu0 0.0
        %6553 = vmatpush1.msra.mxu0 0.0
        %6554 = vmatprep.subr.mxu0 0.0
        %6555 = vmatpush1.msra.mxu0 0.0
        %6556 = vmatprep.subr.mxu0 0.0
        %6557 = vmatpush1.msra.mxu0 0.0
        %6558 = vmatprep.subr.mxu0 0.0
        %6559 = vmatpush1.msra.mxu0 0.0
        %6560 = vmatprep.subr.mxu0 0.0
        %6561 = vmatpush1.msra.mxu0 0.0
        %6562 = vmatprep.subr.mxu0 0.0
        %6563 = vmatpush1.msra.mxu0 0.0
        %6564 = vmatprep.subr.mxu0 0.0
        %6565 = vmatpush1.msra.mxu0 0.0
        %6566 = vmatprep.subr.mxu0 0.0
        %6567 = vmatpush1.msra.mxu0 0.0
        %6568 = vmatprep.subr.mxu0 0.0
        %6569 = vmatpush1.msra.mxu0 0.0
        %6570 = vmatprep.subr.mxu0 0.0
        %6571 = vmatpush1.msra.mxu0 0.0
        %6572 = vmatprep.subr.mxu0 0.0
        %6573 = vmatpush1.msra.mxu0 0.0
        %6574 = vmatprep.subr.mxu0 0.0
        %6575 = vmatpush1.msra.mxu0 0.0
        %6576 = vmatprep.subr.mxu0 0.0
        %6577 = vmatpush1.msra.mxu0 0.0
        %6578 = vmatprep.mubr.f32.mxu0 0.0
        %6579 = vmatmul.mubr.f32.gmra.mrb[0].mxu0 %v6496
        %v6580 = vpop.f32.mrb[0].mxu0
        %v6581 = vadd.f32 0.0, %v6580
        %v6582 = vpop.f32.mrb[0].mxu0
        %6583 = vmatprep.mubr.f32.mxu0 0.0
        %6584 = vmatmul.mubr.f32.gmra.mrb[0].mxu0 %v6501
        %v6585 = vpop.f32.mrb[0].mxu0
        %v6586 = vadd.f32 0.0, %v6585
        %v6587 = vpop.f32.mrb[0].mxu0
        %6588 = vmatprep.mubr.f32.mxu0 0.0
        %6589 = vmatmul.mubr.f32.gmra.mrb[0].mxu0 %v6506
        %v6590 = vpop.f32.mrb[0].mxu0
        %v6591 = vadd.f32 0.0, %v6590
        %v6592 = vpop.f32.mrb[0].mxu0
        %6593 = vmatprep.mubr.f32.mxu0 0.0
        %6594 = vmatmul.mubr.f32.gmra.mrb[0].mxu0 %v6511
        %v6595 = vpop.f32.mrb[0].mxu0
        %v6596 = vadd.f32 0.0, %v6595
        %v6597 = vpop.f32.mrb[0].mxu0
        %6598 = vdwg.mxu0
        %v6603 = vcombine.high %v6581, %v6581
        %v6605 = vunpack.c.l.s4 1966171168
        %v6606 = vunpack.c.0.s8 %v6605
        %v6607 = vlaneseq
        %v6608 = vshrl.u32 %v6607, 7
        %v6609 = vsub.s32 %v6606, %v6608
        %v6610 = vrot.slane %v6581, %v6609
        %v6612 = vunpack.c.l.s4 1966171168
        %v6613 = vunpack.c.0.s8 %v6612
        %v6614 = vlaneseq
        %v6615 = vshrl.u32 %v6614, 7
        %v6616 = vsub.s32 %v6613, %v6615
        %v6617 = vrot.slane %v6603, %v6616
        %v6618 = vcombine.high %v6610, %v6610
        %v6619 = vcombine.high %v6617, %v6617
        %v6621 = vunpack.c.l.s4 1966171168
        %v6622 = vunpack.c.0.s8 %v6621
        %v6623 = vlaneseq
        %v6624 = vshrl.u32 %v6623, 7
        %v6625 = vsub.s32 %v6622, %v6624
        %v6626 = vrot.slane %v6610, %v6625
        %v6628 = vunpack.c.l.s4 1966171168
        %v6629 = vunpack.c.0.s8 %v6628
        %v6630 = vlaneseq
        %v6631 = vshrl.u32 %v6630, 7
        %v6632 = vsub.s32 %v6629, %v6631
        %v6633 = vrot.slane %v6617, %v6632
        %v6635 = vunpack.c.l.s4 1966171168
        %v6636 = vunpack.c.0.s8 %v6635
        %v6637 = vlaneseq
        %v6638 = vshrl.u32 %v6637, 7
        %v6639 = vsub.s32 %v6636, %v6638
        %v6640 = vrot.slane %v6618, %v6639
        %v6642 = vunpack.c.l.s4 1966171168
        %v6643 = vunpack.c.0.s8 %v6642
        %v6644 = vlaneseq
        %v6645 = vshrl.u32 %v6644, 7
        %v6646 = vsub.s32 %v6643, %v6645
        %v6647 = vrot.slane %v6619, %v6646
        %v6648 = vcombine.high %v6626, %v6626
        %v6649 = vcombine.high %v6633, %v6633
        %v6650 = vcombine.high %v6640, %v6640
        %v6651 = vcombine.high %v6647, %v6647
        %v6652 = vcombine.high %v6586, %v6586
        %v6654 = vunpack.c.l.s4 1966171168
        %v6655 = vunpack.c.0.s8 %v6654
        %v6656 = vlaneseq
        %v6657 = vshrl.u32 %v6656, 7
        %v6658 = vsub.s32 %v6655, %v6657
        %v6659 = vrot.slane %v6586, %v6658
        %v6661 = vunpack.c.l.s4 1966171168
        %v6662 = vunpack.c.0.s8 %v6661
        %v6663 = vlaneseq
        %v6664 = vshrl.u32 %v6663, 7
        %v6665 = vsub.s32 %v6662, %v6664
        %v6666 = vrot.slane %v6652, %v6665
        %v6667 = vcombine.high %v6659, %v6659
        %v6668 = vcombine.high %v6666, %v6666
        %v6670 = vunpack.c.l.s4 1966171168
        %v6671 = vunpack.c.0.s8 %v6670
        %v6672 = vlaneseq
        %v6673 = vshrl.u32 %v6672, 7
        %v6674 = vsub.s32 %v6671, %v6673
        %v6675 = vrot.slane %v6659, %v6674
        %v6677 = vunpack.c.l.s4 1966171168
        %v6678 = vunpack.c.0.s8 %v6677
        %v6679 = vlaneseq
        %v6680 = vshrl.u32 %v6679, 7
        %v6681 = vsub.s32 %v6678, %v6680
        %v6682 = vrot.slane %v6666, %v6681
        %v6684 = vunpack.c.l.s4 1966171168
        %v6685 = vunpack.c.0.s8 %v6684
        %v6686 = vlaneseq
        %v6687 = vshrl.u32 %v6686, 7
        %v6688 = vsub.s32 %v6685, %v6687
        %v6689 = vrot.slane %v6667, %v6688
        %v6691 = vunpack.c.l.s4 1966171168
        %v6692 = vunpack.c.0.s8 %v6691
        %v6693 = vlaneseq
        %v6694 = vshrl.u32 %v6693, 7
        %v6695 = vsub.s32 %v6692, %v6694
        %v6696 = vrot.slane %v6668, %v6695
        %v6697 = vcombine.high %v6675, %v6675
        %v6698 = vcombine.high %v6682, %v6682
        %v6699 = vcombine.high %v6689, %v6689
        %v6700 = vcombine.high %v6696, %v6696
        %v6701 = vcombine.high %v6591, %v6591
        %v6703 = vunpack.c.l.s4 1966171168
        %v6704 = vunpack.c.0.s8 %v6703
        %v6705 = vlaneseq
        %v6706 = vshrl.u32 %v6705, 7
        %v6707 = vsub.s32 %v6704, %v6706
        %v6708 = vrot.slane %v6591, %v6707
        %v6710 = vunpack.c.l.s4 1966171168
        %v6711 = vunpack.c.0.s8 %v6710
        %v6712 = vlaneseq
        %v6713 = vshrl.u32 %v6712, 7
        %v6714 = vsub.s32 %v6711, %v6713
        %v6715 = vrot.slane %v6701, %v6714
        %v6716 = vcombine.high %v6708, %v6708
        %v6717 = vcombine.high %v6715, %v6715
        %v6719 = vunpack.c.l.s4 1966171168
        %v6720 = vunpack.c.0.s8 %v6719
        %v6721 = vlaneseq
        %v6722 = vshrl.u32 %v6721, 7
        %v6723 = vsub.s32 %v6720, %v6722
        %v6724 = vrot.slane %v6708, %v6723
        %v6726 = vunpack.c.l.s4 1966171168
        %v6727 = vunpack.c.0.s8 %v6726
        %v6728 = vlaneseq
        %v6729 = vshrl.u32 %v6728, 7
        %v6730 = vsub.s32 %v6727, %v6729
        %v6731 = vrot.slane %v6715, %v6730
        %v6733 = vunpack.c.l.s4 1966171168
        %v6734 = vunpack.c.0.s8 %v6733
        %v6735 = vlaneseq
        %v6736 = vshrl.u32 %v6735, 7
        %v6737 = vsub.s32 %v6734, %v6736
        %v6738 = vrot.slane %v6716, %v6737
        %v6740 = vunpack.c.l.s4 1966171168
        %v6741 = vunpack.c.0.s8 %v6740
        %v6742 = vlaneseq
        %v6743 = vshrl.u32 %v6742, 7
        %v6744 = vsub.s32 %v6741, %v6743
        %v6745 = vrot.slane %v6717, %v6744
        %v6746 = vcombine.high %v6724, %v6724
        %v6747 = vcombine.high %v6731, %v6731
        %v6748 = vcombine.high %v6738, %v6738
        %v6749 = vcombine.high %v6745, %v6745
        %v6750 = vcombine.high %v6596, %v6596
        %v6752 = vunpack.c.l.s4 1966171168
        %v6753 = vunpack.c.0.s8 %v6752
        %v6754 = vlaneseq
        %v6755 = vshrl.u32 %v6754, 7
        %v6756 = vsub.s32 %v6753, %v6755
        %v6757 = vrot.slane %v6596, %v6756
        %v6759 = vunpack.c.l.s4 1966171168
        %v6760 = vunpack.c.0.s8 %v6759
        %v6761 = vlaneseq
        %v6762 = vshrl.u32 %v6761, 7
        %v6763 = vsub.s32 %v6760, %v6762
        %v6764 = vrot.slane %v6750, %v6763
        %v6765 = vcombine.high %v6757, %v6757
        %v6766 = vcombine.high %v6764, %v6764
        %v6768 = vunpack.c.l.s4 1966171168
        %v6769 = vunpack.c.0.s8 %v6768
        %v6770 = vlaneseq
        %v6771 = vshrl.u32 %v6770, 7
        %v6772 = vsub.s32 %v6769, %v6771
        %v6773 = vrot.slane %v6757, %v6772
        %v6775 = vunpack.c.l.s4 1966171168
        %v6776 = vunpack.c.0.s8 %v6775
        %v6777 = vlaneseq
        %v6778 = vshrl.u32 %v6777, 7
        %v6779 = vsub.s32 %v6776, %v6778
        %v6780 = vrot.slane %v6764, %v6779
        %v6782 = vunpack.c.l.s4 1966171168
        %v6783 = vunpack.c.0.s8 %v6782
        %v6784 = vlaneseq
        %v6785 = vshrl.u32 %v6784, 7
        %v6786 = vsub.s32 %v6783, %v6785
        %v6787 = vrot.slane %v6765, %v6786
        %v6789 = vunpack.c.l.s4 1966171168
        %v6790 = vunpack.c.0.s8 %v6789
        %v6791 = vlaneseq
        %v6792 = vshrl.u32 %v6791, 7
        %v6793 = vsub.s32 %v6790, %v6792
        %v6794 = vrot.slane %v6766, %v6793
        %v6795 = vcombine.high %v6773, %v6773
        %v6796 = vcombine.high %v6780, %v6780
        %v6797 = vcombine.high %v6787, %v6787
        %v6798 = vcombine.high %v6794, %v6794
        %v6799 = vlaneseq
        %v6800 = vshrl.u32 %v6799, 7
        %v6801 = vsub.s32 0, %v6800
        %v6802 = vrot.slane %v6626, %v6801
        %v6803 = vlaneseq
        %v6804 = vshrl.u32 %v6803, 7
        %v6805 = vsub.s32 0, %v6804
        %v6806 = vrot.slane %v6640, %v6805
        %v6807 = vlaneseq
        %v6808 = vshrl.u32 %v6807, 7
        %v6809 = vsub.s32 0, %v6808
        %v6810 = vrot.slane %v6648, %v6809
        %v6811 = vlaneseq
        %v6812 = vshrl.u32 %v6811, 7
        %v6813 = vsub.s32 0, %v6812
        %v6814 = vrot.slane %v6650, %v6813
        %v6815 = vlaneseq
        %v6816 = vshrl.u32 %v6815, 7
        %v6817 = vsub.s32 0, %v6816
        %v6818 = vrot.slane %v6633, %v6817
        %v6819 = vlaneseq
        %v6820 = vshrl.u32 %v6819, 7
        %v6821 = vsub.s32 0, %v6820
        %v6822 = vrot.slane %v6647, %v6821
        %v6823 = vlaneseq
        %v6824 = vshrl.u32 %v6823, 7
        %v6825 = vsub.s32 0, %v6824
        %v6826 = vrot.slane %v6649, %v6825
        %v6827 = vlaneseq
        %v6828 = vshrl.u32 %v6827, 7
        %v6829 = vsub.s32 0, %v6828
        %v6830 = vrot.slane %v6651, %v6829
        %v6831 = vlaneseq
        %v6832 = vshrl.u32 %v6831, 7
        %v6833 = vsub.s32 0, %v6832
        %v6834 = vrot.slane %v6675, %v6833
        %v6835 = vlaneseq
        %v6836 = vshrl.u32 %v6835, 7
        %v6837 = vsub.s32 0, %v6836
        %v6838 = vrot.slane %v6689, %v6837
        %v6839 = vlaneseq
        %v6840 = vshrl.u32 %v6839, 7
        %v6841 = vsub.s32 0, %v6840
        %v6842 = vrot.slane %v6697, %v6841
        %v6843 = vlaneseq
        %v6844 = vshrl.u32 %v6843, 7
        %v6845 = vsub.s32 0, %v6844
        %v6846 = vrot.slane %v6699, %v6845
        %v6847 = vlaneseq
        %v6848 = vshrl.u32 %v6847, 7
        %v6849 = vsub.s32 0, %v6848
        %v6850 = vrot.slane %v6682, %v6849
        %v6851 = vlaneseq
        %v6852 = vshrl.u32 %v6851, 7
        %v6853 = vsub.s32 0, %v6852
        %v6854 = vrot.slane %v6696, %v6853
        %v6855 = vlaneseq
        %v6856 = vshrl.u32 %v6855, 7
        %v6857 = vsub.s32 0, %v6856
        %v6858 = vrot.slane %v6698, %v6857
        %v6859 = vlaneseq
        %v6860 = vshrl.u32 %v6859, 7
        %v6861 = vsub.s32 0, %v6860
        %v6862 = vrot.slane %v6700, %v6861
        %v6863 = vlaneseq
        %v6864 = vshrl.u32 %v6863, 7
        %v6865 = vsub.s32 0, %v6864
        %v6866 = vrot.slane %v6724, %v6865
        %v6867 = vlaneseq
        %v6868 = vshrl.u32 %v6867, 7
        %v6869 = vsub.s32 0, %v6868
        %v6870 = vrot.slane %v6738, %v6869
        %v6871 = vlaneseq
        %v6872 = vshrl.u32 %v6871, 7
        %v6873 = vsub.s32 0, %v6872
        %v6874 = vrot.slane %v6746, %v6873
        %v6875 = vlaneseq
        %v6876 = vshrl.u32 %v6875, 7
        %v6877 = vsub.s32 0, %v6876
        %v6878 = vrot.slane %v6748, %v6877
        %v6879 = vlaneseq
        %v6880 = vshrl.u32 %v6879, 7
        %v6881 = vsub.s32 0, %v6880
        %v6882 = vrot.slane %v6731, %v6881
        %v6883 = vlaneseq
        %v6884 = vshrl.u32 %v6883, 7
        %v6885 = vsub.s32 0, %v6884
        %v6886 = vrot.slane %v6745, %v6885
        %v6887 = vlaneseq
        %v6888 = vshrl.u32 %v6887, 7
        %v6889 = vsub.s32 0, %v6888
        %v6890 = vrot.slane %v6747, %v6889
        %v6891 = vlaneseq
        %v6892 = vshrl.u32 %v6891, 7
        %v6893 = vsub.s32 0, %v6892
        %v6894 = vrot.slane %v6749, %v6893
        %v6895 = vlaneseq
        %v6896 = vshrl.u32 %v6895, 7
        %v6897 = vsub.s32 0, %v6896
        %v6898 = vrot.slane %v6773, %v6897
        %v6899 = vlaneseq
        %v6900 = vshrl.u32 %v6899, 7
        %v6901 = vsub.s32 0, %v6900
        %v6902 = vrot.slane %v6787, %v6901
        %v6903 = vlaneseq
        %v6904 = vshrl.u32 %v6903, 7
        %v6905 = vsub.s32 0, %v6904
        %v6906 = vrot.slane %v6795, %v6905
        %v6907 = vlaneseq
        %v6908 = vshrl.u32 %v6907, 7
        %v6909 = vsub.s32 0, %v6908
        %v6910 = vrot.slane %v6797, %v6909
        %v6911 = vlaneseq
        %v6912 = vshrl.u32 %v6911, 7
        %v6913 = vsub.s32 0, %v6912
        %v6914 = vrot.slane %v6780, %v6913
        %v6915 = vlaneseq
        %v6916 = vshrl.u32 %v6915, 7
        %v6917 = vsub.s32 0, %v6916
        %v6918 = vrot.slane %v6794, %v6917
        %v6919 = vlaneseq
        %v6920 = vshrl.u32 %v6919, 7
        %v6921 = vsub.s32 0, %v6920
        %v6922 = vrot.slane %v6796, %v6921
        %v6923 = vlaneseq
        %v6924 = vshrl.u32 %v6923, 7
        %v6925 = vsub.s32 0, %v6924
        %v6926 = vrot.slane %v6798, %v6925
        %v6959 = vmul.f32 %v511, %v6802
        %v6960 = vmul.f32 %v512, %v6802
        %v6961 = vmul.f32 %v513, %v6806
        %v6962 = vmul.f32 %v514, %v6806
        %v6963 = vmul.f32 %v515, %v6810
        %v6964 = vmul.f32 %v516, %v6810
        %v6965 = vmul.f32 %v517, %v6814
        %v6966 = vmul.f32 %v518, %v6814
        %v6967 = vmul.f32 %v519, %v6818
        %v6968 = vmul.f32 %v520, %v6818
        %v6969 = vmul.f32 %v521, %v6822
        %v6970 = vmul.f32 %v522, %v6822
        %v6971 = vmul.f32 %v523, %v6826
        %v6972 = vmul.f32 %v524, %v6826
        %v6973 = vmul.f32 %v525, %v6830
        %v6974 = vmul.f32 %v526, %v6830
        %v6975 = vmul.f32 %v527, %v6834
        %v6976 = vmul.f32 %v528, %v6834
        %v6977 = vmul.f32 %v529, %v6838
        %v6978 = vmul.f32 %v530, %v6838
        %v6979 = vmul.f32 %v531, %v6842
        %v6980 = vmul.f32 %v532, %v6842
        %v6981 = vmul.f32 %v533, %v6846
        %v6982 = vmul.f32 %v534, %v6846
        %v6983 = vmul.f32 %v535, %v6850
        %v6984 = vmul.f32 %v536, %v6850
        %v6985 = vmul.f32 %v537, %v6854
        %v6986 = vmul.f32 %v538, %v6854
        %v6987 = vmul.f32 %v539, %v6858
        %v6988 = vmul.f32 %v540, %v6858
        %v6989 = vmul.f32 %v541, %v6862
        %v6990 = vmul.f32 %v542, %v6862
        %v6991 = vmul.f32 %v543, %v6866
        %v6992 = vmul.f32 %v544, %v6866
        %v6993 = vmul.f32 %v545, %v6870
        %v6994 = vmul.f32 %v546, %v6870
        %v6995 = vmul.f32 %v547, %v6874
        %v6996 = vmul.f32 %v548, %v6874
        %v6997 = vmul.f32 %v549, %v6878
        %v6998 = vmul.f32 %v550, %v6878
        %v6999 = vmul.f32 %v551, %v6882
        %v7000 = vmul.f32 %v552, %v6882
        %v7001 = vmul.f32 %v553, %v6886
        %v7002 = vmul.f32 %v554, %v6886
        %v7003 = vmul.f32 %v555, %v6890
        %v7004 = vmul.f32 %v556, %v6890
        %v7005 = vmul.f32 %v557, %v6894
        %v7006 = vmul.f32 %v558, %v6894
        %v7007 = vmul.f32 %v559, %v6898
        %v7008 = vmul.f32 %v560, %v6898
        %v7009 = vmul.f32 %v561, %v6902
        %v7010 = vmul.f32 %v562, %v6902
        %v7011 = vmul.f32 %v563, %v6906
        %v7012 = vmul.f32 %v564, %v6906
        %v7013 = vmul.f32 %v565, %v6910
        %v7014 = vmul.f32 %v566, %v6910
        %v7015 = vmul.f32 %v567, %v6914
        %v7016 = vmul.f32 %v568, %v6914
        %v7017 = vmul.f32 %v569, %v6918
        %v7018 = vmul.f32 %v570, %v6918
        %v7019 = vmul.f32 %v571, %v6922
        %v7020 = vmul.f32 %v572, %v6922
        %v7021 = vmul.f32 %v573, %v6926
        %v7022 = vmul.f32 %v574, %v6926
        %7023 = vadd.xlane.f32.xlu0 %v6959
        %v7024 = vpop.xlane.xlu0 %7023
        %v7025 = vsel %vm2480, %v6960, 0.0
        %7026 = vadd.xlane.f32.xlu0 %v7025
        %v7027 = vpop.xlane.xlu0 %7026
        %7028 = vadd.xlane.f32.xlu0 %v6961
        %v7029 = vpop.xlane.xlu0 %7028
        %v7030 = vsel %vm2480, %v6962, 0.0
        %7031 = vadd.xlane.f32.xlu0 %v7030
        %v7032 = vpop.xlane.xlu0 %7031
        %7033 = vadd.xlane.f32.xlu0 %v6963
        %v7034 = vpop.xlane.xlu0 %7033
        %v7035 = vsel %vm2480, %v6964, 0.0
        %7036 = vadd.xlane.f32.xlu0 %v7035
        %v7037 = vpop.xlane.xlu0 %7036
        %7038 = vadd.xlane.f32.xlu0 %v6965
        %v7039 = vpop.xlane.xlu0 %7038
        %v7040 = vsel %vm2480, %v6966, 0.0
        %7041 = vadd.xlane.f32.xlu0 %v7040
        %v7042 = vpop.xlane.xlu0 %7041
        %7043 = vadd.xlane.f32.xlu0 %v6967
        %v7044 = vpop.xlane.xlu0 %7043
        %v7045 = vsel %vm2480, %v6968, 0.0
        %7046 = vadd.xlane.f32.xlu0 %v7045
        %v7047 = vpop.xlane.xlu0 %7046
        %7048 = vadd.xlane.f32.xlu0 %v6969
        %v7049 = vpop.xlane.xlu0 %7048
        %v7050 = vsel %vm2480, %v6970, 0.0
        %7051 = vadd.xlane.f32.xlu0 %v7050
        %v7052 = vpop.xlane.xlu0 %7051
        %7053 = vadd.xlane.f32.xlu0 %v6971
        %v7054 = vpop.xlane.xlu0 %7053
        %v7055 = vsel %vm2480, %v6972, 0.0
        %7056 = vadd.xlane.f32.xlu0 %v7055
        %v7057 = vpop.xlane.xlu0 %7056
        %7058 = vadd.xlane.f32.xlu0 %v6973
        %v7059 = vpop.xlane.xlu0 %7058
        %v7060 = vsel %vm2480, %v6974, 0.0
        %7061 = vadd.xlane.f32.xlu0 %v7060
        %v7062 = vpop.xlane.xlu0 %7061
        %7063 = vadd.xlane.f32.xlu0 %v6975
        %v7064 = vpop.xlane.xlu0 %7063
        %v7065 = vsel %vm2480, %v6976, 0.0
        %7066 = vadd.xlane.f32.xlu0 %v7065
        %v7067 = vpop.xlane.xlu0 %7066
        %7068 = vadd.xlane.f32.xlu0 %v6977
        %v7069 = vpop.xlane.xlu0 %7068
        %v7070 = vsel %vm2480, %v6978, 0.0
        %7071 = vadd.xlane.f32.xlu0 %v7070
        %v7072 = vpop.xlane.xlu0 %7071
        %7073 = vadd.xlane.f32.xlu0 %v6979
        %v7074 = vpop.xlane.xlu0 %7073
        %v7075 = vsel %vm2480, %v6980, 0.0
        %7076 = vadd.xlane.f32.xlu0 %v7075
        %v7077 = vpop.xlane.xlu0 %7076
        %7078 = vadd.xlane.f32.xlu0 %v6981
        %v7079 = vpop.xlane.xlu0 %7078
        %v7080 = vsel %vm2480, %v6982, 0.0
        %7081 = vadd.xlane.f32.xlu0 %v7080
        %v7082 = vpop.xlane.xlu0 %7081
        %7083 = vadd.xlane.f32.xlu0 %v6983
        %v7084 = vpop.xlane.xlu0 %7083
        %v7085 = vsel %vm2480, %v6984, 0.0
        %7086 = vadd.xlane.f32.xlu0 %v7085
        %v7087 = vpop.xlane.xlu0 %7086
        %7088 = vadd.xlane.f32.xlu0 %v6985
        %v7089 = vpop.xlane.xlu0 %7088
        %v7090 = vsel %vm2480, %v6986, 0.0
        %7091 = vadd.xlane.f32.xlu0 %v7090
        %v7092 = vpop.xlane.xlu0 %7091
        %7093 = vadd.xlane.f32.xlu0 %v6987
        %v7094 = vpop.xlane.xlu0 %7093
        %v7095 = vsel %vm2480, %v6988, 0.0
        %7096 = vadd.xlane.f32.xlu0 %v7095
        %v7097 = vpop.xlane.xlu0 %7096
        %7098 = vadd.xlane.f32.xlu0 %v6989
        %v7099 = vpop.xlane.xlu0 %7098
        %v7100 = vsel %vm2480, %v6990, 0.0
        %7101 = vadd.xlane.f32.xlu0 %v7100
        %v7102 = vpop.xlane.xlu0 %7101
        %7103 = vadd.xlane.f32.xlu0 %v6991
        %v7104 = vpop.xlane.xlu0 %7103
        %v7105 = vsel %vm2480, %v6992, 0.0
        %7106 = vadd.xlane.f32.xlu0 %v7105
        %v7107 = vpop.xlane.xlu0 %7106
        %7108 = vadd.xlane.f32.xlu0 %v6993
        %v7109 = vpop.xlane.xlu0 %7108
        %v7110 = vsel %vm2480, %v6994, 0.0
        %7111 = vadd.xlane.f32.xlu0 %v7110
        %v7112 = vpop.xlane.xlu0 %7111
        %7113 = vadd.xlane.f32.xlu0 %v6995
        %v7114 = vpop.xlane.xlu0 %7113
        %v7115 = vsel %vm2480, %v6996, 0.0
        %7116 = vadd.xlane.f32.xlu0 %v7115
        %v7117 = vpop.xlane.xlu0 %7116
        %7118 = vadd.xlane.f32.xlu0 %v6997
        %v7119 = vpop.xlane.xlu0 %7118
        %v7120 = vsel %vm2480, %v6998, 0.0
        %7121 = vadd.xlane.f32.xlu0 %v7120
        %v7122 = vpop.xlane.xlu0 %7121
        %7123 = vadd.xlane.f32.xlu0 %v6999
        %v7124 = vpop.xlane.xlu0 %7123
        %v7125 = vsel %vm2480, %v7000, 0.0
        %7126 = vadd.xlane.f32.xlu0 %v7125
        %v7127 = vpop.xlane.xlu0 %7126
        %7128 = vadd.xlane.f32.xlu0 %v7001
        %v7129 = vpop.xlane.xlu0 %7128
        %v7130 = vsel %vm2480, %v7002, 0.0
        %7131 = vadd.xlane.f32.xlu0 %v7130
        %v7132 = vpop.xlane.xlu0 %7131
        %7133 = vadd.xlane.f32.xlu0 %v7003
        %v7134 = vpop.xlane.xlu0 %7133
        %v7135 = vsel %vm2480, %v7004, 0.0
        %7136 = vadd.xlane.f32.xlu0 %v7135
        %v7137 = vpop.xlane.xlu0 %7136
        %7138 = vadd.xlane.f32.xlu0 %v7005
        %v7139 = vpop.xlane.xlu0 %7138
        %v7140 = vsel %vm2480, %v7006, 0.0
        %7141 = vadd.xlane.f32.xlu0 %v7140
        %v7142 = vpop.xlane.xlu0 %7141
        %7143 = vadd.xlane.f32.xlu0 %v7007
        %v7144 = vpop.xlane.xlu0 %7143
        %v7145 = vsel %vm2480, %v7008, 0.0
        %7146 = vadd.xlane.f32.xlu0 %v7145
        %v7147 = vpop.xlane.xlu0 %7146
        %7148 = vadd.xlane.f32.xlu0 %v7009
        %v7149 = vpop.xlane.xlu0 %7148
        %v7150 = vsel %vm2480, %v7010, 0.0
        %7151 = vadd.xlane.f32.xlu0 %v7150
        %v7152 = vpop.xlane.xlu0 %7151
        %7153 = vadd.xlane.f32.xlu0 %v7011
        %v7154 = vpop.xlane.xlu0 %7153
        %v7155 = vsel %vm2480, %v7012, 0.0
        %7156 = vadd.xlane.f32.xlu0 %v7155
        %v7157 = vpop.xlane.xlu0 %7156
        %7158 = vadd.xlane.f32.xlu0 %v7013
        %v7159 = vpop.xlane.xlu0 %7158
        %v7160 = vsel %vm2480, %v7014, 0.0
        %7161 = vadd.xlane.f32.xlu0 %v7160
        %v7162 = vpop.xlane.xlu0 %7161
        %7163 = vadd.xlane.f32.xlu0 %v7015
        %v7164 = vpop.xlane.xlu0 %7163
        %v7165 = vsel %vm2480, %v7016, 0.0
        %7166 = vadd.xlane.f32.xlu0 %v7165
        %v7167 = vpop.xlane.xlu0 %7166
        %7168 = vadd.xlane.f32.xlu0 %v7017
        %v7169 = vpop.xlane.xlu0 %7168
        %v7170 = vsel %vm2480, %v7018, 0.0
        %7171 = vadd.xlane.f32.xlu0 %v7170
        %v7172 = vpop.xlane.xlu0 %7171
        %7173 = vadd.xlane.f32.xlu0 %v7019
        %v7174 = vpop.xlane.xlu0 %7173
        %v7175 = vsel %vm2480, %v7020, 0.0
        %7176 = vadd.xlane.f32.xlu0 %v7175
        %v7177 = vpop.xlane.xlu0 %7176
        %7178 = vadd.xlane.f32.xlu0 %v7021
        %v7179 = vpop.xlane.xlu0 %7178
        %v7180 = vsel %vm2480, %v7022, 0.0
        %7181 = vadd.xlane.f32.xlu0 %v7180
        %v7182 = vpop.xlane.xlu0 %7181
        %v7183 = vmul.f32 %v7024, 0.088388346
        %v7184 = vmul.f32 %v7027, 0.088388346
        %v7185 = vmul.f32 %v7029, 0.088388346
        %v7186 = vmul.f32 %v7032, 0.088388346
        %v7187 = vmul.f32 %v7034, 0.088388346
        %v7188 = vmul.f32 %v7037, 0.088388346
        %v7189 = vmul.f32 %v7039, 0.088388346
        %v7190 = vmul.f32 %v7042, 0.088388346
        %v7191 = vmul.f32 %v7044, 0.088388346
        %v7192 = vmul.f32 %v7047, 0.088388346
        %v7193 = vmul.f32 %v7049, 0.088388346
        %v7194 = vmul.f32 %v7052, 0.088388346
        %v7195 = vmul.f32 %v7054, 0.088388346
        %v7196 = vmul.f32 %v7057, 0.088388346
        %v7197 = vmul.f32 %v7059, 0.088388346
        %v7198 = vmul.f32 %v7062, 0.088388346
        %v7199 = vmul.f32 %v7064, 0.088388346
        %v7200 = vmul.f32 %v7067, 0.088388346
        %v7201 = vmul.f32 %v7069, 0.088388346
        %v7202 = vmul.f32 %v7072, 0.088388346
        %v7203 = vmul.f32 %v7074, 0.088388346
        %v7204 = vmul.f32 %v7077, 0.088388346
        %v7205 = vmul.f32 %v7079, 0.088388346
        %v7206 = vmul.f32 %v7082, 0.088388346
        %v7207 = vmul.f32 %v7084, 0.088388346
        %v7208 = vmul.f32 %v7087, 0.088388346
        %v7209 = vmul.f32 %v7089, 0.088388346
        %v7210 = vmul.f32 %v7092, 0.088388346
        %v7211 = vmul.f32 %v7094, 0.088388346
        %v7212 = vmul.f32 %v7097, 0.088388346
        %v7213 = vmul.f32 %v7099, 0.088388346
        %v7214 = vmul.f32 %v7102, 0.088388346
        %v7215 = vmul.f32 %v7104, 0.088388346
        %v7216 = vmul.f32 %v7107, 0.088388346
        %v7217 = vmul.f32 %v7109, 0.088388346
        %v7218 = vmul.f32 %v7112, 0.088388346
        %v7219 = vmul.f32 %v7114, 0.088388346
        %v7220 = vmul.f32 %v7117, 0.088388346
        %v7221 = vmul.f32 %v7119, 0.088388346
        %v7222 = vmul.f32 %v7122, 0.088388346
        %v7223 = vmul.f32 %v7124, 0.088388346
        %v7224 = vmul.f32 %v7127, 0.088388346
        %v7225 = vmul.f32 %v7129, 0.088388346
        %v7226 = vmul.f32 %v7132, 0.088388346
        %v7227 = vmul.f32 %v7134, 0.088388346
        %v7228 = vmul.f32 %v7137, 0.088388346
        %v7229 = vmul.f32 %v7139, 0.088388346
        %v7230 = vmul.f32 %v7142, 0.088388346
        %v7231 = vmul.f32 %v7144, 0.088388346
        %v7232 = vmul.f32 %v7147, 0.088388346
        %v7233 = vmul.f32 %v7149, 0.088388346
        %v7234 = vmul.f32 %v7152, 0.088388346
        %v7235 = vmul.f32 %v7154, 0.088388346
        %v7236 = vmul.f32 %v7157, 0.088388346
        %v7237 = vmul.f32 %v7159, 0.088388346
        %v7238 = vmul.f32 %v7162, 0.088388346
        %v7239 = vmul.f32 %v7164, 0.088388346
        %v7240 = vmul.f32 %v7167, 0.088388346
        %v7241 = vmul.f32 %v7169, 0.088388346
        %v7242 = vmul.f32 %v7172, 0.088388346
        %v7243 = vmul.f32 %v7174, 0.088388346
        %v7244 = vmul.f32 %v7177, 0.088388346
        %v7245 = vmul.f32 %v7179, 0.088388346
        %v7246 = vmul.f32 %v7182, 0.088388346
        %v7311 = vlaneseq
        %v7312 = vshrl.u32 %v7311, 7
        %v7313 = vsub.s32 %v891, %v7312
        %v7314 = vrot.slane %v7183, %v7313
        %v7315 = vlaneseq
        %v7316 = vshrl.u32 %v7315, 7
        %v7317 = vsub.s32 %v2835, %v7316
        %v7318 = vrot.slane %v7184, %v7317
        %v7319 = vsel %vm2840, %v7318, %v7314
        %v7320 = vlaneseq
        %v7321 = vshrl.u32 %v7320, 7
        %v7322 = vsub.s32 %v891, %v7321
        %v7323 = vrot.slane %v7185, %v7322
        %v7324 = vlaneseq
        %v7325 = vshrl.u32 %v7324, 7
        %v7326 = vsub.s32 %v2835, %v7325
        %v7327 = vrot.slane %v7186, %v7326
        %v7328 = vsel %vm2840, %v7327, %v7323
        %v7329 = vlaneseq
        %v7330 = vshrl.u32 %v7329, 7
        %v7331 = vsub.s32 %v891, %v7330
        %v7332 = vrot.slane %v7187, %v7331
        %v7333 = vlaneseq
        %v7334 = vshrl.u32 %v7333, 7
        %v7335 = vsub.s32 %v2835, %v7334
        %v7336 = vrot.slane %v7188, %v7335
        %v7337 = vsel %vm2840, %v7336, %v7332
        %v7338 = vlaneseq
        %v7339 = vshrl.u32 %v7338, 7
        %v7340 = vsub.s32 %v891, %v7339
        %v7341 = vrot.slane %v7189, %v7340
        %v7342 = vlaneseq
        %v7343 = vshrl.u32 %v7342, 7
        %v7344 = vsub.s32 %v2835, %v7343
        %v7345 = vrot.slane %v7190, %v7344
        %v7346 = vsel %vm2840, %v7345, %v7341
        %v7347 = vlaneseq
        %v7348 = vshrl.u32 %v7347, 7
        %v7349 = vsub.s32 %v891, %v7348
        %v7350 = vrot.slane %v7191, %v7349
        %v7351 = vlaneseq
        %v7352 = vshrl.u32 %v7351, 7
        %v7353 = vsub.s32 %v2835, %v7352
        %v7354 = vrot.slane %v7192, %v7353
        %v7355 = vsel %vm2840, %v7354, %v7350
        %v7356 = vlaneseq
        %v7357 = vshrl.u32 %v7356, 7
        %v7358 = vsub.s32 %v891, %v7357
        %v7359 = vrot.slane %v7193, %v7358
        %v7360 = vlaneseq
        %v7361 = vshrl.u32 %v7360, 7
        %v7362 = vsub.s32 %v2835, %v7361
        %v7363 = vrot.slane %v7194, %v7362
        %v7364 = vsel %vm2840, %v7363, %v7359
        %v7365 = vlaneseq
        %v7366 = vshrl.u32 %v7365, 7
        %v7367 = vsub.s32 %v891, %v7366
        %v7368 = vrot.slane %v7195, %v7367
        %v7369 = vlaneseq
        %v7370 = vshrl.u32 %v7369, 7
        %v7371 = vsub.s32 %v2835, %v7370
        %v7372 = vrot.slane %v7196, %v7371
        %v7373 = vsel %vm2840, %v7372, %v7368
        %v7374 = vlaneseq
        %v7375 = vshrl.u32 %v7374, 7
        %v7376 = vsub.s32 %v891, %v7375
        %v7377 = vrot.slane %v7197, %v7376
        %v7378 = vlaneseq
        %v7379 = vshrl.u32 %v7378, 7
        %v7380 = vsub.s32 %v2835, %v7379
        %v7381 = vrot.slane %v7198, %v7380
        %v7382 = vsel %vm2840, %v7381, %v7377
        %v7383 = vlaneseq
        %v7384 = vshrl.u32 %v7383, 7
        %v7385 = vsub.s32 %v891, %v7384
        %v7386 = vrot.slane %v7199, %v7385
        %v7387 = vlaneseq
        %v7388 = vshrl.u32 %v7387, 7
        %v7389 = vsub.s32 %v2835, %v7388
        %v7390 = vrot.slane %v7200, %v7389
        %v7391 = vsel %vm2840, %v7390, %v7386
        %v7392 = vlaneseq
        %v7393 = vshrl.u32 %v7392, 7
        %v7394 = vsub.s32 %v891, %v7393
        %v7395 = vrot.slane %v7201, %v7394
        %v7396 = vlaneseq
        %v7397 = vshrl.u32 %v7396, 7
        %v7398 = vsub.s32 %v2835, %v7397
        %v7399 = vrot.slane %v7202, %v7398
        %v7400 = vsel %vm2840, %v7399, %v7395
        %v7401 = vlaneseq
        %v7402 = vshrl.u32 %v7401, 7
        %v7403 = vsub.s32 %v891, %v7402
        %v7404 = vrot.slane %v7203, %v7403
        %v7405 = vlaneseq
        %v7406 = vshrl.u32 %v7405, 7
        %v7407 = vsub.s32 %v2835, %v7406
        %v7408 = vrot.slane %v7204, %v7407
        %v7409 = vsel %vm2840, %v7408, %v7404
        %v7410 = vlaneseq
        %v7411 = vshrl.u32 %v7410, 7
        %v7412 = vsub.s32 %v891, %v7411
        %v7413 = vrot.slane %v7205, %v7412
        %v7414 = vlaneseq
        %v7415 = vshrl.u32 %v7414, 7
        %v7416 = vsub.s32 %v2835, %v7415
        %v7417 = vrot.slane %v7206, %v7416
        %v7418 = vsel %vm2840, %v7417, %v7413
        %v7419 = vlaneseq
        %v7420 = vshrl.u32 %v7419, 7
        %v7421 = vsub.s32 %v891, %v7420
        %v7422 = vrot.slane %v7207, %v7421
        %v7423 = vlaneseq
        %v7424 = vshrl.u32 %v7423, 7
        %v7425 = vsub.s32 %v2835, %v7424
        %v7426 = vrot.slane %v7208, %v7425
        %v7427 = vsel %vm2840, %v7426, %v7422
        %v7428 = vlaneseq
        %v7429 = vshrl.u32 %v7428, 7
        %v7430 = vsub.s32 %v891, %v7429
        %v7431 = vrot.slane %v7209, %v7430
        %v7432 = vlaneseq
        %v7433 = vshrl.u32 %v7432, 7
        %v7434 = vsub.s32 %v2835, %v7433
        %v7435 = vrot.slane %v7210, %v7434
        %v7436 = vsel %vm2840, %v7435, %v7431
        %v7437 = vlaneseq
        %v7438 = vshrl.u32 %v7437, 7
        %v7439 = vsub.s32 %v891, %v7438
        %v7440 = vrot.slane %v7211, %v7439
        %v7441 = vlaneseq
        %v7442 = vshrl.u32 %v7441, 7
        %v7443 = vsub.s32 %v2835, %v7442
        %v7444 = vrot.slane %v7212, %v7443
        %v7445 = vsel %vm2840, %v7444, %v7440
        %v7446 = vlaneseq
        %v7447 = vshrl.u32 %v7446, 7
        %v7448 = vsub.s32 %v891, %v7447
        %v7449 = vrot.slane %v7213, %v7448
        %v7450 = vlaneseq
        %v7451 = vshrl.u32 %v7450, 7
        %v7452 = vsub.s32 %v2835, %v7451
        %v7453 = vrot.slane %v7214, %v7452
        %v7454 = vsel %vm2840, %v7453, %v7449
        %v7455 = vlaneseq
        %v7456 = vshrl.u32 %v7455, 7
        %v7457 = vsub.s32 %v891, %v7456
        %v7458 = vrot.slane %v7215, %v7457
        %v7459 = vlaneseq
        %v7460 = vshrl.u32 %v7459, 7
        %v7461 = vsub.s32 %v2835, %v7460
        %v7462 = vrot.slane %v7216, %v7461
        %v7463 = vsel %vm2840, %v7462, %v7458
        %v7464 = vlaneseq
        %v7465 = vshrl.u32 %v7464, 7
        %v7466 = vsub.s32 %v891, %v7465
        %v7467 = vrot.slane %v7217, %v7466
        %v7468 = vlaneseq
        %v7469 = vshrl.u32 %v7468, 7
        %v7470 = vsub.s32 %v2835, %v7469
        %v7471 = vrot.slane %v7218, %v7470
        %v7472 = vsel %vm2840, %v7471, %v7467
        %v7473 = vlaneseq
        %v7474 = vshrl.u32 %v7473, 7
        %v7475 = vsub.s32 %v891, %v7474
        %v7476 = vrot.slane %v7219, %v7475
        %v7477 = vlaneseq
        %v7478 = vshrl.u32 %v7477, 7
        %v7479 = vsub.s32 %v2835, %v7478
        %v7480 = vrot.slane %v7220, %v7479
        %v7481 = vsel %vm2840, %v7480, %v7476
        %v7482 = vlaneseq
        %v7483 = vshrl.u32 %v7482, 7
        %v7484 = vsub.s32 %v891, %v7483
        %v7485 = vrot.slane %v7221, %v7484
        %v7486 = vlaneseq
        %v7487 = vshrl.u32 %v7486, 7
        %v7488 = vsub.s32 %v2835, %v7487
        %v7489 = vrot.slane %v7222, %v7488
        %v7490 = vsel %vm2840, %v7489, %v7485
        %v7491 = vlaneseq
        %v7492 = vshrl.u32 %v7491, 7
        %v7493 = vsub.s32 %v891, %v7492
        %v7494 = vrot.slane %v7223, %v7493
        %v7495 = vlaneseq
        %v7496 = vshrl.u32 %v7495, 7
        %v7497 = vsub.s32 %v2835, %v7496
        %v7498 = vrot.slane %v7224, %v7497
        %v7499 = vsel %vm2840, %v7498, %v7494
        %v7500 = vlaneseq
        %v7501 = vshrl.u32 %v7500, 7
        %v7502 = vsub.s32 %v891, %v7501
        %v7503 = vrot.slane %v7225, %v7502
        %v7504 = vlaneseq
        %v7505 = vshrl.u32 %v7504, 7
        %v7506 = vsub.s32 %v2835, %v7505
        %v7507 = vrot.slane %v7226, %v7506
        %v7508 = vsel %vm2840, %v7507, %v7503
        %v7509 = vlaneseq
        %v7510 = vshrl.u32 %v7509, 7
        %v7511 = vsub.s32 %v891, %v7510
        %v7512 = vrot.slane %v7227, %v7511
        %v7513 = vlaneseq
        %v7514 = vshrl.u32 %v7513, 7
        %v7515 = vsub.s32 %v2835, %v7514
        %v7516 = vrot.slane %v7228, %v7515
        %v7517 = vsel %vm2840, %v7516, %v7512
        %v7518 = vlaneseq
        %v7519 = vshrl.u32 %v7518, 7
        %v7520 = vsub.s32 %v891, %v7519
        %v7521 = vrot.slane %v7229, %v7520
        %v7522 = vlaneseq
        %v7523 = vshrl.u32 %v7522, 7
        %v7524 = vsub.s32 %v2835, %v7523
        %v7525 = vrot.slane %v7230, %v7524
        %v7526 = vsel %vm2840, %v7525, %v7521
        %v7527 = vlaneseq
        %v7528 = vshrl.u32 %v7527, 7
        %v7529 = vsub.s32 %v891, %v7528
        %v7530 = vrot.slane %v7231, %v7529
        %v7531 = vlaneseq
        %v7532 = vshrl.u32 %v7531, 7
        %v7533 = vsub.s32 %v2835, %v7532
        %v7534 = vrot.slane %v7232, %v7533
        %v7535 = vsel %vm2840, %v7534, %v7530
        %v7536 = vlaneseq
        %v7537 = vshrl.u32 %v7536, 7
        %v7538 = vsub.s32 %v891, %v7537
        %v7539 = vrot.slane %v7233, %v7538
        %v7540 = vlaneseq
        %v7541 = vshrl.u32 %v7540, 7
        %v7542 = vsub.s32 %v2835, %v7541
        %v7543 = vrot.slane %v7234, %v7542
        %v7544 = vsel %vm2840, %v7543, %v7539
        %v7545 = vlaneseq
        %v7546 = vshrl.u32 %v7545, 7
        %v7547 = vsub.s32 %v891, %v7546
        %v7548 = vrot.slane %v7235, %v7547
        %v7549 = vlaneseq
        %v7550 = vshrl.u32 %v7549, 7
        %v7551 = vsub.s32 %v2835, %v7550
        %v7552 = vrot.slane %v7236, %v7551
        %v7553 = vsel %vm2840, %v7552, %v7548
        %v7554 = vlaneseq
        %v7555 = vshrl.u32 %v7554, 7
        %v7556 = vsub.s32 %v891, %v7555
        %v7557 = vrot.slane %v7237, %v7556
        %v7558 = vlaneseq
        %v7559 = vshrl.u32 %v7558, 7
        %v7560 = vsub.s32 %v2835, %v7559
        %v7561 = vrot.slane %v7238, %v7560
        %v7562 = vsel %vm2840, %v7561, %v7557
        %v7563 = vlaneseq
        %v7564 = vshrl.u32 %v7563, 7
        %v7565 = vsub.s32 %v891, %v7564
        %v7566 = vrot.slane %v7239, %v7565
        %v7567 = vlaneseq
        %v7568 = vshrl.u32 %v7567, 7
        %v7569 = vsub.s32 %v2835, %v7568
        %v7570 = vrot.slane %v7240, %v7569
        %v7571 = vsel %vm2840, %v7570, %v7566
        %v7572 = vlaneseq
        %v7573 = vshrl.u32 %v7572, 7
        %v7574 = vsub.s32 %v891, %v7573
        %v7575 = vrot.slane %v7241, %v7574
        %v7576 = vlaneseq
        %v7577 = vshrl.u32 %v7576, 7
        %v7578 = vsub.s32 %v2835, %v7577
        %v7579 = vrot.slane %v7242, %v7578
        %v7580 = vsel %vm2840, %v7579, %v7575
        %v7581 = vlaneseq
        %v7582 = vshrl.u32 %v7581, 7
        %v7583 = vsub.s32 %v891, %v7582
        %v7584 = vrot.slane %v7243, %v7583
        %v7585 = vlaneseq
        %v7586 = vshrl.u32 %v7585, 7
        %v7587 = vsub.s32 %v2835, %v7586
        %v7588 = vrot.slane %v7244, %v7587
        %v7589 = vsel %vm2840, %v7588, %v7584
        %v7590 = vlaneseq
        %v7591 = vshrl.u32 %v7590, 7
        %v7592 = vsub.s32 %v891, %v7591
        %v7593 = vrot.slane %v7245, %v7592
        %v7594 = vlaneseq
        %v7595 = vshrl.u32 %v7594, 7
        %v7596 = vsub.s32 %v2835, %v7595
        %v7597 = vrot.slane %v7246, %v7596
        %v7598 = vsel %vm2840, %v7597, %v7593
        %v7599 = vsel %vm3121, %v7328, %v7319
        %v7600 = vsel %vm3123, %v7337, %v7599
        %v7601 = vsel %vm3125, %v7346, %v7600
        %v7602 = vsel %vm3127, %v7355, %v7601
        %v7603 = vsel %vm3129, %v7364, %v7602
        %v7604 = vsel %vm3131, %v7373, %v7603
        %v7605 = vsel %vm3133, %v7382, %v7604
        %v7606 = vsel %vm3121, %v7400, %v7391
        %v7607 = vsel %vm3123, %v7409, %v7606
        %v7608 = vsel %vm3125, %v7418, %v7607
        %v7609 = vsel %vm3127, %v7427, %v7608
        %v7610 = vsel %vm3129, %v7436, %v7609
        %v7611 = vsel %vm3131, %v7445, %v7610
        %v7612 = vsel %vm3133, %v7454, %v7611
        %v7613 = vsel %vm3121, %v7472, %v7463
        %v7614 = vsel %vm3123, %v7481, %v7613
        %v7615 = vsel %vm3125, %v7490, %v7614
        %v7616 = vsel %vm3127, %v7499, %v7615
        %v7617 = vsel %vm3129, %v7508, %v7616
        %v7618 = vsel %vm3131, %v7517, %v7617
        %v7619 = vsel %vm3133, %v7526, %v7618
        %v7620 = vsel %vm3121, %v7544, %v7535
        %v7621 = vsel %vm3123, %v7553, %v7620
        %v7622 = vsel %vm3125, %v7562, %v7621
        %v7623 = vsel %vm3127, %v7571, %v7622
        %v7624 = vsel %vm3129, %v7580, %v7623
        %v7625 = vsel %vm3131, %v7589, %v7624
        %v7626 = vsel %vm3133, %v7598, %v7625
        %v7631 = vsel %vm3160, %v7605, -inf
        %7632 = vmax.xlane.f32.xlu0 %v7631
        %v7633 = vpop.xlane.xlu0 %7632
        %v7634 = vsel %vm3160, %v7612, -inf
        %7635 = vmax.xlane.f32.xlu0 %v7634
        %v7636 = vpop.xlane.xlu0 %7635
        %v7637 = vsel %vm3160, %v7619, -inf
        %7638 = vmax.xlane.f32.xlu0 %v7637
        %v7639 = vpop.xlane.xlu0 %7638
        %v7640 = vsel %vm3160, %v7626, -inf
        %7641 = vmax.xlane.f32.xlu0 %v7640
        %v7642 = vpop.xlane.xlu0 %7641
        %v7647 = vlaneseq
        %v7648 = vshrl.u32 %v7647, 7
        %v7649 = vsub.s32 0, %v7648
        %v7650 = vrot.slane %v7633, %v7649
        %v7651 = vlaneseq
        %v7652 = vshrl.u32 %v7651, 7
        %v7653 = vsub.s32 1, %v7652
        %v7654 = vrot.slane %v7633, %v7653
        %v7655 = vlaneseq
        %v7656 = vshrl.u32 %v7655, 7
        %v7657 = vsub.s32 2, %v7656
        %v7658 = vrot.slane %v7633, %v7657
        %v7659 = vlaneseq
        %v7660 = vshrl.u32 %v7659, 7
        %v7661 = vsub.s32 3, %v7660
        %v7662 = vrot.slane %v7633, %v7661
        %v7663 = vlaneseq
        %v7664 = vshrl.u32 %v7663, 7
        %v7665 = vsub.s32 4, %v7664
        %v7666 = vrot.slane %v7633, %v7665
        %v7667 = vlaneseq
        %v7668 = vshrl.u32 %v7667, 7
        %v7669 = vsub.s32 5, %v7668
        %v7670 = vrot.slane %v7633, %v7669
        %v7671 = vlaneseq
        %v7672 = vshrl.u32 %v7671, 7
        %v7673 = vsub.s32 6, %v7672
        %v7674 = vrot.slane %v7633, %v7673
        %v7675 = vlaneseq
        %v7676 = vshrl.u32 %v7675, 7
        %v7677 = vsub.s32 7, %v7676
        %v7678 = vrot.slane %v7633, %v7677
        %v7679 = vlaneseq
        %v7680 = vshrl.u32 %v7679, 7
        %v7681 = vsub.s32 0, %v7680
        %v7682 = vrot.slane %v7636, %v7681
        %v7683 = vlaneseq
        %v7684 = vshrl.u32 %v7683, 7
        %v7685 = vsub.s32 1, %v7684
        %v7686 = vrot.slane %v7636, %v7685
        %v7687 = vlaneseq
        %v7688 = vshrl.u32 %v7687, 7
        %v7689 = vsub.s32 2, %v7688
        %v7690 = vrot.slane %v7636, %v7689
        %v7691 = vlaneseq
        %v7692 = vshrl.u32 %v7691, 7
        %v7693 = vsub.s32 3, %v7692
        %v7694 = vrot.slane %v7636, %v7693
        %v7695 = vlaneseq
        %v7696 = vshrl.u32 %v7695, 7
        %v7697 = vsub.s32 4, %v7696
        %v7698 = vrot.slane %v7636, %v7697
        %v7699 = vlaneseq
        %v7700 = vshrl.u32 %v7699, 7
        %v7701 = vsub.s32 5, %v7700
        %v7702 = vrot.slane %v7636, %v7701
        %v7703 = vlaneseq
        %v7704 = vshrl.u32 %v7703, 7
        %v7705 = vsub.s32 6, %v7704
        %v7706 = vrot.slane %v7636, %v7705
        %v7707 = vlaneseq
        %v7708 = vshrl.u32 %v7707, 7
        %v7709 = vsub.s32 7, %v7708
        %v7710 = vrot.slane %v7636, %v7709
        %v7711 = vlaneseq
        %v7712 = vshrl.u32 %v7711, 7
        %v7713 = vsub.s32 0, %v7712
        %v7714 = vrot.slane %v7639, %v7713
        %v7715 = vlaneseq
        %v7716 = vshrl.u32 %v7715, 7
        %v7717 = vsub.s32 1, %v7716
        %v7718 = vrot.slane %v7639, %v7717
        %v7719 = vlaneseq
        %v7720 = vshrl.u32 %v7719, 7
        %v7721 = vsub.s32 2, %v7720
        %v7722 = vrot.slane %v7639, %v7721
        %v7723 = vlaneseq
        %v7724 = vshrl.u32 %v7723, 7
        %v7725 = vsub.s32 3, %v7724
        %v7726 = vrot.slane %v7639, %v7725
        %v7727 = vlaneseq
        %v7728 = vshrl.u32 %v7727, 7
        %v7729 = vsub.s32 4, %v7728
        %v7730 = vrot.slane %v7639, %v7729
        %v7731 = vlaneseq
        %v7732 = vshrl.u32 %v7731, 7
        %v7733 = vsub.s32 5, %v7732
        %v7734 = vrot.slane %v7639, %v7733
        %v7735 = vlaneseq
        %v7736 = vshrl.u32 %v7735, 7
        %v7737 = vsub.s32 6, %v7736
        %v7738 = vrot.slane %v7639, %v7737
        %v7739 = vlaneseq
        %v7740 = vshrl.u32 %v7739, 7
        %v7741 = vsub.s32 7, %v7740
        %v7742 = vrot.slane %v7639, %v7741
        %v7743 = vlaneseq
        %v7744 = vshrl.u32 %v7743, 7
        %v7745 = vsub.s32 0, %v7744
        %v7746 = vrot.slane %v7642, %v7745
        %v7747 = vlaneseq
        %v7748 = vshrl.u32 %v7747, 7
        %v7749 = vsub.s32 1, %v7748
        %v7750 = vrot.slane %v7642, %v7749
        %v7751 = vlaneseq
        %v7752 = vshrl.u32 %v7751, 7
        %v7753 = vsub.s32 2, %v7752
        %v7754 = vrot.slane %v7642, %v7753
        %v7755 = vlaneseq
        %v7756 = vshrl.u32 %v7755, 7
        %v7757 = vsub.s32 3, %v7756
        %v7758 = vrot.slane %v7642, %v7757
        %v7759 = vlaneseq
        %v7760 = vshrl.u32 %v7759, 7
        %v7761 = vsub.s32 4, %v7760
        %v7762 = vrot.slane %v7642, %v7761
        %v7763 = vlaneseq
        %v7764 = vshrl.u32 %v7763, 7
        %v7765 = vsub.s32 5, %v7764
        %v7766 = vrot.slane %v7642, %v7765
        %v7767 = vlaneseq
        %v7768 = vshrl.u32 %v7767, 7
        %v7769 = vsub.s32 6, %v7768
        %v7770 = vrot.slane %v7642, %v7769
        %v7771 = vlaneseq
        %v7772 = vshrl.u32 %v7771, 7
        %v7773 = vsub.s32 7, %v7772
        %v7774 = vrot.slane %v7642, %v7773
        %v7807 = vsub.f32 %v7183, %v7650
        %v7808 = vsub.f32 %v7184, %v7650
        %v7809 = vsub.f32 %v7185, %v7654
        %v7810 = vsub.f32 %v7186, %v7654
        %v7811 = vsub.f32 %v7187, %v7658
        %v7812 = vsub.f32 %v7188, %v7658
        %v7813 = vsub.f32 %v7189, %v7662
        %v7814 = vsub.f32 %v7190, %v7662
        %v7815 = vsub.f32 %v7191, %v7666
        %v7816 = vsub.f32 %v7192, %v7666
        %v7817 = vsub.f32 %v7193, %v7670
        %v7818 = vsub.f32 %v7194, %v7670
        %v7819 = vsub.f32 %v7195, %v7674
        %v7820 = vsub.f32 %v7196, %v7674
        %v7821 = vsub.f32 %v7197, %v7678
        %v7822 = vsub.f32 %v7198, %v7678
        %v7823 = vsub.f32 %v7199, %v7682
        %v7824 = vsub.f32 %v7200, %v7682
        %v7825 = vsub.f32 %v7201, %v7686
        %v7826 = vsub.f32 %v7202, %v7686
        %v7827 = vsub.f32 %v7203, %v7690
        %v7828 = vsub.f32 %v7204, %v7690
        %v7829 = vsub.f32 %v7205, %v7694
        %v7830 = vsub.f32 %v7206, %v7694
        %v7831 = vsub.f32 %v7207, %v7698
        %v7832 = vsub.f32 %v7208, %v7698
        %v7833 = vsub.f32 %v7209, %v7702
        %v7834 = vsub.f32 %v7210, %v7702
        %v7835 = vsub.f32 %v7211, %v7706
        %v7836 = vsub.f32 %v7212, %v7706
        %v7837 = vsub.f32 %v7213, %v7710
        %v7838 = vsub.f32 %v7214, %v7710
        %v7839 = vsub.f32 %v7215, %v7714
        %v7840 = vsub.f32 %v7216, %v7714
        %v7841 = vsub.f32 %v7217, %v7718
        %v7842 = vsub.f32 %v7218, %v7718
        %v7843 = vsub.f32 %v7219, %v7722
        %v7844 = vsub.f32 %v7220, %v7722
        %v7845 = vsub.f32 %v7221, %v7726
        %v7846 = vsub.f32 %v7222, %v7726
        %v7847 = vsub.f32 %v7223, %v7730
        %v7848 = vsub.f32 %v7224, %v7730
        %v7849 = vsub.f32 %v7225, %v7734
        %v7850 = vsub.f32 %v7226, %v7734
        %v7851 = vsub.f32 %v7227, %v7738
        %v7852 = vsub.f32 %v7228, %v7738
        %v7853 = vsub.f32 %v7229, %v7742
        %v7854 = vsub.f32 %v7230, %v7742
        %v7855 = vsub.f32 %v7231, %v7746
        %v7856 = vsub.f32 %v7232, %v7746
        %v7857 = vsub.f32 %v7233, %v7750
        %v7858 = vsub.f32 %v7234, %v7750
        %v7859 = vsub.f32 %v7235, %v7754
        %v7860 = vsub.f32 %v7236, %v7754
        %v7861 = vsub.f32 %v7237, %v7758
        %v7862 = vsub.f32 %v7238, %v7758
        %v7863 = vsub.f32 %v7239, %v7762
        %v7864 = vsub.f32 %v7240, %v7762
        %v7865 = vsub.f32 %v7241, %v7766
        %v7866 = vsub.f32 %v7242, %v7766
        %v7867 = vsub.f32 %v7243, %v7770
        %v7868 = vsub.f32 %v7244, %v7770
        %v7869 = vsub.f32 %v7245, %v7774
        %v7870 = vsub.f32 %v7246, %v7774
        %v7871 = vmul.f32 %v7807, 1.442695
        %v7872 = vpow.pop %v7871
        %v7873 = vmul.f32 %v7808, 1.442695
        %v7874 = vpow.pop %v7873
        %v7875 = vmul.f32 %v7809, 1.442695
        %v7876 = vpow.pop %v7875
        %v7877 = vmul.f32 %v7810, 1.442695
        %v7878 = vpow.pop %v7877
        %v7879 = vmul.f32 %v7811, 1.442695
        %v7880 = vpow.pop %v7879
        %v7881 = vmul.f32 %v7812, 1.442695
        %v7882 = vpow.pop %v7881
        %v7883 = vmul.f32 %v7813, 1.442695
        %v7884 = vpow.pop %v7883
        %v7885 = vmul.f32 %v7814, 1.442695
        %v7886 = vpow.pop %v7885
        %v7887 = vmul.f32 %v7815, 1.442695
        %v7888 = vpow.pop %v7887
        %v7889 = vmul.f32 %v7816, 1.442695
        %v7890 = vpow.pop %v7889
        %v7891 = vmul.f32 %v7817, 1.442695
        %v7892 = vpow.pop %v7891
        %v7893 = vmul.f32 %v7818, 1.442695
        %v7894 = vpow.pop %v7893
        %v7895 = vmul.f32 %v7819, 1.442695
        %v7896 = vpow.pop %v7895
        %v7897 = vmul.f32 %v7820, 1.442695
        %v7898 = vpow.pop %v7897
        %v7899 = vmul.f32 %v7821, 1.442695
        %v7900 = vpow.pop %v7899
        %v7901 = vmul.f32 %v7822, 1.442695
        %v7902 = vpow.pop %v7901
        %v7903 = vmul.f32 %v7823, 1.442695
        %v7904 = vpow.pop %v7903
        %v7905 = vmul.f32 %v7824, 1.442695
        %v7906 = vpow.pop %v7905
        %v7907 = vmul.f32 %v7825, 1.442695
        %v7908 = vpow.pop %v7907
        %v7909 = vmul.f32 %v7826, 1.442695
        %v7910 = vpow.pop %v7909
        %v7911 = vmul.f32 %v7827, 1.442695
        %v7912 = vpow.pop %v7911
        %v7913 = vmul.f32 %v7828, 1.442695
        %v7914 = vpow.pop %v7913
        %v7915 = vmul.f32 %v7829, 1.442695
        %v7916 = vpow.pop %v7915
        %v7917 = vmul.f32 %v7830, 1.442695
        %v7918 = vpow.pop %v7917
        %v7919 = vmul.f32 %v7831, 1.442695
        %v7920 = vpow.pop %v7919
        %v7921 = vmul.f32 %v7832, 1.442695
        %v7922 = vpow.pop %v7921
        %v7923 = vmul.f32 %v7833, 1.442695
        %v7924 = vpow.pop %v7923
        %v7925 = vmul.f32 %v7834, 1.442695
        %v7926 = vpow.pop %v7925
        %v7927 = vmul.f32 %v7835, 1.442695
        %v7928 = vpow.pop %v7927
        %v7929 = vmul.f32 %v7836, 1.442695
        %v7930 = vpow.pop %v7929
        %v7931 = vmul.f32 %v7837, 1.442695
        %v7932 = vpow.pop %v7931
        %v7933 = vmul.f32 %v7838, 1.442695
        %v7934 = vpow.pop %v7933
        %v7935 = vmul.f32 %v7839, 1.442695
        %v7936 = vpow.pop %v7935
        %v7937 = vmul.f32 %v7840, 1.442695
        %v7938 = vpow.pop %v7937
        %v7939 = vmul.f32 %v7841, 1.442695
        %v7940 = vpow.pop %v7939
        %v7941 = vmul.f32 %v7842, 1.442695
        %v7942 = vpow.pop %v7941
        %v7943 = vmul.f32 %v7843, 1.442695
        %v7944 = vpow.pop %v7943
        %v7945 = vmul.f32 %v7844, 1.442695
        %v7946 = vpow.pop %v7945
        %v7947 = vmul.f32 %v7845, 1.442695
        %v7948 = vpow.pop %v7947
        %v7949 = vmul.f32 %v7846, 1.442695
        %v7950 = vpow.pop %v7949
        %v7951 = vmul.f32 %v7847, 1.442695
        %v7952 = vpow.pop %v7951
        %v7953 = vmul.f32 %v7848, 1.442695
        %v7954 = vpow.pop %v7953
        %v7955 = vmul.f32 %v7849, 1.442695
        %v7956 = vpow.pop %v7955
        %v7957 = vmul.f32 %v7850, 1.442695
        %v7958 = vpow.pop %v7957
        %v7959 = vmul.f32 %v7851, 1.442695
        %v7960 = vpow.pop %v7959
        %v7961 = vmul.f32 %v7852, 1.442695
        %v7962 = vpow.pop %v7961
        %v7963 = vmul.f32 %v7853, 1.442695
        %v7964 = vpow.pop %v7963
        %v7965 = vmul.f32 %v7854, 1.442695
        %v7966 = vpow.pop %v7965
        %v7967 = vmul.f32 %v7855, 1.442695
        %v7968 = vpow.pop %v7967
        %v7969 = vmul.f32 %v7856, 1.442695
        %v7970 = vpow.pop %v7969
        %v7971 = vmul.f32 %v7857, 1.442695
        %v7972 = vpow.pop %v7971
        %v7973 = vmul.f32 %v7858, 1.442695
        %v7974 = vpow.pop %v7973
        %v7975 = vmul.f32 %v7859, 1.442695
        %v7976 = vpow.pop %v7975
        %v7977 = vmul.f32 %v7860, 1.442695
        %v7978 = vpow.pop %v7977
        %v7979 = vmul.f32 %v7861, 1.442695
        %v7980 = vpow.pop %v7979
        %v7981 = vmul.f32 %v7862, 1.442695
        %v7982 = vpow.pop %v7981
        %v7983 = vmul.f32 %v7863, 1.442695
        %v7984 = vpow.pop %v7983
        %v7985 = vmul.f32 %v7864, 1.442695
        %v7986 = vpow.pop %v7985
        %v7987 = vmul.f32 %v7865, 1.442695
        %v7988 = vpow.pop %v7987
        %v7989 = vmul.f32 %v7866, 1.442695
        %v7990 = vpow.pop %v7989
        %v7991 = vmul.f32 %v7867, 1.442695
        %v7992 = vpow.pop %v7991
        %v7993 = vmul.f32 %v7868, 1.442695
        %v7994 = vpow.pop %v7993
        %v7995 = vmul.f32 %v7869, 1.442695
        %v7996 = vpow.pop %v7995
        %v7997 = vmul.f32 %v7870, 1.442695
        %v7998 = vpow.pop %v7997
        %8063 = vset.pattern.permute.xlu0 0
        %8064 = vperm.xlu0 %8063, %v7872
        %v8065 = vpop.permute.xlu0 %8064
        %8066 = vset.pattern.permute.xlu0 0
        %8067 = vperm.xlu0 %8066, %v7874
        %v8068 = vpop.permute.xlu0 %8067
        %8069 = vset.pattern.permute.xlu0 0
        %8070 = vperm.xlu0 %8069, %v7876
        %v8071 = vpop.permute.xlu0 %8070
        %8072 = vset.pattern.permute.xlu0 0
        %8073 = vperm.xlu0 %8072, %v7878
        %v8074 = vpop.permute.xlu0 %8073
        %8075 = vset.pattern.permute.xlu0 0
        %8076 = vperm.xlu0 %8075, %v7880
        %v8077 = vpop.permute.xlu0 %8076
        %8078 = vset.pattern.permute.xlu0 0
        %8079 = vperm.xlu0 %8078, %v7882
        %v8080 = vpop.permute.xlu0 %8079
        %8081 = vset.pattern.permute.xlu0 0
        %8082 = vperm.xlu0 %8081, %v7884
        %v8083 = vpop.permute.xlu0 %8082
        %8084 = vset.pattern.permute.xlu0 0
        %8085 = vperm.xlu0 %8084, %v7886
        %v8086 = vpop.permute.xlu0 %8085
        %8087 = vset.pattern.permute.xlu0 0
        %8088 = vperm.xlu0 %8087, %v7888
        %v8089 = vpop.permute.xlu0 %8088
        %8090 = vset.pattern.permute.xlu0 0
        %8091 = vperm.xlu0 %8090, %v7890
        %v8092 = vpop.permute.xlu0 %8091
        %8093 = vset.pattern.permute.xlu0 0
        %8094 = vperm.xlu0 %8093, %v7892
        %v8095 = vpop.permute.xlu0 %8094
        %8096 = vset.pattern.permute.xlu0 0
        %8097 = vperm.xlu0 %8096, %v7894
        %v8098 = vpop.permute.xlu0 %8097
        %8099 = vset.pattern.permute.xlu0 0
        %8100 = vperm.xlu0 %8099, %v7896
        %v8101 = vpop.permute.xlu0 %8100
        %8102 = vset.pattern.permute.xlu0 0
        %8103 = vperm.xlu0 %8102, %v7898
        %v8104 = vpop.permute.xlu0 %8103
        %8105 = vset.pattern.permute.xlu0 0
        %8106 = vperm.xlu0 %8105, %v7900
        %v8107 = vpop.permute.xlu0 %8106
        %8108 = vset.pattern.permute.xlu0 0
        %8109 = vperm.xlu0 %8108, %v7902
        %v8110 = vpop.permute.xlu0 %8109
        %8111 = vset.pattern.permute.xlu0 0
        %8112 = vperm.xlu0 %8111, %v7904
        %v8113 = vpop.permute.xlu0 %8112
        %8114 = vset.pattern.permute.xlu0 0
        %8115 = vperm.xlu0 %8114, %v7906
        %v8116 = vpop.permute.xlu0 %8115
        %8117 = vset.pattern.permute.xlu0 0
        %8118 = vperm.xlu0 %8117, %v7908
        %v8119 = vpop.permute.xlu0 %8118
        %8120 = vset.pattern.permute.xlu0 0
        %8121 = vperm.xlu0 %8120, %v7910
        %v8122 = vpop.permute.xlu0 %8121
        %8123 = vset.pattern.permute.xlu0 0
        %8124 = vperm.xlu0 %8123, %v7912
        %v8125 = vpop.permute.xlu0 %8124
        %8126 = vset.pattern.permute.xlu0 0
        %8127 = vperm.xlu0 %8126, %v7914
        %v8128 = vpop.permute.xlu0 %8127
        %8129 = vset.pattern.permute.xlu0 0
        %8130 = vperm.xlu0 %8129, %v7916
        %v8131 = vpop.permute.xlu0 %8130
        %8132 = vset.pattern.permute.xlu0 0
        %8133 = vperm.xlu0 %8132, %v7918
        %v8134 = vpop.permute.xlu0 %8133
        %8135 = vset.pattern.permute.xlu0 0
        %8136 = vperm.xlu0 %8135, %v7920
        %v8137 = vpop.permute.xlu0 %8136
        %8138 = vset.pattern.permute.xlu0 0
        %8139 = vperm.xlu0 %8138, %v7922
        %v8140 = vpop.permute.xlu0 %8139
        %8141 = vset.pattern.permute.xlu0 0
        %8142 = vperm.xlu0 %8141, %v7924
        %v8143 = vpop.permute.xlu0 %8142
        %8144 = vset.pattern.permute.xlu0 0
        %8145 = vperm.xlu0 %8144, %v7926
        %v8146 = vpop.permute.xlu0 %8145
        %8147 = vset.pattern.permute.xlu0 0
        %8148 = vperm.xlu0 %8147, %v7928
        %v8149 = vpop.permute.xlu0 %8148
        %8150 = vset.pattern.permute.xlu0 0
        %8151 = vperm.xlu0 %8150, %v7930
        %v8152 = vpop.permute.xlu0 %8151
        %8153 = vset.pattern.permute.xlu0 0
        %8154 = vperm.xlu0 %8153, %v7932
        %v8155 = vpop.permute.xlu0 %8154
        %8156 = vset.pattern.permute.xlu0 0
        %8157 = vperm.xlu0 %8156, %v7934
        %v8158 = vpop.permute.xlu0 %8157
        %8159 = vset.pattern.permute.xlu0 0
        %8160 = vperm.xlu0 %8159, %v7936
        %v8161 = vpop.permute.xlu0 %8160
        %8162 = vset.pattern.permute.xlu0 0
        %8163 = vperm.xlu0 %8162, %v7938
        %v8164 = vpop.permute.xlu0 %8163
        %8165 = vset.pattern.permute.xlu0 0
        %8166 = vperm.xlu0 %8165, %v7940
        %v8167 = vpop.permute.xlu0 %8166
        %8168 = vset.pattern.permute.xlu0 0
        %8169 = vperm.xlu0 %8168, %v7942
        %v8170 = vpop.permute.xlu0 %8169
        %8171 = vset.pattern.permute.xlu0 0
        %8172 = vperm.xlu0 %8171, %v7944
        %v8173 = vpop.permute.xlu0 %8172
        %8174 = vset.pattern.permute.xlu0 0
        %8175 = vperm.xlu0 %8174, %v7946
        %v8176 = vpop.permute.xlu0 %8175
        %8177 = vset.pattern.permute.xlu0 0
        %8178 = vperm.xlu0 %8177, %v7948
        %v8179 = vpop.permute.xlu0 %8178
        %8180 = vset.pattern.permute.xlu0 0
        %8181 = vperm.xlu0 %8180, %v7950
        %v8182 = vpop.permute.xlu0 %8181
        %8183 = vset.pattern.permute.xlu0 0
        %8184 = vperm.xlu0 %8183, %v7952
        %v8185 = vpop.permute.xlu0 %8184
        %8186 = vset.pattern.permute.xlu0 0
        %8187 = vperm.xlu0 %8186, %v7954
        %v8188 = vpop.permute.xlu0 %8187
        %8189 = vset.pattern.permute.xlu0 0
        %8190 = vperm.xlu0 %8189, %v7956
        %v8191 = vpop.permute.xlu0 %8190
        %8192 = vset.pattern.permute.xlu0 0
        %8193 = vperm.xlu0 %8192, %v7958
        %v8194 = vpop.permute.xlu0 %8193
        %8195 = vset.pattern.permute.xlu0 0
        %8196 = vperm.xlu0 %8195, %v7960
        %v8197 = vpop.permute.xlu0 %8196
        %8198 = vset.pattern.permute.xlu0 0
        %8199 = vperm.xlu0 %8198, %v7962
        %v8200 = vpop.permute.xlu0 %8199
        %8201 = vset.pattern.permute.xlu0 0
        %8202 = vperm.xlu0 %8201, %v7964
        %v8203 = vpop.permute.xlu0 %8202
        %8204 = vset.pattern.permute.xlu0 0
        %8205 = vperm.xlu0 %8204, %v7966
        %v8206 = vpop.permute.xlu0 %8205
        %8207 = vset.pattern.permute.xlu0 0
        %8208 = vperm.xlu0 %8207, %v7968
        %v8209 = vpop.permute.xlu0 %8208
        %8210 = vset.pattern.permute.xlu0 0
        %8211 = vperm.xlu0 %8210, %v7970
        %v8212 = vpop.permute.xlu0 %8211
        %8213 = vset.pattern.permute.xlu0 0
        %8214 = vperm.xlu0 %8213, %v7972
        %v8215 = vpop.permute.xlu0 %8214
        %8216 = vset.pattern.permute.xlu0 0
        %8217 = vperm.xlu0 %8216, %v7974
        %v8218 = vpop.permute.xlu0 %8217
        %8219 = vset.pattern.permute.xlu0 0
        %8220 = vperm.xlu0 %8219, %v7976
        %v8221 = vpop.permute.xlu0 %8220
        %8222 = vset.pattern.permute.xlu0 0
        %8223 = vperm.xlu0 %8222, %v7978
        %v8224 = vpop.permute.xlu0 %8223
        %8225 = vset.pattern.permute.xlu0 0
        %8226 = vperm.xlu0 %8225, %v7980
        %v8227 = vpop.permute.xlu0 %8226
        %8228 = vset.pattern.permute.xlu0 0
        %8229 = vperm.xlu0 %8228, %v7982
        %v8230 = vpop.permute.xlu0 %8229
        %8231 = vset.pattern.permute.xlu0 0
        %8232 = vperm.xlu0 %8231, %v7984
        %v8233 = vpop.permute.xlu0 %8232
        %8234 = vset.pattern.permute.xlu0 0
        %8235 = vperm.xlu0 %8234, %v7986
        %v8236 = vpop.permute.xlu0 %8235
        %8237 = vset.pattern.permute.xlu0 0
        %8238 = vperm.xlu0 %8237, %v7988
        %v8239 = vpop.permute.xlu0 %8238
        %8240 = vset.pattern.permute.xlu0 0
        %8241 = vperm.xlu0 %8240, %v7990
        %v8242 = vpop.permute.xlu0 %8241
        %8243 = vset.pattern.permute.xlu0 0
        %8244 = vperm.xlu0 %8243, %v7992
        %v8245 = vpop.permute.xlu0 %8244
        %8246 = vset.pattern.permute.xlu0 0
        %8247 = vperm.xlu0 %8246, %v7994
        %v8248 = vpop.permute.xlu0 %8247
        %8249 = vset.pattern.permute.xlu0 0
        %8250 = vperm.xlu0 %8249, %v7996
        %v8251 = vpop.permute.xlu0 %8250
        %8252 = vset.pattern.permute.xlu0 0
        %8253 = vperm.xlu0 %8252, %v7998
        %v8254 = vpop.permute.xlu0 %8253
        %v8255 = vlaneseq
        %v8256 = vshrl.u32 %v8255, 7
        %v8257 = vsub.s32 %v891, %v8256
        %v8258 = vrot.slane %v8065, %v8257
        %v8259 = vlaneseq
        %v8260 = vshrl.u32 %v8259, 7
        %v8261 = vsub.s32 %v2835, %v8260
        %v8262 = vrot.slane %v8068, %v8261
        %v8263 = vsel %vm2840, %v8262, %v8258
        %v8264 = vlaneseq
        %v8265 = vshrl.u32 %v8264, 7
        %v8266 = vsub.s32 %v891, %v8265
        %v8267 = vrot.slane %v8071, %v8266
        %v8268 = vlaneseq
        %v8269 = vshrl.u32 %v8268, 7
        %v8270 = vsub.s32 %v2835, %v8269
        %v8271 = vrot.slane %v8074, %v8270
        %v8272 = vsel %vm2840, %v8271, %v8267
        %v8273 = vlaneseq
        %v8274 = vshrl.u32 %v8273, 7
        %v8275 = vsub.s32 %v891, %v8274
        %v8276 = vrot.slane %v8077, %v8275
        %v8277 = vlaneseq
        %v8278 = vshrl.u32 %v8277, 7
        %v8279 = vsub.s32 %v2835, %v8278
        %v8280 = vrot.slane %v8080, %v8279
        %v8281 = vsel %vm2840, %v8280, %v8276
        %v8282 = vlaneseq
        %v8283 = vshrl.u32 %v8282, 7
        %v8284 = vsub.s32 %v891, %v8283
        %v8285 = vrot.slane %v8083, %v8284
        %v8286 = vlaneseq
        %v8287 = vshrl.u32 %v8286, 7
        %v8288 = vsub.s32 %v2835, %v8287
        %v8289 = vrot.slane %v8086, %v8288
        %v8290 = vsel %vm2840, %v8289, %v8285
        %v8291 = vlaneseq
        %v8292 = vshrl.u32 %v8291, 7
        %v8293 = vsub.s32 %v891, %v8292
        %v8294 = vrot.slane %v8089, %v8293
        %v8295 = vlaneseq
        %v8296 = vshrl.u32 %v8295, 7
        %v8297 = vsub.s32 %v2835, %v8296
        %v8298 = vrot.slane %v8092, %v8297
        %v8299 = vsel %vm2840, %v8298, %v8294
        %v8300 = vlaneseq
        %v8301 = vshrl.u32 %v8300, 7
        %v8302 = vsub.s32 %v891, %v8301
        %v8303 = vrot.slane %v8095, %v8302
        %v8304 = vlaneseq
        %v8305 = vshrl.u32 %v8304, 7
        %v8306 = vsub.s32 %v2835, %v8305
        %v8307 = vrot.slane %v8098, %v8306
        %v8308 = vsel %vm2840, %v8307, %v8303
        %v8309 = vlaneseq
        %v8310 = vshrl.u32 %v8309, 7
        %v8311 = vsub.s32 %v891, %v8310
        %v8312 = vrot.slane %v8101, %v8311
        %v8313 = vlaneseq
        %v8314 = vshrl.u32 %v8313, 7
        %v8315 = vsub.s32 %v2835, %v8314
        %v8316 = vrot.slane %v8104, %v8315
        %v8317 = vsel %vm2840, %v8316, %v8312
        %v8318 = vlaneseq
        %v8319 = vshrl.u32 %v8318, 7
        %v8320 = vsub.s32 %v891, %v8319
        %v8321 = vrot.slane %v8107, %v8320
        %v8322 = vlaneseq
        %v8323 = vshrl.u32 %v8322, 7
        %v8324 = vsub.s32 %v2835, %v8323
        %v8325 = vrot.slane %v8110, %v8324
        %v8326 = vsel %vm2840, %v8325, %v8321
        %v8327 = vlaneseq
        %v8328 = vshrl.u32 %v8327, 7
        %v8329 = vsub.s32 %v891, %v8328
        %v8330 = vrot.slane %v8113, %v8329
        %v8331 = vlaneseq
        %v8332 = vshrl.u32 %v8331, 7
        %v8333 = vsub.s32 %v2835, %v8332
        %v8334 = vrot.slane %v8116, %v8333
        %v8335 = vsel %vm2840, %v8334, %v8330
        %v8336 = vlaneseq
        %v8337 = vshrl.u32 %v8336, 7
        %v8338 = vsub.s32 %v891, %v8337
        %v8339 = vrot.slane %v8119, %v8338
        %v8340 = vlaneseq
        %v8341 = vshrl.u32 %v8340, 7
        %v8342 = vsub.s32 %v2835, %v8341
        %v8343 = vrot.slane %v8122, %v8342
        %v8344 = vsel %vm2840, %v8343, %v8339
        %v8345 = vlaneseq
        %v8346 = vshrl.u32 %v8345, 7
        %v8347 = vsub.s32 %v891, %v8346
        %v8348 = vrot.slane %v8125, %v8347
        %v8349 = vlaneseq
        %v8350 = vshrl.u32 %v8349, 7
        %v8351 = vsub.s32 %v2835, %v8350
        %v8352 = vrot.slane %v8128, %v8351
        %v8353 = vsel %vm2840, %v8352, %v8348
        %v8354 = vlaneseq
        %v8355 = vshrl.u32 %v8354, 7
        %v8356 = vsub.s32 %v891, %v8355
        %v8357 = vrot.slane %v8131, %v8356
        %v8358 = vlaneseq
        %v8359 = vshrl.u32 %v8358, 7
        %v8360 = vsub.s32 %v2835, %v8359
        %v8361 = vrot.slane %v8134, %v8360
        %v8362 = vsel %vm2840, %v8361, %v8357
        %v8363 = vlaneseq
        %v8364 = vshrl.u32 %v8363, 7
        %v8365 = vsub.s32 %v891, %v8364
        %v8366 = vrot.slane %v8137, %v8365
        %v8367 = vlaneseq
        %v8368 = vshrl.u32 %v8367, 7
        %v8369 = vsub.s32 %v2835, %v8368
        %v8370 = vrot.slane %v8140, %v8369
        %v8371 = vsel %vm2840, %v8370, %v8366
        %v8372 = vlaneseq
        %v8373 = vshrl.u32 %v8372, 7
        %v8374 = vsub.s32 %v891, %v8373
        %v8375 = vrot.slane %v8143, %v8374
        %v8376 = vlaneseq
        %v8377 = vshrl.u32 %v8376, 7
        %v8378 = vsub.s32 %v2835, %v8377
        %v8379 = vrot.slane %v8146, %v8378
        %v8380 = vsel %vm2840, %v8379, %v8375
        %v8381 = vlaneseq
        %v8382 = vshrl.u32 %v8381, 7
        %v8383 = vsub.s32 %v891, %v8382
        %v8384 = vrot.slane %v8149, %v8383
        %v8385 = vlaneseq
        %v8386 = vshrl.u32 %v8385, 7
        %v8387 = vsub.s32 %v2835, %v8386
        %v8388 = vrot.slane %v8152, %v8387
        %v8389 = vsel %vm2840, %v8388, %v8384
        %v8390 = vlaneseq
        %v8391 = vshrl.u32 %v8390, 7
        %v8392 = vsub.s32 %v891, %v8391
        %v8393 = vrot.slane %v8155, %v8392
        %v8394 = vlaneseq
        %v8395 = vshrl.u32 %v8394, 7
        %v8396 = vsub.s32 %v2835, %v8395
        %v8397 = vrot.slane %v8158, %v8396
        %v8398 = vsel %vm2840, %v8397, %v8393
        %v8399 = vlaneseq
        %v8400 = vshrl.u32 %v8399, 7
        %v8401 = vsub.s32 %v891, %v8400
        %v8402 = vrot.slane %v8161, %v8401
        %v8403 = vlaneseq
        %v8404 = vshrl.u32 %v8403, 7
        %v8405 = vsub.s32 %v2835, %v8404
        %v8406 = vrot.slane %v8164, %v8405
        %v8407 = vsel %vm2840, %v8406, %v8402
        %v8408 = vlaneseq
        %v8409 = vshrl.u32 %v8408, 7
        %v8410 = vsub.s32 %v891, %v8409
        %v8411 = vrot.slane %v8167, %v8410
        %v8412 = vlaneseq
        %v8413 = vshrl.u32 %v8412, 7
        %v8414 = vsub.s32 %v2835, %v8413
        %v8415 = vrot.slane %v8170, %v8414
        %v8416 = vsel %vm2840, %v8415, %v8411
        %v8417 = vlaneseq
        %v8418 = vshrl.u32 %v8417, 7
        %v8419 = vsub.s32 %v891, %v8418
        %v8420 = vrot.slane %v8173, %v8419
        %v8421 = vlaneseq
        %v8422 = vshrl.u32 %v8421, 7
        %v8423 = vsub.s32 %v2835, %v8422
        %v8424 = vrot.slane %v8176, %v8423
        %v8425 = vsel %vm2840, %v8424, %v8420
        %v8426 = vlaneseq
        %v8427 = vshrl.u32 %v8426, 7
        %v8428 = vsub.s32 %v891, %v8427
        %v8429 = vrot.slane %v8179, %v8428
        %v8430 = vlaneseq
        %v8431 = vshrl.u32 %v8430, 7
        %v8432 = vsub.s32 %v2835, %v8431
        %v8433 = vrot.slane %v8182, %v8432
        %v8434 = vsel %vm2840, %v8433, %v8429
        %v8435 = vlaneseq
        %v8436 = vshrl.u32 %v8435, 7
        %v8437 = vsub.s32 %v891, %v8436
        %v8438 = vrot.slane %v8185, %v8437
        %v8439 = vlaneseq
        %v8440 = vshrl.u32 %v8439, 7
        %v8441 = vsub.s32 %v2835, %v8440
        %v8442 = vrot.slane %v8188, %v8441
        %v8443 = vsel %vm2840, %v8442, %v8438
        %v8444 = vlaneseq
        %v8445 = vshrl.u32 %v8444, 7
        %v8446 = vsub.s32 %v891, %v8445
        %v8447 = vrot.slane %v8191, %v8446
        %v8448 = vlaneseq
        %v8449 = vshrl.u32 %v8448, 7
        %v8450 = vsub.s32 %v2835, %v8449
        %v8451 = vrot.slane %v8194, %v8450
        %v8452 = vsel %vm2840, %v8451, %v8447
        %v8453 = vlaneseq
        %v8454 = vshrl.u32 %v8453, 7
        %v8455 = vsub.s32 %v891, %v8454
        %v8456 = vrot.slane %v8197, %v8455
        %v8457 = vlaneseq
        %v8458 = vshrl.u32 %v8457, 7
        %v8459 = vsub.s32 %v2835, %v8458
        %v8460 = vrot.slane %v8200, %v8459
        %v8461 = vsel %vm2840, %v8460, %v8456
        %v8462 = vlaneseq
        %v8463 = vshrl.u32 %v8462, 7
        %v8464 = vsub.s32 %v891, %v8463
        %v8465 = vrot.slane %v8203, %v8464
        %v8466 = vlaneseq
        %v8467 = vshrl.u32 %v8466, 7
        %v8468 = vsub.s32 %v2835, %v8467
        %v8469 = vrot.slane %v8206, %v8468
        %v8470 = vsel %vm2840, %v8469, %v8465
        %v8471 = vlaneseq
        %v8472 = vshrl.u32 %v8471, 7
        %v8473 = vsub.s32 %v891, %v8472
        %v8474 = vrot.slane %v8209, %v8473
        %v8475 = vlaneseq
        %v8476 = vshrl.u32 %v8475, 7
        %v8477 = vsub.s32 %v2835, %v8476
        %v8478 = vrot.slane %v8212, %v8477
        %v8479 = vsel %vm2840, %v8478, %v8474
        %v8480 = vlaneseq
        %v8481 = vshrl.u32 %v8480, 7
        %v8482 = vsub.s32 %v891, %v8481
        %v8483 = vrot.slane %v8215, %v8482
        %v8484 = vlaneseq
        %v8485 = vshrl.u32 %v8484, 7
        %v8486 = vsub.s32 %v2835, %v8485
        %v8487 = vrot.slane %v8218, %v8486
        %v8488 = vsel %vm2840, %v8487, %v8483
        %v8489 = vlaneseq
        %v8490 = vshrl.u32 %v8489, 7
        %v8491 = vsub.s32 %v891, %v8490
        %v8492 = vrot.slane %v8221, %v8491
        %v8493 = vlaneseq
        %v8494 = vshrl.u32 %v8493, 7
        %v8495 = vsub.s32 %v2835, %v8494
        %v8496 = vrot.slane %v8224, %v8495
        %v8497 = vsel %vm2840, %v8496, %v8492
        %v8498 = vlaneseq
        %v8499 = vshrl.u32 %v8498, 7
        %v8500 = vsub.s32 %v891, %v8499
        %v8501 = vrot.slane %v8227, %v8500
        %v8502 = vlaneseq
        %v8503 = vshrl.u32 %v8502, 7
        %v8504 = vsub.s32 %v2835, %v8503
        %v8505 = vrot.slane %v8230, %v8504
        %v8506 = vsel %vm2840, %v8505, %v8501
        %v8507 = vlaneseq
        %v8508 = vshrl.u32 %v8507, 7
        %v8509 = vsub.s32 %v891, %v8508
        %v8510 = vrot.slane %v8233, %v8509
        %v8511 = vlaneseq
        %v8512 = vshrl.u32 %v8511, 7
        %v8513 = vsub.s32 %v2835, %v8512
        %v8514 = vrot.slane %v8236, %v8513
        %v8515 = vsel %vm2840, %v8514, %v8510
        %v8516 = vlaneseq
        %v8517 = vshrl.u32 %v8516, 7
        %v8518 = vsub.s32 %v891, %v8517
        %v8519 = vrot.slane %v8239, %v8518
        %v8520 = vlaneseq
        %v8521 = vshrl.u32 %v8520, 7
        %v8522 = vsub.s32 %v2835, %v8521
        %v8523 = vrot.slane %v8242, %v8522
        %v8524 = vsel %vm2840, %v8523, %v8519
        %v8525 = vlaneseq
        %v8526 = vshrl.u32 %v8525, 7
        %v8527 = vsub.s32 %v891, %v8526
        %v8528 = vrot.slane %v8245, %v8527
        %v8529 = vlaneseq
        %v8530 = vshrl.u32 %v8529, 7
        %v8531 = vsub.s32 %v2835, %v8530
        %v8532 = vrot.slane %v8248, %v8531
        %v8533 = vsel %vm2840, %v8532, %v8528
        %v8534 = vlaneseq
        %v8535 = vshrl.u32 %v8534, 7
        %v8536 = vsub.s32 %v891, %v8535
        %v8537 = vrot.slane %v8251, %v8536
        %v8538 = vlaneseq
        %v8539 = vshrl.u32 %v8538, 7
        %v8540 = vsub.s32 %v2835, %v8539
        %v8541 = vrot.slane %v8254, %v8540
        %v8542 = vsel %vm2840, %v8541, %v8537
        %v8543 = vsel %vm3121, %v8272, %v8263
        %v8544 = vsel %vm3123, %v8281, %v8543
        %v8545 = vsel %vm3125, %v8290, %v8544
        %v8546 = vsel %vm3127, %v8299, %v8545
        %v8547 = vsel %vm3129, %v8308, %v8546
        %v8548 = vsel %vm3131, %v8317, %v8547
        %v8549 = vsel %vm3133, %v8326, %v8548
        %v8550 = vsel %vm3121, %v8344, %v8335
        %v8551 = vsel %vm3123, %v8353, %v8550
        %v8552 = vsel %vm3125, %v8362, %v8551
        %v8553 = vsel %vm3127, %v8371, %v8552
        %v8554 = vsel %vm3129, %v8380, %v8553
        %v8555 = vsel %vm3131, %v8389, %v8554
        %v8556 = vsel %vm3133, %v8398, %v8555
        %v8557 = vsel %vm3121, %v8416, %v8407
        %v8558 = vsel %vm3123, %v8425, %v8557
        %v8559 = vsel %vm3125, %v8434, %v8558
        %v8560 = vsel %vm3127, %v8443, %v8559
        %v8561 = vsel %vm3129, %v8452, %v8560
        %v8562 = vsel %vm3131, %v8461, %v8561
        %v8563 = vsel %vm3133, %v8470, %v8562
        %v8564 = vsel %vm3121, %v8488, %v8479
        %v8565 = vsel %vm3123, %v8497, %v8564
        %v8566 = vsel %vm3125, %v8506, %v8565
        %v8567 = vsel %vm3127, %v8515, %v8566
        %v8568 = vsel %vm3129, %v8524, %v8567
        %v8569 = vsel %vm3131, %v8533, %v8568
        %v8570 = vsel %vm3133, %v8542, %v8569
        %v8575 = vsel %vm3160, %v8549, 0.0
        %8576 = vadd.xlane.f32.xlu0 %v8575
        %v8577 = vpop.xlane.xlu0 %8576
        %v8578 = vsel %vm3160, %v8556, 0.0
        %8579 = vadd.xlane.f32.xlu0 %v8578
        %v8580 = vpop.xlane.xlu0 %8579
        %v8581 = vsel %vm3160, %v8563, 0.0
        %8582 = vadd.xlane.f32.xlu0 %v8581
        %v8583 = vpop.xlane.xlu0 %8582
        %v8584 = vsel %vm3160, %v8570, 0.0
        %8585 = vadd.xlane.f32.xlu0 %v8584
        %v8586 = vpop.xlane.xlu0 %8585
        %v8587 = vrcp.pop %v8577
        %v8588 = vrcp.pop %v8580
        %v8589 = vrcp.pop %v8583
        %v8590 = vrcp.pop %v8586
        %v8595 = vlaneseq
        %v8596 = vshrl.u32 %v8595, 7
        %v8597 = vsub.s32 0, %v8596
        %v8598 = vrot.slane %v8587, %v8597
        %v8599 = vlaneseq
        %v8600 = vshrl.u32 %v8599, 7
        %v8601 = vsub.s32 1, %v8600
        %v8602 = vrot.slane %v8587, %v8601
        %v8603 = vlaneseq
        %v8604 = vshrl.u32 %v8603, 7
        %v8605 = vsub.s32 2, %v8604
        %v8606 = vrot.slane %v8587, %v8605
        %v8607 = vlaneseq
        %v8608 = vshrl.u32 %v8607, 7
        %v8609 = vsub.s32 3, %v8608
        %v8610 = vrot.slane %v8587, %v8609
        %v8611 = vlaneseq
        %v8612 = vshrl.u32 %v8611, 7
        %v8613 = vsub.s32 4, %v8612
        %v8614 = vrot.slane %v8587, %v8613
        %v8615 = vlaneseq
        %v8616 = vshrl.u32 %v8615, 7
        %v8617 = vsub.s32 5, %v8616
        %v8618 = vrot.slane %v8587, %v8617
        %v8619 = vlaneseq
        %v8620 = vshrl.u32 %v8619, 7
        %v8621 = vsub.s32 6, %v8620
        %v8622 = vrot.slane %v8587, %v8621
        %v8623 = vlaneseq
        %v8624 = vshrl.u32 %v8623, 7
        %v8625 = vsub.s32 7, %v8624
        %v8626 = vrot.slane %v8587, %v8625
        %v8627 = vlaneseq
        %v8628 = vshrl.u32 %v8627, 7
        %v8629 = vsub.s32 0, %v8628
        %v8630 = vrot.slane %v8588, %v8629
        %v8631 = vlaneseq
        %v8632 = vshrl.u32 %v8631, 7
        %v8633 = vsub.s32 1, %v8632
        %v8634 = vrot.slane %v8588, %v8633
        %v8635 = vlaneseq
        %v8636 = vshrl.u32 %v8635, 7
        %v8637 = vsub.s32 2, %v8636
        %v8638 = vrot.slane %v8588, %v8637
        %v8639 = vlaneseq
        %v8640 = vshrl.u32 %v8639, 7
        %v8641 = vsub.s32 3, %v8640
        %v8642 = vrot.slane %v8588, %v8641
        %v8643 = vlaneseq
        %v8644 = vshrl.u32 %v8643, 7
        %v8645 = vsub.s32 4, %v8644
        %v8646 = vrot.slane %v8588, %v8645
        %v8647 = vlaneseq
        %v8648 = vshrl.u32 %v8647, 7
        %v8649 = vsub.s32 5, %v8648
        %v8650 = vrot.slane %v8588, %v8649
        %v8651 = vlaneseq
        %v8652 = vshrl.u32 %v8651, 7
        %v8653 = vsub.s32 6, %v8652
        %v8654 = vrot.slane %v8588, %v8653
        %v8655 = vlaneseq
        %v8656 = vshrl.u32 %v8655, 7
        %v8657 = vsub.s32 7, %v8656
        %v8658 = vrot.slane %v8588, %v8657
        %v8659 = vlaneseq
        %v8660 = vshrl.u32 %v8659, 7
        %v8661 = vsub.s32 0, %v8660
        %v8662 = vrot.slane %v8589, %v8661
        %v8663 = vlaneseq
        %v8664 = vshrl.u32 %v8663, 7
        %v8665 = vsub.s32 1, %v8664
        %v8666 = vrot.slane %v8589, %v8665
        %v8667 = vlaneseq
        %v8668 = vshrl.u32 %v8667, 7
        %v8669 = vsub.s32 2, %v8668
        %v8670 = vrot.slane %v8589, %v8669
        %v8671 = vlaneseq
        %v8672 = vshrl.u32 %v8671, 7
        %v8673 = vsub.s32 3, %v8672
        %v8674 = vrot.slane %v8589, %v8673
        %v8675 = vlaneseq
        %v8676 = vshrl.u32 %v8675, 7
        %v8677 = vsub.s32 4, %v8676
        %v8678 = vrot.slane %v8589, %v8677
        %v8679 = vlaneseq
        %v8680 = vshrl.u32 %v8679, 7
        %v8681 = vsub.s32 5, %v8680
        %v8682 = vrot.slane %v8589, %v8681
        %v8683 = vlaneseq
        %v8684 = vshrl.u32 %v8683, 7
        %v8685 = vsub.s32 6, %v8684
        %v8686 = vrot.slane %v8589, %v8685
        %v8687 = vlaneseq
        %v8688 = vshrl.u32 %v8687, 7
        %v8689 = vsub.s32 7, %v8688
        %v8690 = vrot.slane %v8589, %v8689
        %v8691 = vlaneseq
        %v8692 = vshrl.u32 %v8691, 7
        %v8693 = vsub.s32 0, %v8692
        %v8694 = vrot.slane %v8590, %v8693
        %v8695 = vlaneseq
        %v8696 = vshrl.u32 %v8695, 7
        %v8697 = vsub.s32 1, %v8696
        %v8698 = vrot.slane %v8590, %v8697
        %v8699 = vlaneseq
        %v8700 = vshrl.u32 %v8699, 7
        %v8701 = vsub.s32 2, %v8700
        %v8702 = vrot.slane %v8590, %v8701
        %v8703 = vlaneseq
        %v8704 = vshrl.u32 %v8703, 7
        %v8705 = vsub.s32 3, %v8704
        %v8706 = vrot.slane %v8590, %v8705
        %v8707 = vlaneseq
        %v8708 = vshrl.u32 %v8707, 7
        %v8709 = vsub.s32 4, %v8708
        %v8710 = vrot.slane %v8590, %v8709
        %v8711 = vlaneseq
        %v8712 = vshrl.u32 %v8711, 7
        %v8713 = vsub.s32 5, %v8712
        %v8714 = vrot.slane %v8590, %v8713
        %v8715 = vlaneseq
        %v8716 = vshrl.u32 %v8715, 7
        %v8717 = vsub.s32 6, %v8716
        %v8718 = vrot.slane %v8590, %v8717
        %v8719 = vlaneseq
        %v8720 = vshrl.u32 %v8719, 7
        %v8721 = vsub.s32 7, %v8720
        %v8722 = vrot.slane %v8590, %v8721
        %v8755 = vmul.f32 %v7872, %v8598
        %v8756 = vmul.f32 %v7874, %v8598
        %v8757 = vmul.f32 %v7876, %v8602
        %v8758 = vmul.f32 %v7878, %v8602
        %v8759 = vmul.f32 %v7880, %v8606
        %v8760 = vmul.f32 %v7882, %v8606
        %v8761 = vmul.f32 %v7884, %v8610
        %v8762 = vmul.f32 %v7886, %v8610
        %v8763 = vmul.f32 %v7888, %v8614
        %v8764 = vmul.f32 %v7890, %v8614
        %v8765 = vmul.f32 %v7892, %v8618
        %v8766 = vmul.f32 %v7894, %v8618
        %v8767 = vmul.f32 %v7896, %v8622
        %v8768 = vmul.f32 %v7898, %v8622
        %v8769 = vmul.f32 %v7900, %v8626
        %v8770 = vmul.f32 %v7902, %v8626
        %v8771 = vmul.f32 %v7904, %v8630
        %v8772 = vmul.f32 %v7906, %v8630
        %v8773 = vmul.f32 %v7908, %v8634
        %v8774 = vmul.f32 %v7910, %v8634
        %v8775 = vmul.f32 %v7912, %v8638
        %v8776 = vmul.f32 %v7914, %v8638
        %v8777 = vmul.f32 %v7916, %v8642
        %v8778 = vmul.f32 %v7918, %v8642
        %v8779 = vmul.f32 %v7920, %v8646
        %v8780 = vmul.f32 %v7922, %v8646
        %v8781 = vmul.f32 %v7924, %v8650
        %v8782 = vmul.f32 %v7926, %v8650
        %v8783 = vmul.f32 %v7928, %v8654
        %v8784 = vmul.f32 %v7930, %v8654
        %v8785 = vmul.f32 %v7932, %v8658
        %v8786 = vmul.f32 %v7934, %v8658
        %v8787 = vmul.f32 %v7936, %v8662
        %v8788 = vmul.f32 %v7938, %v8662
        %v8789 = vmul.f32 %v7940, %v8666
        %v8790 = vmul.f32 %v7942, %v8666
        %v8791 = vmul.f32 %v7944, %v8670
        %v8792 = vmul.f32 %v7946, %v8670
        %v8793 = vmul.f32 %v7948, %v8674
        %v8794 = vmul.f32 %v7950, %v8674
        %v8795 = vmul.f32 %v7952, %v8678
        %v8796 = vmul.f32 %v7954, %v8678
        %v8797 = vmul.f32 %v7956, %v8682
        %v8798 = vmul.f32 %v7958, %v8682
        %v8799 = vmul.f32 %v7960, %v8686
        %v8800 = vmul.f32 %v7962, %v8686
        %v8801 = vmul.f32 %v7964, %v8690
        %v8802 = vmul.f32 %v7966, %v8690
        %v8803 = vmul.f32 %v7968, %v8694
        %v8804 = vmul.f32 %v7970, %v8694
        %v8805 = vmul.f32 %v7972, %v8698
        %v8806 = vmul.f32 %v7974, %v8698
        %v8807 = vmul.f32 %v7976, %v8702
        %v8808 = vmul.f32 %v7978, %v8702
        %v8809 = vmul.f32 %v7980, %v8706
        %v8810 = vmul.f32 %v7982, %v8706
        %v8811 = vmul.f32 %v7984, %v8710
        %v8812 = vmul.f32 %v7986, %v8710
        %v8813 = vmul.f32 %v7988, %v8714
        %v8814 = vmul.f32 %v7990, %v8714
        %v8815 = vmul.f32 %v7992, %v8718
        %v8816 = vmul.f32 %v7994, %v8718
        %v8817 = vmul.f32 %v7996, %v8722
        %v8818 = vmul.f32 %v7998, %v8722
        %8820 = vset.pattern.permute.xlu0 0
        %8821 = vperm.xlu0 %8820, %v8755
        %v8822 = vpop.permute.xlu0 %8821
        %8825 = vset.pattern.permute.xlu0 0
        %8826 = vperm.xlu0 %8825, %v8756
        %v8827 = vpop.permute.xlu0 %8826
        %8830 = vset.pattern.permute.xlu0 0
        %8831 = vperm.xlu0 %8830, %v8757
        %v8832 = vpop.permute.xlu0 %8831
        %8835 = vset.pattern.permute.xlu0 0
        %8836 = vperm.xlu0 %8835, %v8758
        %v8837 = vpop.permute.xlu0 %8836
        %8840 = vset.pattern.permute.xlu0 0
        %8841 = vperm.xlu0 %8840, %v8759
        %v8842 = vpop.permute.xlu0 %8841
        %8845 = vset.pattern.permute.xlu0 0
        %8846 = vperm.xlu0 %8845, %v8760
        %v8847 = vpop.permute.xlu0 %8846
        %8850 = vset.pattern.permute.xlu0 0
        %8851 = vperm.xlu0 %8850, %v8761
        %v8852 = vpop.permute.xlu0 %8851
        %8855 = vset.pattern.permute.xlu0 0
        %8856 = vperm.xlu0 %8855, %v8762
        %v8857 = vpop.permute.xlu0 %8856
        %8860 = vset.pattern.permute.xlu0 0
        %8861 = vperm.xlu0 %8860, %v8763
        %v8862 = vpop.permute.xlu0 %8861
        %8865 = vset.pattern.permute.xlu0 0
        %8866 = vperm.xlu0 %8865, %v8764
        %v8867 = vpop.permute.xlu0 %8866
        %8870 = vset.pattern.permute.xlu0 0
        %8871 = vperm.xlu0 %8870, %v8765
        %v8872 = vpop.permute.xlu0 %8871
        %8875 = vset.pattern.permute.xlu0 0
        %8876 = vperm.xlu0 %8875, %v8766
        %v8877 = vpop.permute.xlu0 %8876
        %8880 = vset.pattern.permute.xlu0 0
        %8881 = vperm.xlu0 %8880, %v8767
        %v8882 = vpop.permute.xlu0 %8881
        %8885 = vset.pattern.permute.xlu0 0
        %8886 = vperm.xlu0 %8885, %v8768
        %v8887 = vpop.permute.xlu0 %8886
        %8890 = vset.pattern.permute.xlu0 0
        %8891 = vperm.xlu0 %8890, %v8769
        %v8892 = vpop.permute.xlu0 %8891
        %8895 = vset.pattern.permute.xlu0 0
        %8896 = vperm.xlu0 %8895, %v8770
        %v8897 = vpop.permute.xlu0 %8896
        %8900 = vset.pattern.permute.xlu0 0
        %8901 = vperm.xlu0 %8900, %v8771
        %v8902 = vpop.permute.xlu0 %8901
        %8905 = vset.pattern.permute.xlu0 0
        %8906 = vperm.xlu0 %8905, %v8772
        %v8907 = vpop.permute.xlu0 %8906
        %8910 = vset.pattern.permute.xlu0 0
        %8911 = vperm.xlu0 %8910, %v8773
        %v8912 = vpop.permute.xlu0 %8911
        %8915 = vset.pattern.permute.xlu0 0
        %8916 = vperm.xlu0 %8915, %v8774
        %v8917 = vpop.permute.xlu0 %8916
        %8920 = vset.pattern.permute.xlu0 0
        %8921 = vperm.xlu0 %8920, %v8775
        %v8922 = vpop.permute.xlu0 %8921
        %8925 = vset.pattern.permute.xlu0 0
        %8926 = vperm.xlu0 %8925, %v8776
        %v8927 = vpop.permute.xlu0 %8926
        %8930 = vset.pattern.permute.xlu0 0
        %8931 = vperm.xlu0 %8930, %v8777
        %v8932 = vpop.permute.xlu0 %8931
        %8935 = vset.pattern.permute.xlu0 0
        %8936 = vperm.xlu0 %8935, %v8778
        %v8937 = vpop.permute.xlu0 %8936
        %8940 = vset.pattern.permute.xlu0 0
        %8941 = vperm.xlu0 %8940, %v8779
        %v8942 = vpop.permute.xlu0 %8941
        %8945 = vset.pattern.permute.xlu0 0
        %8946 = vperm.xlu0 %8945, %v8780
        %v8947 = vpop.permute.xlu0 %8946
        %8950 = vset.pattern.permute.xlu0 0
        %8951 = vperm.xlu0 %8950, %v8781
        %v8952 = vpop.permute.xlu0 %8951
        %8955 = vset.pattern.permute.xlu0 0
        %8956 = vperm.xlu0 %8955, %v8782
        %v8957 = vpop.permute.xlu0 %8956
        %8960 = vset.pattern.permute.xlu0 0
        %8961 = vperm.xlu0 %8960, %v8783
        %v8962 = vpop.permute.xlu0 %8961
        %8965 = vset.pattern.permute.xlu0 0
        %8966 = vperm.xlu0 %8965, %v8784
        %v8967 = vpop.permute.xlu0 %8966
        %8970 = vset.pattern.permute.xlu0 0
        %8971 = vperm.xlu0 %8970, %v8785
        %v8972 = vpop.permute.xlu0 %8971
        %8975 = vset.pattern.permute.xlu0 0
        %8976 = vperm.xlu0 %8975, %v8786
        %v8977 = vpop.permute.xlu0 %8976
        %8980 = vset.pattern.permute.xlu0 0
        %8981 = vperm.xlu0 %8980, %v8787
        %v8982 = vpop.permute.xlu0 %8981
        %8985 = vset.pattern.permute.xlu0 0
        %8986 = vperm.xlu0 %8985, %v8788
        %v8987 = vpop.permute.xlu0 %8986
        %8990 = vset.pattern.permute.xlu0 0
        %8991 = vperm.xlu0 %8990, %v8789
        %v8992 = vpop.permute.xlu0 %8991
        %8995 = vset.pattern.permute.xlu0 0
        %8996 = vperm.xlu0 %8995, %v8790
        %v8997 = vpop.permute.xlu0 %8996
        %9000 = vset.pattern.permute.xlu0 0
        %9001 = vperm.xlu0 %9000, %v8791
        %v9002 = vpop.permute.xlu0 %9001
        %9005 = vset.pattern.permute.xlu0 0
        %9006 = vperm.xlu0 %9005, %v8792
        %v9007 = vpop.permute.xlu0 %9006
        %9010 = vset.pattern.permute.xlu0 0
        %9011 = vperm.xlu0 %9010, %v8793
        %v9012 = vpop.permute.xlu0 %9011
        %9015 = vset.pattern.permute.xlu0 0
        %9016 = vperm.xlu0 %9015, %v8794
        %v9017 = vpop.permute.xlu0 %9016
        %9020 = vset.pattern.permute.xlu0 0
        %9021 = vperm.xlu0 %9020, %v8795
        %v9022 = vpop.permute.xlu0 %9021
        %9025 = vset.pattern.permute.xlu0 0
        %9026 = vperm.xlu0 %9025, %v8796
        %v9027 = vpop.permute.xlu0 %9026
        %9030 = vset.pattern.permute.xlu0 0
        %9031 = vperm.xlu0 %9030, %v8797
        %v9032 = vpop.permute.xlu0 %9031
        %9035 = vset.pattern.permute.xlu0 0
        %9036 = vperm.xlu0 %9035, %v8798
        %v9037 = vpop.permute.xlu0 %9036
        %9040 = vset.pattern.permute.xlu0 0
        %9041 = vperm.xlu0 %9040, %v8799
        %v9042 = vpop.permute.xlu0 %9041
        %9045 = vset.pattern.permute.xlu0 0
        %9046 = vperm.xlu0 %9045, %v8800
        %v9047 = vpop.permute.xlu0 %9046
        %9050 = vset.pattern.permute.xlu0 0
        %9051 = vperm.xlu0 %9050, %v8801
        %v9052 = vpop.permute.xlu0 %9051
        %9055 = vset.pattern.permute.xlu0 0
        %9056 = vperm.xlu0 %9055, %v8802
        %v9057 = vpop.permute.xlu0 %9056
        %9060 = vset.pattern.permute.xlu0 0
        %9061 = vperm.xlu0 %9060, %v8803
        %v9062 = vpop.permute.xlu0 %9061
        %9065 = vset.pattern.permute.xlu0 0
        %9066 = vperm.xlu0 %9065, %v8804
        %v9067 = vpop.permute.xlu0 %9066
        %9070 = vset.pattern.permute.xlu0 0
        %9071 = vperm.xlu0 %9070, %v8805
        %v9072 = vpop.permute.xlu0 %9071
        %9075 = vset.pattern.permute.xlu0 0
        %9076 = vperm.xlu0 %9075, %v8806
        %v9077 = vpop.permute.xlu0 %9076
        %9080 = vset.pattern.permute.xlu0 0
        %9081 = vperm.xlu0 %9080, %v8807
        %v9082 = vpop.permute.xlu0 %9081
        %9085 = vset.pattern.permute.xlu0 0
        %9086 = vperm.xlu0 %9085, %v8808
        %v9087 = vpop.permute.xlu0 %9086
        %9090 = vset.pattern.permute.xlu0 0
        %9091 = vperm.xlu0 %9090, %v8809
        %v9092 = vpop.permute.xlu0 %9091
        %9095 = vset.pattern.permute.xlu0 0
        %9096 = vperm.xlu0 %9095, %v8810
        %v9097 = vpop.permute.xlu0 %9096
        %9100 = vset.pattern.permute.xlu0 0
        %9101 = vperm.xlu0 %9100, %v8811
        %v9102 = vpop.permute.xlu0 %9101
        %9105 = vset.pattern.permute.xlu0 0
        %9106 = vperm.xlu0 %9105, %v8812
        %v9107 = vpop.permute.xlu0 %9106
        %9110 = vset.pattern.permute.xlu0 0
        %9111 = vperm.xlu0 %9110, %v8813
        %v9112 = vpop.permute.xlu0 %9111
        %9115 = vset.pattern.permute.xlu0 0
        %9116 = vperm.xlu0 %9115, %v8814
        %v9117 = vpop.permute.xlu0 %9116
        %9120 = vset.pattern.permute.xlu0 0
        %9121 = vperm.xlu0 %9120, %v8815
        %v9122 = vpop.permute.xlu0 %9121
        %9125 = vset.pattern.permute.xlu0 0
        %9126 = vperm.xlu0 %9125, %v8816
        %v9127 = vpop.permute.xlu0 %9126
        %9130 = vset.pattern.permute.xlu0 0
        %9131 = vperm.xlu0 %9130, %v8817
        %v9132 = vpop.permute.xlu0 %9131
        %9135 = vset.pattern.permute.xlu0 0
        %9136 = vperm.xlu0 %9135, %v8818
        %v9137 = vpop.permute.xlu0 %9136
        %v9139 = vmul.f32 %v8822, %v511
        %v9140 = vmul.f32 %v8827, %v512
        %v9141 = vmul.f32 %v8832, %v513
        %v9142 = vmul.f32 %v8837, %v514
        %v9143 = vmul.f32 %v8842, %v515
        %v9144 = vmul.f32 %v8847, %v516
        %v9145 = vmul.f32 %v8852, %v517
        %v9146 = vmul.f32 %v8857, %v518
        %v9147 = vmul.f32 %v8862, %v519
        %v9148 = vmul.f32 %v8867, %v520
        %v9149 = vmul.f32 %v8872, %v521
        %v9150 = vmul.f32 %v8877, %v522
        %v9151 = vmul.f32 %v8882, %v523
        %v9152 = vmul.f32 %v8887, %v524
        %v9153 = vmul.f32 %v8892, %v525
        %v9154 = vmul.f32 %v8897, %v526
        %v9155 = vmul.f32 %v8902, %v527
        %v9156 = vmul.f32 %v8907, %v528
        %v9157 = vmul.f32 %v8912, %v529
        %v9158 = vmul.f32 %v8917, %v530
        %v9159 = vmul.f32 %v8922, %v531
        %v9160 = vmul.f32 %v8927, %v532
        %v9161 = vmul.f32 %v8932, %v533
        %v9162 = vmul.f32 %v8937, %v534
        %v9163 = vmul.f32 %v8942, %v535
        %v9164 = vmul.f32 %v8947, %v536
        %v9165 = vmul.f32 %v8952, %v537
        %v9166 = vmul.f32 %v8957, %v538
        %v9167 = vmul.f32 %v8962, %v539
        %v9168 = vmul.f32 %v8967, %v540
        %v9169 = vmul.f32 %v8972, %v541
        %v9170 = vmul.f32 %v8977, %v542
        %v9171 = vmul.f32 %v8982, %v543
        %v9172 = vmul.f32 %v8987, %v544
        %v9173 = vmul.f32 %v8992, %v545
        %v9174 = vmul.f32 %v8997, %v546
        %v9175 = vmul.f32 %v9002, %v547
        %v9176 = vmul.f32 %v9007, %v548
        %v9177 = vmul.f32 %v9012, %v549
        %v9178 = vmul.f32 %v9017, %v550
        %v9179 = vmul.f32 %v9022, %v551
        %v9180 = vmul.f32 %v9027, %v552
        %v9181 = vmul.f32 %v9032, %v553
        %v9182 = vmul.f32 %v9037, %v554
        %v9183 = vmul.f32 %v9042, %v555
        %v9184 = vmul.f32 %v9047, %v556
        %v9185 = vmul.f32 %v9052, %v557
        %v9186 = vmul.f32 %v9057, %v558
        %v9187 = vmul.f32 %v9062, %v559
        %v9188 = vmul.f32 %v9067, %v560
        %v9189 = vmul.f32 %v9072, %v561
        %v9190 = vmul.f32 %v9077, %v562
        %v9191 = vmul.f32 %v9082, %v563
        %v9192 = vmul.f32 %v9087, %v564
        %v9193 = vmul.f32 %v9092, %v565
        %v9194 = vmul.f32 %v9097, %v566
        %v9195 = vmul.f32 %v9102, %v567
        %v9196 = vmul.f32 %v9107, %v568
        %v9197 = vmul.f32 %v9112, %v569
        %v9198 = vmul.f32 %v9117, %v570
        %v9199 = vmul.f32 %v9122, %v571
        %v9200 = vmul.f32 %v9127, %v572
        %v9201 = vmul.f32 %v9132, %v573
        %v9202 = vmul.f32 %v9137, %v574
        %v9203 = vsel %vm2480, %v9140, 0.0
        %v9204 = vadd.f32 %v9139, %v9203
        %v9205 = vrot.slane %v9204, 4
        %v9206 = vadd.f32 %v9204, %v9205
        %v9207 = vrot.slane %v9206, 2
        %v9208 = vadd.f32 %v9206, %v9207
        %v9209 = vrot.slane %v9208, 1
        %v9210 = vadd.f32 %v9208, %v9209
        %v9211 = vsel %vm2480, %v9142, 0.0
        %v9212 = vadd.f32 %v9141, %v9211
        %v9213 = vrot.slane %v9212, 4
        %v9214 = vadd.f32 %v9212, %v9213
        %v9215 = vrot.slane %v9214, 2
        %v9216 = vadd.f32 %v9214, %v9215
        %v9217 = vrot.slane %v9216, 1
        %v9218 = vadd.f32 %v9216, %v9217
        %v9219 = vsel %vm2480, %v9144, 0.0
        %v9220 = vadd.f32 %v9143, %v9219
        %v9221 = vrot.slane %v9220, 4
        %v9222 = vadd.f32 %v9220, %v9221
        %v9223 = vrot.slane %v9222, 2
        %v9224 = vadd.f32 %v9222, %v9223
        %v9225 = vrot.slane %v9224, 1
        %v9226 = vadd.f32 %v9224, %v9225
        %v9227 = vsel %vm2480, %v9146, 0.0
        %v9228 = vadd.f32 %v9145, %v9227
        %v9229 = vrot.slane %v9228, 4
        %v9230 = vadd.f32 %v9228, %v9229
        %v9231 = vrot.slane %v9230, 2
        %v9232 = vadd.f32 %v9230, %v9231
        %v9233 = vrot.slane %v9232, 1
        %v9234 = vadd.f32 %v9232, %v9233
        %v9235 = vsel %vm2480, %v9148, 0.0
        %v9236 = vadd.f32 %v9147, %v9235
        %v9237 = vrot.slane %v9236, 4
        %v9238 = vadd.f32 %v9236, %v9237
        %v9239 = vrot.slane %v9238, 2
        %v9240 = vadd.f32 %v9238, %v9239
        %v9241 = vrot.slane %v9240, 1
        %v9242 = vadd.f32 %v9240, %v9241
        %v9243 = vsel %vm2480, %v9150, 0.0
        %v9244 = vadd.f32 %v9149, %v9243
        %v9245 = vrot.slane %v9244, 4
        %v9246 = vadd.f32 %v9244, %v9245
        %v9247 = vrot.slane %v9246, 2
        %v9248 = vadd.f32 %v9246, %v9247
        %v9249 = vrot.slane %v9248, 1
        %v9250 = vadd.f32 %v9248, %v9249
        %v9251 = vsel %vm2480, %v9152, 0.0
        %v9252 = vadd.f32 %v9151, %v9251
        %v9253 = vrot.slane %v9252, 4
        %v9254 = vadd.f32 %v9252, %v9253
        %v9255 = vrot.slane %v9254, 2
        %v9256 = vadd.f32 %v9254, %v9255
        %v9257 = vrot.slane %v9256, 1
        %v9258 = vadd.f32 %v9256, %v9257
        %v9259 = vsel %vm2480, %v9154, 0.0
        %v9260 = vadd.f32 %v9153, %v9259
        %v9261 = vrot.slane %v9260, 4
        %v9262 = vadd.f32 %v9260, %v9261
        %v9263 = vrot.slane %v9262, 2
        %v9264 = vadd.f32 %v9262, %v9263
        %v9265 = vrot.slane %v9264, 1
        %v9266 = vadd.f32 %v9264, %v9265
        %v9267 = vsel %vm2480, %v9156, 0.0
        %v9268 = vadd.f32 %v9155, %v9267
        %v9269 = vrot.slane %v9268, 4
        %v9270 = vadd.f32 %v9268, %v9269
        %v9271 = vrot.slane %v9270, 2
        %v9272 = vadd.f32 %v9270, %v9271
        %v9273 = vrot.slane %v9272, 1
        %v9274 = vadd.f32 %v9272, %v9273
        %v9275 = vsel %vm2480, %v9158, 0.0
        %v9276 = vadd.f32 %v9157, %v9275
        %v9277 = vrot.slane %v9276, 4
        %v9278 = vadd.f32 %v9276, %v9277
        %v9279 = vrot.slane %v9278, 2
        %v9280 = vadd.f32 %v9278, %v9279
        %v9281 = vrot.slane %v9280, 1
        %v9282 = vadd.f32 %v9280, %v9281
        %v9283 = vsel %vm2480, %v9160, 0.0
        %v9284 = vadd.f32 %v9159, %v9283
        %v9285 = vrot.slane %v9284, 4
        %v9286 = vadd.f32 %v9284, %v9285
        %v9287 = vrot.slane %v9286, 2
        %v9288 = vadd.f32 %v9286, %v9287
        %v9289 = vrot.slane %v9288, 1
        %v9290 = vadd.f32 %v9288, %v9289
        %v9291 = vsel %vm2480, %v9162, 0.0
        %v9292 = vadd.f32 %v9161, %v9291
        %v9293 = vrot.slane %v9292, 4
        %v9294 = vadd.f32 %v9292, %v9293
        %v9295 = vrot.slane %v9294, 2
        %v9296 = vadd.f32 %v9294, %v9295
        %v9297 = vrot.slane %v9296, 1
        %v9298 = vadd.f32 %v9296, %v9297
        %v9299 = vsel %vm2480, %v9164, 0.0
        %v9300 = vadd.f32 %v9163, %v9299
        %v9301 = vrot.slane %v9300, 4
        %v9302 = vadd.f32 %v9300, %v9301
        %v9303 = vrot.slane %v9302, 2
        %v9304 = vadd.f32 %v9302, %v9303
        %v9305 = vrot.slane %v9304, 1
        %v9306 = vadd.f32 %v9304, %v9305
        %v9307 = vsel %vm2480, %v9166, 0.0
        %v9308 = vadd.f32 %v9165, %v9307
        %v9309 = vrot.slane %v9308, 4
        %v9310 = vadd.f32 %v9308, %v9309
        %v9311 = vrot.slane %v9310, 2
        %v9312 = vadd.f32 %v9310, %v9311
        %v9313 = vrot.slane %v9312, 1
        %v9314 = vadd.f32 %v9312, %v9313
        %v9315 = vsel %vm2480, %v9168, 0.0
        %v9316 = vadd.f32 %v9167, %v9315
        %v9317 = vrot.slane %v9316, 4
        %v9318 = vadd.f32 %v9316, %v9317
        %v9319 = vrot.slane %v9318, 2
        %v9320 = vadd.f32 %v9318, %v9319
        %v9321 = vrot.slane %v9320, 1
        %v9322 = vadd.f32 %v9320, %v9321
        %v9323 = vsel %vm2480, %v9170, 0.0
        %v9324 = vadd.f32 %v9169, %v9323
        %v9325 = vrot.slane %v9324, 4
        %v9326 = vadd.f32 %v9324, %v9325
        %v9327 = vrot.slane %v9326, 2
        %v9328 = vadd.f32 %v9326, %v9327
        %v9329 = vrot.slane %v9328, 1
        %v9330 = vadd.f32 %v9328, %v9329
        %v9331 = vsel %vm2480, %v9172, 0.0
        %v9332 = vadd.f32 %v9171, %v9331
        %v9333 = vrot.slane %v9332, 4
        %v9334 = vadd.f32 %v9332, %v9333
        %v9335 = vrot.slane %v9334, 2
        %v9336 = vadd.f32 %v9334, %v9335
        %v9337 = vrot.slane %v9336, 1
        %v9338 = vadd.f32 %v9336, %v9337
        %v9339 = vsel %vm2480, %v9174, 0.0
        %v9340 = vadd.f32 %v9173, %v9339
        %v9341 = vrot.slane %v9340, 4
        %v9342 = vadd.f32 %v9340, %v9341
        %v9343 = vrot.slane %v9342, 2
        %v9344 = vadd.f32 %v9342, %v9343
        %v9345 = vrot.slane %v9344, 1
        %v9346 = vadd.f32 %v9344, %v9345
        %v9347 = vsel %vm2480, %v9176, 0.0
        %v9348 = vadd.f32 %v9175, %v9347
        %v9349 = vrot.slane %v9348, 4
        %v9350 = vadd.f32 %v9348, %v9349
        %v9351 = vrot.slane %v9350, 2
        %v9352 = vadd.f32 %v9350, %v9351
        %v9353 = vrot.slane %v9352, 1
        %v9354 = vadd.f32 %v9352, %v9353
        %v9355 = vsel %vm2480, %v9178, 0.0
        %v9356 = vadd.f32 %v9177, %v9355
        %v9357 = vrot.slane %v9356, 4
        %v9358 = vadd.f32 %v9356, %v9357
        %v9359 = vrot.slane %v9358, 2
        %v9360 = vadd.f32 %v9358, %v9359
        %v9361 = vrot.slane %v9360, 1
        %v9362 = vadd.f32 %v9360, %v9361
        %v9363 = vsel %vm2480, %v9180, 0.0
        %v9364 = vadd.f32 %v9179, %v9363
        %v9365 = vrot.slane %v9364, 4
        %v9366 = vadd.f32 %v9364, %v9365
        %v9367 = vrot.slane %v9366, 2
        %v9368 = vadd.f32 %v9366, %v9367
        %v9369 = vrot.slane %v9368, 1
        %v9370 = vadd.f32 %v9368, %v9369
        %v9371 = vsel %vm2480, %v9182, 0.0
        %v9372 = vadd.f32 %v9181, %v9371
        %v9373 = vrot.slane %v9372, 4
        %v9374 = vadd.f32 %v9372, %v9373
        %v9375 = vrot.slane %v9374, 2
        %v9376 = vadd.f32 %v9374, %v9375
        %v9377 = vrot.slane %v9376, 1
        %v9378 = vadd.f32 %v9376, %v9377
        %v9379 = vsel %vm2480, %v9184, 0.0
        %v9380 = vadd.f32 %v9183, %v9379
        %v9381 = vrot.slane %v9380, 4
        %v9382 = vadd.f32 %v9380, %v9381
        %v9383 = vrot.slane %v9382, 2
        %v9384 = vadd.f32 %v9382, %v9383
        %v9385 = vrot.slane %v9384, 1
        %v9386 = vadd.f32 %v9384, %v9385
        %v9387 = vsel %vm2480, %v9186, 0.0
        %v9388 = vadd.f32 %v9185, %v9387
        %v9389 = vrot.slane %v9388, 4
        %v9390 = vadd.f32 %v9388, %v9389
        %v9391 = vrot.slane %v9390, 2
        %v9392 = vadd.f32 %v9390, %v9391
        %v9393 = vrot.slane %v9392, 1
        %v9394 = vadd.f32 %v9392, %v9393
        %v9395 = vsel %vm2480, %v9188, 0.0
        %v9396 = vadd.f32 %v9187, %v9395
        %v9397 = vrot.slane %v9396, 4
        %v9398 = vadd.f32 %v9396, %v9397
        %v9399 = vrot.slane %v9398, 2
        %v9400 = vadd.f32 %v9398, %v9399
        %v9401 = vrot.slane %v9400, 1
        %v9402 = vadd.f32 %v9400, %v9401
        %v9403 = vsel %vm2480, %v9190, 0.0
        %v9404 = vadd.f32 %v9189, %v9403
        %v9405 = vrot.slane %v9404, 4
        %v9406 = vadd.f32 %v9404, %v9405
        %v9407 = vrot.slane %v9406, 2
        %v9408 = vadd.f32 %v9406, %v9407
        %v9409 = vrot.slane %v9408, 1
        %v9410 = vadd.f32 %v9408, %v9409
        %v9411 = vsel %vm2480, %v9192, 0.0
        %v9412 = vadd.f32 %v9191, %v9411
        %v9413 = vrot.slane %v9412, 4
        %v9414 = vadd.f32 %v9412, %v9413
        %v9415 = vrot.slane %v9414, 2
        %v9416 = vadd.f32 %v9414, %v9415
        %v9417 = vrot.slane %v9416, 1
        %v9418 = vadd.f32 %v9416, %v9417
        %v9419 = vsel %vm2480, %v9194, 0.0
        %v9420 = vadd.f32 %v9193, %v9419
        %v9421 = vrot.slane %v9420, 4
        %v9422 = vadd.f32 %v9420, %v9421
        %v9423 = vrot.slane %v9422, 2
        %v9424 = vadd.f32 %v9422, %v9423
        %v9425 = vrot.slane %v9424, 1
        %v9426 = vadd.f32 %v9424, %v9425
        %v9427 = vsel %vm2480, %v9196, 0.0
        %v9428 = vadd.f32 %v9195, %v9427
        %v9429 = vrot.slane %v9428, 4
        %v9430 = vadd.f32 %v9428, %v9429
        %v9431 = vrot.slane %v9430, 2
        %v9432 = vadd.f32 %v9430, %v9431
        %v9433 = vrot.slane %v9432, 1
        %v9434 = vadd.f32 %v9432, %v9433
        %v9435 = vsel %vm2480, %v9198, 0.0
        %v9436 = vadd.f32 %v9197, %v9435
        %v9437 = vrot.slane %v9436, 4
        %v9438 = vadd.f32 %v9436, %v9437
        %v9439 = vrot.slane %v9438, 2
        %v9440 = vadd.f32 %v9438, %v9439
        %v9441 = vrot.slane %v9440, 1
        %v9442 = vadd.f32 %v9440, %v9441
        %v9443 = vsel %vm2480, %v9200, 0.0
        %v9444 = vadd.f32 %v9199, %v9443
        %v9445 = vrot.slane %v9444, 4
        %v9446 = vadd.f32 %v9444, %v9445
        %v9447 = vrot.slane %v9446, 2
        %v9448 = vadd.f32 %v9446, %v9447
        %v9449 = vrot.slane %v9448, 1
        %v9450 = vadd.f32 %v9448, %v9449
        %v9451 = vsel %vm2480, %v9202, 0.0
        %v9452 = vadd.f32 %v9201, %v9451
        %v9453 = vrot.slane %v9452, 4
        %v9454 = vadd.f32 %v9452, %v9453
        %v9455 = vrot.slane %v9454, 2
        %v9456 = vadd.f32 %v9454, %v9455
        %v9457 = vrot.slane %v9456, 1
        %v9458 = vadd.f32 %v9456, %v9457
        %v9491 = vsel %vm3121, %v9218, %v9210
        %v9492 = vsel %vm3123, %v9226, %v9491
        %v9493 = vsel %vm3125, %v9234, %v9492
        %v9494 = vsel %vm3127, %v9242, %v9493
        %v9495 = vsel %vm3129, %v9250, %v9494
        %v9496 = vsel %vm3131, %v9258, %v9495
        %v9497 = vsel %vm3133, %v9266, %v9496
        %v9498 = vsel %vm3121, %v9282, %v9274
        %v9499 = vsel %vm3123, %v9290, %v9498
        %v9500 = vsel %vm3125, %v9298, %v9499
        %v9501 = vsel %vm3127, %v9306, %v9500
        %v9502 = vsel %vm3129, %v9314, %v9501
        %v9503 = vsel %vm3131, %v9322, %v9502
        %v9504 = vsel %vm3133, %v9330, %v9503
        %v9505 = vsel %vm3121, %v9346, %v9338
        %v9506 = vsel %vm3123, %v9354, %v9505
        %v9507 = vsel %vm3125, %v9362, %v9506
        %v9508 = vsel %vm3127, %v9370, %v9507
        %v9509 = vsel %vm3129, %v9378, %v9508
        %v9510 = vsel %vm3131, %v9386, %v9509
        %v9511 = vsel %vm3133, %v9394, %v9510
        %v9512 = vsel %vm3121, %v9410, %v9402
        %v9513 = vsel %vm3123, %v9418, %v9512
        %v9514 = vsel %vm3125, %v9426, %v9513
        %v9515 = vsel %vm3127, %v9434, %v9514
        %v9516 = vsel %vm3129, %v9442, %v9515
        %v9517 = vsel %vm3131, %v9450, %v9516
        %v9518 = vsel %vm3133, %v9458, %v9517
        %9523 = vmatprep.subr.mxu0 0.0
        %9524 = vmatpush1.msra.mxu0 %v5341
        %9525 = vmatprep.subr.mxu0 0.0
        %9526 = vmatpush1.msra.mxu0 %v5342
        %9527 = vmatprep.subr.mxu0 0.0
        %9528 = vmatpush1.msra.mxu0 %v5343
        %9529 = vmatprep.subr.mxu0 0.0
        %9530 = vmatpush1.msra.mxu0 %v5344
        %9531 = vmatprep.subr.mxu0 0.0
        %9532 = vmatpush1.msra.mxu0 %v5345
        %9533 = vmatprep.subr.mxu0 0.0
        %9534 = vmatpush1.msra.mxu0 %v5346
        %9535 = vmatprep.subr.mxu0 0.0
        %9536 = vmatpush1.msra.mxu0 %v5347
        %9537 = vmatprep.subr.mxu0 0.0
        %9538 = vmatpush1.msra.mxu0 %v5348
        %9539 = vmatprep.subr.mxu0 0.0
        %9540 = vmatpush1.msra.mxu0 %v5349
        %9541 = vmatprep.subr.mxu0 0.0
        %9542 = vmatpush1.msra.mxu0 %v5350
        %9543 = vmatprep.subr.mxu0 0.0
        %9544 = vmatpush1.msra.mxu0 %v5351
        %9545 = vmatprep.subr.mxu0 0.0
        %9546 = vmatpush1.msra.mxu0 %v5352
        %9547 = vmatprep.subr.mxu0 0.0
        %9548 = vmatpush1.msra.mxu0 %v5353
        %9549 = vmatprep.subr.mxu0 0.0
        %9550 = vmatpush1.msra.mxu0 %v5354
        %9551 = vmatprep.subr.mxu0 0.0
        %9552 = vmatpush1.msra.mxu0 %v5355
        %9553 = vmatprep.subr.mxu0 0.0
        %9554 = vmatpush1.msra.mxu0 %v5356
        %9555 = vmatprep.subr.mxu0 0.0
        %9556 = vmatpush1.msra.mxu0 0.0
        %9557 = vmatprep.subr.mxu0 0.0
        %9558 = vmatpush1.msra.mxu0 0.0
        %9559 = vmatprep.subr.mxu0 0.0
        %9560 = vmatpush1.msra.mxu0 0.0
        %9561 = vmatprep.subr.mxu0 0.0
        %9562 = vmatpush1.msra.mxu0 0.0
        %9563 = vmatprep.subr.mxu0 0.0
        %9564 = vmatpush1.msra.mxu0 0.0
        %9565 = vmatprep.subr.mxu0 0.0
        %9566 = vmatpush1.msra.mxu0 0.0
        %9567 = vmatprep.subr.mxu0 0.0
        %9568 = vmatpush1.msra.mxu0 0.0
        %9569 = vmatprep.subr.mxu0 0.0
        %9570 = vmatpush1.msra.mxu0 0.0
        %9571 = vmatprep.subr.mxu0 0.0
        %9572 = vmatpush1.msra.mxu0 0.0
        %9573 = vmatprep.subr.mxu0 0.0
        %9574 = vmatpush1.msra.mxu0 0.0
        %9575 = vmatprep.subr.mxu0 0.0
        %9576 = vmatpush1.msra.mxu0 0.0
        %9577 = vmatprep.subr.mxu0 0.0
        %9578 = vmatpush1.msra.mxu0 0.0
        %9579 = vmatprep.subr.mxu0 0.0
        %9580 = vmatpush1.msra.mxu0 0.0
        %9581 = vmatprep.subr.mxu0 0.0
        %9582 = vmatpush1.msra.mxu0 0.0
        %9583 = vmatprep.subr.mxu0 0.0
        %9584 = vmatpush1.msra.mxu0 0.0
        %9585 = vmatprep.subr.mxu0 0.0
        %9586 = vmatpush1.msra.mxu0 0.0
        %9587 = vmatprep.mubr.f32.mxu0 0.0
        %9588 = vmatmul.mubr.f32.gmra.mrb[0].mxu0 %v9497
        %v9589 = vpop.f32.mrb[0].mxu0
        %v9590 = vadd.f32 0.0, %v9589
        %v9591 = vpop.f32.mrb[0].mxu0
        %9592 = vmatprep.mubr.f32.mxu0 0.0
        %9593 = vmatmul.mubr.f32.gmra.mrb[0].mxu0 %v9504
        %v9594 = vpop.f32.mrb[0].mxu0
        %v9595 = vadd.f32 0.0, %v9594
        %v9596 = vpop.f32.mrb[0].mxu0
        %9597 = vmatprep.mubr.f32.mxu0 0.0
        %9598 = vmatmul.mubr.f32.gmra.mrb[0].mxu0 %v9511
        %v9599 = vpop.f32.mrb[0].mxu0
        %v9600 = vadd.f32 0.0, %v9599
        %v9601 = vpop.f32.mrb[0].mxu0
        %9602 = vmatprep.mubr.f32.mxu0 0.0
        %9603 = vmatmul.mubr.f32.gmra.mrb[0].mxu0 %v9518
        %v9604 = vpop.f32.mrb[0].mxu0
        %v9605 = vadd.f32 0.0, %v9604
        %v9606 = vpop.f32.mrb[0].mxu0
        %9607 = vdwg.mxu0
        %v9608 = vld [vmem:[%s9] sm:$0xff]
        %v9609 = vld [vmem:[%s9 + $0x8] sm:$0xff]
        %v9610 = vld [vmem:[%s9 + $0x10] sm:$0xff]
        %v9611 = vld [vmem:[%s9 + $0x18] sm:$0xff]
        %v9612 = vld [vmem:[%s9 + $0x20] sm:$0xff]
        %v9613 = vld [vmem:[%s9 + $0x28] sm:$0xff]
        %v9614 = vld [vmem:[%s9 + $0x30] sm:$0xff]
        %v9615 = vld [vmem:[%s9 + $0x38] sm:$0xff]
        %v9616 = vld [vmem:[%s9 + $0x40] sm:$0xff]
        %v9617 = vld [vmem:[%s9 + $0x48] sm:$0xff]
        %v9618 = vld [vmem:[%s9 + $0x50] sm:$0xff]
        %v9619 = vld [vmem:[%s9 + $0x58] sm:$0xff]
        %v9620 = vld [vmem:[%s9 + $0x60] sm:$0xff]
        %v9621 = vld [vmem:[%s9 + $0x68] sm:$0xff]
        %v9622 = vld [vmem:[%s9 + $0x70] sm:$0xff]
        %v9623 = vld [vmem:[%s9 + $0x78] sm:$0xff]
        %v9624 = vld [vmem:[%s10] sm:$0xff]
        %v9625 = vld [vmem:[%s10 + $0x8] sm:$0xff]
        %v9626 = vld [vmem:[%s10 + $0x10] sm:$0xff]
        %v9627 = vld [vmem:[%s10 + $0x18] sm:$0xff]
        %v9628 = vld [vmem:[%s10 + $0x20] sm:$0xff]
        %v9629 = vld [vmem:[%s10 + $0x28] sm:$0xff]
        %v9630 = vld [vmem:[%s10 + $0x30] sm:$0xff]
        %v9631 = vld [vmem:[%s10 + $0x38] sm:$0xff]
        %v9632 = vld [vmem:[%s10 + $0x40] sm:$0xff]
        %v9633 = vld [vmem:[%s10 + $0x48] sm:$0xff]
        %v9634 = vld [vmem:[%s10 + $0x50] sm:$0xff]
        %v9635 = vld [vmem:[%s10 + $0x58] sm:$0xff]
        %v9636 = vld [vmem:[%s10 + $0x60] sm:$0xff]
        %v9637 = vld [vmem:[%s10 + $0x68] sm:$0xff]
        %v9638 = vld [vmem:[%s10 + $0x70] sm:$0xff]
        %v9639 = vld [vmem:[%s10 + $0x78] sm:$0xff]
        %9640 = vmatprep.subr.mxu0 0.0
        %9641 = vmatpush1.msra.mxu0 %v9624
        %9642 = vmatprep.subr.mxu0 0.0
        %9643 = vmatpush1.msra.mxu0 %v9625
        %9644 = vmatprep.subr.mxu0 0.0
        %9645 = vmatpush1.msra.mxu0 %v9626
        %9646 = vmatprep.subr.mxu0 0.0
        %9647 = vmatpush1.msra.mxu0 %v9627
        %9648 = vmatprep.subr.mxu0 0.0
        %9649 = vmatpush1.msra.mxu0 %v9628
        %9650 = vmatprep.subr.mxu0 0.0
        %9651 = vmatpush1.msra.mxu0 %v9629
        %9652 = vmatprep.subr.mxu0 0.0
        %9653 = vmatpush1.msra.mxu0 %v9630
        %9654 = vmatprep.subr.mxu0 0.0
        %9655 = vmatpush1.msra.mxu0 %v9631
        %9656 = vmatprep.subr.mxu0 0.0
        %9657 = vmatpush1.msra.mxu0 %v9632
        %9658 = vmatprep.subr.mxu0 0.0
        %9659 = vmatpush1.msra.mxu0 %v9633
        %9660 = vmatprep.subr.mxu0 0.0
        %9661 = vmatpush1.msra.mxu0 %v9634
        %9662 = vmatprep.subr.mxu0 0.0
        %9663 = vmatpush1.msra.mxu0 %v9635
        %9664 = vmatprep.subr.mxu0 0.0
        %9665 = vmatpush1.msra.mxu0 %v9636
        %9666 = vmatprep.subr.mxu0 0.0
        %9667 = vmatpush1.msra.mxu0 %v9637
        %9668 = vmatprep.subr.mxu0 0.0
        %9669 = vmatpush1.msra.mxu0 %v9638
        %9670 = vmatprep.subr.mxu0 0.0
        %9671 = vmatpush1.msra.mxu0 %v9639
        %9672 = vmatprep.subr.mxu0 0.0
        %9673 = vmatpush1.msra.mxu0 0.0
        %9674 = vmatprep.subr.mxu0 0.0
        %9675 = vmatpush1.msra.mxu0 0.0
        %9676 = vmatprep.subr.mxu0 0.0
        %9677 = vmatpush1.msra.mxu0 0.0
        %9678 = vmatprep.subr.mxu0 0.0
        %9679 = vmatpush1.msra.mxu0 0.0
        %9680 = vmatprep.subr.mxu0 0.0
        %9681 = vmatpush1.msra.mxu0 0.0
        %9682 = vmatprep.subr.mxu0 0.0
        %9683 = vmatpush1.msra.mxu0 0.0
        %9684 = vmatprep.subr.mxu0 0.0
        %9685 = vmatpush1.msra.mxu0 0.0
        %9686 = vmatprep.subr.mxu0 0.0
        %9687 = vmatpush1.msra.mxu0 0.0
        %9688 = vmatprep.subr.mxu0 0.0
        %9689 = vmatpush1.msra.mxu0 0.0
        %9690 = vmatprep.subr.mxu0 0.0
        %9691 = vmatpush1.msra.mxu0 0.0
        %9692 = vmatprep.subr.mxu0 0.0
        %9693 = vmatpush1.msra.mxu0 0.0
        %9694 = vmatprep.subr.mxu0 0.0
        %9695 = vmatpush1.msra.mxu0 0.0
        %9696 = vmatprep.subr.mxu0 0.0
        %9697 = vmatpush1.msra.mxu0 0.0
        %9698 = vmatprep.subr.mxu0 0.0
        %9699 = vmatpush1.msra.mxu0 0.0
        %9700 = vmatprep.subr.mxu0 0.0
        %9701 = vmatpush1.msra.mxu0 0.0
        %9702 = vmatprep.subr.mxu0 0.0
        %9703 = vmatpush1.msra.mxu0 0.0
        %9704 = vmatprep.mubr.f32.mxu0 0.0
        %9705 = vmatmul.mubr.f32.gmra.mrb[0].mxu0 %v9590
        %v9706 = vpop.f32.mrb[0].mxu0
        %v9707 = vadd.f32 0.0, %v9706
        %v9708 = vpop.f32.mrb[0].mxu0
        %9709 = vmatprep.mubr.f32.mxu0 0.0
        %9710 = vmatmul.mubr.f32.gmra.mrb[0].mxu0 %v9595
        %v9711 = vpop.f32.mrb[0].mxu0
        %v9712 = vadd.f32 0.0, %v9711
        %v9713 = vpop.f32.mrb[0].mxu0
        %9714 = vmatprep.mubr.f32.mxu0 0.0
        %9715 = vmatmul.mubr.f32.gmra.mrb[0].mxu0 %v9600
        %v9716 = vpop.f32.mrb[0].mxu0
        %v9717 = vadd.f32 0.0, %v9716
        %v9718 = vpop.f32.mrb[0].mxu0
        %9719 = vmatprep.mubr.f32.mxu0 0.0
        %9720 = vmatmul.mubr.f32.gmra.mrb[0].mxu0 %v9605
        %v9721 = vpop.f32.mrb[0].mxu0
        %v9722 = vadd.f32 0.0, %v9721
        %v9723 = vpop.f32.mrb[0].mxu0
        %9724 = vdwg.mxu0
        %9725 = vmatprep.subr.mxu0 0.0
        %9726 = vmatpush1.msra.mxu0 %v9608
        %9727 = vmatprep.subr.mxu0 0.0
        %9728 = vmatpush1.msra.mxu0 %v9609
        %9729 = vmatprep.subr.mxu0 0.0
        %9730 = vmatpush1.msra.mxu0 %v9610
        %9731 = vmatprep.subr.mxu0 0.0
        %9732 = vmatpush1.msra.mxu0 %v9611
        %9733 = vmatprep.subr.mxu0 0.0
        %9734 = vmatpush1.msra.mxu0 %v9612
        %9735 = vmatprep.subr.mxu0 0.0
        %9736 = vmatpush1.msra.mxu0 %v9613
        %9737 = vmatprep.subr.mxu0 0.0
        %9738 = vmatpush1.msra.mxu0 %v9614
        %9739 = vmatprep.subr.mxu0 0.0
        %9740 = vmatpush1.msra.mxu0 %v9615
        %9741 = vmatprep.subr.mxu0 0.0
        %9742 = vmatpush1.msra.mxu0 %v9616
        %9743 = vmatprep.subr.mxu0 0.0
        %9744 = vmatpush1.msra.mxu0 %v9617
        %9745 = vmatprep.subr.mxu0 0.0
        %9746 = vmatpush1.msra.mxu0 %v9618
        %9747 = vmatprep.subr.mxu0 0.0
        %9748 = vmatpush1.msra.mxu0 %v9619
        %9749 = vmatprep.subr.mxu0 0.0
        %9750 = vmatpush1.msra.mxu0 %v9620
        %9751 = vmatprep.subr.mxu0 0.0
        %9752 = vmatpush1.msra.mxu0 %v9621
        %9753 = vmatprep.subr.mxu0 0.0
        %9754 = vmatpush1.msra.mxu0 %v9622
        %9755 = vmatprep.subr.mxu0 0.0
        %9756 = vmatpush1.msra.mxu0 %v9623
        %9757 = vmatprep.subr.mxu0 0.0
        %9758 = vmatpush1.msra.mxu0 0.0
        %9759 = vmatprep.subr.mxu0 0.0
        %9760 = vmatpush1.msra.mxu0 0.0
        %9761 = vmatprep.subr.mxu0 0.0
        %9762 = vmatpush1.msra.mxu0 0.0
        %9763 = vmatprep.subr.mxu0 0.0
        %9764 = vmatpush1.msra.mxu0 0.0
        %9765 = vmatprep.subr.mxu0 0.0
        %9766 = vmatpush1.msra.mxu0 0.0
        %9767 = vmatprep.subr.mxu0 0.0
        %9768 = vmatpush1.msra.mxu0 0.0
        %9769 = vmatprep.subr.mxu0 0.0
        %9770 = vmatpush1.msra.mxu0 0.0
        %9771 = vmatprep.subr.mxu0 0.0
        %9772 = vmatpush1.msra.mxu0 0.0
        %9773 = vmatprep.subr.mxu0 0.0
        %9774 = vmatpush1.msra.mxu0 0.0
        %9775 = vmatprep.subr.mxu0 0.0
        %9776 = vmatpush1.msra.mxu0 0.0
        %9777 = vmatprep.subr.mxu0 0.0
        %9778 = vmatpush1.msra.mxu0 0.0
        %9779 = vmatprep.subr.mxu0 0.0
        %9780 = vmatpush1.msra.mxu0 0.0
        %9781 = vmatprep.subr.mxu0 0.0
        %9782 = vmatpush1.msra.mxu0 0.0
        %9783 = vmatprep.subr.mxu0 0.0
        %9784 = vmatpush1.msra.mxu0 0.0
        %9785 = vmatprep.subr.mxu0 0.0
        %9786 = vmatpush1.msra.mxu0 0.0
        %9787 = vmatprep.subr.mxu0 0.0
        %9788 = vmatpush1.msra.mxu0 0.0
        %9789 = vmatprep.mubr.f32.mxu0 0.0
        %9790 = vmatmul.mubr.f32.gmra.mrb[0].mxu0 %v5651
        %v9791 = vpop.f32.mrb[0].mxu0
        %v9792 = vadd.f32 %v9707, %v9791
        %v9793 = vpop.f32.mrb[0].mxu0
        %9794 = vmatprep.mubr.f32.mxu0 0.0
        %9795 = vmatmul.mubr.f32.gmra.mrb[0].mxu0 %v5656
        %v9796 = vpop.f32.mrb[0].mxu0
        %v9797 = vadd.f32 %v9712, %v9796
        %v9798 = vpop.f32.mrb[0].mxu0
        %9799 = vmatprep.mubr.f32.mxu0 0.0
        %9800 = vmatmul.mubr.f32.gmra.mrb[0].mxu0 %v5661
        %v9801 = vpop.f32.mrb[0].mxu0
        %v9802 = vadd.f32 %v9717, %v9801
        %v9803 = vpop.f32.mrb[0].mxu0
        %9804 = vmatprep.mubr.f32.mxu0 0.0
        %9805 = vmatmul.mubr.f32.gmra.mrb[0].mxu0 %v5666
        %v9806 = vpop.f32.mrb[0].mxu0
        %v9807 = vadd.f32 %v9722, %v9806
        %v9808 = vpop.f32.mrb[0].mxu0
        %9809 = vdwg.mxu0
        %v9810 = vld [vmem:[%s11] sm:$0xff]
        %v9811 = vld [vmem:[%s11 + $0x8] sm:$0xff]
        %v9812 = vld [vmem:[%s11 + $0x10] sm:$0xff]
        %v9813 = vld [vmem:[%s11 + $0x18] sm:$0xff]
        %v9814 = vld [vmem:[%s11 + $0x20] sm:$0xff]
        %v9815 = vld [vmem:[%s11 + $0x28] sm:$0xff]
        %v9816 = vld [vmem:[%s11 + $0x30] sm:$0xff]
        %v9817 = vld [vmem:[%s11 + $0x38] sm:$0xff]
        %v9818 = vld [vmem:[%s11 + $0x40] sm:$0xff]
        %v9819 = vld [vmem:[%s11 + $0x48] sm:$0xff]
        %v9820 = vld [vmem:[%s11 + $0x50] sm:$0xff]
        %v9821 = vld [vmem:[%s11 + $0x58] sm:$0xff]
        %v9822 = vld [vmem:[%s11 + $0x60] sm:$0xff]
        %v9823 = vld [vmem:[%s11 + $0x68] sm:$0xff]
        %v9824 = vld [vmem:[%s11 + $0x70] sm:$0xff]
        %v9825 = vld [vmem:[%s11 + $0x78] sm:$0xff]
        %v9826 = vld [vmem:[%s12] sm:$0xff]
        %v9827 = vld [vmem:[%s12 + $0x8] sm:$0xff]
        %v9828 = vld [vmem:[%s12 + $0x10] sm:$0xff]
        %v9829 = vld [vmem:[%s12 + $0x18] sm:$0xff]
        %v9830 = vld [vmem:[%s12 + $0x20] sm:$0xff]
        %v9831 = vld [vmem:[%s12 + $0x28] sm:$0xff]
        %v9832 = vld [vmem:[%s12 + $0x30] sm:$0xff]
        %v9833 = vld [vmem:[%s12 + $0x38] sm:$0xff]
        %v9834 = vld [vmem:[%s12 + $0x40] sm:$0xff]
        %v9835 = vld [vmem:[%s12 + $0x48] sm:$0xff]
        %v9836 = vld [vmem:[%s12 + $0x50] sm:$0xff]
        %v9837 = vld [vmem:[%s12 + $0x58] sm:$0xff]
        %v9838 = vld [vmem:[%s12 + $0x60] sm:$0xff]
        %v9839 = vld [vmem:[%s12 + $0x68] sm:$0xff]
        %v9840 = vld [vmem:[%s12 + $0x70] sm:$0xff]
        %v9841 = vld [vmem:[%s12 + $0x78] sm:$0xff]
        %9842 = vmatprep.subr.mxu0 0.0
        %9843 = vmatpush1.msra.mxu0 %v9826
        %9844 = vmatprep.subr.mxu0 0.0
        %9845 = vmatpush1.msra.mxu0 %v9827
        %9846 = vmatprep.subr.mxu0 0.0
        %9847 = vmatpush1.msra.mxu0 %v9828
        %9848 = vmatprep.subr.mxu0 0.0
        %9849 = vmatpush1.msra.mxu0 %v9829
        %9850 = vmatprep.subr.mxu0 0.0
        %9851 = vmatpush1.msra.mxu0 %v9830
        %9852 = vmatprep.subr.mxu0 0.0
        %9853 = vmatpush1.msra.mxu0 %v9831
        %9854 = vmatprep.subr.mxu0 0.0
        %9855 = vmatpush1.msra.mxu0 %v9832
        %9856 = vmatprep.subr.mxu0 0.0
        %9857 = vmatpush1.msra.mxu0 %v9833
        %9858 = vmatprep.subr.mxu0 0.0
        %9859 = vmatpush1.msra.mxu0 %v9834
        %9860 = vmatprep.subr.mxu0 0.0
        %9861 = vmatpush1.msra.mxu0 %v9835
        %9862 = vmatprep.subr.mxu0 0.0
        %9863 = vmatpush1.msra.mxu0 %v9836
        %9864 = vmatprep.subr.mxu0 0.0
        %9865 = vmatpush1.msra.mxu0 %v9837
        %9866 = vmatprep.subr.mxu0 0.0
        %9867 = vmatpush1.msra.mxu0 %v9838
        %9868 = vmatprep.subr.mxu0 0.0
        %9869 = vmatpush1.msra.mxu0 %v9839
        %9870 = vmatprep.subr.mxu0 0.0
        %9871 = vmatpush1.msra.mxu0 %v9840
        %9872 = vmatprep.subr.mxu0 0.0
        %9873 = vmatpush1.msra.mxu0 %v9841
        %9874 = vmatprep.subr.mxu0 0.0
        %9875 = vmatpush1.msra.mxu0 0.0
        %9876 = vmatprep.subr.mxu0 0.0
        %9877 = vmatpush1.msra.mxu0 0.0
        %9878 = vmatprep.subr.mxu0 0.0
        %9879 = vmatpush1.msra.mxu0 0.0
        %9880 = vmatprep.subr.mxu0 0.0
        %9881 = vmatpush1.msra.mxu0 0.0
        %9882 = vmatprep.subr.mxu0 0.0
        %9883 = vmatpush1.msra.mxu0 0.0
        %9884 = vmatprep.subr.mxu0 0.0
        %9885 = vmatpush1.msra.mxu0 0.0
        %9886 = vmatprep.subr.mxu0 0.0
        %9887 = vmatpush1.msra.mxu0 0.0
        %9888 = vmatprep.subr.mxu0 0.0
        %9889 = vmatpush1.msra.mxu0 0.0
        %9890 = vmatprep.subr.mxu0 0.0
        %9891 = vmatpush1.msra.mxu0 0.0
        %9892 = vmatprep.subr.mxu0 0.0
        %9893 = vmatpush1.msra.mxu0 0.0
        %9894 = vmatprep.subr.mxu0 0.0
        %9895 = vmatpush1.msra.mxu0 0.0
        %9896 = vmatprep.subr.mxu0 0.0
        %9897 = vmatpush1.msra.mxu0 0.0
        %9898 = vmatprep.subr.mxu0 0.0
        %9899 = vmatpush1.msra.mxu0 0.0
        %9900 = vmatprep.subr.mxu0 0.0
        %9901 = vmatpush1.msra.mxu0 0.0
        %9902 = vmatprep.subr.mxu0 0.0
        %9903 = vmatpush1.msra.mxu0 0.0
        %9904 = vmatprep.subr.mxu0 0.0
        %9905 = vmatpush1.msra.mxu0 0.0
        %9906 = vmatprep.mubr.f32.mxu0 0.0
        %9907 = vmatmul.mubr.f32.gmra.mrb[0].mxu0 %v575
        %v9908 = vpop.f32.mrb[0].mxu0
        %v9909 = vadd.f32 0.0, %v9908
        %v9910 = vpop.f32.mrb[0].mxu0
        %9911 = vmatprep.mubr.f32.mxu0 0.0
        %9912 = vmatmul.mubr.f32.gmra.mrb[0].mxu0 %v576
        %v9913 = vpop.f32.mrb[0].mxu0
        %v9914 = vadd.f32 0.0, %v9913
        %v9915 = vpop.f32.mrb[0].mxu0
        %9916 = vmatprep.mubr.f32.mxu0 0.0
        %9917 = vmatmul.mubr.f32.gmra.mrb[0].mxu0 %v577
        %v9918 = vpop.f32.mrb[0].mxu0
        %v9919 = vadd.f32 0.0, %v9918
        %v9920 = vpop.f32.mrb[0].mxu0
        %9921 = vmatprep.mubr.f32.mxu0 0.0
        %9922 = vmatmul.mubr.f32.gmra.mrb[0].mxu0 %v578
        %v9923 = vpop.f32.mrb[0].mxu0
        %v9924 = vadd.f32 0.0, %v9923
        %v9925 = vpop.f32.mrb[0].mxu0
        %9926 = vdwg.mxu0
        %9927 = vmatprep.subr.mxu0 0.0
        %9928 = vmatpush1.msra.mxu0 %v9810
        %9929 = vmatprep.subr.mxu0 0.0
        %9930 = vmatpush1.msra.mxu0 %v9811
        %9931 = vmatprep.subr.mxu0 0.0
        %9932 = vmatpush1.msra.mxu0 %v9812
        %9933 = vmatprep.subr.mxu0 0.0
        %9934 = vmatpush1.msra.mxu0 %v9813
        %9935 = vmatprep.subr.mxu0 0.0
        %9936 = vmatpush1.msra.mxu0 %v9814
        %9937 = vmatprep.subr.mxu0 0.0
        %9938 = vmatpush1.msra.mxu0 %v9815
        %9939 = vmatprep.subr.mxu0 0.0
        %9940 = vmatpush1.msra.mxu0 %v9816
        %9941 = vmatprep.subr.mxu0 0.0
        %9942 = vmatpush1.msra.mxu0 %v9817
        %9943 = vmatprep.subr.mxu0 0.0
        %9944 = vmatpush1.msra.mxu0 %v9818
        %9945 = vmatprep.subr.mxu0 0.0
        %9946 = vmatpush1.msra.mxu0 %v9819
        %9947 = vmatprep.subr.mxu0 0.0
        %9948 = vmatpush1.msra.mxu0 %v9820
        %9949 = vmatprep.subr.mxu0 0.0
        %9950 = vmatpush1.msra.mxu0 %v9821
        %9951 = vmatprep.subr.mxu0 0.0
        %9952 = vmatpush1.msra.mxu0 %v9822
        %9953 = vmatprep.subr.mxu0 0.0
        %9954 = vmatpush1.msra.mxu0 %v9823
        %9955 = vmatprep.subr.mxu0 0.0
        %9956 = vmatpush1.msra.mxu0 %v9824
        %9957 = vmatprep.subr.mxu0 0.0
        %9958 = vmatpush1.msra.mxu0 %v9825
        %9959 = vmatprep.subr.mxu0 0.0
        %9960 = vmatpush1.msra.mxu0 0.0
        %9961 = vmatprep.subr.mxu0 0.0
        %9962 = vmatpush1.msra.mxu0 0.0
        %9963 = vmatprep.subr.mxu0 0.0
        %9964 = vmatpush1.msra.mxu0 0.0
        %9965 = vmatprep.subr.mxu0 0.0
        %9966 = vmatpush1.msra.mxu0 0.0
        %9967 = vmatprep.subr.mxu0 0.0
        %9968 = vmatpush1.msra.mxu0 0.0
        %9969 = vmatprep.subr.mxu0 0.0
        %9970 = vmatpush1.msra.mxu0 0.0
        %9971 = vmatprep.subr.mxu0 0.0
        %9972 = vmatpush1.msra.mxu0 0.0
        %9973 = vmatprep.subr.mxu0 0.0
        %9974 = vmatpush1.msra.mxu0 0.0
        %9975 = vmatprep.subr.mxu0 0.0
        %9976 = vmatpush1.msra.mxu0 0.0
        %9977 = vmatprep.subr.mxu0 0.0
        %9978 = vmatpush1.msra.mxu0 0.0
        %9979 = vmatprep.subr.mxu0 0.0
        %9980 = vmatpush1.msra.mxu0 0.0
        %9981 = vmatprep.subr.mxu0 0.0
        %9982 = vmatpush1.msra.mxu0 0.0
        %9983 = vmatprep.subr.mxu0 0.0
        %9984 = vmatpush1.msra.mxu0 0.0
        %9985 = vmatprep.subr.mxu0 0.0
        %9986 = vmatpush1.msra.mxu0 0.0
        %9987 = vmatprep.subr.mxu0 0.0
        %9988 = vmatpush1.msra.mxu0 0.0
        %9989 = vmatprep.subr.mxu0 0.0
        %9990 = vmatpush1.msra.mxu0 0.0
        %9991 = vmatprep.mubr.f32.mxu0 0.0
        %9992 = vmatmul.mubr.f32.gmra.mrb[0].mxu0 %v9792
        %v9993 = vpop.f32.mrb[0].mxu0
        %v9994 = vadd.f32 %v9909, %v9993
        %v9995 = vpop.f32.mrb[0].mxu0
        %9996 = vmatprep.mubr.f32.mxu0 0.0
        %9997 = vmatmul.mubr.f32.gmra.mrb[0].mxu0 %v9797
        %v9998 = vpop.f32.mrb[0].mxu0
        %v9999 = vadd.f32 %v9914, %v9998
        %v10000 = vpop.f32.mrb[0].mxu0
        %10001 = vmatprep.mubr.f32.mxu0 0.0
        %10002 = vmatmul.mubr.f32.gmra.mrb[0].mxu0 %v9802
        %v10003 = vpop.f32.mrb[0].mxu0
        %v10004 = vadd.f32 %v9919, %v10003
        %v10005 = vpop.f32.mrb[0].mxu0
        %10006 = vmatprep.mubr.f32.mxu0 0.0
        %10007 = vmatmul.mubr.f32.gmra.mrb[0].mxu0 %v9807
        %v10008 = vpop.f32.mrb[0].mxu0
        %v10009 = vadd.f32 %v9924, %v10008
        %v10010 = vpop.f32.mrb[0].mxu0
        %10011 = vdwg.mxu0
        %v10012 = vtanh.pop %v9994
        %v10013 = vtanh.pop %v9999
        %v10014 = vtanh.pop %v10004
        %v10015 = vtanh.pop %v10009
        %10016 = vst [vmem:[%s484] sm:$0xff] %v10012
        %10017 = vst [vmem:[%s484 + $0x8] sm:$0xff] %v10013
        %10018 = vst [vmem:[%s484 + $0x10] sm:$0xff] %v10014
        %10019 = vst [vmem:[%s484 + $0x18] sm:$0xff] %v10015
        %s10020 = sand.u32 %s328, 1
        %s10021 = scalar_lea.sflag [#allocation3], %s10020
        %s10022 = sand.u32 %s328, 1
        %s10023 = smul.addr %s10022, 32
        %s10024 = scalar_lea.vmem [#allocation2], %s10023
        // Predicated region
        $region73: #{tpu_custom_call.1} parent=71 // pred_check
          %p10025 = pneg %p338
        $region74: #{tpu_custom_call.1} parent=71 // pred_check_branch
          %10027 = sbr.rel (%p10025) target = $region76
        $region75: #{tpu_custom_call.1} parent=71 // pred_region
          %s10028 = smul.u32 4, %s27
          %s10030 = ssub.s32 512, 512
          %10031 = vsyncadd %s10021, %s10030
          %s10032 = smul.addr %s10028, 128
          %s10033 = scalar_lea.hbm %s13, %s10032
          %s10034 = sshll.u32 %s10024, 4
          %s10035 = int_to_ptr.vmem [resolvable:$true] %s10034
          %10040 = dma.vmem_to_hbm [thread:$0]  %s10035, 512, %s10033, %s10021, 128, 128, 8
        $region76: #{tpu_custom_call.1} parent=71 // pred_fallthru
          _
      $region72: #{tpu_custom_call.1} parent=5 // pred_fallthru
        _
      %p10041 = scmp.le.s32.totalorder 2, %s22
      // Predicated region
      $region77: #{tpu_custom_call.1} parent=5 // pred_check
        %p10042 = pneg %p10041
      $region78: #{tpu_custom_call.1} parent=5 // pred_check_branch
        %10044 = sbr.rel (%p10042) target = $region80
      $region79: #{tpu_custom_call.1} parent=5 // pred_region
        %s10045 = ssub.s32 %s22, 2
        // Predicated region
        $region81: #{tpu_custom_call.1} parent=79 // pred_check
          %p10046 = pneg %p344
        $region82: #{tpu_custom_call.1} parent=79 // pred_check_branch
          %10048 = sbr.rel (%p10046) target = $region84
        $region83: #{tpu_custom_call.1} parent=79 // pred_region
          %s10049 = sand.u32 %s329, 1
          %s10050 = scalar_lea.sflag [#allocation3], %s10049
          %s10051 = sand.u32 %s329, 1
          %s10052 = smul.addr %s10051, 32
          %s10053 = scalar_lea.vmem [#allocation2], %s10052
          %10054 = dma.done %s10050, 512
        $region84: #{tpu_custom_call.1} parent=79 // pred_fallthru
          _
      $region80: #{tpu_custom_call.1} parent=5 // pred_fallthru
        _
    $region6: #{tpu_custom_call.1} parent=1 // loop_footer
      %s26 = sadd.s32 1, %s22
    $region7: #{tpu_custom_call.1} parent=1 // loop_footer_branch
      %21 = sbr.rel target = $region3
    $region8: #{tpu_custom_call.1} parent=1 // loop_exit
      _
    %10055 = vsyncpa [#allocation3], 1
    %s10056 = scalar_lea.sflag [#allocation3], 1
    %10057 = vsyncpa %s10056, 1

</llo_original>
